<compile_context>
chip_gen: v7x
topology: tpu7x:2x2x1
jax: 0.10.0
libtpu: 0.0.40
codegen_flags: <defaults>
</compile_context>

<pallas_src>
import functools

import jax
import jax.numpy as jnp
from jax import lax
from jax.experimental import pallas as pl
from jax.experimental.pallas import tpu as pltpu


CONFIG = {
    "mfn_t_in_dim": 16,
    "mfn_a_in_dim": 8,
    "mfn_v_in_dim": 8,
    "mfn_t_n_hidden": 32,
    "mfn_a_n_hidden": 16,
    "mfn_v_n_hidden": 16,
    # attn_in = 2 * (t_h + a_h + v_h)
    "mfn_attn_in_dim": 2 * (32 + 16 + 16),
    "mfn_nn1_dim": 32,
    "mfn_nn1_dropout": 0.0,
    "mfn_nn2_dim": 32,
    "mfn_nn2_dropout": 0.0,
    "mfn_mem_dim": 64,
    # gamma_in = attn_in + mem
    "mfn_gamma_in_dim": 2 * (32 + 16 + 16) + 64,
    "mfn_gamma1_dim": 32,
    "mfn_gamma1_dropout": 0.0,
    "mfn_gamma2_dim": 32,
    "mfn_gamma2_dropout": 0.0,
    # output_in = t_h + a_h + v_h + mem
    "mfn_output_in_dim": 32 + 16 + 16 + 64,
    "mfn_output_hidden_dim": 32,
    "mfn_output_dim": 8,
    "mfn_output_dropout": 0.0,
    "use_punchline": True,
    "use_t_punchline": True,
    "use_a_punchline": True,
    "use_v_punchline": True,
}

OUT_PAD = 128        # lane-dense output slab width
_UNROLL_MAX_T = 32   # fully unroll the time loop up to this many steps


# ---------------------------------------------------------------------------
# Pallas kernel
# ---------------------------------------------------------------------------
def mfn_kernel(T, N, H, MEM,
               x_ref, s0_ref,
               w_ih_ref, w_hh_ref, b_lstm_ref,
               a1w1_ref, a1b1_ref, a1w2_ref, a1b2_ref,
               a2w1_ref, a2b1_ref, a2w2_ref, a2b2_ref,
               gw1a_ref, gw1m_ref, gb1_ref, gw2_ref, gb2_ref,
               ow1_ref, ob1_ref, ow2_ref, ob2_ref,
               out_ref, xw_ref):
    G4 = 4 * H
    f32 = jnp.float32

    # Pre-broadcast the small per-step biases once so the (unrolled) loop body
    # never re-emits broadcast_in_dim.  Weights stay in VMEM refs and are
    # loaded at their use sites (keeps vreg pressure low, no spill traffic).
    a1b1 = jnp.broadcast_to(a1b1_ref[...], (N, a1b1_ref.shape[1]))
    a1b2 = jnp.broadcast_to(a1b2_ref[...], (N, a1b2_ref.shape[1]))
    a2b1 = jnp.broadcast_to(a2b1_ref[...], (N, a2b1_ref.shape[1]))
    a2b2 = jnp.broadcast_to(a2b2_ref[...], (N, a2b2_ref.shape[1]))
    gb1 = jnp.broadcast_to(gb1_ref[...], (N, gb1_ref.shape[1]))
    gb2 = jnp.broadcast_to(gb2_ref[...], (N, gb2_ref.shape[1]))

    # Hoisted input projection: one (T*N, D) @ (D, 4H) matmul for every
    # timestep at once, LSTM bias folded in.  Removes one MXU push and the
    # bias add from the serial per-step critical path and fills MXU rows far
    # better than T tiny (N, D) matmuls.
    xw_ref[...] = (
        jnp.dot(x_ref[...], w_ih_ref[...], preferred_element_type=f32)
        + b_lstm_ref[...])

    s0 = s0_ref[...]                       # (N, H + MEM) = [c_packed | mem]
    h = jnp.zeros((N, H), f32)
    c = s0[:, :H]
    mem = s0[:, H:]

    def step(i, h, c, mem):
        # Per-step x-projection (already includes the LSTM bias).
        row = i * N
        if not isinstance(row, int):       # dynamic index in the rolled path
            row = pl.multiple_of(row, 8)   # N is a multiple of 8
        gates = xw_ref[pl.ds(row, N), :] + jnp.dot(
            h, w_hh_ref[...], preferred_element_type=f32)   # (N, 4H)

        # Gate layout is [i | f | o | g]: one sigmoid over 3H lanes, one tanh
        # over H lanes (instead of four separate 64-lane gate nonlinearities).
        sg = jax.nn.sigmoid(gates[:, :3 * H])
        gg = jnp.tanh(gates[:, 3 * H:])
        ig = sg[:, 0 * H:1 * H]
        fg = sg[:, 1 * H:2 * H]
        og = sg[:, 2 * H:3 * H]
        c_new = fg * c + ig * gg
        h_new = og * jnp.tanh(c_new)

        c_star = jnp.concatenate([c, c_new], axis=1)          # (N, 2H)

        # Attention MLP + exact softmax over the feature dim.
        hid1 = jnp.maximum(
            jnp.dot(c_star, a1w1_ref[...], preferred_element_type=f32) + a1b1,
            0.0)
        logits = jnp.dot(hid1, a1w2_ref[...], preferred_element_type=f32) + a1b2
        z = logits - jnp.max(logits, axis=1, keepdims=True)
        e = jnp.exp(z)
        attention = e / jnp.sum(e, axis=1, keepdims=True)     # exact reciprocal
        attended = attention * c_star

        hid2 = jnp.maximum(
            jnp.dot(attended, a2w1_ref[...], preferred_element_type=f32) + a2b1,
            0.0)
        c_hat = jnp.tanh(
            jnp.dot(hid2, a2w2_ref[...], preferred_element_type=f32) + a2b2)

        # Fused gamma1/gamma2 FC1, split across [attended | mem] so the
        # 192-lane `both` concatenate is never materialized.
        ghid = jnp.maximum(
            jnp.dot(attended, gw1a_ref[...], preferred_element_type=f32)
            + jnp.dot(mem, gw1m_ref[...], preferred_element_type=f32)
            + gb1, 0.0)
        # Block-diagonal FC2 -> [gamma1 | gamma2] in one 128-lane sigmoid.
        gmm = jax.nn.sigmoid(
            jnp.dot(ghid, gw2_ref[...], preferred_element_type=f32) + gb2)
        new_mem = gmm[:, :MEM] * mem + gmm[:, MEM:] * c_hat
        return h_new, c_new, new_mem

    if T <= _UNROLL_MAX_T:
        # Full unroll at trace time: the scheduler sees the whole dependency
        # chain and can overlap the attention/gamma work of step i (feeds only
        # `mem`) with the LSTM chain of step i+1.
        for i in range(T):
            h, c, mem = step(i, h, c, mem)
    else:
        h, c, mem = lax.fori_loop(
            0, T, lambda i, carry: step(i, *carry), (h, c, mem))

    last_h = jnp.concatenate([h, mem], axis=1)                # (N, H + MEM)
    ohid = jnp.maximum(
        jnp.dot(last_h, ow1_ref[...], preferred_element_type=f32) + ob1_ref[...],
        0.0)
    out = jnp.dot(ohid, ow2_ref[...], preferred_element_type=f32) + ob2_ref[...]
    out_ref[...] = out                                        # (N, 128) lane-dense


# ---------------------------------------------------------------------------
# Parameter repacking (raw per-layer params -> fused kernel layout).
# Weight-only: call ONCE, reuse across forward calls.
# ---------------------------------------------------------------------------
def pack_params(cfg, params):
    TI = cfg["mfn_t_in_dim"]; AI = cfg["mfn_a_in_dim"]; VI = cfg["mfn_v_in_dim"]
    TH = cfg["mfn_t_n_hidden"]; AH = cfg["mfn_a_n_hidden"]; VH = cfg["mfn_v_n_hidden"]
    D = TI + AI + VI
    H = TH + AH + VH
    MEM = cfg["mfn_mem_dim"]
    g1d = cfg["mfn_gamma1_dim"]
    od = cfg["mfn_output_dim"]
    attn_in = 2 * H

    (wih_t, whh_t, b_t, wih_a, whh_a, b_a, wih_v, whh_v, b_v,
     a1w1, a1b1, a1w2, a1b2, a2w1, a2b1, a2w2, a2b2,
     g1w1, g1b1, g1w2, g1b2, g2w1, g2b1, g2w2, g2b2,
     ow1, ob1, ow2, ob2) = params

    row_off = [(0, TI), (TI, AI), (TI + AI, VI)]     # x column offsets per modality
    col_off = [(0, TH), (TH, AH), (TH + AH, VH)]     # packed h/c offsets per modality
    hids = [TH, AH, VH]

    # Raw torch gate order is (i, f, g, o); packed order is [i | f | o | g]
    # so the three sigmoid gates are contiguous and tanh is last.
    gate_perm = (0, 1, 3, 2)

    w_ih = jnp.zeros((D, 4 * H), jnp.float32)
    w_hh = jnp.zeros((H, 4 * H), jnp.float32)
    b_lstm = jnp.zeros((1, 4 * H), jnp.float32)
    mods = [(wih_t, whh_t, b_t), (wih_a, whh_a, b_a), (wih_v, whh_v, b_v)]
    for m, (wi, wh, bb) in enumerate(mods):
        hm = hids[m]
        r0, rl = row_off[m]
        c0, cl = col_off[m]
        for g_raw in range(4):
            g_new = gate_perm[g_raw]
            dst = slice(g_new * H + c0, g_new * H + c0 + cl)
            src = slice(g_raw * hm, (g_raw + 1) * hm)
            w_ih = w_ih.at[r0:r0 + rl, dst].set(wi[:, src])
            w_hh = w_hh.at[c0:c0 + cl, dst].set(wh[:, src])
            b_lstm = b_lstm.at[:, dst].set(bb[:, src])

    # gamma1/gamma2 fusion: stacked FC1 (split rows for attended vs mem so the
    # kernel never builds the 192-lane `both` concat), block-diagonal FC2.
    gw1 = jnp.concatenate([g1w1, g2w1], axis=1)                 # (gamma_in, 64)
    gw1a = gw1[:attn_in, :]                                     # multiplies attended
    gw1m = gw1[attn_in:, :]                                     # multiplies mem
    gb1 = jnp.concatenate([g1b1, g2b1], axis=1)                 # (1, 64)
    gw2 = jnp.zeros((g1w2.shape[0] + g2w2.shape[0], 2 * MEM), jnp.float32)
    gw2 = gw2.at[:g1d, :MEM].set(g1w2)
    gw2 = gw2.at[g1d:, MEM:].set(g2w2)
    gb2 = jnp.concatenate([g1b2, g2b2], axis=1)                 # (1, 128)

    # Pad output FC2 to 128 lanes for an unmasked, lane-dense output store.
    ow2p = jnp.zeros((ow2.shape[0], OUT_PAD), jnp.float32).at[:, :od].set(ow2)
    ob2p = jnp.zeros((1, OUT_PAD), jnp.float32).at[:, :od].set(ob2)

    return [w_ih, w_hh, b_lstm,
            a1w1, a1b1, a1w2, a1b2,
            a2w1, a2b1, a2w2, a2b2,
            gw1a, gw1m, gb1, gw2, gb2,
            ow1, ob1, ow2p, ob2p]


def make_punchline_mask(cfg):
    TI = cfg["mfn_t_in_dim"]; AI = cfg["mfn_a_in_dim"]; VI = cfg["mfn_v_in_dim"]
    use_t = cfg["use_punchline"] and cfg["use_t_punchline"]
    use_a = cfg["use_punchline"] and cfg["use_a_punchline"]
    use_v = cfg["use_punchline"] and cfg["use_v_punchline"]
    return jnp.concatenate([
        jnp.full((TI,), float(use_t), jnp.float32),
        jnp.full((AI,), float(use_a), jnp.float32),
        jnp.full((VI,), float(use_v), jnp.float32),
    ])


# ---------------------------------------------------------------------------
# Forward wrapper (jit this; pack_params/make_punchline_mask run once outside)
# ---------------------------------------------------------------------------
def mfn_forward(cfg, packed_params, punch_mask, x_p, c_t, c_a, c_v, mem):
    T, N, D = x_p.shape
    H = cfg["mfn_t_n_hidden"] + cfg["mfn_a_n_hidden"] + cfg["mfn_v_n_hidden"]
    MEM = cfg["mfn_mem_dim"]
    od = cfg["mfn_output_dim"]

    x_p = x_p * punch_mask[None, None, :]

    # Pad the batch (sublane) dim to a multiple of 8 and flatten (T, N) so the
    # in-kernel hoisted x @ W_ih is a single row-dense matmul.
    n_pad = max(8, ((N + 7) // 8) * 8)
    x_pad = jnp.zeros((T, n_pad, D), jnp.float32).at[:, :N, :].set(x_p)
    x_flat = x_pad.reshape(T * n_pad, D)

    # Merge initial c_t/c_a/c_v/mem into one (n_pad, 128) state input.
    s0 = jnp.zeros((n_pad, H + MEM), jnp.float32)
    s0 = s0.at[:N, :].set(jnp.concatenate([c_t, c_a, c_v, mem], axis=1))

    inputs = [x_flat, s0] + list(packed_params)

    # NOTE: gridless, single-TensorCore, fully VMEM-resident (~0.4 MiB total).
    # For v7x with a real batch, add a parallel grid axis over batch tiles
    # (dimension_semantics=("parallel",)); for very long T, stream x/xw over a
    # T-chunk grid axis instead of keeping it VMEM-resident.
    out = pl.pallas_call(
        functools.partial(mfn_kernel, T, n_pad, H, MEM),
        out_shape=jax.ShapeDtypeStruct((n_pad, OUT_PAD), jnp.float32),
        in_specs=[pl.BlockSpec(memory_space=pltpu.MemorySpace.VMEM)] * len(inputs),
        out_specs=pl.BlockSpec(memory_space=pltpu.MemorySpace.VMEM),
        scratch_shapes=[pltpu.VMEM((T * n_pad, 4 * H), jnp.float32)],
    )(*inputs)
    return out[:N, :od]


# ---------------------------------------------------------------------------
# Pure-JAX reference (mirrors the PyTorch module, uses the RAW params).
# Matmuls forced to HIGHEST precision so the comparison is not polluted by
# XLA's default bf16 matmul path for f32 on TPU.
# ---------------------------------------------------------------------------
_HI = jax.lax.Precision.HIGHEST


def _mm(a, b):
    return jnp.dot(a, b, precision=_HI)


def _lstm_step_ref(x, h, c, w_ih, w_hh, b, hid):
    gates = _mm(x, w_ih) + _mm(h, w_hh) + b
    i = jax.nn.sigmoid(gates[:, 0 * hid:1 * hid])
    f = jax.nn.sigmoid(gates[:, 1 * hid:2 * hid])
    g = jnp.tanh(gates[:, 2 * hid:3 * hid])
    o = jax.nn.sigmoid(gates[:, 3 * hid:4 * hid])
    c_new = f * c + i * g
    h_new = o * jnp.tanh(c_new)
    return h_new, c_new


def mfn_reference(cfg, params, x_p, c_t, c_a, c_v, mem):
    x_p = x_p * make_punchline_mask(cfg)[None, None, :]
    (wih_t, whh_t, b_t, wih_a, whh_a, b_a, wih_v, whh_v, b_v,
     a1w1, a1b1, a1w2, a1b2, a2w1, a2b1, a2w2, a2b2,
     g1w1, g1b1, g1w2, g1b2, g2w1, g2b1, g2w2, g2b2,
     ow1, ob1, ow2, ob2) = params
    T, N, _ = x_p.shape
    TI = cfg["mfn_t_in_dim"]; AI = cfg["mfn_a_in_dim"]
    TH = cfg["mfn_t_n_hidden"]; AH = cfg["mfn_a_n_hidden"]; VH = cfg["mfn_v_n_hidden"]

    t_h = jnp.zeros((N, TH), jnp.float32)
    a_h = jnp.zeros((N, AH), jnp.float32)
    v_h = jnp.zeros((N, VH), jnp.float32)
    t_c, a_c, v_c = c_t, c_a, c_v
    for i in range(T):
        xt = x_p[i, :, :TI]
        xa = x_p[i, :, TI:TI + AI]
        xv = x_p[i, :, TI + AI:]
        pre_c = jnp.concatenate([t_c, a_c, v_c], axis=1)
        nt_h, nt_c = _lstm_step_ref(xt, t_h, t_c, wih_t, whh_t, b_t, TH)
        na_h, na_c = _lstm_step_ref(xa, a_h, a_c, wih_a, whh_a, b_a, AH)
        nv_h, nv_c = _lstm_step_ref(xv, v_h, v_c, wih_v, whh_v, b_v, VH)
        cur_c = jnp.concatenate([nt_c, na_c, nv_c], axis=1)
        c_star = jnp.concatenate([pre_c, cur_c], axis=1)
        attention = jax.nn.softmax(
            _mm(jnp.maximum(_mm(c_star, a1w1) + a1b1, 0.0), a1w2) + a1b2, axis=1)
        attended = attention * c_star
        c_hat = jnp.tanh(_mm(jnp.maximum(_mm(attended, a2w1) + a2b1, 0.0), a2w2) + a2b2)
        both = jnp.concatenate([attended, mem], axis=1)
        gamma1 = jax.nn.sigmoid(_mm(jnp.maximum(_mm(both, g1w1) + g1b1, 0.0), g1w2) + g1b2)
        gamma2 = jax.nn.sigmoid(_mm(jnp.maximum(_mm(both, g2w1) + g2b1, 0.0), g2w2) + g2b2)
        mem = gamma1 * mem + gamma2 * c_hat
        t_h, t_c, a_h, a_c, v_h, v_c = nt_h, nt_c, na_h, na_c, nv_h, nv_c
    last_h = jnp.concatenate([t_h, a_h, v_h, mem], axis=1)
    return _mm(jnp.maximum(_mm(last_h, ow1) + ob1, 0.0), ow2) + ob2


# ---------------------------------------------------------------------------
# Deterministic parameter init (raw per-layer layout, PyTorch-like uniform).
# ---------------------------------------------------------------------------
def init_params(cfg, key):
    keys = iter(jax.random.split(key, 64))

    def uni(shape, scale):
        return jax.random.uniform(next(keys), shape, jnp.float32, -scale, scale)

    params = []
    # LSTM cells: W_ih^T (in, 4H), W_hh^T (H, 4H), combined bias (1, 4H)
    for in_dim, hid in [
        (cfg["mfn_t_in_dim"], cfg["mfn_t_n_hidden"]),
        (cfg["mfn_a_in_dim"], cfg["mfn_a_n_hidden"]),
        (cfg["mfn_v_in_dim"], cfg["mfn_v_n_hidden"]),
    ]:
        k = 1.0 / (hid ** 0.5)
        params.append(uni((in_dim, 4 * hid), k))
        params.append(uni((hid, 4 * hid), k))
        params.append(uni((1, 4 * hid), k))  # b_ih + b_hh combined

    # Linear layers: W^T (in, out), b (1, out)
    lin_dims = [
        (cfg["mfn_attn_in_dim"], cfg["mfn_nn1_dim"]),              # attn1_fc1
        (cfg["mfn_nn1_dim"], cfg["mfn_attn_in_dim"]),              # attn1_fc2
        (cfg["mfn_attn_in_dim"], cfg["mfn_nn2_dim"]),              # attn2_fc1
        (cfg["mfn_nn2_dim"], cfg["mfn_mem_dim"]),                  # attn2_fc2
        (cfg["mfn_gamma_in_dim"], cfg["mfn_gamma1_dim"]),          # gamma1_fc1
        (cfg["mfn_gamma1_dim"], cfg["mfn_mem_dim"]),               # gamma1_fc2
        (cfg["mfn_gamma_in_dim"], cfg["mfn_gamma2_dim"]),          # gamma2_fc1
        (cfg["mfn_gamma2_dim"], cfg["mfn_mem_dim"]),               # gamma2_fc2
        (cfg["mfn_output_in_dim"], cfg["mfn_output_hidden_dim"]),  # output_fc1
        (cfg["mfn_output_hidden_dim"], cfg["mfn_output_dim"]),     # output_fc2
    ]
    for din, dout in lin_dims:
        k = 1.0 / (din ** 0.5)
        params.append(uni((din, dout), k))
        params.append(uni((1, dout), k))
    return params


if __name__ == "__main__":
    cfg = CONFIG
    key = jax.random.PRNGKey(0)
    kx, kc1, kc2, kc3, km, kp = jax.random.split(key, 6)

    T, N = 8, 2
    D = cfg["mfn_t_in_dim"] + cfg["mfn_a_in_dim"] + cfg["mfn_v_in_dim"]

    x_p = jax.random.normal(kx, (T, N, D), jnp.float32)
    c_t = jax.random.normal(kc1, (N, cfg["mfn_t_n_hidden"]), jnp.float32)
    c_a = jax.random.normal(kc2, (N, cfg["mfn_a_n_hidden"]), jnp.float32)
    c_v = jax.random.normal(kc3, (N, cfg["mfn_v_n_hidden"]), jnp.float32)
    mem = jax.random.normal(km, (N, cfg["mfn_mem_dim"]), jnp.float32)
    params = init_params(cfg, kp)

    # Hoisted out of the per-call path: weight repacking + punchline mask.
    packed = pack_params(cfg, params)
    punch_mask = make_punchline_mask(cfg)
    fwd = jax.jit(functools.partial(mfn_forward, cfg))

    out = fwd(packed, punch_mask, x_p, c_t, c_a, c_v, mem)
    out = jax.block_until_ready(out)

    ref = mfn_reference(cfg, params, x_p, c_t, c_a, c_v, mem)
    assert out.shape == (N, cfg["mfn_output_dim"]), out.shape
    # Exact softmax reciprocal now; remaining differences are f32 matmul
    # accumulation-order / fused-vs-separate layer effects only, so the
    # tolerance is tightened vs the previous (approx-reciprocal) revision.
    assert jnp.allclose(out, ref, atol=5e-3, rtol=5e-3), (out, ref)

    print("KERNEL_OK")
</pallas_src>

<mosaic_0001>
module attributes {stable_mosaic.version = 11 : i64} {
  func.func @mfn_kernel(%arg0: memref<64x32xf32, #tpu.memory_space<vmem>>, %arg1: memref<8x128xf32, #tpu.memory_space<vmem>>, %arg2: memref<32x256xf32, #tpu.memory_space<vmem>>, %arg3: memref<64x256xf32, #tpu.memory_space<vmem>>, %arg4: memref<1x256xf32, #tpu.memory_space<vmem>>, %arg5: memref<128x32xf32, #tpu.memory_space<vmem>>, %arg6: memref<1x32xf32, #tpu.memory_space<vmem>>, %arg7: memref<32x128xf32, #tpu.memory_space<vmem>>, %arg8: memref<1x128xf32, #tpu.memory_space<vmem>>, %arg9: memref<128x32xf32, #tpu.memory_space<vmem>>, %arg10: memref<1x32xf32, #tpu.memory_space<vmem>>, %arg11: memref<32x64xf32, #tpu.memory_space<vmem>>, %arg12: memref<1x64xf32, #tpu.memory_space<vmem>>, %arg13: memref<128x64xf32, #tpu.memory_space<vmem>>, %arg14: memref<64x64xf32, #tpu.memory_space<vmem>>, %arg15: memref<1x64xf32, #tpu.memory_space<vmem>>, %arg16: memref<64x128xf32, #tpu.memory_space<vmem>>, %arg17: memref<1x128xf32, #tpu.memory_space<vmem>>, %arg18: memref<128x32xf32, #tpu.memory_space<vmem>>, %arg19: memref<1x32xf32, #tpu.memory_space<vmem>>, %arg20: memref<32x128xf32, #tpu.memory_space<vmem>>, %arg21: memref<1x128xf32, #tpu.memory_space<vmem>>, %arg22: memref<8x128xf32, #tpu.memory_space<vmem>>, %arg23: memref<64x256xf32, #tpu.memory_space<vmem>>) attributes {dimension_semantics = [], scalar_prefetch = 0 : i64, scratch_operands = 1 : i64, tpu.core_type = #tpu.core_type<tc>} {
    %c0 = arith.constant 0 : index
    %c0_0 = arith.constant 0 : index
    %0 = vector.load %arg6[%c0, %c0_0] : memref<1x32xf32, #tpu.memory_space<vmem>>, vector<1x32xf32>
    %1 = vector.shape_cast %0 : vector<1x32xf32> to vector<1x32xf32>
    %2 = vector.broadcast %1 : vector<1x32xf32> to vector<8x32xf32>
    %c0_1 = arith.constant 0 : index
    %c0_2 = arith.constant 0 : index
    %3 = vector.load %arg8[%c0_1, %c0_2] : memref<1x128xf32, #tpu.memory_space<vmem>>, vector<1x128xf32>
    %4 = vector.shape_cast %3 : vector<1x128xf32> to vector<1x128xf32>
    %5 = vector.broadcast %4 : vector<1x128xf32> to vector<8x128xf32>
    %c0_3 = arith.constant 0 : index
    %c0_4 = arith.constant 0 : index
    %6 = vector.load %arg10[%c0_3, %c0_4] : memref<1x32xf32, #tpu.memory_space<vmem>>, vector<1x32xf32>
    %7 = vector.shape_cast %6 : vector<1x32xf32> to vector<1x32xf32>
    %8 = vector.broadcast %7 : vector<1x32xf32> to vector<8x32xf32>
    %c0_5 = arith.constant 0 : index
    %c0_6 = arith.constant 0 : index
    %9 = vector.load %arg12[%c0_5, %c0_6] : memref<1x64xf32, #tpu.memory_space<vmem>>, vector<1x64xf32>
    %10 = vector.shape_cast %9 : vector<1x64xf32> to vector<1x64xf32>
    %11 = vector.broadcast %10 : vector<1x64xf32> to vector<8x64xf32>
    %c0_7 = arith.constant 0 : index
    %c0_8 = arith.constant 0 : index
    %12 = vector.load %arg15[%c0_7, %c0_8] : memref<1x64xf32, #tpu.memory_space<vmem>>, vector<1x64xf32>
    %13 = vector.shape_cast %12 : vector<1x64xf32> to vector<1x64xf32>
    %14 = vector.broadcast %13 : vector<1x64xf32> to vector<8x64xf32>
    %c0_9 = arith.constant 0 : index
    %c0_10 = arith.constant 0 : index
    %15 = vector.load %arg17[%c0_9, %c0_10] : memref<1x128xf32, #tpu.memory_space<vmem>>, vector<1x128xf32>
    %16 = vector.shape_cast %15 : vector<1x128xf32> to vector<1x128xf32>
    %17 = vector.broadcast %16 : vector<1x128xf32> to vector<8x128xf32>
    %c0_11 = arith.constant 0 : index
    %c0_12 = arith.constant 0 : index
    %18 = vector.load %arg0[%c0_11, %c0_12] : memref<64x32xf32, #tpu.memory_space<vmem>>, vector<64x32xf32>
    %c0_13 = arith.constant 0 : index
    %c0_14 = arith.constant 0 : index
    %19 = vector.load %arg2[%c0_13, %c0_14] : memref<32x256xf32, #tpu.memory_space<vmem>>, vector<32x256xf32>
    %cst = arith.constant dense<0.000000e+00> : vector<64x256xf32>
    %20 = tpu.matmul %18, %19, %cst {dimension_numbers = #tpu.dot_dimension_numbers<[1], [0], [0], [1], [0, 0, 1, 1], [], []>} : vector<64x32xf32>, vector<32x256xf32>, vector<64x256xf32> -> vector<64x256xf32>
    %c0_15 = arith.constant 0 : index
    %c0_16 = arith.constant 0 : index
    %21 = vector.load %arg4[%c0_15, %c0_16] : memref<1x256xf32, #tpu.memory_space<vmem>>, vector<1x256xf32>
    %22 = vector.broadcast %21 : vector<1x256xf32> to vector<64x256xf32>
    %23 = arith.addf %20, %22 : vector<64x256xf32>
    %c0_17 = arith.constant 0 : index
    %c0_18 = arith.constant 0 : index
    %24 = vector.load %arg23[%c0_17, %c0_18] : memref<64x256xf32, #tpu.memory_space<vmem>>, vector<64x256xf32>
    tpu.vector_store %arg23[%c0_17, %c0_18], %23 {strides = array<i32>} : memref<64x256xf32, #tpu.memory_space<vmem>>, vector<64x256xf32>,
    %c0_19 = arith.constant 0 : index
    %c0_20 = arith.constant 0 : index
    %25 = vector.load %arg1[%c0_19, %c0_20] : memref<8x128xf32, #tpu.memory_space<vmem>>, vector<8x128xf32>
    %cst_21 = arith.constant 0.000000e+00 : f32
    %26 = vector.broadcast %cst_21 : f32 to vector<8x64xf32>
    %27 = vector.extract_strided_slice %25 {offsets = [0, 0], sizes = [8, 64], strides = [1, 1]} : vector<8x128xf32> to vector<8x64xf32>
    %28 = vector.extract_strided_slice %25 {offsets = [0, 64], sizes = [8, 64], strides = [1, 1]} : vector<8x128xf32> to vector<8x64xf32>
    %c0_22 = arith.constant 0 : index
    %c0_23 = arith.constant 0 : index
    %29 = vector.load %arg23[%c0_22, %c0_23] : memref<64x256xf32, #tpu.memory_space<vmem>>, vector<8x256xf32>
    %c0_24 = arith.constant 0 : index
    %c0_25 = arith.constant 0 : index
    %30 = vector.load %arg3[%c0_24, %c0_25] : memref<64x256xf32, #tpu.memory_space<vmem>>, vector<64x256xf32>
    %cst_26 = arith.constant dense<0.000000e+00> : vector<8x256xf32>
    %31 = tpu.matmul %26, %30, %cst_26 {dimension_numbers = #tpu.dot_dimension_numbers<[1], [0], [0], [1], [0, 0, 1, 1], [], []>} : vector<8x64xf32>, vector<64x256xf32>, vector<8x256xf32> -> vector<8x256xf32>
    %32 = arith.addf %29, %31 : vector<8x256xf32>
    %33 = vector.extract_strided_slice %32 {offsets = [0, 0], sizes = [8, 192], strides = [1, 1]} : vector<8x256xf32> to vector<8x192xf32>
    %34 = arith.negf %33 : vector<8x192xf32>
    %35 = math.exp %34 : vector<8x192xf32>
    %cst_27 = arith.constant 1.000000e+00 : f32
    %36 = vector.broadcast %cst_27 : f32 to vector<8x192xf32>
    %37 = arith.addf %36, %35 : vector<8x192xf32>
    %38 = arith.divf %36, %37 : vector<8x192xf32>
    %39 = vector.extract_strided_slice %32 {offsets = [0, 192], sizes = [8, 64], strides = [1, 1]} : vector<8x256xf32> to vector<8x64xf32>
    %40 = math.tanh %39 : vector<8x64xf32>
    %41 = vector.extract_strided_slice %38 {offsets = [0, 0], sizes = [8, 64], strides = [1, 1]} : vector<8x192xf32> to vector<8x64xf32>
    %42 = vector.extract_strided_slice %38 {offsets = [0, 64], sizes = [8, 64], strides = [1, 1]} : vector<8x192xf32> to vector<8x64xf32>
    %43 = vector.extract_strided_slice %38 {offsets = [0, 128], sizes = [8, 64], strides = [1, 1]} : vector<8x192xf32> to vector<8x64xf32>
    %44 = arith.mulf %42, %27 : vector<8x64xf32>
    %45 = arith.mulf %41, %40 : vector<8x64xf32>
    %46 = arith.addf %44, %45 : vector<8x64xf32>
    %47 = math.tanh %46 : vector<8x64xf32>
    %48 = arith.mulf %43, %47 : vector<8x64xf32>
    %49 = tpu.concatenate %27, %46 in 1 : vector<8x64xf32>, vector<8x64xf32> -> vector<8x128xf32>
    %c0_28 = arith.constant 0 : index
    %c0_29 = arith.constant 0 : index
    %50 = vector.load %arg5[%c0_28, %c0_29] : memref<128x32xf32, #tpu.memory_space<vmem>>, vector<128x32xf32>
    %cst_30 = arith.constant dense<0.000000e+00> : vector<8x32xf32>
    %51 = tpu.matmul %49, %50, %cst_30 {dimension_numbers = #tpu.dot_dimension_numbers<[1], [0], [0], [1], [0, 0, 1, 1], [], []>} : vector<8x128xf32>, vector<128x32xf32>, vector<8x32xf32> -> vector<8x32xf32>
    %52 = arith.addf %51, %2 : vector<8x32xf32>
    %cst_31 = arith.constant 0.000000e+00 : f32
    %53 = vector.broadcast %cst_31 : f32 to vector<8x32xf32>
    %54 = arith.maximumf %52, %53 : vector<8x32xf32>
    %c0_32 = arith.constant 0 : index
    %c0_33 = arith.constant 0 : index
    %55 = vector.load %arg7[%c0_32, %c0_33] : memref<32x128xf32, #tpu.memory_space<vmem>>, vector<32x128xf32>
    %cst_34 = arith.constant dense<0.000000e+00> : vector<8x128xf32>
    %56 = tpu.matmul %54, %55, %cst_34 {dimension_numbers = #tpu.dot_dimension_numbers<[1], [0], [0], [1], [0, 0, 1, 1], [], []>} : vector<8x32xf32>, vector<32x128xf32>, vector<8x128xf32> -> vector<8x128xf32>
    %57 = arith.addf %56, %5 : vector<8x128xf32>
    %cst_35 = arith.constant dense<0xFF800000> : vector<8xf32>
    %58 = vector.multi_reduction <maximumf>, %57, %cst_35 [1] : vector<8x128xf32> to vector<8xf32>
    %59 = vector.shape_cast %58 : vector<8xf32> to vector<8x1xf32>
    %60 = vector.broadcast %59 : vector<8x1xf32> to vector<8x128xf32>
    %61 = arith.subf %57, %60 : vector<8x128xf32>
    %62 = math.exp %61 : vector<8x128xf32>
    %cst_36 = arith.constant dense<0.000000e+00> : vector<8xf32>
    %63 = vector.multi_reduction <add>, %62, %cst_36 [1] : vector<8x128xf32> to vector<8xf32>
    %64 = vector.shape_cast %63 : vector<8xf32> to vector<8x1xf32>
    %65 = vector.broadcast %64 : vector<8x1xf32> to vector<8x128xf32>
    %66 = arith.divf %62, %65 : vector<8x128xf32>
    %67 = arith.mulf %66, %49 : vector<8x128xf32>
    %c0_37 = arith.constant 0 : index
    %c0_38 = arith.constant 0 : index
    %68 = vector.load %arg9[%c0_37, %c0_38] : memref<128x32xf32, #tpu.memory_space<vmem>>, vector<128x32xf32>
    %cst_39 = arith.constant dense<0.000000e+00> : vector<8x32xf32>
    %69 = tpu.matmul %67, %68, %cst_39 {dimension_numbers = #tpu.dot_dimension_numbers<[1], [0], [0], [1], [0, 0, 1, 1], [], []>} : vector<8x128xf32>, vector<128x32xf32>, vector<8x32xf32> -> vector<8x32xf32>
    %70 = arith.addf %69, %8 : vector<8x32xf32>
    %cst_40 = arith.constant 0.000000e+00 : f32
    %71 = vector.broadcast %cst_40 : f32 to vector<8x32xf32>
    %72 = arith.maximumf %70, %71 : vector<8x32xf32>
    %c0_41 = arith.constant 0 : index
    %c0_42 = arith.constant 0 : index
    %73 = vector.load %arg11[%c0_41, %c0_42] : memref<32x64xf32, #tpu.memory_space<vmem>>, vector<32x64xf32>
    %cst_43 = arith.constant dense<0.000000e+00> : vector<8x64xf32>
    %74 = tpu.matmul %72, %73, %cst_43 {dimension_numbers = #tpu.dot_dimension_numbers<[1], [0], [0], [1], [0, 0, 1, 1], [], []>} : vector<8x32xf32>, vector<32x64xf32>, vector<8x64xf32> -> vector<8x64xf32>
    %75 = arith.addf %74, %11 : vector<8x64xf32>
    %76 = math.tanh %75 : vector<8x64xf32>
    %c0_44 = arith.constant 0 : index
    %c0_45 = arith.constant 0 : index
    %77 = vector.load %arg13[%c0_44, %c0_45] : memref<128x64xf32, #tpu.memory_space<vmem>>, vector<128x64xf32>
    %cst_46 = arith.constant dense<0.000000e+00> : vector<8x64xf32>
    %78 = tpu.matmul %67, %77, %cst_46 {dimension_numbers = #tpu.dot_dimension_numbers<[1], [0], [0], [1], [0, 0, 1, 1], [], []>} : vector<8x128xf32>, vector<128x64xf32>, vector<8x64xf32> -> vector<8x64xf32>
    %c0_47 = arith.constant 0 : index
    %c0_48 = arith.constant 0 : index
    %79 = vector.load %arg14[%c0_47, %c0_48] : memref<64x64xf32, #tpu.memory_space<vmem>>, vector<64x64xf32>
    %cst_49 = arith.constant dense<0.000000e+00> : vector<8x64xf32>
    %80 = tpu.matmul %28, %79, %cst_49 {dimension_numbers = #tpu.dot_dimension_numbers<[1], [0], [0], [1], [0, 0, 1, 1], [], []>} : vector<8x64xf32>, vector<64x64xf32>, vector<8x64xf32> -> vector<8x64xf32>
    %81 = arith.addf %78, %80 : vector<8x64xf32>
    %82 = arith.addf %81, %14 : vector<8x64xf32>
    %cst_50 = arith.constant 0.000000e+00 : f32
    %83 = vector.broadcast %cst_50 : f32 to vector<8x64xf32>
    %84 = arith.maximumf %82, %83 : vector<8x64xf32>
    %c0_51 = arith.constant 0 : index
    %c0_52 = arith.constant 0 : index
    %85 = vector.load %arg16[%c0_51, %c0_52] : memref<64x128xf32, #tpu.memory_space<vmem>>, vector<64x128xf32>
    %cst_53 = arith.constant dense<0.000000e+00> : vector<8x128xf32>
    %86 = tpu.matmul %84, %85, %cst_53 {dimension_numbers = #tpu.dot_dimension_numbers<[1], [0], [0], [1], [0, 0, 1, 1], [], []>} : vector<8x64xf32>, vector<64x128xf32>, vector<8x128xf32> -> vector<8x128xf32>
    %87 = arith.addf %86, %17 : vector<8x128xf32>
    %88 = arith.negf %87 : vector<8x128xf32>
    %89 = math.exp %88 : vector<8x128xf32>
    %cst_54 = arith.constant 1.000000e+00 : f32
    %90 = vector.broadcast %cst_54 : f32 to vector<8x128xf32>
    %91 = arith.addf %90, %89 : vector<8x128xf32>
    %92 = arith.divf %90, %91 : vector<8x128xf32>
    %93 = vector.extract_strided_slice %92 {offsets = [0, 0], sizes = [8, 64], strides = [1, 1]} : vector<8x128xf32> to vector<8x64xf32>
    %94 = arith.mulf %93, %28 : vector<8x64xf32>
    %95 = vector.extract_strided_slice %92 {offsets = [0, 64], sizes = [8, 64], strides = [1, 1]} : vector<8x128xf32> to vector<8x64xf32>
    %96 = arith.mulf %95, %76 : vector<8x64xf32>
    %97 = arith.addf %94, %96 : vector<8x64xf32>
    %c8 = arith.constant 8 : index
    %c0_55 = arith.constant 0 : index
    %98 = vector.load %arg23[%c8, %c0_55] : memref<64x256xf32, #tpu.memory_space<vmem>>, vector<8x256xf32>
    %c0_56 = arith.constant 0 : index
    %c0_57 = arith.constant 0 : index
    %99 = vector.load %arg3[%c0_56, %c0_57] : memref<64x256xf32, #tpu.memory_space<vmem>>, vector<64x256xf32>
    %cst_58 = arith.constant dense<0.000000e+00> : vector<8x256xf32>
    %100 = tpu.matmul %48, %99, %cst_58 {dimension_numbers = #tpu.dot_dimension_numbers<[1], [0], [0], [1], [0, 0, 1, 1], [], []>} : vector<8x64xf32>, vector<64x256xf32>, vector<8x256xf32> -> vector<8x256xf32>
    %101 = arith.addf %98, %100 : vector<8x256xf32>
    %102 = vector.extract_strided_slice %101 {offsets = [0, 0], sizes = [8, 192], strides = [1, 1]} : vector<8x256xf32> to vector<8x192xf32>
    %103 = arith.negf %102 : vector<8x192xf32>
    %104 = math.exp %103 : vector<8x192xf32>
    %cst_59 = arith.constant 1.000000e+00 : f32
    %105 = vector.broadcast %cst_59 : f32 to vector<8x192xf32>
    %106 = arith.addf %105, %104 : vector<8x192xf32>
    %107 = arith.divf %105, %106 : vector<8x192xf32>
    %108 = vector.extract_strided_slice %101 {offsets = [0, 192], sizes = [8, 64], strides = [1, 1]} : vector<8x256xf32> to vector<8x64xf32>
    %109 = math.tanh %108 : vector<8x64xf32>
    %110 = vector.extract_strided_slice %107 {offsets = [0, 0], sizes = [8, 64], strides = [1, 1]} : vector<8x192xf32> to vector<8x64xf32>
    %111 = vector.extract_strided_slice %107 {offsets = [0, 64], sizes = [8, 64], strides = [1, 1]} : vector<8x192xf32> to vector<8x64xf32>
    %112 = vector.extract_strided_slice %107 {offsets = [0, 128], sizes = [8, 64], strides = [1, 1]} : vector<8x192xf32> to vector<8x64xf32>
    %113 = arith.mulf %111, %46 : vector<8x64xf32>
    %114 = arith.mulf %110, %109 : vector<8x64xf32>
    %115 = arith.addf %113, %114 : vector<8x64xf32>
    %116 = math.tanh %115 : vector<8x64xf32>
    %117 = arith.mulf %112, %116 : vector<8x64xf32>
    %118 = tpu.concatenate %46, %115 in 1 : vector<8x64xf32>, vector<8x64xf32> -> vector<8x128xf32>
    %c0_60 = arith.constant 0 : index
    %c0_61 = arith.constant 0 : index
    %119 = vector.load %arg5[%c0_60, %c0_61] : memref<128x32xf32, #tpu.memory_space<vmem>>, vector<128x32xf32>
    %cst_62 = arith.constant dense<0.000000e+00> : vector<8x32xf32>
    %120 = tpu.matmul %118, %119, %cst_62 {dimension_numbers = #tpu.dot_dimension_numbers<[1], [0], [0], [1], [0, 0, 1, 1], [], []>} : vector<8x128xf32>, vector<128x32xf32>, vector<8x32xf32> -> vector<8x32xf32>
    %121 = arith.addf %120, %2 : vector<8x32xf32>
    %cst_63 = arith.constant 0.000000e+00 : f32
    %122 = vector.broadcast %cst_63 : f32 to vector<8x32xf32>
    %123 = arith.maximumf %121, %122 : vector<8x32xf32>
    %c0_64 = arith.constant 0 : index
    %c0_65 = arith.constant 0 : index
    %124 = vector.load %arg7[%c0_64, %c0_65] : memref<32x128xf32, #tpu.memory_space<vmem>>, vector<32x128xf32>
    %cst_66 = arith.constant dense<0.000000e+00> : vector<8x128xf32>
    %125 = tpu.matmul %123, %124, %cst_66 {dimension_numbers = #tpu.dot_dimension_numbers<[1], [0], [0], [1], [0, 0, 1, 1], [], []>} : vector<8x32xf32>, vector<32x128xf32>, vector<8x128xf32> -> vector<8x128xf32>
    %126 = arith.addf %125, %5 : vector<8x128xf32>
    %cst_67 = arith.constant dense<0xFF800000> : vector<8xf32>
    %127 = vector.multi_reduction <maximumf>, %126, %cst_67 [1] : vector<8x128xf32> to vector<8xf32>
    %128 = vector.shape_cast %127 : vector<8xf32> to vector<8x1xf32>
    %129 = vector.broadcast %128 : vector<8x1xf32> to vector<8x128xf32>
    %130 = arith.subf %126, %129 : vector<8x128xf32>
    %131 = math.exp %130 : vector<8x128xf32>
    %cst_68 = arith.constant dense<0.000000e+00> : vector<8xf32>
    %132 = vector.multi_reduction <add>, %131, %cst_68 [1] : vector<8x128xf32> to vector<8xf32>
    %133 = vector.shape_cast %132 : vector<8xf32> to vector<8x1xf32>
    %134 = vector.broadcast %133 : vector<8x1xf32> to vector<8x128xf32>
    %135 = arith.divf %131, %134 : vector<8x128xf32>
    %136 = arith.mulf %135, %118 : vector<8x128xf32>
    %c0_69 = arith.constant 0 : index
    %c0_70 = arith.constant 0 : index
    %137 = vector.load %arg9[%c0_69, %c0_70] : memref<128x32xf32, #tpu.memory_space<vmem>>, vector<128x32xf32>
    %cst_71 = arith.constant dense<0.000000e+00> : vector<8x32xf32>
    %138 = tpu.matmul %136, %137, %cst_71 {dimension_numbers = #tpu.dot_dimension_numbers<[1], [0], [0], [1], [0, 0, 1, 1], [], []>} : vector<8x128xf32>, vector<128x32xf32>, vector<8x32xf32> -> vector<8x32xf32>
    %139 = arith.addf %138, %8 : vector<8x32xf32>
    %cst_72 = arith.constant 0.000000e+00 : f32
    %140 = vector.broadcast %cst_72 : f32 to vector<8x32xf32>
    %141 = arith.maximumf %139, %140 : vector<8x32xf32>
    %c0_73 = arith.constant 0 : index
    %c0_74 = arith.constant 0 : index
    %142 = vector.load %arg11[%c0_73, %c0_74] : memref<32x64xf32, #tpu.memory_space<vmem>>, vector<32x64xf32>
    %cst_75 = arith.constant dense<0.000000e+00> : vector<8x64xf32>
    %143 = tpu.matmul %141, %142, %cst_75 {dimension_numbers = #tpu.dot_dimension_numbers<[1], [0], [0], [1], [0, 0, 1, 1], [], []>} : vector<8x32xf32>, vector<32x64xf32>, vector<8x64xf32> -> vector<8x64xf32>
    %144 = arith.addf %143, %11 : vector<8x64xf32>
    %145 = math.tanh %144 : vector<8x64xf32>
    %c0_76 = arith.constant 0 : index
    %c0_77 = arith.constant 0 : index
    %146 = vector.load %arg13[%c0_76, %c0_77] : memref<128x64xf32, #tpu.memory_space<vmem>>, vector<128x64xf32>
    %cst_78 = arith.constant dense<0.000000e+00> : vector<8x64xf32>
    %147 = tpu.matmul %136, %146, %cst_78 {dimension_numbers = #tpu.dot_dimension_numbers<[1], [0], [0], [1], [0, 0, 1, 1], [], []>} : vector<8x128xf32>, vector<128x64xf32>, vector<8x64xf32> -> vector<8x64xf32>
    %c0_79 = arith.constant 0 : index
    %c0_80 = arith.constant 0 : index
    %148 = vector.load %arg14[%c0_79, %c0_80] : memref<64x64xf32, #tpu.memory_space<vmem>>, vector<64x64xf32>
    %cst_81 = arith.constant dense<0.000000e+00> : vector<8x64xf32>
    %149 = tpu.matmul %97, %148, %cst_81 {dimension_numbers = #tpu.dot_dimension_numbers<[1], [0], [0], [1], [0, 0, 1, 1], [], []>} : vector<8x64xf32>, vector<64x64xf32>, vector<8x64xf32> -> vector<8x64xf32>
    %150 = arith.addf %147, %149 : vector<8x64xf32>
    %151 = arith.addf %150, %14 : vector<8x64xf32>
    %cst_82 = arith.constant 0.000000e+00 : f32
    %152 = vector.broadcast %cst_82 : f32 to vector<8x64xf32>
    %153 = arith.maximumf %151, %152 : vector<8x64xf32>
    %c0_83 = arith.constant 0 : index
    %c0_84 = arith.constant 0 : index
    %154 = vector.load %arg16[%c0_83, %c0_84] : memref<64x128xf32, #tpu.memory_space<vmem>>, vector<64x128xf32>
    %cst_85 = arith.constant dense<0.000000e+00> : vector<8x128xf32>
    %155 = tpu.matmul %153, %154, %cst_85 {dimension_numbers = #tpu.dot_dimension_numbers<[1], [0], [0], [1], [0, 0, 1, 1], [], []>} : vector<8x64xf32>, vector<64x128xf32>, vector<8x128xf32> -> vector<8x128xf32>
    %156 = arith.addf %155, %17 : vector<8x128xf32>
    %157 = arith.negf %156 : vector<8x128xf32>
    %158 = math.exp %157 : vector<8x128xf32>
    %cst_86 = arith.constant 1.000000e+00 : f32
    %159 = vector.broadcast %cst_86 : f32 to vector<8x128xf32>
    %160 = arith.addf %159, %158 : vector<8x128xf32>
    %161 = arith.divf %159, %160 : vector<8x128xf32>
    %162 = vector.extract_strided_slice %161 {offsets = [0, 0], sizes = [8, 64], strides = [1, 1]} : vector<8x128xf32> to vector<8x64xf32>
    %163 = arith.mulf %162, %97 : vector<8x64xf32>
    %164 = vector.extract_strided_slice %161 {offsets = [0, 64], sizes = [8, 64], strides = [1, 1]} : vector<8x128xf32> to vector<8x64xf32>
    %165 = arith.mulf %164, %145 : vector<8x64xf32>
    %166 = arith.addf %163, %165 : vector<8x64xf32>
    %c16 = arith.constant 16 : index
    %c0_87 = arith.constant 0 : index
    %167 = vector.load %arg23[%c16, %c0_87] : memref<64x256xf32, #tpu.memory_space<vmem>>, vector<8x256xf32>
    %c0_88 = arith.constant 0 : index
    %c0_89 = arith.constant 0 : index
    %168 = vector.load %arg3[%c0_88, %c0_89] : memref<64x256xf32, #tpu.memory_space<vmem>>, vector<64x256xf32>
    %cst_90 = arith.constant dense<0.000000e+00> : vector<8x256xf32>
    %169 = tpu.matmul %117, %168, %cst_90 {dimension_numbers = #tpu.dot_dimension_numbers<[1], [0], [0], [1], [0, 0, 1, 1], [], []>} : vector<8x64xf32>, vector<64x256xf32>, vector<8x256xf32> -> vector<8x256xf32>
    %170 = arith.addf %167, %169 : vector<8x256xf32>
    %171 = vector.extract_strided_slice %170 {offsets = [0, 0], sizes = [8, 192], strides = [1, 1]} : vector<8x256xf32> to vector<8x192xf32>
    %172 = arith.negf %171 : vector<8x192xf32>
    %173 = math.exp %172 : vector<8x192xf32>
    %cst_91 = arith.constant 1.000000e+00 : f32
    %174 = vector.broadcast %cst_91 : f32 to vector<8x192xf32>
    %175 = arith.addf %174, %173 : vector<8x192xf32>
    %176 = arith.divf %174, %175 : vector<8x192xf32>
    %177 = vector.extract_strided_slice %170 {offsets = [0, 192], sizes = [8, 64], strides = [1, 1]} : vector<8x256xf32> to vector<8x64xf32>
    %178 = math.tanh %177 : vector<8x64xf32>
    %179 = vector.extract_strided_slice %176 {offsets = [0, 0], sizes = [8, 64], strides = [1, 1]} : vector<8x192xf32> to vector<8x64xf32>
    %180 = vector.extract_strided_slice %176 {offsets = [0, 64], sizes = [8, 64], strides = [1, 1]} : vector<8x192xf32> to vector<8x64xf32>
    %181 = vector.extract_strided_slice %176 {offsets = [0, 128], sizes = [8, 64], strides = [1, 1]} : vector<8x192xf32> to vector<8x64xf32>
    %182 = arith.mulf %180, %115 : vector<8x64xf32>
    %183 = arith.mulf %179, %178 : vector<8x64xf32>
    %184 = arith.addf %182, %183 : vector<8x64xf32>
    %185 = math.tanh %184 : vector<8x64xf32>
    %186 = arith.mulf %181, %185 : vector<8x64xf32>
    %187 = tpu.concatenate %115, %184 in 1 : vector<8x64xf32>, vector<8x64xf32> -> vector<8x128xf32>
    %c0_92 = arith.constant 0 : index
    %c0_93 = arith.constant 0 : index
    %188 = vector.load %arg5[%c0_92, %c0_93] : memref<128x32xf32, #tpu.memory_space<vmem>>, vector<128x32xf32>
    %cst_94 = arith.constant dense<0.000000e+00> : vector<8x32xf32>
    %189 = tpu.matmul %187, %188, %cst_94 {dimension_numbers = #tpu.dot_dimension_numbers<[1], [0], [0], [1], [0, 0, 1, 1], [], []>} : vector<8x128xf32>, vector<128x32xf32>, vector<8x32xf32> -> vector<8x32xf32>
    %190 = arith.addf %189, %2 : vector<8x32xf32>
    %cst_95 = arith.constant 0.000000e+00 : f32
    %191 = vector.broadcast %cst_95 : f32 to vector<8x32xf32>
    %192 = arith.maximumf %190, %191 : vector<8x32xf32>
    %c0_96 = arith.constant 0 : index
    %c0_97 = arith.constant 0 : index
    %193 = vector.load %arg7[%c0_96, %c0_97] : memref<32x128xf32, #tpu.memory_space<vmem>>, vector<32x128xf32>
    %cst_98 = arith.constant dense<0.000000e+00> : vector<8x128xf32>
    %194 = tpu.matmul %192, %193, %cst_98 {dimension_numbers = #tpu.dot_dimension_numbers<[1], [0], [0], [1], [0, 0, 1, 1], [], []>} : vector<8x32xf32>, vector<32x128xf32>, vector<8x128xf32> -> vector<8x128xf32>
    %195 = arith.addf %194, %5 : vector<8x128xf32>
    %cst_99 = arith.constant dense<0xFF800000> : vector<8xf32>
    %196 = vector.multi_reduction <maximumf>, %195, %cst_99 [1] : vector<8x128xf32> to vector<8xf32>
    %197 = vector.shape_cast %196 : vector<8xf32> to vector<8x1xf32>
    %198 = vector.broadcast %197 : vector<8x1xf32> to vector<8x128xf32>
    %199 = arith.subf %195, %198 : vector<8x128xf32>
    %200 = math.exp %199 : vector<8x128xf32>
    %cst_100 = arith.constant dense<0.000000e+00> : vector<8xf32>
    %201 = vector.multi_reduction <add>, %200, %cst_100 [1] : vector<8x128xf32> to vector<8xf32>
    %202 = vector.shape_cast %201 : vector<8xf32> to vector<8x1xf32>
    %203 = vector.broadcast %202 : vector<8x1xf32> to vector<8x128xf32>
    %204 = arith.divf %200, %203 : vector<8x128xf32>
    %205 = arith.mulf %204, %187 : vector<8x128xf32>
    %c0_101 = arith.constant 0 : index
    %c0_102 = arith.constant 0 : index
    %206 = vector.load %arg9[%c0_101, %c0_102] : memref<128x32xf32, #tpu.memory_space<vmem>>, vector<128x32xf32>
    %cst_103 = arith.constant dense<0.000000e+00> : vector<8x32xf32>
    %207 = tpu.matmul %205, %206, %cst_103 {dimension_numbers = #tpu.dot_dimension_numbers<[1], [0], [0], [1], [0, 0, 1, 1], [], []>} : vector<8x128xf32>, vector<128x32xf32>, vector<8x32xf32> -> vector<8x32xf32>
    %208 = arith.addf %207, %8 : vector<8x32xf32>
    %cst_104 = arith.constant 0.000000e+00 : f32
    %209 = vector.broadcast %cst_104 : f32 to vector<8x32xf32>
    %210 = arith.maximumf %208, %209 : vector<8x32xf32>
    %c0_105 = arith.constant 0 : index
    %c0_106 = arith.constant 0 : index
    %211 = vector.load %arg11[%c0_105, %c0_106] : memref<32x64xf32, #tpu.memory_space<vmem>>, vector<32x64xf32>
    %cst_107 = arith.constant dense<0.000000e+00> : vector<8x64xf32>
    %212 = tpu.matmul %210, %211, %cst_107 {dimension_numbers = #tpu.dot_dimension_numbers<[1], [0], [0], [1], [0, 0, 1, 1], [], []>} : vector<8x32xf32>, vector<32x64xf32>, vector<8x64xf32> -> vector<8x64xf32>
    %213 = arith.addf %212, %11 : vector<8x64xf32>
    %214 = math.tanh %213 : vector<8x64xf32>
    %c0_108 = arith.constant 0 : index
    %c0_109 = arith.constant 0 : index
    %215 = vector.load %arg13[%c0_108, %c0_109] : memref<128x64xf32, #tpu.memory_space<vmem>>, vector<128x64xf32>
    %cst_110 = arith.constant dense<0.000000e+00> : vector<8x64xf32>
    %216 = tpu.matmul %205, %215, %cst_110 {dimension_numbers = #tpu.dot_dimension_numbers<[1], [0], [0], [1], [0, 0, 1, 1], [], []>} : vector<8x128xf32>, vector<128x64xf32>, vector<8x64xf32> -> vector<8x64xf32>
    %c0_111 = arith.constant 0 : index
    %c0_112 = arith.constant 0 : index
    %217 = vector.load %arg14[%c0_111, %c0_112] : memref<64x64xf32, #tpu.memory_space<vmem>>, vector<64x64xf32>
    %cst_113 = arith.constant dense<0.000000e+00> : vector<8x64xf32>
    %218 = tpu.matmul %166, %217, %cst_113 {dimension_numbers = #tpu.dot_dimension_numbers<[1], [0], [0], [1], [0, 0, 1, 1], [], []>} : vector<8x64xf32>, vector<64x64xf32>, vector<8x64xf32> -> vector<8x64xf32>
    %219 = arith.addf %216, %218 : vector<8x64xf32>
    %220 = arith.addf %219, %14 : vector<8x64xf32>
    %cst_114 = arith.constant 0.000000e+00 : f32
    %221 = vector.broadcast %cst_114 : f32 to vector<8x64xf32>
    %222 = arith.maximumf %220, %221 : vector<8x64xf32>
    %c0_115 = arith.constant 0 : index
    %c0_116 = arith.constant 0 : index
    %223 = vector.load %arg16[%c0_115, %c0_116] : memref<64x128xf32, #tpu.memory_space<vmem>>, vector<64x128xf32>
    %cst_117 = arith.constant dense<0.000000e+00> : vector<8x128xf32>
    %224 = tpu.matmul %222, %223, %cst_117 {dimension_numbers = #tpu.dot_dimension_numbers<[1], [0], [0], [1], [0, 0, 1, 1], [], []>} : vector<8x64xf32>, vector<64x128xf32>, vector<8x128xf32> -> vector<8x128xf32>
    %225 = arith.addf %224, %17 : vector<8x128xf32>
    %226 = arith.negf %225 : vector<8x128xf32>
    %227 = math.exp %226 : vector<8x128xf32>
    %cst_118 = arith.constant 1.000000e+00 : f32
    %228 = vector.broadcast %cst_118 : f32 to vector<8x128xf32>
    %229 = arith.addf %228, %227 : vector<8x128xf32>
    %230 = arith.divf %228, %229 : vector<8x128xf32>
    %231 = vector.extract_strided_slice %230 {offsets = [0, 0], sizes = [8, 64], strides = [1, 1]} : vector<8x128xf32> to vector<8x64xf32>
    %232 = arith.mulf %231, %166 : vector<8x64xf32>
    %233 = vector.extract_strided_slice %230 {offsets = [0, 64], sizes = [8, 64], strides = [1, 1]} : vector<8x128xf32> to vector<8x64xf32>
    %234 = arith.mulf %233, %214 : vector<8x64xf32>
    %235 = arith.addf %232, %234 : vector<8x64xf32>
    %c24 = arith.constant 24 : index
    %c0_119 = arith.constant 0 : index
    %236 = vector.load %arg23[%c24, %c0_119] : memref<64x256xf32, #tpu.memory_space<vmem>>, vector<8x256xf32>
    %c0_120 = arith.constant 0 : index
    %c0_121 = arith.constant 0 : index
    %237 = vector.load %arg3[%c0_120, %c0_121] : memref<64x256xf32, #tpu.memory_space<vmem>>, vector<64x256xf32>
    %cst_122 = arith.constant dense<0.000000e+00> : vector<8x256xf32>
    %238 = tpu.matmul %186, %237, %cst_122 {dimension_numbers = #tpu.dot_dimension_numbers<[1], [0], [0], [1], [0, 0, 1, 1], [], []>} : vector<8x64xf32>, vector<64x256xf32>, vector<8x256xf32> -> vector<8x256xf32>
    %239 = arith.addf %236, %238 : vector<8x256xf32>
    %240 = vector.extract_strided_slice %239 {offsets = [0, 0], sizes = [8, 192], strides = [1, 1]} : vector<8x256xf32> to vector<8x192xf32>
    %241 = arith.negf %240 : vector<8x192xf32>
    %242 = math.exp %241 : vector<8x192xf32>
    %cst_123 = arith.constant 1.000000e+00 : f32
    %243 = vector.broadcast %cst_123 : f32 to vector<8x192xf32>
    %244 = arith.addf %243, %242 : vector<8x192xf32>
    %245 = arith.divf %243, %244 : vector<8x192xf32>
    %246 = vector.extract_strided_slice %239 {offsets = [0, 192], sizes = [8, 64], strides = [1, 1]} : vector<8x256xf32> to vector<8x64xf32>
    %247 = math.tanh %246 : vector<8x64xf32>
    %248 = vector.extract_strided_slice %245 {offsets = [0, 0], sizes = [8, 64], strides = [1, 1]} : vector<8x192xf32> to vector<8x64xf32>
    %249 = vector.extract_strided_slice %245 {offsets = [0, 64], sizes = [8, 64], strides = [1, 1]} : vector<8x192xf32> to vector<8x64xf32>
    %250 = vector.extract_strided_slice %245 {offsets = [0, 128], sizes = [8, 64], strides = [1, 1]} : vector<8x192xf32> to vector<8x64xf32>
    %251 = arith.mulf %249, %184 : vector<8x64xf32>
    %252 = arith.mulf %248, %247 : vector<8x64xf32>
    %253 = arith.addf %251, %252 : vector<8x64xf32>
    %254 = math.tanh %253 : vector<8x64xf32>
    %255 = arith.mulf %250, %254 : vector<8x64xf32>
    %256 = tpu.concatenate %184, %253 in 1 : vector<8x64xf32>, vector<8x64xf32> -> vector<8x128xf32>
    %c0_124 = arith.constant 0 : index
    %c0_125 = arith.constant 0 : index
    %257 = vector.load %arg5[%c0_124, %c0_125] : memref<128x32xf32, #tpu.memory_space<vmem>>, vector<128x32xf32>
    %cst_126 = arith.constant dense<0.000000e+00> : vector<8x32xf32>
    %258 = tpu.matmul %256, %257, %cst_126 {dimension_numbers = #tpu.dot_dimension_numbers<[1], [0], [0], [1], [0, 0, 1, 1], [], []>} : vector<8x128xf32>, vector<128x32xf32>, vector<8x32xf32> -> vector<8x32xf32>
    %259 = arith.addf %258, %2 : vector<8x32xf32>
    %cst_127 = arith.constant 0.000000e+00 : f32
    %260 = vector.broadcast %cst_127 : f32 to vector<8x32xf32>
    %261 = arith.maximumf %259, %260 : vector<8x32xf32>
    %c0_128 = arith.constant 0 : index
    %c0_129 = arith.constant 0 : index
    %262 = vector.load %arg7[%c0_128, %c0_129] : memref<32x128xf32, #tpu.memory_space<vmem>>, vector<32x128xf32>
    %cst_130 = arith.constant dense<0.000000e+00> : vector<8x128xf32>
    %263 = tpu.matmul %261, %262, %cst_130 {dimension_numbers = #tpu.dot_dimension_numbers<[1], [0], [0], [1], [0, 0, 1, 1], [], []>} : vector<8x32xf32>, vector<32x128xf32>, vector<8x128xf32> -> vector<8x128xf32>
    %264 = arith.addf %263, %5 : vector<8x128xf32>
    %cst_131 = arith.constant dense<0xFF800000> : vector<8xf32>
    %265 = vector.multi_reduction <maximumf>, %264, %cst_131 [1] : vector<8x128xf32> to vector<8xf32>
    %266 = vector.shape_cast %265 : vector<8xf32> to vector<8x1xf32>
    %267 = vector.broadcast %266 : vector<8x1xf32> to vector<8x128xf32>
    %268 = arith.subf %264, %267 : vector<8x128xf32>
    %269 = math.exp %268 : vector<8x128xf32>
    %cst_132 = arith.constant dense<0.000000e+00> : vector<8xf32>
    %270 = vector.multi_reduction <add>, %269, %cst_132 [1] : vector<8x128xf32> to vector<8xf32>
    %271 = vector.shape_cast %270 : vector<8xf32> to vector<8x1xf32>
    %272 = vector.broadcast %271 : vector<8x1xf32> to vector<8x128xf32>
    %273 = arith.divf %269, %272 : vector<8x128xf32>
    %274 = arith.mulf %273, %256 : vector<8x128xf32>
    %c0_133 = arith.constant 0 : index
    %c0_134 = arith.constant 0 : index
    %275 = vector.load %arg9[%c0_133, %c0_134] : memref<128x32xf32, #tpu.memory_space<vmem>>, vector<128x32xf32>
    %cst_135 = arith.constant dense<0.000000e+00> : vector<8x32xf32>
    %276 = tpu.matmul %274, %275, %cst_135 {dimension_numbers = #tpu.dot_dimension_numbers<[1], [0], [0], [1], [0, 0, 1, 1], [], []>} : vector<8x128xf32>, vector<128x32xf32>, vector<8x32xf32> -> vector<8x32xf32>
    %277 = arith.addf %276, %8 : vector<8x32xf32>
    %cst_136 = arith.constant 0.000000e+00 : f32
    %278 = vector.broadcast %cst_136 : f32 to vector<8x32xf32>
    %279 = arith.maximumf %277, %278 : vector<8x32xf32>
    %c0_137 = arith.constant 0 : index
    %c0_138 = arith.constant 0 : index
    %280 = vector.load %arg11[%c0_137, %c0_138] : memref<32x64xf32, #tpu.memory_space<vmem>>, vector<32x64xf32>
    %cst_139 = arith.constant dense<0.000000e+00> : vector<8x64xf32>
    %281 = tpu.matmul %279, %280, %cst_139 {dimension_numbers = #tpu.dot_dimension_numbers<[1], [0], [0], [1], [0, 0, 1, 1], [], []>} : vector<8x32xf32>, vector<32x64xf32>, vector<8x64xf32> -> vector<8x64xf32>
    %282 = arith.addf %281, %11 : vector<8x64xf32>
    %283 = math.tanh %282 : vector<8x64xf32>
    %c0_140 = arith.constant 0 : index
    %c0_141 = arith.constant 0 : index
    %284 = vector.load %arg13[%c0_140, %c0_141] : memref<128x64xf32, #tpu.memory_space<vmem>>, vector<128x64xf32>
    %cst_142 = arith.constant dense<0.000000e+00> : vector<8x64xf32>
    %285 = tpu.matmul %274, %284, %cst_142 {dimension_numbers = #tpu.dot_dimension_numbers<[1], [0], [0], [1], [0, 0, 1, 1], [], []>} : vector<8x128xf32>, vector<128x64xf32>, vector<8x64xf32> -> vector<8x64xf32>
    %c0_143 = arith.constant 0 : index
    %c0_144 = arith.constant 0 : index
    %286 = vector.load %arg14[%c0_143, %c0_144] : memref<64x64xf32, #tpu.memory_space<vmem>>, vector<64x64xf32>
    %cst_145 = arith.constant dense<0.000000e+00> : vector<8x64xf32>
    %287 = tpu.matmul %235, %286, %cst_145 {dimension_numbers = #tpu.dot_dimension_numbers<[1], [0], [0], [1], [0, 0, 1, 1], [], []>} : vector<8x64xf32>, vector<64x64xf32>, vector<8x64xf32> -> vector<8x64xf32>
    %288 = arith.addf %285, %287 : vector<8x64xf32>
    %289 = arith.addf %288, %14 : vector<8x64xf32>
    %cst_146 = arith.constant 0.000000e+00 : f32
    %290 = vector.broadcast %cst_146 : f32 to vector<8x64xf32>
    %291 = arith.maximumf %289, %290 : vector<8x64xf32>
    %c0_147 = arith.constant 0 : index
    %c0_148 = arith.constant 0 : index
    %292 = vector.load %arg16[%c0_147, %c0_148] : memref<64x128xf32, #tpu.memory_space<vmem>>, vector<64x128xf32>
    %cst_149 = arith.constant dense<0.000000e+00> : vector<8x128xf32>
    %293 = tpu.matmul %291, %292, %cst_149 {dimension_numbers = #tpu.dot_dimension_numbers<[1], [0], [0], [1], [0, 0, 1, 1], [], []>} : vector<8x64xf32>, vector<64x128xf32>, vector<8x128xf32> -> vector<8x128xf32>
    %294 = arith.addf %293, %17 : vector<8x128xf32>
    %295 = arith.negf %294 : vector<8x128xf32>
    %296 = math.exp %295 : vector<8x128xf32>
    %cst_150 = arith.constant 1.000000e+00 : f32
    %297 = vector.broadcast %cst_150 : f32 to vector<8x128xf32>
    %298 = arith.addf %297, %296 : vector<8x128xf32>
    %299 = arith.divf %297, %298 : vector<8x128xf32>
    %300 = vector.extract_strided_slice %299 {offsets = [0, 0], sizes = [8, 64], strides = [1, 1]} : vector<8x128xf32> to vector<8x64xf32>
    %301 = arith.mulf %300, %235 : vector<8x64xf32>
    %302 = vector.extract_strided_slice %299 {offsets = [0, 64], sizes = [8, 64], strides = [1, 1]} : vector<8x128xf32> to vector<8x64xf32>
    %303 = arith.mulf %302, %283 : vector<8x64xf32>
    %304 = arith.addf %301, %303 : vector<8x64xf32>
    %c32 = arith.constant 32 : index
    %c0_151 = arith.constant 0 : index
    %305 = vector.load %arg23[%c32, %c0_151] : memref<64x256xf32, #tpu.memory_space<vmem>>, vector<8x256xf32>
    %c0_152 = arith.constant 0 : index
    %c0_153 = arith.constant 0 : index
    %306 = vector.load %arg3[%c0_152, %c0_153] : memref<64x256xf32, #tpu.memory_space<vmem>>, vector<64x256xf32>
    %cst_154 = arith.constant dense<0.000000e+00> : vector<8x256xf32>
    %307 = tpu.matmul %255, %306, %cst_154 {dimension_numbers = #tpu.dot_dimension_numbers<[1], [0], [0], [1], [0, 0, 1, 1], [], []>} : vector<8x64xf32>, vector<64x256xf32>, vector<8x256xf32> -> vector<8x256xf32>
    %308 = arith.addf %305, %307 : vector<8x256xf32>
    %309 = vector.extract_strided_slice %308 {offsets = [0, 0], sizes = [8, 192], strides = [1, 1]} : vector<8x256xf32> to vector<8x192xf32>
    %310 = arith.negf %309 : vector<8x192xf32>
    %311 = math.exp %310 : vector<8x192xf32>
    %cst_155 = arith.constant 1.000000e+00 : f32
    %312 = vector.broadcast %cst_155 : f32 to vector<8x192xf32>
    %313 = arith.addf %312, %311 : vector<8x192xf32>
    %314 = arith.divf %312, %313 : vector<8x192xf32>
    %315 = vector.extract_strided_slice %308 {offsets = [0, 192], sizes = [8, 64], strides = [1, 1]} : vector<8x256xf32> to vector<8x64xf32>
    %316 = math.tanh %315 : vector<8x64xf32>
    %317 = vector.extract_strided_slice %314 {offsets = [0, 0], sizes = [8, 64], strides = [1, 1]} : vector<8x192xf32> to vector<8x64xf32>
    %318 = vector.extract_strided_slice %314 {offsets = [0, 64], sizes = [8, 64], strides = [1, 1]} : vector<8x192xf32> to vector<8x64xf32>
    %319 = vector.extract_strided_slice %314 {offsets = [0, 128], sizes = [8, 64], strides = [1, 1]} : vector<8x192xf32> to vector<8x64xf32>
    %320 = arith.mulf %318, %253 : vector<8x64xf32>
    %321 = arith.mulf %317, %316 : vector<8x64xf32>
    %322 = arith.addf %320, %321 : vector<8x64xf32>
    %323 = math.tanh %322 : vector<8x64xf32>
    %324 = arith.mulf %319, %323 : vector<8x64xf32>
    %325 = tpu.concatenate %253, %322 in 1 : vector<8x64xf32>, vector<8x64xf32> -> vector<8x128xf32>
    %c0_156 = arith.constant 0 : index
    %c0_157 = arith.constant 0 : index
    %326 = vector.load %arg5[%c0_156, %c0_157] : memref<128x32xf32, #tpu.memory_space<vmem>>, vector<128x32xf32>
    %cst_158 = arith.constant dense<0.000000e+00> : vector<8x32xf32>
    %327 = tpu.matmul %325, %326, %cst_158 {dimension_numbers = #tpu.dot_dimension_numbers<[1], [0], [0], [1], [0, 0, 1, 1], [], []>} : vector<8x128xf32>, vector<128x32xf32>, vector<8x32xf32> -> vector<8x32xf32>
    %328 = arith.addf %327, %2 : vector<8x32xf32>
    %cst_159 = arith.constant 0.000000e+00 : f32
    %329 = vector.broadcast %cst_159 : f32 to vector<8x32xf32>
    %330 = arith.maximumf %328, %329 : vector<8x32xf32>
    %c0_160 = arith.constant 0 : index
    %c0_161 = arith.constant 0 : index
    %331 = vector.load %arg7[%c0_160, %c0_161] : memref<32x128xf32, #tpu.memory_space<vmem>>, vector<32x128xf32>
    %cst_162 = arith.constant dense<0.000000e+00> : vector<8x128xf32>
    %332 = tpu.matmul %330, %331, %cst_162 {dimension_numbers = #tpu.dot_dimension_numbers<[1], [0], [0], [1], [0, 0, 1, 1], [], []>} : vector<8x32xf32>, vector<32x128xf32>, vector<8x128xf32> -> vector<8x128xf32>
    %333 = arith.addf %332, %5 : vector<8x128xf32>
    %cst_163 = arith.constant dense<0xFF800000> : vector<8xf32>
    %334 = vector.multi_reduction <maximumf>, %333, %cst_163 [1] : vector<8x128xf32> to vector<8xf32>
    %335 = vector.shape_cast %334 : vector<8xf32> to vector<8x1xf32>
    %336 = vector.broadcast %335 : vector<8x1xf32> to vector<8x128xf32>
    %337 = arith.subf %333, %336 : vector<8x128xf32>
    %338 = math.exp %337 : vector<8x128xf32>
    %cst_164 = arith.constant dense<0.000000e+00> : vector<8xf32>
    %339 = vector.multi_reduction <add>, %338, %cst_164 [1] : vector<8x128xf32> to vector<8xf32>
    %340 = vector.shape_cast %339 : vector<8xf32> to vector<8x1xf32>
    %341 = vector.broadcast %340 : vector<8x1xf32> to vector<8x128xf32>
    %342 = arith.divf %338, %341 : vector<8x128xf32>
    %343 = arith.mulf %342, %325 : vector<8x128xf32>
    %c0_165 = arith.constant 0 : index
    %c0_166 = arith.constant 0 : index
    %344 = vector.load %arg9[%c0_165, %c0_166] : memref<128x32xf32, #tpu.memory_space<vmem>>, vector<128x32xf32>
    %cst_167 = arith.constant dense<0.000000e+00> : vector<8x32xf32>
    %345 = tpu.matmul %343, %344, %cst_167 {dimension_numbers = #tpu.dot_dimension_numbers<[1], [0], [0], [1], [0, 0, 1, 1], [], []>} : vector<8x128xf32>, vector<128x32xf32>, vector<8x32xf32> -> vector<8x32xf32>
    %346 = arith.addf %345, %8 : vector<8x32xf32>
    %cst_168 = arith.constant 0.000000e+00 : f32
    %347 = vector.broadcast %cst_168 : f32 to vector<8x32xf32>
    %348 = arith.maximumf %346, %347 : vector<8x32xf32>
    %c0_169 = arith.constant 0 : index
    %c0_170 = arith.constant 0 : index
    %349 = vector.load %arg11[%c0_169, %c0_170] : memref<32x64xf32, #tpu.memory_space<vmem>>, vector<32x64xf32>
    %cst_171 = arith.constant dense<0.000000e+00> : vector<8x64xf32>
    %350 = tpu.matmul %348, %349, %cst_171 {dimension_numbers = #tpu.dot_dimension_numbers<[1], [0], [0], [1], [0, 0, 1, 1], [], []>} : vector<8x32xf32>, vector<32x64xf32>, vector<8x64xf32> -> vector<8x64xf32>
    %351 = arith.addf %350, %11 : vector<8x64xf32>
    %352 = math.tanh %351 : vector<8x64xf32>
    %c0_172 = arith.constant 0 : index
    %c0_173 = arith.constant 0 : index
    %353 = vector.load %arg13[%c0_172, %c0_173] : memref<128x64xf32, #tpu.memory_space<vmem>>, vector<128x64xf32>
    %cst_174 = arith.constant dense<0.000000e+00> : vector<8x64xf32>
    %354 = tpu.matmul %343, %353, %cst_174 {dimension_numbers = #tpu.dot_dimension_numbers<[1], [0], [0], [1], [0, 0, 1, 1], [], []>} : vector<8x128xf32>, vector<128x64xf32>, vector<8x64xf32> -> vector<8x64xf32>
    %c0_175 = arith.constant 0 : index
    %c0_176 = arith.constant 0 : index
    %355 = vector.load %arg14[%c0_175, %c0_176] : memref<64x64xf32, #tpu.memory_space<vmem>>, vector<64x64xf32>
    %cst_177 = arith.constant dense<0.000000e+00> : vector<8x64xf32>
    %356 = tpu.matmul %304, %355, %cst_177 {dimension_numbers = #tpu.dot_dimension_numbers<[1], [0], [0], [1], [0, 0, 1, 1], [], []>} : vector<8x64xf32>, vector<64x64xf32>, vector<8x64xf32> -> vector<8x64xf32>
    %357 = arith.addf %354, %356 : vector<8x64xf32>
    %358 = arith.addf %357, %14 : vector<8x64xf32>
    %cst_178 = arith.constant 0.000000e+00 : f32
    %359 = vector.broadcast %cst_178 : f32 to vector<8x64xf32>
    %360 = arith.maximumf %358, %359 : vector<8x64xf32>
    %c0_179 = arith.constant 0 : index
    %c0_180 = arith.constant 0 : index
    %361 = vector.load %arg16[%c0_179, %c0_180] : memref<64x128xf32, #tpu.memory_space<vmem>>, vector<64x128xf32>
    %cst_181 = arith.constant dense<0.000000e+00> : vector<8x128xf32>
    %362 = tpu.matmul %360, %361, %cst_181 {dimension_numbers = #tpu.dot_dimension_numbers<[1], [0], [0], [1], [0, 0, 1, 1], [], []>} : vector<8x64xf32>, vector<64x128xf32>, vector<8x128xf32> -> vector<8x128xf32>
    %363 = arith.addf %362, %17 : vector<8x128xf32>
    %364 = arith.negf %363 : vector<8x128xf32>
    %365 = math.exp %364 : vector<8x128xf32>
    %cst_182 = arith.constant 1.000000e+00 : f32
    %366 = vector.broadcast %cst_182 : f32 to vector<8x128xf32>
    %367 = arith.addf %366, %365 : vector<8x128xf32>
    %368 = arith.divf %366, %367 : vector<8x128xf32>
    %369 = vector.extract_strided_slice %368 {offsets = [0, 0], sizes = [8, 64], strides = [1, 1]} : vector<8x128xf32> to vector<8x64xf32>
    %370 = arith.mulf %369, %304 : vector<8x64xf32>
    %371 = vector.extract_strided_slice %368 {offsets = [0, 64], sizes = [8, 64], strides = [1, 1]} : vector<8x128xf32> to vector<8x64xf32>
    %372 = arith.mulf %371, %352 : vector<8x64xf32>
    %373 = arith.addf %370, %372 : vector<8x64xf32>
    %c40 = arith.constant 40 : index
    %c0_183 = arith.constant 0 : index
    %374 = vector.load %arg23[%c40, %c0_183] : memref<64x256xf32, #tpu.memory_space<vmem>>, vector<8x256xf32>
    %c0_184 = arith.constant 0 : index
    %c0_185 = arith.constant 0 : index
    %375 = vector.load %arg3[%c0_184, %c0_185] : memref<64x256xf32, #tpu.memory_space<vmem>>, vector<64x256xf32>
    %cst_186 = arith.constant dense<0.000000e+00> : vector<8x256xf32>
    %376 = tpu.matmul %324, %375, %cst_186 {dimension_numbers = #tpu.dot_dimension_numbers<[1], [0], [0], [1], [0, 0, 1, 1], [], []>} : vector<8x64xf32>, vector<64x256xf32>, vector<8x256xf32> -> vector<8x256xf32>
    %377 = arith.addf %374, %376 : vector<8x256xf32>
    %378 = vector.extract_strided_slice %377 {offsets = [0, 0], sizes = [8, 192], strides = [1, 1]} : vector<8x256xf32> to vector<8x192xf32>
    %379 = arith.negf %378 : vector<8x192xf32>
    %380 = math.exp %379 : vector<8x192xf32>
    %cst_187 = arith.constant 1.000000e+00 : f32
    %381 = vector.broadcast %cst_187 : f32 to vector<8x192xf32>
    %382 = arith.addf %381, %380 : vector<8x192xf32>
    %383 = arith.divf %381, %382 : vector<8x192xf32>
    %384 = vector.extract_strided_slice %377 {offsets = [0, 192], sizes = [8, 64], strides = [1, 1]} : vector<8x256xf32> to vector<8x64xf32>
    %385 = math.tanh %384 : vector<8x64xf32>
    %386 = vector.extract_strided_slice %383 {offsets = [0, 0], sizes = [8, 64], strides = [1, 1]} : vector<8x192xf32> to vector<8x64xf32>
    %387 = vector.extract_strided_slice %383 {offsets = [0, 64], sizes = [8, 64], strides = [1, 1]} : vector<8x192xf32> to vector<8x64xf32>
    %388 = vector.extract_strided_slice %383 {offsets = [0, 128], sizes = [8, 64], strides = [1, 1]} : vector<8x192xf32> to vector<8x64xf32>
    %389 = arith.mulf %387, %322 : vector<8x64xf32>
    %390 = arith.mulf %386, %385 : vector<8x64xf32>
    %391 = arith.addf %389, %390 : vector<8x64xf32>
    %392 = math.tanh %391 : vector<8x64xf32>
    %393 = arith.mulf %388, %392 : vector<8x64xf32>
    %394 = tpu.concatenate %322, %391 in 1 : vector<8x64xf32>, vector<8x64xf32> -> vector<8x128xf32>
    %c0_188 = arith.constant 0 : index
    %c0_189 = arith.constant 0 : index
    %395 = vector.load %arg5[%c0_188, %c0_189] : memref<128x32xf32, #tpu.memory_space<vmem>>, vector<128x32xf32>
    %cst_190 = arith.constant dense<0.000000e+00> : vector<8x32xf32>
    %396 = tpu.matmul %394, %395, %cst_190 {dimension_numbers = #tpu.dot_dimension_numbers<[1], [0], [0], [1], [0, 0, 1, 1], [], []>} : vector<8x128xf32>, vector<128x32xf32>, vector<8x32xf32> -> vector<8x32xf32>
    %397 = arith.addf %396, %2 : vector<8x32xf32>
    %cst_191 = arith.constant 0.000000e+00 : f32
    %398 = vector.broadcast %cst_191 : f32 to vector<8x32xf32>
    %399 = arith.maximumf %397, %398 : vector<8x32xf32>
    %c0_192 = arith.constant 0 : index
    %c0_193 = arith.constant 0 : index
    %400 = vector.load %arg7[%c0_192, %c0_193] : memref<32x128xf32, #tpu.memory_space<vmem>>, vector<32x128xf32>
    %cst_194 = arith.constant dense<0.000000e+00> : vector<8x128xf32>
    %401 = tpu.matmul %399, %400, %cst_194 {dimension_numbers = #tpu.dot_dimension_numbers<[1], [0], [0], [1], [0, 0, 1, 1], [], []>} : vector<8x32xf32>, vector<32x128xf32>, vector<8x128xf32> -> vector<8x128xf32>
    %402 = arith.addf %401, %5 : vector<8x128xf32>
    %cst_195 = arith.constant dense<0xFF800000> : vector<8xf32>
    %403 = vector.multi_reduction <maximumf>, %402, %cst_195 [1] : vector<8x128xf32> to vector<8xf32>
    %404 = vector.shape_cast %403 : vector<8xf32> to vector<8x1xf32>
    %405 = vector.broadcast %404 : vector<8x1xf32> to vector<8x128xf32>
    %406 = arith.subf %402, %405 : vector<8x128xf32>
    %407 = math.exp %406 : vector<8x128xf32>
    %cst_196 = arith.constant dense<0.000000e+00> : vector<8xf32>
    %408 = vector.multi_reduction <add>, %407, %cst_196 [1] : vector<8x128xf32> to vector<8xf32>
    %409 = vector.shape_cast %408 : vector<8xf32> to vector<8x1xf32>
    %410 = vector.broadcast %409 : vector<8x1xf32> to vector<8x128xf32>
    %411 = arith.divf %407, %410 : vector<8x128xf32>
    %412 = arith.mulf %411, %394 : vector<8x128xf32>
    %c0_197 = arith.constant 0 : index
    %c0_198 = arith.constant 0 : index
    %413 = vector.load %arg9[%c0_197, %c0_198] : memref<128x32xf32, #tpu.memory_space<vmem>>, vector<128x32xf32>
    %cst_199 = arith.constant dense<0.000000e+00> : vector<8x32xf32>
    %414 = tpu.matmul %412, %413, %cst_199 {dimension_numbers = #tpu.dot_dimension_numbers<[1], [0], [0], [1], [0, 0, 1, 1], [], []>} : vector<8x128xf32>, vector<128x32xf32>, vector<8x32xf32> -> vector<8x32xf32>
    %415 = arith.addf %414, %8 : vector<8x32xf32>
    %cst_200 = arith.constant 0.000000e+00 : f32
    %416 = vector.broadcast %cst_200 : f32 to vector<8x32xf32>
    %417 = arith.maximumf %415, %416 : vector<8x32xf32>
    %c0_201 = arith.constant 0 : index
    %c0_202 = arith.constant 0 : index
    %418 = vector.load %arg11[%c0_201, %c0_202] : memref<32x64xf32, #tpu.memory_space<vmem>>, vector<32x64xf32>
    %cst_203 = arith.constant dense<0.000000e+00> : vector<8x64xf32>
    %419 = tpu.matmul %417, %418, %cst_203 {dimension_numbers = #tpu.dot_dimension_numbers<[1], [0], [0], [1], [0, 0, 1, 1], [], []>} : vector<8x32xf32>, vector<32x64xf32>, vector<8x64xf32> -> vector<8x64xf32>
    %420 = arith.addf %419, %11 : vector<8x64xf32>
    %421 = math.tanh %420 : vector<8x64xf32>
    %c0_204 = arith.constant 0 : index
    %c0_205 = arith.constant 0 : index
    %422 = vector.load %arg13[%c0_204, %c0_205] : memref<128x64xf32, #tpu.memory_space<vmem>>, vector<128x64xf32>
    %cst_206 = arith.constant dense<0.000000e+00> : vector<8x64xf32>
    %423 = tpu.matmul %412, %422, %cst_206 {dimension_numbers = #tpu.dot_dimension_numbers<[1], [0], [0], [1], [0, 0, 1, 1], [], []>} : vector<8x128xf32>, vector<128x64xf32>, vector<8x64xf32> -> vector<8x64xf32>
    %c0_207 = arith.constant 0 : index
    %c0_208 = arith.constant 0 : index
    %424 = vector.load %arg14[%c0_207, %c0_208] : memref<64x64xf32, #tpu.memory_space<vmem>>, vector<64x64xf32>
    %cst_209 = arith.constant dense<0.000000e+00> : vector<8x64xf32>
    %425 = tpu.matmul %373, %424, %cst_209 {dimension_numbers = #tpu.dot_dimension_numbers<[1], [0], [0], [1], [0, 0, 1, 1], [], []>} : vector<8x64xf32>, vector<64x64xf32>, vector<8x64xf32> -> vector<8x64xf32>
    %426 = arith.addf %423, %425 : vector<8x64xf32>
    %427 = arith.addf %426, %14 : vector<8x64xf32>
    %cst_210 = arith.constant 0.000000e+00 : f32
    %428 = vector.broadcast %cst_210 : f32 to vector<8x64xf32>
    %429 = arith.maximumf %427, %428 : vector<8x64xf32>
    %c0_211 = arith.constant 0 : index
    %c0_212 = arith.constant 0 : index
    %430 = vector.load %arg16[%c0_211, %c0_212] : memref<64x128xf32, #tpu.memory_space<vmem>>, vector<64x128xf32>
    %cst_213 = arith.constant dense<0.000000e+00> : vector<8x128xf32>
    %431 = tpu.matmul %429, %430, %cst_213 {dimension_numbers = #tpu.dot_dimension_numbers<[1], [0], [0], [1], [0, 0, 1, 1], [], []>} : vector<8x64xf32>, vector<64x128xf32>, vector<8x128xf32> -> vector<8x128xf32>
    %432 = arith.addf %431, %17 : vector<8x128xf32>
    %433 = arith.negf %432 : vector<8x128xf32>
    %434 = math.exp %433 : vector<8x128xf32>
    %cst_214 = arith.constant 1.000000e+00 : f32
    %435 = vector.broadcast %cst_214 : f32 to vector<8x128xf32>
    %436 = arith.addf %435, %434 : vector<8x128xf32>
    %437 = arith.divf %435, %436 : vector<8x128xf32>
    %438 = vector.extract_strided_slice %437 {offsets = [0, 0], sizes = [8, 64], strides = [1, 1]} : vector<8x128xf32> to vector<8x64xf32>
    %439 = arith.mulf %438, %373 : vector<8x64xf32>
    %440 = vector.extract_strided_slice %437 {offsets = [0, 64], sizes = [8, 64], strides = [1, 1]} : vector<8x128xf32> to vector<8x64xf32>
    %441 = arith.mulf %440, %421 : vector<8x64xf32>
    %442 = arith.addf %439, %441 : vector<8x64xf32>
    %c48 = arith.constant 48 : index
    %c0_215 = arith.constant 0 : index
    %443 = vector.load %arg23[%c48, %c0_215] : memref<64x256xf32, #tpu.memory_space<vmem>>, vector<8x256xf32>
    %c0_216 = arith.constant 0 : index
    %c0_217 = arith.constant 0 : index
    %444 = vector.load %arg3[%c0_216, %c0_217] : memref<64x256xf32, #tpu.memory_space<vmem>>, vector<64x256xf32>
    %cst_218 = arith.constant dense<0.000000e+00> : vector<8x256xf32>
    %445 = tpu.matmul %393, %444, %cst_218 {dimension_numbers = #tpu.dot_dimension_numbers<[1], [0], [0], [1], [0, 0, 1, 1], [], []>} : vector<8x64xf32>, vector<64x256xf32>, vector<8x256xf32> -> vector<8x256xf32>
    %446 = arith.addf %443, %445 : vector<8x256xf32>
    %447 = vector.extract_strided_slice %446 {offsets = [0, 0], sizes = [8, 192], strides = [1, 1]} : vector<8x256xf32> to vector<8x192xf32>
    %448 = arith.negf %447 : vector<8x192xf32>
    %449 = math.exp %448 : vector<8x192xf32>
    %cst_219 = arith.constant 1.000000e+00 : f32
    %450 = vector.broadcast %cst_219 : f32 to vector<8x192xf32>
    %451 = arith.addf %450, %449 : vector<8x192xf32>
    %452 = arith.divf %450, %451 : vector<8x192xf32>
    %453 = vector.extract_strided_slice %446 {offsets = [0, 192], sizes = [8, 64], strides = [1, 1]} : vector<8x256xf32> to vector<8x64xf32>
    %454 = math.tanh %453 : vector<8x64xf32>
    %455 = vector.extract_strided_slice %452 {offsets = [0, 0], sizes = [8, 64], strides = [1, 1]} : vector<8x192xf32> to vector<8x64xf32>
    %456 = vector.extract_strided_slice %452 {offsets = [0, 64], sizes = [8, 64], strides = [1, 1]} : vector<8x192xf32> to vector<8x64xf32>
    %457 = vector.extract_strided_slice %452 {offsets = [0, 128], sizes = [8, 64], strides = [1, 1]} : vector<8x192xf32> to vector<8x64xf32>
    %458 = arith.mulf %456, %391 : vector<8x64xf32>
    %459 = arith.mulf %455, %454 : vector<8x64xf32>
    %460 = arith.addf %458, %459 : vector<8x64xf32>
    %461 = math.tanh %460 : vector<8x64xf32>
    %462 = arith.mulf %457, %461 : vector<8x64xf32>
    %463 = tpu.concatenate %391, %460 in 1 : vector<8x64xf32>, vector<8x64xf32> -> vector<8x128xf32>
    %c0_220 = arith.constant 0 : index
    %c0_221 = arith.constant 0 : index
    %464 = vector.load %arg5[%c0_220, %c0_221] : memref<128x32xf32, #tpu.memory_space<vmem>>, vector<128x32xf32>
    %cst_222 = arith.constant dense<0.000000e+00> : vector<8x32xf32>
    %465 = tpu.matmul %463, %464, %cst_222 {dimension_numbers = #tpu.dot_dimension_numbers<[1], [0], [0], [1], [0, 0, 1, 1], [], []>} : vector<8x128xf32>, vector<128x32xf32>, vector<8x32xf32> -> vector<8x32xf32>
    %466 = arith.addf %465, %2 : vector<8x32xf32>
    %cst_223 = arith.constant 0.000000e+00 : f32
    %467 = vector.broadcast %cst_223 : f32 to vector<8x32xf32>
    %468 = arith.maximumf %466, %467 : vector<8x32xf32>
    %c0_224 = arith.constant 0 : index
    %c0_225 = arith.constant 0 : index
    %469 = vector.load %arg7[%c0_224, %c0_225] : memref<32x128xf32, #tpu.memory_space<vmem>>, vector<32x128xf32>
    %cst_226 = arith.constant dense<0.000000e+00> : vector<8x128xf32>
    %470 = tpu.matmul %468, %469, %cst_226 {dimension_numbers = #tpu.dot_dimension_numbers<[1], [0], [0], [1], [0, 0, 1, 1], [], []>} : vector<8x32xf32>, vector<32x128xf32>, vector<8x128xf32> -> vector<8x128xf32>
    %471 = arith.addf %470, %5 : vector<8x128xf32>
    %cst_227 = arith.constant dense<0xFF800000> : vector<8xf32>
    %472 = vector.multi_reduction <maximumf>, %471, %cst_227 [1] : vector<8x128xf32> to vector<8xf32>
    %473 = vector.shape_cast %472 : vector<8xf32> to vector<8x1xf32>
    %474 = vector.broadcast %473 : vector<8x1xf32> to vector<8x128xf32>
    %475 = arith.subf %471, %474 : vector<8x128xf32>
    %476 = math.exp %475 : vector<8x128xf32>
    %cst_228 = arith.constant dense<0.000000e+00> : vector<8xf32>
    %477 = vector.multi_reduction <add>, %476, %cst_228 [1] : vector<8x128xf32> to vector<8xf32>
    %478 = vector.shape_cast %477 : vector<8xf32> to vector<8x1xf32>
    %479 = vector.broadcast %478 : vector<8x1xf32> to vector<8x128xf32>
    %480 = arith.divf %476, %479 : vector<8x128xf32>
    %481 = arith.mulf %480, %463 : vector<8x128xf32>
    %c0_229 = arith.constant 0 : index
    %c0_230 = arith.constant 0 : index
    %482 = vector.load %arg9[%c0_229, %c0_230] : memref<128x32xf32, #tpu.memory_space<vmem>>, vector<128x32xf32>
    %cst_231 = arith.constant dense<0.000000e+00> : vector<8x32xf32>
    %483 = tpu.matmul %481, %482, %cst_231 {dimension_numbers = #tpu.dot_dimension_numbers<[1], [0], [0], [1], [0, 0, 1, 1], [], []>} : vector<8x128xf32>, vector<128x32xf32>, vector<8x32xf32> -> vector<8x32xf32>
    %484 = arith.addf %483, %8 : vector<8x32xf32>
    %cst_232 = arith.constant 0.000000e+00 : f32
    %485 = vector.broadcast %cst_232 : f32 to vector<8x32xf32>
    %486 = arith.maximumf %484, %485 : vector<8x32xf32>
    %c0_233 = arith.constant 0 : index
    %c0_234 = arith.constant 0 : index
    %487 = vector.load %arg11[%c0_233, %c0_234] : memref<32x64xf32, #tpu.memory_space<vmem>>, vector<32x64xf32>
    %cst_235 = arith.constant dense<0.000000e+00> : vector<8x64xf32>
    %488 = tpu.matmul %486, %487, %cst_235 {dimension_numbers = #tpu.dot_dimension_numbers<[1], [0], [0], [1], [0, 0, 1, 1], [], []>} : vector<8x32xf32>, vector<32x64xf32>, vector<8x64xf32> -> vector<8x64xf32>
    %489 = arith.addf %488, %11 : vector<8x64xf32>
    %490 = math.tanh %489 : vector<8x64xf32>
    %c0_236 = arith.constant 0 : index
    %c0_237 = arith.constant 0 : index
    %491 = vector.load %arg13[%c0_236, %c0_237] : memref<128x64xf32, #tpu.memory_space<vmem>>, vector<128x64xf32>
    %cst_238 = arith.constant dense<0.000000e+00> : vector<8x64xf32>
    %492 = tpu.matmul %481, %491, %cst_238 {dimension_numbers = #tpu.dot_dimension_numbers<[1], [0], [0], [1], [0, 0, 1, 1], [], []>} : vector<8x128xf32>, vector<128x64xf32>, vector<8x64xf32> -> vector<8x64xf32>
    %c0_239 = arith.constant 0 : index
    %c0_240 = arith.constant 0 : index
    %493 = vector.load %arg14[%c0_239, %c0_240] : memref<64x64xf32, #tpu.memory_space<vmem>>, vector<64x64xf32>
    %cst_241 = arith.constant dense<0.000000e+00> : vector<8x64xf32>
    %494 = tpu.matmul %442, %493, %cst_241 {dimension_numbers = #tpu.dot_dimension_numbers<[1], [0], [0], [1], [0, 0, 1, 1], [], []>} : vector<8x64xf32>, vector<64x64xf32>, vector<8x64xf32> -> vector<8x64xf32>
    %495 = arith.addf %492, %494 : vector<8x64xf32>
    %496 = arith.addf %495, %14 : vector<8x64xf32>
    %cst_242 = arith.constant 0.000000e+00 : f32
    %497 = vector.broadcast %cst_242 : f32 to vector<8x64xf32>
    %498 = arith.maximumf %496, %497 : vector<8x64xf32>
    %c0_243 = arith.constant 0 : index
    %c0_244 = arith.constant 0 : index
    %499 = vector.load %arg16[%c0_243, %c0_244] : memref<64x128xf32, #tpu.memory_space<vmem>>, vector<64x128xf32>
    %cst_245 = arith.constant dense<0.000000e+00> : vector<8x128xf32>
    %500 = tpu.matmul %498, %499, %cst_245 {dimension_numbers = #tpu.dot_dimension_numbers<[1], [0], [0], [1], [0, 0, 1, 1], [], []>} : vector<8x64xf32>, vector<64x128xf32>, vector<8x128xf32> -> vector<8x128xf32>
    %501 = arith.addf %500, %17 : vector<8x128xf32>
    %502 = arith.negf %501 : vector<8x128xf32>
    %503 = math.exp %502 : vector<8x128xf32>
    %cst_246 = arith.constant 1.000000e+00 : f32
    %504 = vector.broadcast %cst_246 : f32 to vector<8x128xf32>
    %505 = arith.addf %504, %503 : vector<8x128xf32>
    %506 = arith.divf %504, %505 : vector<8x128xf32>
    %507 = vector.extract_strided_slice %506 {offsets = [0, 0], sizes = [8, 64], strides = [1, 1]} : vector<8x128xf32> to vector<8x64xf32>
    %508 = arith.mulf %507, %442 : vector<8x64xf32>
    %509 = vector.extract_strided_slice %506 {offsets = [0, 64], sizes = [8, 64], strides = [1, 1]} : vector<8x128xf32> to vector<8x64xf32>
    %510 = arith.mulf %509, %490 : vector<8x64xf32>
    %511 = arith.addf %508, %510 : vector<8x64xf32>
    %c56 = arith.constant 56 : index
    %c0_247 = arith.constant 0 : index
    %512 = vector.load %arg23[%c56, %c0_247] : memref<64x256xf32, #tpu.memory_space<vmem>>, vector<8x256xf32>
    %c0_248 = arith.constant 0 : index
    %c0_249 = arith.constant 0 : index
    %513 = vector.load %arg3[%c0_248, %c0_249] : memref<64x256xf32, #tpu.memory_space<vmem>>, vector<64x256xf32>
    %cst_250 = arith.constant dense<0.000000e+00> : vector<8x256xf32>
    %514 = tpu.matmul %462, %513, %cst_250 {dimension_numbers = #tpu.dot_dimension_numbers<[1], [0], [0], [1], [0, 0, 1, 1], [], []>} : vector<8x64xf32>, vector<64x256xf32>, vector<8x256xf32> -> vector<8x256xf32>
    %515 = arith.addf %512, %514 : vector<8x256xf32>
    %516 = vector.extract_strided_slice %515 {offsets = [0, 0], sizes = [8, 192], strides = [1, 1]} : vector<8x256xf32> to vector<8x192xf32>
    %517 = arith.negf %516 : vector<8x192xf32>
    %518 = math.exp %517 : vector<8x192xf32>
    %cst_251 = arith.constant 1.000000e+00 : f32
    %519 = vector.broadcast %cst_251 : f32 to vector<8x192xf32>
    %520 = arith.addf %519, %518 : vector<8x192xf32>
    %521 = arith.divf %519, %520 : vector<8x192xf32>
    %522 = vector.extract_strided_slice %515 {offsets = [0, 192], sizes = [8, 64], strides = [1, 1]} : vector<8x256xf32> to vector<8x64xf32>
    %523 = math.tanh %522 : vector<8x64xf32>
    %524 = vector.extract_strided_slice %521 {offsets = [0, 0], sizes = [8, 64], strides = [1, 1]} : vector<8x192xf32> to vector<8x64xf32>
    %525 = vector.extract_strided_slice %521 {offsets = [0, 64], sizes = [8, 64], strides = [1, 1]} : vector<8x192xf32> to vector<8x64xf32>
    %526 = vector.extract_strided_slice %521 {offsets = [0, 128], sizes = [8, 64], strides = [1, 1]} : vector<8x192xf32> to vector<8x64xf32>
    %527 = arith.mulf %525, %460 : vector<8x64xf32>
    %528 = arith.mulf %524, %523 : vector<8x64xf32>
    %529 = arith.addf %527, %528 : vector<8x64xf32>
    %530 = math.tanh %529 : vector<8x64xf32>
    %531 = arith.mulf %526, %530 : vector<8x64xf32>
    %532 = tpu.concatenate %460, %529 in 1 : vector<8x64xf32>, vector<8x64xf32> -> vector<8x128xf32>
    %c0_252 = arith.constant 0 : index
    %c0_253 = arith.constant 0 : index
    %533 = vector.load %arg5[%c0_252, %c0_253] : memref<128x32xf32, #tpu.memory_space<vmem>>, vector<128x32xf32>
    %cst_254 = arith.constant dense<0.000000e+00> : vector<8x32xf32>
    %534 = tpu.matmul %532, %533, %cst_254 {dimension_numbers = #tpu.dot_dimension_numbers<[1], [0], [0], [1], [0, 0, 1, 1], [], []>} : vector<8x128xf32>, vector<128x32xf32>, vector<8x32xf32> -> vector<8x32xf32>
    %535 = arith.addf %534, %2 : vector<8x32xf32>
    %cst_255 = arith.constant 0.000000e+00 : f32
    %536 = vector.broadcast %cst_255 : f32 to vector<8x32xf32>
    %537 = arith.maximumf %535, %536 : vector<8x32xf32>
    %c0_256 = arith.constant 0 : index
    %c0_257 = arith.constant 0 : index
    %538 = vector.load %arg7[%c0_256, %c0_257] : memref<32x128xf32, #tpu.memory_space<vmem>>, vector<32x128xf32>
    %cst_258 = arith.constant dense<0.000000e+00> : vector<8x128xf32>
    %539 = tpu.matmul %537, %538, %cst_258 {dimension_numbers = #tpu.dot_dimension_numbers<[1], [0], [0], [1], [0, 0, 1, 1], [], []>} : vector<8x32xf32>, vector<32x128xf32>, vector<8x128xf32> -> vector<8x128xf32>
    %540 = arith.addf %539, %5 : vector<8x128xf32>
    %cst_259 = arith.constant dense<0xFF800000> : vector<8xf32>
    %541 = vector.multi_reduction <maximumf>, %540, %cst_259 [1] : vector<8x128xf32> to vector<8xf32>
    %542 = vector.shape_cast %541 : vector<8xf32> to vector<8x1xf32>
    %543 = vector.broadcast %542 : vector<8x1xf32> to vector<8x128xf32>
    %544 = arith.subf %540, %543 : vector<8x128xf32>
    %545 = math.exp %544 : vector<8x128xf32>
    %cst_260 = arith.constant dense<0.000000e+00> : vector<8xf32>
    %546 = vector.multi_reduction <add>, %545, %cst_260 [1] : vector<8x128xf32> to vector<8xf32>
    %547 = vector.shape_cast %546 : vector<8xf32> to vector<8x1xf32>
    %548 = vector.broadcast %547 : vector<8x1xf32> to vector<8x128xf32>
    %549 = arith.divf %545, %548 : vector<8x128xf32>
    %550 = arith.mulf %549, %532 : vector<8x128xf32>
    %c0_261 = arith.constant 0 : index
    %c0_262 = arith.constant 0 : index
    %551 = vector.load %arg9[%c0_261, %c0_262] : memref<128x32xf32, #tpu.memory_space<vmem>>, vector<128x32xf32>
    %cst_263 = arith.constant dense<0.000000e+00> : vector<8x32xf32>
    %552 = tpu.matmul %550, %551, %cst_263 {dimension_numbers = #tpu.dot_dimension_numbers<[1], [0], [0], [1], [0, 0, 1, 1], [], []>} : vector<8x128xf32>, vector<128x32xf32>, vector<8x32xf32> -> vector<8x32xf32>
    %553 = arith.addf %552, %8 : vector<8x32xf32>
    %cst_264 = arith.constant 0.000000e+00 : f32
    %554 = vector.broadcast %cst_264 : f32 to vector<8x32xf32>
    %555 = arith.maximumf %553, %554 : vector<8x32xf32>
    %c0_265 = arith.constant 0 : index
    %c0_266 = arith.constant 0 : index
    %556 = vector.load %arg11[%c0_265, %c0_266] : memref<32x64xf32, #tpu.memory_space<vmem>>, vector<32x64xf32>
    %cst_267 = arith.constant dense<0.000000e+00> : vector<8x64xf32>
    %557 = tpu.matmul %555, %556, %cst_267 {dimension_numbers = #tpu.dot_dimension_numbers<[1], [0], [0], [1], [0, 0, 1, 1], [], []>} : vector<8x32xf32>, vector<32x64xf32>, vector<8x64xf32> -> vector<8x64xf32>
    %558 = arith.addf %557, %11 : vector<8x64xf32>
    %559 = math.tanh %558 : vector<8x64xf32>
    %c0_268 = arith.constant 0 : index
    %c0_269 = arith.constant 0 : index
    %560 = vector.load %arg13[%c0_268, %c0_269] : memref<128x64xf32, #tpu.memory_space<vmem>>, vector<128x64xf32>
    %cst_270 = arith.constant dense<0.000000e+00> : vector<8x64xf32>
    %561 = tpu.matmul %550, %560, %cst_270 {dimension_numbers = #tpu.dot_dimension_numbers<[1], [0], [0], [1], [0, 0, 1, 1], [], []>} : vector<8x128xf32>, vector<128x64xf32>, vector<8x64xf32> -> vector<8x64xf32>
    %c0_271 = arith.constant 0 : index
    %c0_272 = arith.constant 0 : index
    %562 = vector.load %arg14[%c0_271, %c0_272] : memref<64x64xf32, #tpu.memory_space<vmem>>, vector<64x64xf32>
    %cst_273 = arith.constant dense<0.000000e+00> : vector<8x64xf32>
    %563 = tpu.matmul %511, %562, %cst_273 {dimension_numbers = #tpu.dot_dimension_numbers<[1], [0], [0], [1], [0, 0, 1, 1], [], []>} : vector<8x64xf32>, vector<64x64xf32>, vector<8x64xf32> -> vector<8x64xf32>
    %564 = arith.addf %561, %563 : vector<8x64xf32>
    %565 = arith.addf %564, %14 : vector<8x64xf32>
    %cst_274 = arith.constant 0.000000e+00 : f32
    %566 = vector.broadcast %cst_274 : f32 to vector<8x64xf32>
    %567 = arith.maximumf %565, %566 : vector<8x64xf32>
    %c0_275 = arith.constant 0 : index
    %c0_276 = arith.constant 0 : index
    %568 = vector.load %arg16[%c0_275, %c0_276] : memref<64x128xf32, #tpu.memory_space<vmem>>, vector<64x128xf32>
    %cst_277 = arith.constant dense<0.000000e+00> : vector<8x128xf32>
    %569 = tpu.matmul %567, %568, %cst_277 {dimension_numbers = #tpu.dot_dimension_numbers<[1], [0], [0], [1], [0, 0, 1, 1], [], []>} : vector<8x64xf32>, vector<64x128xf32>, vector<8x128xf32> -> vector<8x128xf32>
    %570 = arith.addf %569, %17 : vector<8x128xf32>
    %571 = arith.negf %570 : vector<8x128xf32>
    %572 = math.exp %571 : vector<8x128xf32>
    %cst_278 = arith.constant 1.000000e+00 : f32
    %573 = vector.broadcast %cst_278 : f32 to vector<8x128xf32>
    %574 = arith.addf %573, %572 : vector<8x128xf32>
    %575 = arith.divf %573, %574 : vector<8x128xf32>
    %576 = vector.extract_strided_slice %575 {offsets = [0, 0], sizes = [8, 64], strides = [1, 1]} : vector<8x128xf32> to vector<8x64xf32>
    %577 = arith.mulf %576, %511 : vector<8x64xf32>
    %578 = vector.extract_strided_slice %575 {offsets = [0, 64], sizes = [8, 64], strides = [1, 1]} : vector<8x128xf32> to vector<8x64xf32>
    %579 = arith.mulf %578, %559 : vector<8x64xf32>
    %580 = arith.addf %577, %579 : vector<8x64xf32>
    %581 = tpu.concatenate %531, %580 in 1 : vector<8x64xf32>, vector<8x64xf32> -> vector<8x128xf32>
    %c0_279 = arith.constant 0 : index
    %c0_280 = arith.constant 0 : index
    %582 = vector.load %arg18[%c0_279, %c0_280] : memref<128x32xf32, #tpu.memory_space<vmem>>, vector<128x32xf32>
    %cst_281 = arith.constant dense<0.000000e+00> : vector<8x32xf32>
    %583 = tpu.matmul %581, %582, %cst_281 {dimension_numbers = #tpu.dot_dimension_numbers<[1], [0], [0], [1], [0, 0, 1, 1], [], []>} : vector<8x128xf32>, vector<128x32xf32>, vector<8x32xf32> -> vector<8x32xf32>
    %c0_282 = arith.constant 0 : index
    %c0_283 = arith.constant 0 : index
    %584 = vector.load %arg19[%c0_282, %c0_283] : memref<1x32xf32, #tpu.memory_space<vmem>>, vector<1x32xf32>
    %585 = vector.broadcast %584 : vector<1x32xf32> to vector<8x32xf32>
    %586 = arith.addf %583, %585 : vector<8x32xf32>
    %cst_284 = arith.constant 0.000000e+00 : f32
    %587 = vector.broadcast %cst_284 : f32 to vector<8x32xf32>
    %588 = arith.maximumf %586, %587 : vector<8x32xf32>
    %c0_285 = arith.constant 0 : index
    %c0_286 = arith.constant 0 : index
    %589 = vector.load %arg20[%c0_285, %c0_286] : memref<32x128xf32, #tpu.memory_space<vmem>>, vector<32x128xf32>
    %cst_287 = arith.constant dense<0.000000e+00> : vector<8x128xf32>
    %590 = tpu.matmul %588, %589, %cst_287 {dimension_numbers = #tpu.dot_dimension_numbers<[1], [0], [0], [1], [0, 0, 1, 1], [], []>} : vector<8x32xf32>, vector<32x128xf32>, vector<8x128xf32> -> vector<8x128xf32>
    %c0_288 = arith.constant 0 : index
    %c0_289 = arith.constant 0 : index
    %591 = vector.load %arg21[%c0_288, %c0_289] : memref<1x128xf32, #tpu.memory_space<vmem>>, vector<1x128xf32>
    %592 = vector.broadcast %591 : vector<1x128xf32> to vector<8x128xf32>
    %593 = arith.addf %590, %592 : vector<8x128xf32>
    %c0_290 = arith.constant 0 : index
    %c0_291 = arith.constant 0 : index
    %594 = vector.load %arg22[%c0_290, %c0_291] : memref<8x128xf32, #tpu.memory_space<vmem>>, vector<8x128xf32>
    tpu.vector_store %arg22[%c0_290, %c0_291], %593 {strides = array<i32>} : memref<8x128xf32, #tpu.memory_space<vmem>>, vector<8x128xf32>,
    return
  }
}

</mosaic_0001>

<llo_original>
// kernel: mfn_forward.1
$region0: #{mfn_forward.1}
  #allocation0 [shape = 'u32[]', space=smem, size = 0x4, offset = 0x4, fixed_abs, tag = 'smem constant byte address 0x4 - core index']
  #allocation1 [shape = 'u32[144,128]{1,0:T(1,128)}', space=vmem, size = 0x12000, scoped, tag = 'internal scratch']
  #allocation2 [shape = 'f32[64,256]{1,0:T(8,128)}', space=vmem, size = 0x10000, scoped, tag = 'scratch operand']
  %s0 = inlined_call_operand.vmem [shape: f32[64,32], index: 0, kind: input, shape index: {}]
  %s1 = inlined_call_operand.vmem [shape: f32[8,128], index: 1, kind: input, shape index: {}]
  %s2 = inlined_call_operand.vmem [shape: f32[32,256], index: 2, kind: input, shape index: {}]
  %s3 = inlined_call_operand.vmem [shape: f32[64,256], index: 3, kind: input, shape index: {}]
  %s4 = inlined_call_operand.vmem [shape: f32[1,256], index: 4, kind: input, shape index: {}]
  %s5 = inlined_call_operand.vmem [shape: f32[128,32], index: 5, kind: input, shape index: {}]
  %s6 = inlined_call_operand.vmem [shape: f32[1,32], index: 6, kind: input, shape index: {}]
  %s7 = inlined_call_operand.vmem [shape: f32[32,128], index: 7, kind: input, shape index: {}]
  %s8 = inlined_call_operand.vmem [shape: f32[1,128], index: 8, kind: input, shape index: {}]
  %s9 = inlined_call_operand.vmem [shape: f32[128,32], index: 9, kind: input, shape index: {}]
  %s10 = inlined_call_operand.vmem [shape: f32[1,32], index: 10, kind: input, shape index: {}]
  %s11 = inlined_call_operand.vmem [shape: f32[32,64], index: 11, kind: input, shape index: {}]
  %s12 = inlined_call_operand.vmem [shape: f32[1,64], index: 12, kind: input, shape index: {}]
  %s13 = inlined_call_operand.vmem [shape: f32[128,64], index: 13, kind: input, shape index: {}]
  %s14 = inlined_call_operand.vmem [shape: f32[64,64], index: 14, kind: input, shape index: {}]
  %s15 = inlined_call_operand.vmem [shape: f32[1,64], index: 15, kind: input, shape index: {}]
  %s16 = inlined_call_operand.vmem [shape: f32[64,128], index: 16, kind: input, shape index: {}]
  %s17 = inlined_call_operand.vmem [shape: f32[1,128], index: 17, kind: input, shape index: {}]
  %s18 = inlined_call_operand.vmem [shape: f32[128,32], index: 18, kind: input, shape index: {}]
  %s19 = inlined_call_operand.vmem [shape: f32[1,32], index: 19, kind: input, shape index: {}]
  %s20 = inlined_call_operand.vmem [shape: f32[32,128], index: 20, kind: input, shape index: {}]
  %s21 = inlined_call_operand.vmem [shape: f32[1,128], index: 21, kind: input, shape index: {}]
  %s22 = inlined_call_operand.vmem [shape: f32[8,128], index: 22, kind: output, shape index: {}]
  %s23 = sld [smem:[#allocation0]]
  $region98: #{mfn_forward.1} parent=0
    _
  %s25 = ssub.s32 1, %s23
  %s26 = scalar_select 0, %s25, %s23
  // Predicated region
  $region2: #{mfn_forward.1} parent=0 // pred_check
    _
  $region3: #{mfn_forward.1} parent=0 // pred_check_branch
    %28 = sbr.rel (0) target = $region5
  $region4: #{mfn_forward.1} parent=0 // pred_region
    _
  $region5: #{mfn_forward.1} parent=0 // pred_fallthru
    _
  // Predicated region
  $region6: #{mfn_forward.1} parent=0 // pred_check
    _
  $region7: #{mfn_forward.1} parent=0 // pred_check_branch
    %30 = sbr.rel (0) target = $region9
  $region8: #{mfn_forward.1} parent=0 // pred_region
    _
  $region9: #{mfn_forward.1} parent=0 // pred_fallthru
    _
  // Predicated region
  $region10: #{mfn_forward.1} parent=0 // pred_check
    _
  $region11: #{mfn_forward.1} parent=0 // pred_check_branch
    %32 = sbr.rel (0) target = $region13
  $region12: #{mfn_forward.1} parent=0 // pred_region
    _
  $region13: #{mfn_forward.1} parent=0 // pred_fallthru
    _
  // Predicated region
  $region14: #{mfn_forward.1} parent=0 // pred_check
    _
  $region15: #{mfn_forward.1} parent=0 // pred_check_branch
    %34 = sbr.rel (0) target = $region17
  $region16: #{mfn_forward.1} parent=0 // pred_region
    _
  $region17: #{mfn_forward.1} parent=0 // pred_fallthru
    _
  // Predicated region
  $region18: #{mfn_forward.1} parent=0 // pred_check
    _
  $region19: #{mfn_forward.1} parent=0 // pred_check_branch
    %36 = sbr.rel (0) target = $region21
  $region20: #{mfn_forward.1} parent=0 // pred_region
    _
  $region21: #{mfn_forward.1} parent=0 // pred_fallthru
    _
  // Predicated region
  $region22: #{mfn_forward.1} parent=0 // pred_check
    _
  $region23: #{mfn_forward.1} parent=0 // pred_check_branch
    %38 = sbr.rel (0) target = $region25
  $region24: #{mfn_forward.1} parent=0 // pred_region
    _
  $region25: #{mfn_forward.1} parent=0 // pred_fallthru
    _
  // Predicated region
  $region26: #{mfn_forward.1} parent=0 // pred_check
    _
  $region27: #{mfn_forward.1} parent=0 // pred_check_branch
    %40 = sbr.rel (0) target = $region29
  $region28: #{mfn_forward.1} parent=0 // pred_region
    _
  $region29: #{mfn_forward.1} parent=0 // pred_fallthru
    _
  // Predicated region
  $region30: #{mfn_forward.1} parent=0 // pred_check
    _
  $region31: #{mfn_forward.1} parent=0 // pred_check_branch
    %42 = sbr.rel (0) target = $region33
  $region32: #{mfn_forward.1} parent=0 // pred_region
    _
  $region33: #{mfn_forward.1} parent=0 // pred_fallthru
    _
  // Predicated region
  $region34: #{mfn_forward.1} parent=0 // pred_check
    _
  $region35: #{mfn_forward.1} parent=0 // pred_check_branch
    %44 = sbr.rel (0) target = $region37
  $region36: #{mfn_forward.1} parent=0 // pred_region
    _
  $region37: #{mfn_forward.1} parent=0 // pred_fallthru
    _
  // Predicated region
  $region38: #{mfn_forward.1} parent=0 // pred_check
    _
  $region39: #{mfn_forward.1} parent=0 // pred_check_branch
    %46 = sbr.rel (0) target = $region41
  $region40: #{mfn_forward.1} parent=0 // pred_region
    _
  $region41: #{mfn_forward.1} parent=0 // pred_fallthru
    _
  // Predicated region
  $region42: #{mfn_forward.1} parent=0 // pred_check
    _
  $region43: #{mfn_forward.1} parent=0 // pred_check_branch
    %48 = sbr.rel (0) target = $region45
  $region44: #{mfn_forward.1} parent=0 // pred_region
    _
  $region45: #{mfn_forward.1} parent=0 // pred_fallthru
    _
  // Predicated region
  $region46: #{mfn_forward.1} parent=0 // pred_check
    _
  $region47: #{mfn_forward.1} parent=0 // pred_check_branch
    %50 = sbr.rel (0) target = $region49
  $region48: #{mfn_forward.1} parent=0 // pred_region
    _
  $region49: #{mfn_forward.1} parent=0 // pred_fallthru
    _
  // Predicated region
  $region50: #{mfn_forward.1} parent=0 // pred_check
    _
  $region51: #{mfn_forward.1} parent=0 // pred_check_branch
    %52 = sbr.rel (0) target = $region53
  $region52: #{mfn_forward.1} parent=0 // pred_region
    _
  $region53: #{mfn_forward.1} parent=0 // pred_fallthru
    _
  // Predicated region
  $region54: #{mfn_forward.1} parent=0 // pred_check
    _
  $region55: #{mfn_forward.1} parent=0 // pred_check_branch
    %54 = sbr.rel (0) target = $region57
  $region56: #{mfn_forward.1} parent=0 // pred_region
    _
  $region57: #{mfn_forward.1} parent=0 // pred_fallthru
    _
  // Predicated region
  $region58: #{mfn_forward.1} parent=0 // pred_check
    _
  $region59: #{mfn_forward.1} parent=0 // pred_check_branch
    %56 = sbr.rel (0) target = $region61
  $region60: #{mfn_forward.1} parent=0 // pred_region
    _
  $region61: #{mfn_forward.1} parent=0 // pred_fallthru
    _
  // Predicated region
  $region62: #{mfn_forward.1} parent=0 // pred_check
    _
  $region63: #{mfn_forward.1} parent=0 // pred_check_branch
    %58 = sbr.rel (0) target = $region65
  $region64: #{mfn_forward.1} parent=0 // pred_region
    _
  $region65: #{mfn_forward.1} parent=0 // pred_fallthru
    _
  // Predicated region
  $region66: #{mfn_forward.1} parent=0 // pred_check
    _
  $region67: #{mfn_forward.1} parent=0 // pred_check_branch
    %60 = sbr.rel (0) target = $region69
  $region68: #{mfn_forward.1} parent=0 // pred_region
    _
  $region69: #{mfn_forward.1} parent=0 // pred_fallthru
    _
  // Predicated region
  $region70: #{mfn_forward.1} parent=0 // pred_check
    _
  $region71: #{mfn_forward.1} parent=0 // pred_check_branch
    %62 = sbr.rel (0) target = $region73
  $region72: #{mfn_forward.1} parent=0 // pred_region
    _
  $region73: #{mfn_forward.1} parent=0 // pred_fallthru
    _
  // Predicated region
  $region74: #{mfn_forward.1} parent=0 // pred_check
    _
  $region75: #{mfn_forward.1} parent=0 // pred_check_branch
    %64 = sbr.rel (0) target = $region77
  $region76: #{mfn_forward.1} parent=0 // pred_region
    _
  $region77: #{mfn_forward.1} parent=0 // pred_fallthru
    _
  // Predicated region
  $region78: #{mfn_forward.1} parent=0 // pred_check
    _
  $region79: #{mfn_forward.1} parent=0 // pred_check_branch
    %66 = sbr.rel (0) target = $region81
  $region80: #{mfn_forward.1} parent=0 // pred_region
    _
  $region81: #{mfn_forward.1} parent=0 // pred_fallthru
    _
  // Predicated region
  $region82: #{mfn_forward.1} parent=0 // pred_check
    _
  $region83: #{mfn_forward.1} parent=0 // pred_check_branch
    %68 = sbr.rel (0) target = $region85
  $region84: #{mfn_forward.1} parent=0 // pred_region
    _
  $region85: #{mfn_forward.1} parent=0 // pred_fallthru
    _
  // Predicated region
  $region86: #{mfn_forward.1} parent=0 // pred_check
    _
  $region87: #{mfn_forward.1} parent=0 // pred_check_branch
    %70 = sbr.rel (0) target = $region89
  $region88: #{mfn_forward.1} parent=0 // pred_region
    _
  $region89: #{mfn_forward.1} parent=0 // pred_fallthru
    _
  %v71 = vld [vmem:[%s6] sm:$0x1]
  %v73 = vlaneseq
  %v74 = vshrl.u32 %v73, 7
  %v75 = vsub.s32 0, %v74
  %v76 = vrot.slane %v71, %v75
  %v78 = vld [vmem:[%s8] sm:$0x1]
  %v80 = vlaneseq
  %v81 = vshrl.u32 %v80, 7
  %v82 = vsub.s32 0, %v81
  %v83 = vrot.slane %v78, %v82
  %v85 = vld [vmem:[%s10] sm:$0x1]
  %v87 = vlaneseq
  %v88 = vshrl.u32 %v87, 7
  %v89 = vsub.s32 0, %v88
  %v90 = vrot.slane %v85, %v89
  %v92 = vld [vmem:[%s12] sm:$0x1]
  %v94 = vlaneseq
  %v95 = vshrl.u32 %v94, 7
  %v96 = vsub.s32 0, %v95
  %v97 = vrot.slane %v92, %v96
  %v99 = vld [vmem:[%s15] sm:$0x1]
  %v101 = vlaneseq
  %v102 = vshrl.u32 %v101, 7
  %v103 = vsub.s32 0, %v102
  %v104 = vrot.slane %v99, %v103
  %v106 = vld [vmem:[%s17] sm:$0x1]
  %v108 = vlaneseq
  %v109 = vshrl.u32 %v108, 7
  %v110 = vsub.s32 0, %v109
  %v111 = vrot.slane %v106, %v110
  %v113 = vld [vmem:[%s0] sm:$0xff]
  %v114 = vld [vmem:[%s0 + $0x8] sm:$0xff]
  %v115 = vld [vmem:[%s0 + $0x10] sm:$0xff]
  %v116 = vld [vmem:[%s0 + $0x18] sm:$0xff]
  %v117 = vld [vmem:[%s0 + $0x20] sm:$0xff]
  %v118 = vld [vmem:[%s0 + $0x28] sm:$0xff]
  %v119 = vld [vmem:[%s0 + $0x30] sm:$0xff]
  %v120 = vld [vmem:[%s0 + $0x38] sm:$0xff]
  %v121 = vld [vmem:[%s2] sm:$0xff]
  %v122 = vld [vmem:[%s2 + $0x8] sm:$0xff]
  %v123 = vld [vmem:[%s2 + $0x10] sm:$0xff]
  %v124 = vld [vmem:[%s2 + $0x18] sm:$0xff]
  %v125 = vld [vmem:[%s2 + $0x20] sm:$0xff]
  %v126 = vld [vmem:[%s2 + $0x28] sm:$0xff]
  %v127 = vld [vmem:[%s2 + $0x30] sm:$0xff]
  %v128 = vld [vmem:[%s2 + $0x38] sm:$0xff]
  %v129 = vld [vmem:[%s4] sm:$0x3]
  %v131 = vlaneseq
  %v132 = vshrl.u32 %v131, 7
  %v133 = vsub.s32 0, %v132
  %v134 = vrot.slane %v129, %v133
  %v135 = vlaneseq
  %v136 = vshrl.u32 %v135, 7
  %v137 = vsub.s32 1, %v136
  %v138 = vrot.slane %v129, %v137
  %vm141 = vcmask 261120
  %v143 = vsel %vm141, %v113, 0
  %v146 = vsel %vm141, %v114, 0
  %v149 = vsel %vm141, %v115, 0
  %v152 = vsel %vm141, %v116, 0
  %v155 = vsel %vm141, %v117, 0
  %v158 = vsel %vm141, %v118, 0
  %v161 = vsel %vm141, %v119, 0
  %v164 = vsel %vm141, %v120, 0
  %166 = vmatprep.subr.mxu0 %v122
  %167 = vmatpush1.msra.mxu0 %v121
  %168 = vmatprep.subr.mxu0 %v124
  %169 = vmatpush1.msra.mxu0 %v123
  %170 = vmatprep.subr.mxu0 %v126
  %171 = vmatpush1.msra.mxu0 %v125
  %172 = vmatprep.subr.mxu0 %v128
  %173 = vmatpush1.msra.mxu0 %v127
  %174 = vmatprep.subr.mxu0 0.0
  %175 = vmatpush1.msra.mxu0 0.0
  %176 = vmatprep.subr.mxu0 0.0
  %177 = vmatpush1.msra.mxu0 0.0
  %178 = vmatprep.subr.mxu0 0.0
  %179 = vmatpush1.msra.mxu0 0.0
  %180 = vmatprep.subr.mxu0 0.0
  %181 = vmatpush1.msra.mxu0 0.0
  %182 = vmatprep.subr.mxu0 0.0
  %183 = vmatpush1.msra.mxu0 0.0
  %184 = vmatprep.subr.mxu0 0.0
  %185 = vmatpush1.msra.mxu0 0.0
  %186 = vmatprep.subr.mxu0 0.0
  %187 = vmatpush1.msra.mxu0 0.0
  %188 = vmatprep.subr.mxu0 0.0
  %189 = vmatpush1.msra.mxu0 0.0
  %190 = vmatprep.subr.mxu0 0.0
  %191 = vmatpush1.msra.mxu0 0.0
  %192 = vmatprep.subr.mxu0 0.0
  %193 = vmatpush1.msra.mxu0 0.0
  %194 = vmatprep.subr.mxu0 0.0
  %195 = vmatpush1.msra.mxu0 0.0
  %196 = vmatprep.subr.mxu0 0.0
  %197 = vmatpush1.msra.mxu0 0.0
  %198 = vmatprep.subr.mxu0 0.0
  %199 = vmatpush1.msra.mxu0 0.0
  %200 = vmatprep.subr.mxu0 0.0
  %201 = vmatpush1.msra.mxu0 0.0
  %202 = vmatprep.subr.mxu0 0.0
  %203 = vmatpush1.msra.mxu0 0.0
  %204 = vmatprep.subr.mxu0 0.0
  %205 = vmatpush1.msra.mxu0 0.0
  %206 = vmatprep.subr.mxu0 0.0
  %207 = vmatpush1.msra.mxu0 0.0
  %208 = vmatprep.subr.mxu0 0.0
  %209 = vmatpush1.msra.mxu0 0.0
  %210 = vmatprep.subr.mxu0 0.0
  %211 = vmatpush1.msra.mxu0 0.0
  %212 = vmatprep.subr.mxu0 0.0
  %213 = vmatpush1.msra.mxu0 0.0
  %214 = vmatprep.subr.mxu0 0.0
  %215 = vmatpush1.msra.mxu0 0.0
  %216 = vmatprep.subr.mxu0 0.0
  %217 = vmatpush1.msra.mxu0 0.0
  %218 = vmatprep.subr.mxu0 0.0
  %219 = vmatpush1.msra.mxu0 0.0
  %220 = vmatprep.subr.mxu0 0.0
  %221 = vmatpush1.msra.mxu0 0.0
  %222 = vmatprep.subr.mxu0 0.0
  %223 = vmatpush1.msra.mxu0 0.0
  %224 = vmatprep.subr.mxu0 0.0
  %225 = vmatpush1.msra.mxu0 0.0
  %226 = vmatprep.subr.mxu0 0.0
  %227 = vmatpush1.msra.mxu0 0.0
  %228 = vmatprep.subr.mxu0 0.0
  %229 = vmatpush1.msra.mxu0 0.0
  %230 = vmatprep.mubr.f32.mxu0 0.0
  %231 = vmatmul.mubr.f32.gmra.mrb[0].mxu0 %v143
  %v232 = vpop.f32.mrb[0].mxu0
  %v233 = vadd.f32 %v134, %v232
  %v234 = vpop.f32.mrb[0].mxu0
  %v235 = vadd.f32 %v138, %v234
  %236 = vmatprep.mubr.f32.mxu0 0.0
  %237 = vmatmul.mubr.f32.gmra.mrb[0].mxu0 %v146
  %v238 = vpop.f32.mrb[0].mxu0
  %v239 = vadd.f32 %v134, %v238
  %v240 = vpop.f32.mrb[0].mxu0
  %v241 = vadd.f32 %v138, %v240
  %242 = vmatprep.mubr.f32.mxu0 0.0
  %243 = vmatmul.mubr.f32.gmra.mrb[0].mxu0 %v149
  %v244 = vpop.f32.mrb[0].mxu0
  %v245 = vadd.f32 %v134, %v244
  %v246 = vpop.f32.mrb[0].mxu0
  %v247 = vadd.f32 %v138, %v246
  %248 = vmatprep.mubr.f32.mxu0 0.0
  %249 = vmatmul.mubr.f32.gmra.mrb[0].mxu0 %v152
  %v250 = vpop.f32.mrb[0].mxu0
  %v251 = vadd.f32 %v134, %v250
  %v252 = vpop.f32.mrb[0].mxu0
  %v253 = vadd.f32 %v138, %v252
  %254 = vmatprep.mubr.f32.mxu0 0.0
  %255 = vmatmul.mubr.f32.gmra.mrb[0].mxu0 %v155
  %v256 = vpop.f32.mrb[0].mxu0
  %v257 = vadd.f32 %v134, %v256
  %v258 = vpop.f32.mrb[0].mxu0
  %v259 = vadd.f32 %v138, %v258
  %260 = vmatprep.mubr.f32.mxu0 0.0
  %261 = vmatmul.mubr.f32.gmra.mrb[0].mxu0 %v158
  %v262 = vpop.f32.mrb[0].mxu0
  %v263 = vadd.f32 %v134, %v262
  %v264 = vpop.f32.mrb[0].mxu0
  %v265 = vadd.f32 %v138, %v264
  %266 = vmatprep.mubr.f32.mxu0 0.0
  %267 = vmatmul.mubr.f32.gmra.mrb[0].mxu0 %v161
  %v268 = vpop.f32.mrb[0].mxu0
  %v269 = vadd.f32 %v134, %v268
  %v270 = vpop.f32.mrb[0].mxu0
  %v271 = vadd.f32 %v138, %v270
  %272 = vmatprep.mubr.f32.mxu0 0.0
  %273 = vmatmul.mubr.f32.gmra.mrb[0].mxu0 %v164
  %v274 = vpop.f32.mrb[0].mxu0
  %v275 = vadd.f32 %v134, %v274
  %v276 = vpop.f32.mrb[0].mxu0
  %v277 = vadd.f32 %v138, %v276
  %278 = vdwg.mxu0
  %279 = vst [vmem:[#allocation2] sm:$0xff] %v233
  %280 = vst [vmem:[#allocation2 + $0x8] sm:$0xff] %v235
  %281 = vst [vmem:[#allocation2 + $0x10] sm:$0xff] %v239
  %282 = vst [vmem:[#allocation2 + $0x18] sm:$0xff] %v241
  %283 = vst [vmem:[#allocation2 + $0x20] sm:$0xff] %v245
  %284 = vst [vmem:[#allocation2 + $0x28] sm:$0xff] %v247
  %285 = vst [vmem:[#allocation2 + $0x30] sm:$0xff] %v251
  %286 = vst [vmem:[#allocation2 + $0x38] sm:$0xff] %v253
  %287 = vst [vmem:[#allocation2 + $0x40] sm:$0xff] %v257
  %288 = vst [vmem:[#allocation2 + $0x48] sm:$0xff] %v259
  %289 = vst [vmem:[#allocation2 + $0x50] sm:$0xff] %v263
  %290 = vst [vmem:[#allocation2 + $0x58] sm:$0xff] %v265
  %291 = vst [vmem:[#allocation2 + $0x60] sm:$0xff] %v269
  %292 = vst [vmem:[#allocation2 + $0x68] sm:$0xff] %v271
  %293 = vst [vmem:[#allocation2 + $0x70] sm:$0xff] %v275
  %294 = vst [vmem:[#allocation2 + $0x78] sm:$0xff] %v277
  %v295 = vld [vmem:[%s1] sm:$0xff]
  %v296 = vld [vmem:[#allocation2] sm:$0xff]
  %v297 = vld [vmem:[#allocation2 + $0x8] sm:$0xff]
  %v298 = vld [vmem:[%s3] sm:$0xff]
  %v299 = vld [vmem:[%s3 + $0x8] sm:$0xff]
  %v300 = vld [vmem:[%s3 + $0x10] sm:$0xff]
  %v301 = vld [vmem:[%s3 + $0x18] sm:$0xff]
  %v302 = vld [vmem:[%s3 + $0x20] sm:$0xff]
  %v303 = vld [vmem:[%s3 + $0x28] sm:$0xff]
  %v304 = vld [vmem:[%s3 + $0x30] sm:$0xff]
  %v305 = vld [vmem:[%s3 + $0x38] sm:$0xff]
  %v306 = vld [vmem:[%s3 + $0x40] sm:$0xff]
  %v307 = vld [vmem:[%s3 + $0x48] sm:$0xff]
  %v308 = vld [vmem:[%s3 + $0x50] sm:$0xff]
  %v309 = vld [vmem:[%s3 + $0x58] sm:$0xff]
  %v310 = vld [vmem:[%s3 + $0x60] sm:$0xff]
  %v311 = vld [vmem:[%s3 + $0x68] sm:$0xff]
  %v312 = vld [vmem:[%s3 + $0x70] sm:$0xff]
  %v313 = vld [vmem:[%s3 + $0x78] sm:$0xff]
  %vm314 = vcmask 523264
  %v316 = vsel %vm314, 0.0, 0
  %318 = vmatprep.subr.mxu0 %v299
  %319 = vmatpush1.msra.mxu0 %v298
  %320 = vmatprep.subr.mxu0 %v301
  %321 = vmatpush1.msra.mxu0 %v300
  %322 = vmatprep.subr.mxu0 %v303
  %323 = vmatpush1.msra.mxu0 %v302
  %324 = vmatprep.subr.mxu0 %v305
  %325 = vmatpush1.msra.mxu0 %v304
  %326 = vmatprep.subr.mxu0 %v307
  %327 = vmatpush1.msra.mxu0 %v306
  %328 = vmatprep.subr.mxu0 %v309
  %329 = vmatpush1.msra.mxu0 %v308
  %330 = vmatprep.subr.mxu0 %v311
  %331 = vmatpush1.msra.mxu0 %v310
  %332 = vmatprep.subr.mxu0 %v313
  %333 = vmatpush1.msra.mxu0 %v312
  %334 = vmatprep.subr.mxu0 0.0
  %335 = vmatpush1.msra.mxu0 0.0
  %336 = vmatprep.subr.mxu0 0.0
  %337 = vmatpush1.msra.mxu0 0.0
  %338 = vmatprep.subr.mxu0 0.0
  %339 = vmatpush1.msra.mxu0 0.0
  %340 = vmatprep.subr.mxu0 0.0
  %341 = vmatpush1.msra.mxu0 0.0
  %342 = vmatprep.subr.mxu0 0.0
  %343 = vmatpush1.msra.mxu0 0.0
  %344 = vmatprep.subr.mxu0 0.0
  %345 = vmatpush1.msra.mxu0 0.0
  %346 = vmatprep.subr.mxu0 0.0
  %347 = vmatpush1.msra.mxu0 0.0
  %348 = vmatprep.subr.mxu0 0.0
  %349 = vmatpush1.msra.mxu0 0.0
  %350 = vmatprep.subr.mxu0 0.0
  %351 = vmatpush1.msra.mxu0 0.0
  %352 = vmatprep.subr.mxu0 0.0
  %353 = vmatpush1.msra.mxu0 0.0
  %354 = vmatprep.subr.mxu0 0.0
  %355 = vmatpush1.msra.mxu0 0.0
  %356 = vmatprep.subr.mxu0 0.0
  %357 = vmatpush1.msra.mxu0 0.0
  %358 = vmatprep.subr.mxu0 0.0
  %359 = vmatpush1.msra.mxu0 0.0
  %360 = vmatprep.subr.mxu0 0.0
  %361 = vmatpush1.msra.mxu0 0.0
  %362 = vmatprep.subr.mxu0 0.0
  %363 = vmatpush1.msra.mxu0 0.0
  %364 = vmatprep.subr.mxu0 0.0
  %365 = vmatpush1.msra.mxu0 0.0
  %366 = vmatprep.subr.mxu0 0.0
  %367 = vmatpush1.msra.mxu0 0.0
  %368 = vmatprep.subr.mxu0 0.0
  %369 = vmatpush1.msra.mxu0 0.0
  %370 = vmatprep.subr.mxu0 0.0
  %371 = vmatpush1.msra.mxu0 0.0
  %372 = vmatprep.subr.mxu0 0.0
  %373 = vmatpush1.msra.mxu0 0.0
  %374 = vmatprep.subr.mxu0 0.0
  %375 = vmatpush1.msra.mxu0 0.0
  %376 = vmatprep.subr.mxu0 0.0
  %377 = vmatpush1.msra.mxu0 0.0
  %378 = vmatprep.subr.mxu0 0.0
  %379 = vmatpush1.msra.mxu0 0.0
  %380 = vmatprep.subr.mxu0 0.0
  %381 = vmatpush1.msra.mxu0 0.0
  %382 = vmatprep.mubr.f32.mxu0 0.0
  %383 = vmatmul.mubr.f32.gmra.mrb[0].mxu0 %v316
  %v384 = vpop.f32.mrb[0].mxu0
  %v385 = vadd.f32 0.0, %v384
  %v386 = vpop.f32.mrb[0].mxu0
  %v387 = vadd.f32 0.0, %v386
  %388 = vdwg.mxu0
  %v389 = vadd.f32 %v296, %v385
  %v390 = vadd.f32 %v297, %v387
  %v391 = vxor.u32 %v389, 2147483648
  %v392 = vxor.u32 %v390, 2147483648
  %v393 = vmul.f32 %v391, 1.442695
  %v394 = vpow.pop %v393
  %v395 = vmul.f32 %v392, 1.442695
  %v396 = vpow.pop %v395
  %v397 = vadd.f32 %v394, 1.0
  %v398 = vadd.f32 %v396, 1.0
  %v399 = vrcp.pop %v397
  %v400 = vmul.f32 1.0, %v399
  %v401 = vrcp.pop %v398
  %v402 = vmul.f32 1.0, %v401
  %v403 = vtanh.pop %v390
  %405 = vrot.lane.b32.xlu0 %v295, 64
  %v406 = vpop.permute.xlu0 %405
  %v408 = vmul.f32 %v400, %v406
  %410 = vrot.lane.b32.xlu0 %v403, 64
  %v411 = vpop.permute.xlu0 %410
  %v413 = vmul.f32 %v400, %v411
  %415 = vrot.lane.b32.xlu0 %v413, 64
  %v416 = vpop.permute.xlu0 %415
  %v418 = vadd.f32 %v408, %v416
  %v419 = vtanh.pop %v418
  %421 = vrot.lane.b32.xlu0 %v419, 64
  %v422 = vpop.permute.xlu0 %421
  %v424 = vmul.f32 %v402, %v422
  %v425 = vsel %vm314, %v295, %v418
  %v426 = vld [vmem:[%s5] sm:$0xff]
  %v427 = vld [vmem:[%s5 + $0x8] sm:$0xff]
  %v428 = vld [vmem:[%s5 + $0x10] sm:$0xff]
  %v429 = vld [vmem:[%s5 + $0x18] sm:$0xff]
  %v430 = vld [vmem:[%s5 + $0x20] sm:$0xff]
  %v431 = vld [vmem:[%s5 + $0x28] sm:$0xff]
  %v432 = vld [vmem:[%s5 + $0x30] sm:$0xff]
  %v433 = vld [vmem:[%s5 + $0x38] sm:$0xff]
  %v434 = vld [vmem:[%s5 + $0x40] sm:$0xff]
  %v435 = vld [vmem:[%s5 + $0x48] sm:$0xff]
  %v436 = vld [vmem:[%s5 + $0x50] sm:$0xff]
  %v437 = vld [vmem:[%s5 + $0x58] sm:$0xff]
  %v438 = vld [vmem:[%s5 + $0x60] sm:$0xff]
  %v439 = vld [vmem:[%s5 + $0x68] sm:$0xff]
  %v440 = vld [vmem:[%s5 + $0x70] sm:$0xff]
  %v441 = vld [vmem:[%s5 + $0x78] sm:$0xff]
  %442 = vmatprep.subr.mxu0 0.0
  %443 = vmatpush1.msra.mxu0 %v426
  %444 = vmatprep.subr.mxu0 0.0
  %445 = vmatpush1.msra.mxu0 %v427
  %446 = vmatprep.subr.mxu0 0.0
  %447 = vmatpush1.msra.mxu0 %v428
  %448 = vmatprep.subr.mxu0 0.0
  %449 = vmatpush1.msra.mxu0 %v429
  %450 = vmatprep.subr.mxu0 0.0
  %451 = vmatpush1.msra.mxu0 %v430
  %452 = vmatprep.subr.mxu0 0.0
  %453 = vmatpush1.msra.mxu0 %v431
  %454 = vmatprep.subr.mxu0 0.0
  %455 = vmatpush1.msra.mxu0 %v432
  %456 = vmatprep.subr.mxu0 0.0
  %457 = vmatpush1.msra.mxu0 %v433
  %458 = vmatprep.subr.mxu0 0.0
  %459 = vmatpush1.msra.mxu0 %v434
  %460 = vmatprep.subr.mxu0 0.0
  %461 = vmatpush1.msra.mxu0 %v435
  %462 = vmatprep.subr.mxu0 0.0
  %463 = vmatpush1.msra.mxu0 %v436
  %464 = vmatprep.subr.mxu0 0.0
  %465 = vmatpush1.msra.mxu0 %v437
  %466 = vmatprep.subr.mxu0 0.0
  %467 = vmatpush1.msra.mxu0 %v438
  %468 = vmatprep.subr.mxu0 0.0
  %469 = vmatpush1.msra.mxu0 %v439
  %470 = vmatprep.subr.mxu0 0.0
  %471 = vmatpush1.msra.mxu0 %v440
  %472 = vmatprep.subr.mxu0 0.0
  %473 = vmatpush1.msra.mxu0 %v441
  %474 = vmatprep.subr.mxu0 0.0
  %475 = vmatpush1.msra.mxu0 0.0
  %476 = vmatprep.subr.mxu0 0.0
  %477 = vmatpush1.msra.mxu0 0.0
  %478 = vmatprep.subr.mxu0 0.0
  %479 = vmatpush1.msra.mxu0 0.0
  %480 = vmatprep.subr.mxu0 0.0
  %481 = vmatpush1.msra.mxu0 0.0
  %482 = vmatprep.subr.mxu0 0.0
  %483 = vmatpush1.msra.mxu0 0.0
  %484 = vmatprep.subr.mxu0 0.0
  %485 = vmatpush1.msra.mxu0 0.0
  %486 = vmatprep.subr.mxu0 0.0
  %487 = vmatpush1.msra.mxu0 0.0
  %488 = vmatprep.subr.mxu0 0.0
  %489 = vmatpush1.msra.mxu0 0.0
  %490 = vmatprep.subr.mxu0 0.0
  %491 = vmatpush1.msra.mxu0 0.0
  %492 = vmatprep.subr.mxu0 0.0
  %493 = vmatpush1.msra.mxu0 0.0
  %494 = vmatprep.subr.mxu0 0.0
  %495 = vmatpush1.msra.mxu0 0.0
  %496 = vmatprep.subr.mxu0 0.0
  %497 = vmatpush1.msra.mxu0 0.0
  %498 = vmatprep.subr.mxu0 0.0
  %499 = vmatpush1.msra.mxu0 0.0
  %500 = vmatprep.subr.mxu0 0.0
  %501 = vmatpush1.msra.mxu0 0.0
  %502 = vmatprep.subr.mxu0 0.0
  %503 = vmatpush1.msra.mxu0 0.0
  %504 = vmatprep.subr.mxu0 0.0
  %505 = vmatpush1.msra.mxu0 0.0
  %506 = vmatprep.mubr.f32.mxu0 0.0
  %507 = vmatmul.mubr.f32.gmra.mrb[0].mxu0 %v425
  %v508 = vpop.f32.mrb[0].mxu0
  %v509 = vadd.f32 %v76, %v508
  %v510 = vpop.f32.mrb[0].mxu0
  %511 = vdwg.mxu0
  %v512 = vmax.f32 %v509, 0.0
  %v513 = vld [vmem:[%s7] sm:$0xff]
  %v514 = vld [vmem:[%s7 + $0x8] sm:$0xff]
  %v515 = vld [vmem:[%s7 + $0x10] sm:$0xff]
  %v516 = vld [vmem:[%s7 + $0x18] sm:$0xff]
  %v518 = vsel %vm141, %v512, 0
  %520 = vmatprep.subr.mxu0 0.0
  %521 = vmatpush1.msra.mxu0 %v513
  %522 = vmatprep.subr.mxu0 0.0
  %523 = vmatpush1.msra.mxu0 %v514
  %524 = vmatprep.subr.mxu0 0.0
  %525 = vmatpush1.msra.mxu0 %v515
  %526 = vmatprep.subr.mxu0 0.0
  %527 = vmatpush1.msra.mxu0 %v516
  %528 = vmatprep.subr.mxu0 0.0
  %529 = vmatpush1.msra.mxu0 0.0
  %530 = vmatprep.subr.mxu0 0.0
  %531 = vmatpush1.msra.mxu0 0.0
  %532 = vmatprep.subr.mxu0 0.0
  %533 = vmatpush1.msra.mxu0 0.0
  %534 = vmatprep.subr.mxu0 0.0
  %535 = vmatpush1.msra.mxu0 0.0
  %536 = vmatprep.subr.mxu0 0.0
  %537 = vmatpush1.msra.mxu0 0.0
  %538 = vmatprep.subr.mxu0 0.0
  %539 = vmatpush1.msra.mxu0 0.0
  %540 = vmatprep.subr.mxu0 0.0
  %541 = vmatpush1.msra.mxu0 0.0
  %542 = vmatprep.subr.mxu0 0.0
  %543 = vmatpush1.msra.mxu0 0.0
  %544 = vmatprep.subr.mxu0 0.0
  %545 = vmatpush1.msra.mxu0 0.0
  %546 = vmatprep.subr.mxu0 0.0
  %547 = vmatpush1.msra.mxu0 0.0
  %548 = vmatprep.subr.mxu0 0.0
  %549 = vmatpush1.msra.mxu0 0.0
  %550 = vmatprep.subr.mxu0 0.0
  %551 = vmatpush1.msra.mxu0 0.0
  %552 = vmatprep.subr.mxu0 0.0
  %553 = vmatpush1.msra.mxu0 0.0
  %554 = vmatprep.subr.mxu0 0.0
  %555 = vmatpush1.msra.mxu0 0.0
  %556 = vmatprep.subr.mxu0 0.0
  %557 = vmatpush1.msra.mxu0 0.0
  %558 = vmatprep.subr.mxu0 0.0
  %559 = vmatpush1.msra.mxu0 0.0
  %560 = vmatprep.subr.mxu0 0.0
  %561 = vmatpush1.msra.mxu0 0.0
  %562 = vmatprep.subr.mxu0 0.0
  %563 = vmatpush1.msra.mxu0 0.0
  %564 = vmatprep.subr.mxu0 0.0
  %565 = vmatpush1.msra.mxu0 0.0
  %566 = vmatprep.subr.mxu0 0.0
  %567 = vmatpush1.msra.mxu0 0.0
  %568 = vmatprep.subr.mxu0 0.0
  %569 = vmatpush1.msra.mxu0 0.0
  %570 = vmatprep.subr.mxu0 0.0
  %571 = vmatpush1.msra.mxu0 0.0
  %572 = vmatprep.subr.mxu0 0.0
  %573 = vmatpush1.msra.mxu0 0.0
  %574 = vmatprep.subr.mxu0 0.0
  %575 = vmatpush1.msra.mxu0 0.0
  %576 = vmatprep.subr.mxu0 0.0
  %577 = vmatpush1.msra.mxu0 0.0
  %578 = vmatprep.subr.mxu0 0.0
  %579 = vmatpush1.msra.mxu0 0.0
  %580 = vmatprep.subr.mxu0 0.0
  %581 = vmatpush1.msra.mxu0 0.0
  %582 = vmatprep.subr.mxu0 0.0
  %583 = vmatpush1.msra.mxu0 0.0
  %584 = vmatprep.mubr.f32.mxu0 0.0
  %585 = vmatmul.mubr.f32.gmra.mrb[0].mxu0 %v518
  %v586 = vpop.f32.mrb[0].mxu0
  %v587 = vadd.f32 %v83, %v586
  %v588 = vpop.f32.mrb[0].mxu0
  %589 = vdwg.mxu0
  %590 = vmax.xlane.f32.xlu0 %v587
  %v591 = vpop.xlane.xlu0 %590
  %v592 = vsub.f32 %v587, %v591
  %v593 = vmul.f32 %v592, 1.442695
  %v594 = vpow.pop %v593
  %595 = vadd.xlane.f32.xlu0 %v594
  %v596 = vpop.xlane.xlu0 %595
  %v597 = vrcp.pop %v596
  %v598 = vmul.f32 %v594, %v597
  %v599 = vmul.f32 %v598, %v425
  %v600 = vld [vmem:[%s9] sm:$0xff]
  %v601 = vld [vmem:[%s9 + $0x8] sm:$0xff]
  %v602 = vld [vmem:[%s9 + $0x10] sm:$0xff]
  %v603 = vld [vmem:[%s9 + $0x18] sm:$0xff]
  %v604 = vld [vmem:[%s9 + $0x20] sm:$0xff]
  %v605 = vld [vmem:[%s9 + $0x28] sm:$0xff]
  %v606 = vld [vmem:[%s9 + $0x30] sm:$0xff]
  %v607 = vld [vmem:[%s9 + $0x38] sm:$0xff]
  %v608 = vld [vmem:[%s9 + $0x40] sm:$0xff]
  %v609 = vld [vmem:[%s9 + $0x48] sm:$0xff]
  %v610 = vld [vmem:[%s9 + $0x50] sm:$0xff]
  %v611 = vld [vmem:[%s9 + $0x58] sm:$0xff]
  %v612 = vld [vmem:[%s9 + $0x60] sm:$0xff]
  %v613 = vld [vmem:[%s9 + $0x68] sm:$0xff]
  %v614 = vld [vmem:[%s9 + $0x70] sm:$0xff]
  %v615 = vld [vmem:[%s9 + $0x78] sm:$0xff]
  %616 = vmatprep.subr.mxu0 0.0
  %617 = vmatpush1.msra.mxu0 %v600
  %618 = vmatprep.subr.mxu0 0.0
  %619 = vmatpush1.msra.mxu0 %v601
  %620 = vmatprep.subr.mxu0 0.0
  %621 = vmatpush1.msra.mxu0 %v602
  %622 = vmatprep.subr.mxu0 0.0
  %623 = vmatpush1.msra.mxu0 %v603
  %624 = vmatprep.subr.mxu0 0.0
  %625 = vmatpush1.msra.mxu0 %v604
  %626 = vmatprep.subr.mxu0 0.0
  %627 = vmatpush1.msra.mxu0 %v605
  %628 = vmatprep.subr.mxu0 0.0
  %629 = vmatpush1.msra.mxu0 %v606
  %630 = vmatprep.subr.mxu0 0.0
  %631 = vmatpush1.msra.mxu0 %v607
  %632 = vmatprep.subr.mxu0 0.0
  %633 = vmatpush1.msra.mxu0 %v608
  %634 = vmatprep.subr.mxu0 0.0
  %635 = vmatpush1.msra.mxu0 %v609
  %636 = vmatprep.subr.mxu0 0.0
  %637 = vmatpush1.msra.mxu0 %v610
  %638 = vmatprep.subr.mxu0 0.0
  %639 = vmatpush1.msra.mxu0 %v611
  %640 = vmatprep.subr.mxu0 0.0
  %641 = vmatpush1.msra.mxu0 %v612
  %642 = vmatprep.subr.mxu0 0.0
  %643 = vmatpush1.msra.mxu0 %v613
  %644 = vmatprep.subr.mxu0 0.0
  %645 = vmatpush1.msra.mxu0 %v614
  %646 = vmatprep.subr.mxu0 0.0
  %647 = vmatpush1.msra.mxu0 %v615
  %648 = vmatprep.subr.mxu0 0.0
  %649 = vmatpush1.msra.mxu0 0.0
  %650 = vmatprep.subr.mxu0 0.0
  %651 = vmatpush1.msra.mxu0 0.0
  %652 = vmatprep.subr.mxu0 0.0
  %653 = vmatpush1.msra.mxu0 0.0
  %654 = vmatprep.subr.mxu0 0.0
  %655 = vmatpush1.msra.mxu0 0.0
  %656 = vmatprep.subr.mxu0 0.0
  %657 = vmatpush1.msra.mxu0 0.0
  %658 = vmatprep.subr.mxu0 0.0
  %659 = vmatpush1.msra.mxu0 0.0
  %660 = vmatprep.subr.mxu0 0.0
  %661 = vmatpush1.msra.mxu0 0.0
  %662 = vmatprep.subr.mxu0 0.0
  %663 = vmatpush1.msra.mxu0 0.0
  %664 = vmatprep.subr.mxu0 0.0
  %665 = vmatpush1.msra.mxu0 0.0
  %666 = vmatprep.subr.mxu0 0.0
  %667 = vmatpush1.msra.mxu0 0.0
  %668 = vmatprep.subr.mxu0 0.0
  %669 = vmatpush1.msra.mxu0 0.0
  %670 = vmatprep.subr.mxu0 0.0
  %671 = vmatpush1.msra.mxu0 0.0
  %672 = vmatprep.subr.mxu0 0.0
  %673 = vmatpush1.msra.mxu0 0.0
  %674 = vmatprep.subr.mxu0 0.0
  %675 = vmatpush1.msra.mxu0 0.0
  %676 = vmatprep.subr.mxu0 0.0
  %677 = vmatpush1.msra.mxu0 0.0
  %678 = vmatprep.subr.mxu0 0.0
  %679 = vmatpush1.msra.mxu0 0.0
  %680 = vmatprep.mubr.f32.mxu0 0.0
  %681 = vmatmul.mubr.f32.gmra.mrb[0].mxu0 %v599
  %v682 = vpop.f32.mrb[0].mxu0
  %v683 = vadd.f32 %v90, %v682
  %v684 = vpop.f32.mrb[0].mxu0
  %685 = vdwg.mxu0
  %v686 = vmax.f32 %v683, 0.0
  %v687 = vld [vmem:[%s11] sm:$0xff]
  %v688 = vld [vmem:[%s11 + $0x8] sm:$0xff]
  %v689 = vld [vmem:[%s11 + $0x10] sm:$0xff]
  %v690 = vld [vmem:[%s11 + $0x18] sm:$0xff]
  %v692 = vsel %vm141, %v686, 0
  %694 = vmatprep.subr.mxu0 0.0
  %695 = vmatpush1.msra.mxu0 %v687
  %696 = vmatprep.subr.mxu0 0.0
  %697 = vmatpush1.msra.mxu0 %v688
  %698 = vmatprep.subr.mxu0 0.0
  %699 = vmatpush1.msra.mxu0 %v689
  %700 = vmatprep.subr.mxu0 0.0
  %701 = vmatpush1.msra.mxu0 %v690
  %702 = vmatprep.subr.mxu0 0.0
  %703 = vmatpush1.msra.mxu0 0.0
  %704 = vmatprep.subr.mxu0 0.0
  %705 = vmatpush1.msra.mxu0 0.0
  %706 = vmatprep.subr.mxu0 0.0
  %707 = vmatpush1.msra.mxu0 0.0
  %708 = vmatprep.subr.mxu0 0.0
  %709 = vmatpush1.msra.mxu0 0.0
  %710 = vmatprep.subr.mxu0 0.0
  %711 = vmatpush1.msra.mxu0 0.0
  %712 = vmatprep.subr.mxu0 0.0
  %713 = vmatpush1.msra.mxu0 0.0
  %714 = vmatprep.subr.mxu0 0.0
  %715 = vmatpush1.msra.mxu0 0.0
  %716 = vmatprep.subr.mxu0 0.0
  %717 = vmatpush1.msra.mxu0 0.0
  %718 = vmatprep.subr.mxu0 0.0
  %719 = vmatpush1.msra.mxu0 0.0
  %720 = vmatprep.subr.mxu0 0.0
  %721 = vmatpush1.msra.mxu0 0.0
  %722 = vmatprep.subr.mxu0 0.0
  %723 = vmatpush1.msra.mxu0 0.0
  %724 = vmatprep.subr.mxu0 0.0
  %725 = vmatpush1.msra.mxu0 0.0
  %726 = vmatprep.subr.mxu0 0.0
  %727 = vmatpush1.msra.mxu0 0.0
  %728 = vmatprep.subr.mxu0 0.0
  %729 = vmatpush1.msra.mxu0 0.0
  %730 = vmatprep.subr.mxu0 0.0
  %731 = vmatpush1.msra.mxu0 0.0
  %732 = vmatprep.subr.mxu0 0.0
  %733 = vmatpush1.msra.mxu0 0.0
  %734 = vmatprep.subr.mxu0 0.0
  %735 = vmatpush1.msra.mxu0 0.0
  %736 = vmatprep.subr.mxu0 0.0
  %737 = vmatpush1.msra.mxu0 0.0
  %738 = vmatprep.subr.mxu0 0.0
  %739 = vmatpush1.msra.mxu0 0.0
  %740 = vmatprep.subr.mxu0 0.0
  %741 = vmatpush1.msra.mxu0 0.0
  %742 = vmatprep.subr.mxu0 0.0
  %743 = vmatpush1.msra.mxu0 0.0
  %744 = vmatprep.subr.mxu0 0.0
  %745 = vmatpush1.msra.mxu0 0.0
  %746 = vmatprep.subr.mxu0 0.0
  %747 = vmatpush1.msra.mxu0 0.0
  %748 = vmatprep.subr.mxu0 0.0
  %749 = vmatpush1.msra.mxu0 0.0
  %750 = vmatprep.subr.mxu0 0.0
  %751 = vmatpush1.msra.mxu0 0.0
  %752 = vmatprep.subr.mxu0 0.0
  %753 = vmatpush1.msra.mxu0 0.0
  %754 = vmatprep.subr.mxu0 0.0
  %755 = vmatpush1.msra.mxu0 0.0
  %756 = vmatprep.subr.mxu0 0.0
  %757 = vmatpush1.msra.mxu0 0.0
  %758 = vmatprep.mubr.f32.mxu0 0.0
  %759 = vmatmul.mubr.f32.gmra.mrb[0].mxu0 %v692
  %v760 = vpop.f32.mrb[0].mxu0
  %v761 = vadd.f32 %v97, %v760
  %v762 = vpop.f32.mrb[0].mxu0
  %763 = vdwg.mxu0
  %v764 = vtanh.pop %v761
  %v765 = vld [vmem:[%s13] sm:$0xff]
  %v766 = vld [vmem:[%s13 + $0x8] sm:$0xff]
  %v767 = vld [vmem:[%s13 + $0x10] sm:$0xff]
  %v768 = vld [vmem:[%s13 + $0x18] sm:$0xff]
  %v769 = vld [vmem:[%s13 + $0x20] sm:$0xff]
  %v770 = vld [vmem:[%s13 + $0x28] sm:$0xff]
  %v771 = vld [vmem:[%s13 + $0x30] sm:$0xff]
  %v772 = vld [vmem:[%s13 + $0x38] sm:$0xff]
  %v773 = vld [vmem:[%s13 + $0x40] sm:$0xff]
  %v774 = vld [vmem:[%s13 + $0x48] sm:$0xff]
  %v775 = vld [vmem:[%s13 + $0x50] sm:$0xff]
  %v776 = vld [vmem:[%s13 + $0x58] sm:$0xff]
  %v777 = vld [vmem:[%s13 + $0x60] sm:$0xff]
  %v778 = vld [vmem:[%s13 + $0x68] sm:$0xff]
  %v779 = vld [vmem:[%s13 + $0x70] sm:$0xff]
  %v780 = vld [vmem:[%s13 + $0x78] sm:$0xff]
  %v781 = vld [vmem:[%s14] sm:$0xff]
  %v782 = vld [vmem:[%s14 + $0x8] sm:$0xff]
  %v783 = vld [vmem:[%s14 + $0x10] sm:$0xff]
  %v784 = vld [vmem:[%s14 + $0x18] sm:$0xff]
  %v785 = vld [vmem:[%s14 + $0x20] sm:$0xff]
  %v786 = vld [vmem:[%s14 + $0x28] sm:$0xff]
  %v787 = vld [vmem:[%s14 + $0x30] sm:$0xff]
  %v788 = vld [vmem:[%s14 + $0x38] sm:$0xff]
  %v789 = vsel %vm314, %v406, 0
  %791 = vmatprep.subr.mxu0 0.0
  %792 = vmatpush1.msra.mxu0 %v781
  %793 = vmatprep.subr.mxu0 0.0
  %794 = vmatpush1.msra.mxu0 %v782
  %795 = vmatprep.subr.mxu0 0.0
  %796 = vmatpush1.msra.mxu0 %v783
  %797 = vmatprep.subr.mxu0 0.0
  %798 = vmatpush1.msra.mxu0 %v784
  %799 = vmatprep.subr.mxu0 0.0
  %800 = vmatpush1.msra.mxu0 %v785
  %801 = vmatprep.subr.mxu0 0.0
  %802 = vmatpush1.msra.mxu0 %v786
  %803 = vmatprep.subr.mxu0 0.0
  %804 = vmatpush1.msra.mxu0 %v787
  %805 = vmatprep.subr.mxu0 0.0
  %806 = vmatpush1.msra.mxu0 %v788
  %807 = vmatprep.subr.mxu0 0.0
  %808 = vmatpush1.msra.mxu0 0.0
  %809 = vmatprep.subr.mxu0 0.0
  %810 = vmatpush1.msra.mxu0 0.0
  %811 = vmatprep.subr.mxu0 0.0
  %812 = vmatpush1.msra.mxu0 0.0
  %813 = vmatprep.subr.mxu0 0.0
  %814 = vmatpush1.msra.mxu0 0.0
  %815 = vmatprep.subr.mxu0 0.0
  %816 = vmatpush1.msra.mxu0 0.0
  %817 = vmatprep.subr.mxu0 0.0
  %818 = vmatpush1.msra.mxu0 0.0
  %819 = vmatprep.subr.mxu0 0.0
  %820 = vmatpush1.msra.mxu0 0.0
  %821 = vmatprep.subr.mxu0 0.0
  %822 = vmatpush1.msra.mxu0 0.0
  %823 = vmatprep.subr.mxu0 0.0
  %824 = vmatpush1.msra.mxu0 0.0
  %825 = vmatprep.subr.mxu0 0.0
  %826 = vmatpush1.msra.mxu0 0.0
  %827 = vmatprep.subr.mxu0 0.0
  %828 = vmatpush1.msra.mxu0 0.0
  %829 = vmatprep.subr.mxu0 0.0
  %830 = vmatpush1.msra.mxu0 0.0
  %831 = vmatprep.subr.mxu0 0.0
  %832 = vmatpush1.msra.mxu0 0.0
  %833 = vmatprep.subr.mxu0 0.0
  %834 = vmatpush1.msra.mxu0 0.0
  %835 = vmatprep.subr.mxu0 0.0
  %836 = vmatpush1.msra.mxu0 0.0
  %837 = vmatprep.subr.mxu0 0.0
  %838 = vmatpush1.msra.mxu0 0.0
  %839 = vmatprep.subr.mxu0 0.0
  %840 = vmatpush1.msra.mxu0 0.0
  %841 = vmatprep.subr.mxu0 0.0
  %842 = vmatpush1.msra.mxu0 0.0
  %843 = vmatprep.subr.mxu0 0.0
  %844 = vmatpush1.msra.mxu0 0.0
  %845 = vmatprep.subr.mxu0 0.0
  %846 = vmatpush1.msra.mxu0 0.0
  %847 = vmatprep.subr.mxu0 0.0
  %848 = vmatpush1.msra.mxu0 0.0
  %849 = vmatprep.subr.mxu0 0.0
  %850 = vmatpush1.msra.mxu0 0.0
  %851 = vmatprep.subr.mxu0 0.0
  %852 = vmatpush1.msra.mxu0 0.0
  %853 = vmatprep.subr.mxu0 0.0
  %854 = vmatpush1.msra.mxu0 0.0
  %855 = vmatprep.mubr.f32.mxu0 0.0
  %856 = vmatmul.mubr.f32.gmra.mrb[0].mxu0 %v789
  %v857 = vpop.f32.mrb[0].mxu0
  %v858 = vadd.f32 0.0, %v857
  %v859 = vpop.f32.mrb[0].mxu0
  %860 = vdwg.mxu0
  %861 = vmatprep.subr.mxu0 0.0
  %862 = vmatpush1.msra.mxu0 %v765
  %863 = vmatprep.subr.mxu0 0.0
  %864 = vmatpush1.msra.mxu0 %v766
  %865 = vmatprep.subr.mxu0 0.0
  %866 = vmatpush1.msra.mxu0 %v767
  %867 = vmatprep.subr.mxu0 0.0
  %868 = vmatpush1.msra.mxu0 %v768
  %869 = vmatprep.subr.mxu0 0.0
  %870 = vmatpush1.msra.mxu0 %v769
  %871 = vmatprep.subr.mxu0 0.0
  %872 = vmatpush1.msra.mxu0 %v770
  %873 = vmatprep.subr.mxu0 0.0
  %874 = vmatpush1.msra.mxu0 %v771
  %875 = vmatprep.subr.mxu0 0.0
  %876 = vmatpush1.msra.mxu0 %v772
  %877 = vmatprep.subr.mxu0 0.0
  %878 = vmatpush1.msra.mxu0 %v773
  %879 = vmatprep.subr.mxu0 0.0
  %880 = vmatpush1.msra.mxu0 %v774
  %881 = vmatprep.subr.mxu0 0.0
  %882 = vmatpush1.msra.mxu0 %v775
  %883 = vmatprep.subr.mxu0 0.0
  %884 = vmatpush1.msra.mxu0 %v776
  %885 = vmatprep.subr.mxu0 0.0
  %886 = vmatpush1.msra.mxu0 %v777
  %887 = vmatprep.subr.mxu0 0.0
  %888 = vmatpush1.msra.mxu0 %v778
  %889 = vmatprep.subr.mxu0 0.0
  %890 = vmatpush1.msra.mxu0 %v779
  %891 = vmatprep.subr.mxu0 0.0
  %892 = vmatpush1.msra.mxu0 %v780
  %893 = vmatprep.subr.mxu0 0.0
  %894 = vmatpush1.msra.mxu0 0.0
  %895 = vmatprep.subr.mxu0 0.0
  %896 = vmatpush1.msra.mxu0 0.0
  %897 = vmatprep.subr.mxu0 0.0
  %898 = vmatpush1.msra.mxu0 0.0
  %899 = vmatprep.subr.mxu0 0.0
  %900 = vmatpush1.msra.mxu0 0.0
  %901 = vmatprep.subr.mxu0 0.0
  %902 = vmatpush1.msra.mxu0 0.0
  %903 = vmatprep.subr.mxu0 0.0
  %904 = vmatpush1.msra.mxu0 0.0
  %905 = vmatprep.subr.mxu0 0.0
  %906 = vmatpush1.msra.mxu0 0.0
  %907 = vmatprep.subr.mxu0 0.0
  %908 = vmatpush1.msra.mxu0 0.0
  %909 = vmatprep.subr.mxu0 0.0
  %910 = vmatpush1.msra.mxu0 0.0
  %911 = vmatprep.subr.mxu0 0.0
  %912 = vmatpush1.msra.mxu0 0.0
  %913 = vmatprep.subr.mxu0 0.0
  %914 = vmatpush1.msra.mxu0 0.0
  %915 = vmatprep.subr.mxu0 0.0
  %916 = vmatpush1.msra.mxu0 0.0
  %917 = vmatprep.subr.mxu0 0.0
  %918 = vmatpush1.msra.mxu0 0.0
  %919 = vmatprep.subr.mxu0 0.0
  %920 = vmatpush1.msra.mxu0 0.0
  %921 = vmatprep.subr.mxu0 0.0
  %922 = vmatpush1.msra.mxu0 0.0
  %923 = vmatprep.subr.mxu0 0.0
  %924 = vmatpush1.msra.mxu0 0.0
  %925 = vmatprep.mubr.f32.mxu0 0.0
  %926 = vmatmul.mubr.f32.gmra.mrb[0].mxu0 %v599
  %v927 = vpop.f32.mrb[0].mxu0
  %v928 = vadd.f32 %v858, %v927
  %v929 = vpop.f32.mrb[0].mxu0
  %930 = vdwg.mxu0
  %v931 = vadd.f32 %v928, %v104
  %v932 = vmax.f32 %v931, 0.0
  %v933 = vld [vmem:[%s16] sm:$0xff]
  %v934 = vld [vmem:[%s16 + $0x8] sm:$0xff]
  %v935 = vld [vmem:[%s16 + $0x10] sm:$0xff]
  %v936 = vld [vmem:[%s16 + $0x18] sm:$0xff]
  %v937 = vld [vmem:[%s16 + $0x20] sm:$0xff]
  %v938 = vld [vmem:[%s16 + $0x28] sm:$0xff]
  %v939 = vld [vmem:[%s16 + $0x30] sm:$0xff]
  %v940 = vld [vmem:[%s16 + $0x38] sm:$0xff]
  %v942 = vsel %vm314, %v932, 0
  %944 = vmatprep.subr.mxu0 0.0
  %945 = vmatpush1.msra.mxu0 %v933
  %946 = vmatprep.subr.mxu0 0.0
  %947 = vmatpush1.msra.mxu0 %v934
  %948 = vmatprep.subr.mxu0 0.0
  %949 = vmatpush1.msra.mxu0 %v935
  %950 = vmatprep.subr.mxu0 0.0
  %951 = vmatpush1.msra.mxu0 %v936
  %952 = vmatprep.subr.mxu0 0.0
  %953 = vmatpush1.msra.mxu0 %v937
  %954 = vmatprep.subr.mxu0 0.0
  %955 = vmatpush1.msra.mxu0 %v938
  %956 = vmatprep.subr.mxu0 0.0
  %957 = vmatpush1.msra.mxu0 %v939
  %958 = vmatprep.subr.mxu0 0.0
  %959 = vmatpush1.msra.mxu0 %v940
  %960 = vmatprep.subr.mxu0 0.0
  %961 = vmatpush1.msra.mxu0 0.0
  %962 = vmatprep.subr.mxu0 0.0
  %963 = vmatpush1.msra.mxu0 0.0
  %964 = vmatprep.subr.mxu0 0.0
  %965 = vmatpush1.msra.mxu0 0.0
  %966 = vmatprep.subr.mxu0 0.0
  %967 = vmatpush1.msra.mxu0 0.0
  %968 = vmatprep.subr.mxu0 0.0
  %969 = vmatpush1.msra.mxu0 0.0
  %970 = vmatprep.subr.mxu0 0.0
  %971 = vmatpush1.msra.mxu0 0.0
  %972 = vmatprep.subr.mxu0 0.0
  %973 = vmatpush1.msra.mxu0 0.0
  %974 = vmatprep.subr.mxu0 0.0
  %975 = vmatpush1.msra.mxu0 0.0
  %976 = vmatprep.subr.mxu0 0.0
  %977 = vmatpush1.msra.mxu0 0.0
  %978 = vmatprep.subr.mxu0 0.0
  %979 = vmatpush1.msra.mxu0 0.0
  %980 = vmatprep.subr.mxu0 0.0
  %981 = vmatpush1.msra.mxu0 0.0
  %982 = vmatprep.subr.mxu0 0.0
  %983 = vmatpush1.msra.mxu0 0.0
  %984 = vmatprep.subr.mxu0 0.0
  %985 = vmatpush1.msra.mxu0 0.0
  %986 = vmatprep.subr.mxu0 0.0
  %987 = vmatpush1.msra.mxu0 0.0
  %988 = vmatprep.subr.mxu0 0.0
  %989 = vmatpush1.msra.mxu0 0.0
  %990 = vmatprep.subr.mxu0 0.0
  %991 = vmatpush1.msra.mxu0 0.0
  %992 = vmatprep.subr.mxu0 0.0
  %993 = vmatpush1.msra.mxu0 0.0
  %994 = vmatprep.subr.mxu0 0.0
  %995 = vmatpush1.msra.mxu0 0.0
  %996 = vmatprep.subr.mxu0 0.0
  %997 = vmatpush1.msra.mxu0 0.0
  %998 = vmatprep.subr.mxu0 0.0
  %999 = vmatpush1.msra.mxu0 0.0
  %1000 = vmatprep.subr.mxu0 0.0
  %1001 = vmatpush1.msra.mxu0 0.0
  %1002 = vmatprep.subr.mxu0 0.0
  %1003 = vmatpush1.msra.mxu0 0.0
  %1004 = vmatprep.subr.mxu0 0.0
  %1005 = vmatpush1.msra.mxu0 0.0
  %1006 = vmatprep.subr.mxu0 0.0
  %1007 = vmatpush1.msra.mxu0 0.0
  %1008 = vmatprep.mubr.f32.mxu0 0.0
  %1009 = vmatmul.mubr.f32.gmra.mrb[0].mxu0 %v942
  %v1010 = vpop.f32.mrb[0].mxu0
  %v1011 = vadd.f32 %v111, %v1010
  %v1012 = vpop.f32.mrb[0].mxu0
  %1013 = vdwg.mxu0
  %v1014 = vxor.u32 %v1011, 2147483648
  %v1015 = vmul.f32 %v1014, 1.442695
  %v1016 = vpow.pop %v1015
  %v1017 = vadd.f32 %v1016, 1.0
  %v1018 = vrcp.pop %v1017
  %v1019 = vmul.f32 1.0, %v1018
  %v1020 = vmul.f32 %v1019, %v406
  %1022 = vrot.lane.b32.xlu0 %v764, 64
  %v1023 = vpop.permute.xlu0 %1022
  %v1025 = vmul.f32 %v1019, %v1023
  %1027 = vrot.lane.b32.xlu0 %v1025, 64
  %v1028 = vpop.permute.xlu0 %1027
  %v1030 = vadd.f32 %v1020, %v1028
  %v1031 = vld [vmem:[#allocation2 + $0x10] sm:$0xff]
  %v1032 = vld [vmem:[#allocation2 + $0x18] sm:$0xff]
  %v1034 = vsel %vm314, %v424, 0
  %1036 = vmatprep.subr.mxu0 %v299
  %1037 = vmatpush1.msra.mxu0 %v298
  %1038 = vmatprep.subr.mxu0 %v301
  %1039 = vmatpush1.msra.mxu0 %v300
  %1040 = vmatprep.subr.mxu0 %v303
  %1041 = vmatpush1.msra.mxu0 %v302
  %1042 = vmatprep.subr.mxu0 %v305
  %1043 = vmatpush1.msra.mxu0 %v304
  %1044 = vmatprep.subr.mxu0 %v307
  %1045 = vmatpush1.msra.mxu0 %v306
  %1046 = vmatprep.subr.mxu0 %v309
  %1047 = vmatpush1.msra.mxu0 %v308
  %1048 = vmatprep.subr.mxu0 %v311
  %1049 = vmatpush1.msra.mxu0 %v310
  %1050 = vmatprep.subr.mxu0 %v313
  %1051 = vmatpush1.msra.mxu0 %v312
  %1052 = vmatprep.subr.mxu0 0.0
  %1053 = vmatpush1.msra.mxu0 0.0
  %1054 = vmatprep.subr.mxu0 0.0
  %1055 = vmatpush1.msra.mxu0 0.0
  %1056 = vmatprep.subr.mxu0 0.0
  %1057 = vmatpush1.msra.mxu0 0.0
  %1058 = vmatprep.subr.mxu0 0.0
  %1059 = vmatpush1.msra.mxu0 0.0
  %1060 = vmatprep.subr.mxu0 0.0
  %1061 = vmatpush1.msra.mxu0 0.0
  %1062 = vmatprep.subr.mxu0 0.0
  %1063 = vmatpush1.msra.mxu0 0.0
  %1064 = vmatprep.subr.mxu0 0.0
  %1065 = vmatpush1.msra.mxu0 0.0
  %1066 = vmatprep.subr.mxu0 0.0
  %1067 = vmatpush1.msra.mxu0 0.0
  %1068 = vmatprep.subr.mxu0 0.0
  %1069 = vmatpush1.msra.mxu0 0.0
  %1070 = vmatprep.subr.mxu0 0.0
  %1071 = vmatpush1.msra.mxu0 0.0
  %1072 = vmatprep.subr.mxu0 0.0
  %1073 = vmatpush1.msra.mxu0 0.0
  %1074 = vmatprep.subr.mxu0 0.0
  %1075 = vmatpush1.msra.mxu0 0.0
  %1076 = vmatprep.subr.mxu0 0.0
  %1077 = vmatpush1.msra.mxu0 0.0
  %1078 = vmatprep.subr.mxu0 0.0
  %1079 = vmatpush1.msra.mxu0 0.0
  %1080 = vmatprep.subr.mxu0 0.0
  %1081 = vmatpush1.msra.mxu0 0.0
  %1082 = vmatprep.subr.mxu0 0.0
  %1083 = vmatpush1.msra.mxu0 0.0
  %1084 = vmatprep.subr.mxu0 0.0
  %1085 = vmatpush1.msra.mxu0 0.0
  %1086 = vmatprep.subr.mxu0 0.0
  %1087 = vmatpush1.msra.mxu0 0.0
  %1088 = vmatprep.subr.mxu0 0.0
  %1089 = vmatpush1.msra.mxu0 0.0
  %1090 = vmatprep.subr.mxu0 0.0
  %1091 = vmatpush1.msra.mxu0 0.0
  %1092 = vmatprep.subr.mxu0 0.0
  %1093 = vmatpush1.msra.mxu0 0.0
  %1094 = vmatprep.subr.mxu0 0.0
  %1095 = vmatpush1.msra.mxu0 0.0
  %1096 = vmatprep.subr.mxu0 0.0
  %1097 = vmatpush1.msra.mxu0 0.0
  %1098 = vmatprep.subr.mxu0 0.0
  %1099 = vmatpush1.msra.mxu0 0.0
  %1100 = vmatprep.mubr.f32.mxu0 0.0
  %1101 = vmatmul.mubr.f32.gmra.mrb[0].mxu0 %v1034
  %v1102 = vpop.f32.mrb[0].mxu0
  %v1103 = vadd.f32 0.0, %v1102
  %v1104 = vpop.f32.mrb[0].mxu0
  %v1105 = vadd.f32 0.0, %v1104
  %1106 = vdwg.mxu0
  %v1107 = vadd.f32 %v1031, %v1103
  %v1108 = vadd.f32 %v1032, %v1105
  %v1109 = vxor.u32 %v1107, 2147483648
  %v1110 = vxor.u32 %v1108, 2147483648
  %v1111 = vmul.f32 %v1109, 1.442695
  %v1112 = vpow.pop %v1111
  %v1113 = vmul.f32 %v1110, 1.442695
  %v1114 = vpow.pop %v1113
  %v1115 = vadd.f32 %v1112, 1.0
  %v1116 = vadd.f32 %v1114, 1.0
  %v1117 = vrcp.pop %v1115
  %v1118 = vmul.f32 1.0, %v1117
  %v1119 = vrcp.pop %v1116
  %v1120 = vmul.f32 1.0, %v1119
  %v1121 = vtanh.pop %v1108
  %v1122 = vmul.f32 %v1118, %v418
  %1124 = vrot.lane.b32.xlu0 %v1121, 64
  %v1125 = vpop.permute.xlu0 %1124
  %v1127 = vmul.f32 %v1118, %v1125
  %1129 = vrot.lane.b32.xlu0 %v1127, 64
  %v1130 = vpop.permute.xlu0 %1129
  %v1132 = vadd.f32 %v1122, %v1130
  %v1133 = vtanh.pop %v1132
  %1135 = vrot.lane.b32.xlu0 %v1133, 64
  %v1136 = vpop.permute.xlu0 %1135
  %v1138 = vmul.f32 %v1120, %v1136
  %1140 = vrot.lane.b32.xlu0 %v418, 64
  %v1141 = vpop.permute.xlu0 %1140
  %v1143 = vsel %vm314, %v1141, %v1132
  %1144 = vmatprep.subr.mxu0 0.0
  %1145 = vmatpush1.msra.mxu0 %v426
  %1146 = vmatprep.subr.mxu0 0.0
  %1147 = vmatpush1.msra.mxu0 %v427
  %1148 = vmatprep.subr.mxu0 0.0
  %1149 = vmatpush1.msra.mxu0 %v428
  %1150 = vmatprep.subr.mxu0 0.0
  %1151 = vmatpush1.msra.mxu0 %v429
  %1152 = vmatprep.subr.mxu0 0.0
  %1153 = vmatpush1.msra.mxu0 %v430
  %1154 = vmatprep.subr.mxu0 0.0
  %1155 = vmatpush1.msra.mxu0 %v431
  %1156 = vmatprep.subr.mxu0 0.0
  %1157 = vmatpush1.msra.mxu0 %v432
  %1158 = vmatprep.subr.mxu0 0.0
  %1159 = vmatpush1.msra.mxu0 %v433
  %1160 = vmatprep.subr.mxu0 0.0
  %1161 = vmatpush1.msra.mxu0 %v434
  %1162 = vmatprep.subr.mxu0 0.0
  %1163 = vmatpush1.msra.mxu0 %v435
  %1164 = vmatprep.subr.mxu0 0.0
  %1165 = vmatpush1.msra.mxu0 %v436
  %1166 = vmatprep.subr.mxu0 0.0
  %1167 = vmatpush1.msra.mxu0 %v437
  %1168 = vmatprep.subr.mxu0 0.0
  %1169 = vmatpush1.msra.mxu0 %v438
  %1170 = vmatprep.subr.mxu0 0.0
  %1171 = vmatpush1.msra.mxu0 %v439
  %1172 = vmatprep.subr.mxu0 0.0
  %1173 = vmatpush1.msra.mxu0 %v440
  %1174 = vmatprep.subr.mxu0 0.0
  %1175 = vmatpush1.msra.mxu0 %v441
  %1176 = vmatprep.subr.mxu0 0.0
  %1177 = vmatpush1.msra.mxu0 0.0
  %1178 = vmatprep.subr.mxu0 0.0
  %1179 = vmatpush1.msra.mxu0 0.0
  %1180 = vmatprep.subr.mxu0 0.0
  %1181 = vmatpush1.msra.mxu0 0.0
  %1182 = vmatprep.subr.mxu0 0.0
  %1183 = vmatpush1.msra.mxu0 0.0
  %1184 = vmatprep.subr.mxu0 0.0
  %1185 = vmatpush1.msra.mxu0 0.0
  %1186 = vmatprep.subr.mxu0 0.0
  %1187 = vmatpush1.msra.mxu0 0.0
  %1188 = vmatprep.subr.mxu0 0.0
  %1189 = vmatpush1.msra.mxu0 0.0
  %1190 = vmatprep.subr.mxu0 0.0
  %1191 = vmatpush1.msra.mxu0 0.0
  %1192 = vmatprep.subr.mxu0 0.0
  %1193 = vmatpush1.msra.mxu0 0.0
  %1194 = vmatprep.subr.mxu0 0.0
  %1195 = vmatpush1.msra.mxu0 0.0
  %1196 = vmatprep.subr.mxu0 0.0
  %1197 = vmatpush1.msra.mxu0 0.0
  %1198 = vmatprep.subr.mxu0 0.0
  %1199 = vmatpush1.msra.mxu0 0.0
  %1200 = vmatprep.subr.mxu0 0.0
  %1201 = vmatpush1.msra.mxu0 0.0
  %1202 = vmatprep.subr.mxu0 0.0
  %1203 = vmatpush1.msra.mxu0 0.0
  %1204 = vmatprep.subr.mxu0 0.0
  %1205 = vmatpush1.msra.mxu0 0.0
  %1206 = vmatprep.subr.mxu0 0.0
  %1207 = vmatpush1.msra.mxu0 0.0
  %1208 = vmatprep.mubr.f32.mxu0 0.0
  %1209 = vmatmul.mubr.f32.gmra.mrb[0].mxu0 %v1143
  %v1210 = vpop.f32.mrb[0].mxu0
  %v1211 = vadd.f32 %v76, %v1210
  %v1212 = vpop.f32.mrb[0].mxu0
  %1213 = vdwg.mxu0
  %v1214 = vmax.f32 %v1211, 0.0
  %v1216 = vsel %vm141, %v1214, 0
  %1218 = vmatprep.subr.mxu0 0.0
  %1219 = vmatpush1.msra.mxu0 %v513
  %1220 = vmatprep.subr.mxu0 0.0
  %1221 = vmatpush1.msra.mxu0 %v514
  %1222 = vmatprep.subr.mxu0 0.0
  %1223 = vmatpush1.msra.mxu0 %v515
  %1224 = vmatprep.subr.mxu0 0.0
  %1225 = vmatpush1.msra.mxu0 %v516
  %1226 = vmatprep.subr.mxu0 0.0
  %1227 = vmatpush1.msra.mxu0 0.0
  %1228 = vmatprep.subr.mxu0 0.0
  %1229 = vmatpush1.msra.mxu0 0.0
  %1230 = vmatprep.subr.mxu0 0.0
  %1231 = vmatpush1.msra.mxu0 0.0
  %1232 = vmatprep.subr.mxu0 0.0
  %1233 = vmatpush1.msra.mxu0 0.0
  %1234 = vmatprep.subr.mxu0 0.0
  %1235 = vmatpush1.msra.mxu0 0.0
  %1236 = vmatprep.subr.mxu0 0.0
  %1237 = vmatpush1.msra.mxu0 0.0
  %1238 = vmatprep.subr.mxu0 0.0
  %1239 = vmatpush1.msra.mxu0 0.0
  %1240 = vmatprep.subr.mxu0 0.0
  %1241 = vmatpush1.msra.mxu0 0.0
  %1242 = vmatprep.subr.mxu0 0.0
  %1243 = vmatpush1.msra.mxu0 0.0
  %1244 = vmatprep.subr.mxu0 0.0
  %1245 = vmatpush1.msra.mxu0 0.0
  %1246 = vmatprep.subr.mxu0 0.0
  %1247 = vmatpush1.msra.mxu0 0.0
  %1248 = vmatprep.subr.mxu0 0.0
  %1249 = vmatpush1.msra.mxu0 0.0
  %1250 = vmatprep.subr.mxu0 0.0
  %1251 = vmatpush1.msra.mxu0 0.0
  %1252 = vmatprep.subr.mxu0 0.0
  %1253 = vmatpush1.msra.mxu0 0.0
  %1254 = vmatprep.subr.mxu0 0.0
  %1255 = vmatpush1.msra.mxu0 0.0
  %1256 = vmatprep.subr.mxu0 0.0
  %1257 = vmatpush1.msra.mxu0 0.0
  %1258 = vmatprep.subr.mxu0 0.0
  %1259 = vmatpush1.msra.mxu0 0.0
  %1260 = vmatprep.subr.mxu0 0.0
  %1261 = vmatpush1.msra.mxu0 0.0
  %1262 = vmatprep.subr.mxu0 0.0
  %1263 = vmatpush1.msra.mxu0 0.0
  %1264 = vmatprep.subr.mxu0 0.0
  %1265 = vmatpush1.msra.mxu0 0.0
  %1266 = vmatprep.subr.mxu0 0.0
  %1267 = vmatpush1.msra.mxu0 0.0
  %1268 = vmatprep.subr.mxu0 0.0
  %1269 = vmatpush1.msra.mxu0 0.0
  %1270 = vmatprep.subr.mxu0 0.0
  %1271 = vmatpush1.msra.mxu0 0.0
  %1272 = vmatprep.subr.mxu0 0.0
  %1273 = vmatpush1.msra.mxu0 0.0
  %1274 = vmatprep.subr.mxu0 0.0
  %1275 = vmatpush1.msra.mxu0 0.0
  %1276 = vmatprep.subr.mxu0 0.0
  %1277 = vmatpush1.msra.mxu0 0.0
  %1278 = vmatprep.subr.mxu0 0.0
  %1279 = vmatpush1.msra.mxu0 0.0
  %1280 = vmatprep.subr.mxu0 0.0
  %1281 = vmatpush1.msra.mxu0 0.0
  %1282 = vmatprep.mubr.f32.mxu0 0.0
  %1283 = vmatmul.mubr.f32.gmra.mrb[0].mxu0 %v1216
  %v1284 = vpop.f32.mrb[0].mxu0
  %v1285 = vadd.f32 %v83, %v1284
  %v1286 = vpop.f32.mrb[0].mxu0
  %1287 = vdwg.mxu0
  %1288 = vmax.xlane.f32.xlu0 %v1285
  %v1289 = vpop.xlane.xlu0 %1288
  %v1290 = vsub.f32 %v1285, %v1289
  %v1291 = vmul.f32 %v1290, 1.442695
  %v1292 = vpow.pop %v1291
  %1293 = vadd.xlane.f32.xlu0 %v1292
  %v1294 = vpop.xlane.xlu0 %1293
  %v1295 = vrcp.pop %v1294
  %v1296 = vmul.f32 %v1292, %v1295
  %v1297 = vmul.f32 %v1296, %v1143
  %1298 = vmatprep.subr.mxu0 0.0
  %1299 = vmatpush1.msra.mxu0 %v600
  %1300 = vmatprep.subr.mxu0 0.0
  %1301 = vmatpush1.msra.mxu0 %v601
  %1302 = vmatprep.subr.mxu0 0.0
  %1303 = vmatpush1.msra.mxu0 %v602
  %1304 = vmatprep.subr.mxu0 0.0
  %1305 = vmatpush1.msra.mxu0 %v603
  %1306 = vmatprep.subr.mxu0 0.0
  %1307 = vmatpush1.msra.mxu0 %v604
  %1308 = vmatprep.subr.mxu0 0.0
  %1309 = vmatpush1.msra.mxu0 %v605
  %1310 = vmatprep.subr.mxu0 0.0
  %1311 = vmatpush1.msra.mxu0 %v606
  %1312 = vmatprep.subr.mxu0 0.0
  %1313 = vmatpush1.msra.mxu0 %v607
  %1314 = vmatprep.subr.mxu0 0.0
  %1315 = vmatpush1.msra.mxu0 %v608
  %1316 = vmatprep.subr.mxu0 0.0
  %1317 = vmatpush1.msra.mxu0 %v609
  %1318 = vmatprep.subr.mxu0 0.0
  %1319 = vmatpush1.msra.mxu0 %v610
  %1320 = vmatprep.subr.mxu0 0.0
  %1321 = vmatpush1.msra.mxu0 %v611
  %1322 = vmatprep.subr.mxu0 0.0
  %1323 = vmatpush1.msra.mxu0 %v612
  %1324 = vmatprep.subr.mxu0 0.0
  %1325 = vmatpush1.msra.mxu0 %v613
  %1326 = vmatprep.subr.mxu0 0.0
  %1327 = vmatpush1.msra.mxu0 %v614
  %1328 = vmatprep.subr.mxu0 0.0
  %1329 = vmatpush1.msra.mxu0 %v615
  %1330 = vmatprep.subr.mxu0 0.0
  %1331 = vmatpush1.msra.mxu0 0.0
  %1332 = vmatprep.subr.mxu0 0.0
  %1333 = vmatpush1.msra.mxu0 0.0
  %1334 = vmatprep.subr.mxu0 0.0
  %1335 = vmatpush1.msra.mxu0 0.0
  %1336 = vmatprep.subr.mxu0 0.0
  %1337 = vmatpush1.msra.mxu0 0.0
  %1338 = vmatprep.subr.mxu0 0.0
  %1339 = vmatpush1.msra.mxu0 0.0
  %1340 = vmatprep.subr.mxu0 0.0
  %1341 = vmatpush1.msra.mxu0 0.0
  %1342 = vmatprep.subr.mxu0 0.0
  %1343 = vmatpush1.msra.mxu0 0.0
  %1344 = vmatprep.subr.mxu0 0.0
  %1345 = vmatpush1.msra.mxu0 0.0
  %1346 = vmatprep.subr.mxu0 0.0
  %1347 = vmatpush1.msra.mxu0 0.0
  %1348 = vmatprep.subr.mxu0 0.0
  %1349 = vmatpush1.msra.mxu0 0.0
  %1350 = vmatprep.subr.mxu0 0.0
  %1351 = vmatpush1.msra.mxu0 0.0
  %1352 = vmatprep.subr.mxu0 0.0
  %1353 = vmatpush1.msra.mxu0 0.0
  %1354 = vmatprep.subr.mxu0 0.0
  %1355 = vmatpush1.msra.mxu0 0.0
  %1356 = vmatprep.subr.mxu0 0.0
  %1357 = vmatpush1.msra.mxu0 0.0
  %1358 = vmatprep.subr.mxu0 0.0
  %1359 = vmatpush1.msra.mxu0 0.0
  %1360 = vmatprep.subr.mxu0 0.0
  %1361 = vmatpush1.msra.mxu0 0.0
  %1362 = vmatprep.mubr.f32.mxu0 0.0
  %1363 = vmatmul.mubr.f32.gmra.mrb[0].mxu0 %v1297
  %v1364 = vpop.f32.mrb[0].mxu0
  %v1365 = vadd.f32 %v90, %v1364
  %v1366 = vpop.f32.mrb[0].mxu0
  %1367 = vdwg.mxu0
  %v1368 = vmax.f32 %v1365, 0.0
  %v1370 = vsel %vm141, %v1368, 0
  %1372 = vmatprep.subr.mxu0 0.0
  %1373 = vmatpush1.msra.mxu0 %v687
  %1374 = vmatprep.subr.mxu0 0.0
  %1375 = vmatpush1.msra.mxu0 %v688
  %1376 = vmatprep.subr.mxu0 0.0
  %1377 = vmatpush1.msra.mxu0 %v689
  %1378 = vmatprep.subr.mxu0 0.0
  %1379 = vmatpush1.msra.mxu0 %v690
  %1380 = vmatprep.subr.mxu0 0.0
  %1381 = vmatpush1.msra.mxu0 0.0
  %1382 = vmatprep.subr.mxu0 0.0
  %1383 = vmatpush1.msra.mxu0 0.0
  %1384 = vmatprep.subr.mxu0 0.0
  %1385 = vmatpush1.msra.mxu0 0.0
  %1386 = vmatprep.subr.mxu0 0.0
  %1387 = vmatpush1.msra.mxu0 0.0
  %1388 = vmatprep.subr.mxu0 0.0
  %1389 = vmatpush1.msra.mxu0 0.0
  %1390 = vmatprep.subr.mxu0 0.0
  %1391 = vmatpush1.msra.mxu0 0.0
  %1392 = vmatprep.subr.mxu0 0.0
  %1393 = vmatpush1.msra.mxu0 0.0
  %1394 = vmatprep.subr.mxu0 0.0
  %1395 = vmatpush1.msra.mxu0 0.0
  %1396 = vmatprep.subr.mxu0 0.0
  %1397 = vmatpush1.msra.mxu0 0.0
  %1398 = vmatprep.subr.mxu0 0.0
  %1399 = vmatpush1.msra.mxu0 0.0
  %1400 = vmatprep.subr.mxu0 0.0
  %1401 = vmatpush1.msra.mxu0 0.0
  %1402 = vmatprep.subr.mxu0 0.0
  %1403 = vmatpush1.msra.mxu0 0.0
  %1404 = vmatprep.subr.mxu0 0.0
  %1405 = vmatpush1.msra.mxu0 0.0
  %1406 = vmatprep.subr.mxu0 0.0
  %1407 = vmatpush1.msra.mxu0 0.0
  %1408 = vmatprep.subr.mxu0 0.0
  %1409 = vmatpush1.msra.mxu0 0.0
  %1410 = vmatprep.subr.mxu0 0.0
  %1411 = vmatpush1.msra.mxu0 0.0
  %1412 = vmatprep.subr.mxu0 0.0
  %1413 = vmatpush1.msra.mxu0 0.0
  %1414 = vmatprep.subr.mxu0 0.0
  %1415 = vmatpush1.msra.mxu0 0.0
  %1416 = vmatprep.subr.mxu0 0.0
  %1417 = vmatpush1.msra.mxu0 0.0
  %1418 = vmatprep.subr.mxu0 0.0
  %1419 = vmatpush1.msra.mxu0 0.0
  %1420 = vmatprep.subr.mxu0 0.0
  %1421 = vmatpush1.msra.mxu0 0.0
  %1422 = vmatprep.subr.mxu0 0.0
  %1423 = vmatpush1.msra.mxu0 0.0
  %1424 = vmatprep.subr.mxu0 0.0
  %1425 = vmatpush1.msra.mxu0 0.0
  %1426 = vmatprep.subr.mxu0 0.0
  %1427 = vmatpush1.msra.mxu0 0.0
  %1428 = vmatprep.subr.mxu0 0.0
  %1429 = vmatpush1.msra.mxu0 0.0
  %1430 = vmatprep.subr.mxu0 0.0
  %1431 = vmatpush1.msra.mxu0 0.0
  %1432 = vmatprep.subr.mxu0 0.0
  %1433 = vmatpush1.msra.mxu0 0.0
  %1434 = vmatprep.subr.mxu0 0.0
  %1435 = vmatpush1.msra.mxu0 0.0
  %1436 = vmatprep.mubr.f32.mxu0 0.0
  %1437 = vmatmul.mubr.f32.gmra.mrb[0].mxu0 %v1370
  %v1438 = vpop.f32.mrb[0].mxu0
  %v1439 = vadd.f32 %v97, %v1438
  %v1440 = vpop.f32.mrb[0].mxu0
  %1441 = vdwg.mxu0
  %v1442 = vtanh.pop %v1439
  %v1444 = vsel %vm314, %v1030, 0
  %1446 = vmatprep.subr.mxu0 0.0
  %1447 = vmatpush1.msra.mxu0 %v781
  %1448 = vmatprep.subr.mxu0 0.0
  %1449 = vmatpush1.msra.mxu0 %v782
  %1450 = vmatprep.subr.mxu0 0.0
  %1451 = vmatpush1.msra.mxu0 %v783
  %1452 = vmatprep.subr.mxu0 0.0
  %1453 = vmatpush1.msra.mxu0 %v784
  %1454 = vmatprep.subr.mxu0 0.0
  %1455 = vmatpush1.msra.mxu0 %v785
  %1456 = vmatprep.subr.mxu0 0.0
  %1457 = vmatpush1.msra.mxu0 %v786
  %1458 = vmatprep.subr.mxu0 0.0
  %1459 = vmatpush1.msra.mxu0 %v787
  %1460 = vmatprep.subr.mxu0 0.0
  %1461 = vmatpush1.msra.mxu0 %v788
  %1462 = vmatprep.subr.mxu0 0.0
  %1463 = vmatpush1.msra.mxu0 0.0
  %1464 = vmatprep.subr.mxu0 0.0
  %1465 = vmatpush1.msra.mxu0 0.0
  %1466 = vmatprep.subr.mxu0 0.0
  %1467 = vmatpush1.msra.mxu0 0.0
  %1468 = vmatprep.subr.mxu0 0.0
  %1469 = vmatpush1.msra.mxu0 0.0
  %1470 = vmatprep.subr.mxu0 0.0
  %1471 = vmatpush1.msra.mxu0 0.0
  %1472 = vmatprep.subr.mxu0 0.0
  %1473 = vmatpush1.msra.mxu0 0.0
  %1474 = vmatprep.subr.mxu0 0.0
  %1475 = vmatpush1.msra.mxu0 0.0
  %1476 = vmatprep.subr.mxu0 0.0
  %1477 = vmatpush1.msra.mxu0 0.0
  %1478 = vmatprep.subr.mxu0 0.0
  %1479 = vmatpush1.msra.mxu0 0.0
  %1480 = vmatprep.subr.mxu0 0.0
  %1481 = vmatpush1.msra.mxu0 0.0
  %1482 = vmatprep.subr.mxu0 0.0
  %1483 = vmatpush1.msra.mxu0 0.0
  %1484 = vmatprep.subr.mxu0 0.0
  %1485 = vmatpush1.msra.mxu0 0.0
  %1486 = vmatprep.subr.mxu0 0.0
  %1487 = vmatpush1.msra.mxu0 0.0
  %1488 = vmatprep.subr.mxu0 0.0
  %1489 = vmatpush1.msra.mxu0 0.0
  %1490 = vmatprep.subr.mxu0 0.0
  %1491 = vmatpush1.msra.mxu0 0.0
  %1492 = vmatprep.subr.mxu0 0.0
  %1493 = vmatpush1.msra.mxu0 0.0
  %1494 = vmatprep.subr.mxu0 0.0
  %1495 = vmatpush1.msra.mxu0 0.0
  %1496 = vmatprep.subr.mxu0 0.0
  %1497 = vmatpush1.msra.mxu0 0.0
  %1498 = vmatprep.subr.mxu0 0.0
  %1499 = vmatpush1.msra.mxu0 0.0
  %1500 = vmatprep.subr.mxu0 0.0
  %1501 = vmatpush1.msra.mxu0 0.0
  %1502 = vmatprep.subr.mxu0 0.0
  %1503 = vmatpush1.msra.mxu0 0.0
  %1504 = vmatprep.subr.mxu0 0.0
  %1505 = vmatpush1.msra.mxu0 0.0
  %1506 = vmatprep.subr.mxu0 0.0
  %1507 = vmatpush1.msra.mxu0 0.0
  %1508 = vmatprep.subr.mxu0 0.0
  %1509 = vmatpush1.msra.mxu0 0.0
  %1510 = vmatprep.mubr.f32.mxu0 0.0
  %1511 = vmatmul.mubr.f32.gmra.mrb[0].mxu0 %v1444
  %v1512 = vpop.f32.mrb[0].mxu0
  %v1513 = vadd.f32 0.0, %v1512
  %v1514 = vpop.f32.mrb[0].mxu0
  %1515 = vdwg.mxu0
  %1516 = vmatprep.subr.mxu0 0.0
  %1517 = vmatpush1.msra.mxu0 %v765
  %1518 = vmatprep.subr.mxu0 0.0
  %1519 = vmatpush1.msra.mxu0 %v766
  %1520 = vmatprep.subr.mxu0 0.0
  %1521 = vmatpush1.msra.mxu0 %v767
  %1522 = vmatprep.subr.mxu0 0.0
  %1523 = vmatpush1.msra.mxu0 %v768
  %1524 = vmatprep.subr.mxu0 0.0
  %1525 = vmatpush1.msra.mxu0 %v769
  %1526 = vmatprep.subr.mxu0 0.0
  %1527 = vmatpush1.msra.mxu0 %v770
  %1528 = vmatprep.subr.mxu0 0.0
  %1529 = vmatpush1.msra.mxu0 %v771
  %1530 = vmatprep.subr.mxu0 0.0
  %1531 = vmatpush1.msra.mxu0 %v772
  %1532 = vmatprep.subr.mxu0 0.0
  %1533 = vmatpush1.msra.mxu0 %v773
  %1534 = vmatprep.subr.mxu0 0.0
  %1535 = vmatpush1.msra.mxu0 %v774
  %1536 = vmatprep.subr.mxu0 0.0
  %1537 = vmatpush1.msra.mxu0 %v775
  %1538 = vmatprep.subr.mxu0 0.0
  %1539 = vmatpush1.msra.mxu0 %v776
  %1540 = vmatprep.subr.mxu0 0.0
  %1541 = vmatpush1.msra.mxu0 %v777
  %1542 = vmatprep.subr.mxu0 0.0
  %1543 = vmatpush1.msra.mxu0 %v778
  %1544 = vmatprep.subr.mxu0 0.0
  %1545 = vmatpush1.msra.mxu0 %v779
  %1546 = vmatprep.subr.mxu0 0.0
  %1547 = vmatpush1.msra.mxu0 %v780
  %1548 = vmatprep.subr.mxu0 0.0
  %1549 = vmatpush1.msra.mxu0 0.0
  %1550 = vmatprep.subr.mxu0 0.0
  %1551 = vmatpush1.msra.mxu0 0.0
  %1552 = vmatprep.subr.mxu0 0.0
  %1553 = vmatpush1.msra.mxu0 0.0
  %1554 = vmatprep.subr.mxu0 0.0
  %1555 = vmatpush1.msra.mxu0 0.0
  %1556 = vmatprep.subr.mxu0 0.0
  %1557 = vmatpush1.msra.mxu0 0.0
  %1558 = vmatprep.subr.mxu0 0.0
  %1559 = vmatpush1.msra.mxu0 0.0
  %1560 = vmatprep.subr.mxu0 0.0
  %1561 = vmatpush1.msra.mxu0 0.0
  %1562 = vmatprep.subr.mxu0 0.0
  %1563 = vmatpush1.msra.mxu0 0.0
  %1564 = vmatprep.subr.mxu0 0.0
  %1565 = vmatpush1.msra.mxu0 0.0
  %1566 = vmatprep.subr.mxu0 0.0
  %1567 = vmatpush1.msra.mxu0 0.0
  %1568 = vmatprep.subr.mxu0 0.0
  %1569 = vmatpush1.msra.mxu0 0.0
  %1570 = vmatprep.subr.mxu0 0.0
  %1571 = vmatpush1.msra.mxu0 0.0
  %1572 = vmatprep.subr.mxu0 0.0
  %1573 = vmatpush1.msra.mxu0 0.0
  %1574 = vmatprep.subr.mxu0 0.0
  %1575 = vmatpush1.msra.mxu0 0.0
  %1576 = vmatprep.subr.mxu0 0.0
  %1577 = vmatpush1.msra.mxu0 0.0
  %1578 = vmatprep.subr.mxu0 0.0
  %1579 = vmatpush1.msra.mxu0 0.0
  %1580 = vmatprep.mubr.f32.mxu0 0.0
  %1581 = vmatmul.mubr.f32.gmra.mrb[0].mxu0 %v1297
  %v1582 = vpop.f32.mrb[0].mxu0
  %v1583 = vadd.f32 %v1513, %v1582
  %v1584 = vpop.f32.mrb[0].mxu0
  %1585 = vdwg.mxu0
  %v1586 = vadd.f32 %v1583, %v104
  %v1587 = vmax.f32 %v1586, 0.0
  %v1589 = vsel %vm314, %v1587, 0
  %1591 = vmatprep.subr.mxu0 0.0
  %1592 = vmatpush1.msra.mxu0 %v933
  %1593 = vmatprep.subr.mxu0 0.0
  %1594 = vmatpush1.msra.mxu0 %v934
  %1595 = vmatprep.subr.mxu0 0.0
  %1596 = vmatpush1.msra.mxu0 %v935
  %1597 = vmatprep.subr.mxu0 0.0
  %1598 = vmatpush1.msra.mxu0 %v936
  %1599 = vmatprep.subr.mxu0 0.0
  %1600 = vmatpush1.msra.mxu0 %v937
  %1601 = vmatprep.subr.mxu0 0.0
  %1602 = vmatpush1.msra.mxu0 %v938
  %1603 = vmatprep.subr.mxu0 0.0
  %1604 = vmatpush1.msra.mxu0 %v939
  %1605 = vmatprep.subr.mxu0 0.0
  %1606 = vmatpush1.msra.mxu0 %v940
  %1607 = vmatprep.subr.mxu0 0.0
  %1608 = vmatpush1.msra.mxu0 0.0
  %1609 = vmatprep.subr.mxu0 0.0
  %1610 = vmatpush1.msra.mxu0 0.0
  %1611 = vmatprep.subr.mxu0 0.0
  %1612 = vmatpush1.msra.mxu0 0.0
  %1613 = vmatprep.subr.mxu0 0.0
  %1614 = vmatpush1.msra.mxu0 0.0
  %1615 = vmatprep.subr.mxu0 0.0
  %1616 = vmatpush1.msra.mxu0 0.0
  %1617 = vmatprep.subr.mxu0 0.0
  %1618 = vmatpush1.msra.mxu0 0.0
  %1619 = vmatprep.subr.mxu0 0.0
  %1620 = vmatpush1.msra.mxu0 0.0
  %1621 = vmatprep.subr.mxu0 0.0
  %1622 = vmatpush1.msra.mxu0 0.0
  %1623 = vmatprep.subr.mxu0 0.0
  %1624 = vmatpush1.msra.mxu0 0.0
  %1625 = vmatprep.subr.mxu0 0.0
  %1626 = vmatpush1.msra.mxu0 0.0
  %1627 = vmatprep.subr.mxu0 0.0
  %1628 = vmatpush1.msra.mxu0 0.0
  %1629 = vmatprep.subr.mxu0 0.0
  %1630 = vmatpush1.msra.mxu0 0.0
  %1631 = vmatprep.subr.mxu0 0.0
  %1632 = vmatpush1.msra.mxu0 0.0
  %1633 = vmatprep.subr.mxu0 0.0
  %1634 = vmatpush1.msra.mxu0 0.0
  %1635 = vmatprep.subr.mxu0 0.0
  %1636 = vmatpush1.msra.mxu0 0.0
  %1637 = vmatprep.subr.mxu0 0.0
  %1638 = vmatpush1.msra.mxu0 0.0
  %1639 = vmatprep.subr.mxu0 0.0
  %1640 = vmatpush1.msra.mxu0 0.0
  %1641 = vmatprep.subr.mxu0 0.0
  %1642 = vmatpush1.msra.mxu0 0.0
  %1643 = vmatprep.subr.mxu0 0.0
  %1644 = vmatpush1.msra.mxu0 0.0
  %1645 = vmatprep.subr.mxu0 0.0
  %1646 = vmatpush1.msra.mxu0 0.0
  %1647 = vmatprep.subr.mxu0 0.0
  %1648 = vmatpush1.msra.mxu0 0.0
  %1649 = vmatprep.subr.mxu0 0.0
  %1650 = vmatpush1.msra.mxu0 0.0
  %1651 = vmatprep.subr.mxu0 0.0
  %1652 = vmatpush1.msra.mxu0 0.0
  %1653 = vmatprep.subr.mxu0 0.0
  %1654 = vmatpush1.msra.mxu0 0.0
  %1655 = vmatprep.mubr.f32.mxu0 0.0
  %1656 = vmatmul.mubr.f32.gmra.mrb[0].mxu0 %v1589
  %v1657 = vpop.f32.mrb[0].mxu0
  %v1658 = vadd.f32 %v111, %v1657
  %v1659 = vpop.f32.mrb[0].mxu0
  %1660 = vdwg.mxu0
  %v1661 = vxor.u32 %v1658, 2147483648
  %v1662 = vmul.f32 %v1661, 1.442695
  %v1663 = vpow.pop %v1662
  %v1664 = vadd.f32 %v1663, 1.0
  %v1665 = vrcp.pop %v1664
  %v1666 = vmul.f32 1.0, %v1665
  %v1667 = vmul.f32 %v1666, %v1030
  %1669 = vrot.lane.b32.xlu0 %v1442, 64
  %v1670 = vpop.permute.xlu0 %1669
  %v1672 = vmul.f32 %v1666, %v1670
  %1674 = vrot.lane.b32.xlu0 %v1672, 64
  %v1675 = vpop.permute.xlu0 %1674
  %v1677 = vadd.f32 %v1667, %v1675
  %v1678 = vld [vmem:[#allocation2 + $0x20] sm:$0xff]
  %v1679 = vld [vmem:[#allocation2 + $0x28] sm:$0xff]
  %v1681 = vsel %vm314, %v1138, 0
  %1683 = vmatprep.subr.mxu0 %v299
  %1684 = vmatpush1.msra.mxu0 %v298
  %1685 = vmatprep.subr.mxu0 %v301
  %1686 = vmatpush1.msra.mxu0 %v300
  %1687 = vmatprep.subr.mxu0 %v303
  %1688 = vmatpush1.msra.mxu0 %v302
  %1689 = vmatprep.subr.mxu0 %v305
  %1690 = vmatpush1.msra.mxu0 %v304
  %1691 = vmatprep.subr.mxu0 %v307
  %1692 = vmatpush1.msra.mxu0 %v306
  %1693 = vmatprep.subr.mxu0 %v309
  %1694 = vmatpush1.msra.mxu0 %v308
  %1695 = vmatprep.subr.mxu0 %v311
  %1696 = vmatpush1.msra.mxu0 %v310
  %1697 = vmatprep.subr.mxu0 %v313
  %1698 = vmatpush1.msra.mxu0 %v312
  %1699 = vmatprep.subr.mxu0 0.0
  %1700 = vmatpush1.msra.mxu0 0.0
  %1701 = vmatprep.subr.mxu0 0.0
  %1702 = vmatpush1.msra.mxu0 0.0
  %1703 = vmatprep.subr.mxu0 0.0
  %1704 = vmatpush1.msra.mxu0 0.0
  %1705 = vmatprep.subr.mxu0 0.0
  %1706 = vmatpush1.msra.mxu0 0.0
  %1707 = vmatprep.subr.mxu0 0.0
  %1708 = vmatpush1.msra.mxu0 0.0
  %1709 = vmatprep.subr.mxu0 0.0
  %1710 = vmatpush1.msra.mxu0 0.0
  %1711 = vmatprep.subr.mxu0 0.0
  %1712 = vmatpush1.msra.mxu0 0.0
  %1713 = vmatprep.subr.mxu0 0.0
  %1714 = vmatpush1.msra.mxu0 0.0
  %1715 = vmatprep.subr.mxu0 0.0
  %1716 = vmatpush1.msra.mxu0 0.0
  %1717 = vmatprep.subr.mxu0 0.0
  %1718 = vmatpush1.msra.mxu0 0.0
  %1719 = vmatprep.subr.mxu0 0.0
  %1720 = vmatpush1.msra.mxu0 0.0
  %1721 = vmatprep.subr.mxu0 0.0
  %1722 = vmatpush1.msra.mxu0 0.0
  %1723 = vmatprep.subr.mxu0 0.0
  %1724 = vmatpush1.msra.mxu0 0.0
  %1725 = vmatprep.subr.mxu0 0.0
  %1726 = vmatpush1.msra.mxu0 0.0
  %1727 = vmatprep.subr.mxu0 0.0
  %1728 = vmatpush1.msra.mxu0 0.0
  %1729 = vmatprep.subr.mxu0 0.0
  %1730 = vmatpush1.msra.mxu0 0.0
  %1731 = vmatprep.subr.mxu0 0.0
  %1732 = vmatpush1.msra.mxu0 0.0
  %1733 = vmatprep.subr.mxu0 0.0
  %1734 = vmatpush1.msra.mxu0 0.0
  %1735 = vmatprep.subr.mxu0 0.0
  %1736 = vmatpush1.msra.mxu0 0.0
  %1737 = vmatprep.subr.mxu0 0.0
  %1738 = vmatpush1.msra.mxu0 0.0
  %1739 = vmatprep.subr.mxu0 0.0
  %1740 = vmatpush1.msra.mxu0 0.0
  %1741 = vmatprep.subr.mxu0 0.0
  %1742 = vmatpush1.msra.mxu0 0.0
  %1743 = vmatprep.subr.mxu0 0.0
  %1744 = vmatpush1.msra.mxu0 0.0
  %1745 = vmatprep.subr.mxu0 0.0
  %1746 = vmatpush1.msra.mxu0 0.0
  %1747 = vmatprep.mubr.f32.mxu0 0.0
  %1748 = vmatmul.mubr.f32.gmra.mrb[0].mxu0 %v1681
  %v1749 = vpop.f32.mrb[0].mxu0
  %v1750 = vadd.f32 0.0, %v1749
  %v1751 = vpop.f32.mrb[0].mxu0
  %v1752 = vadd.f32 0.0, %v1751
  %1753 = vdwg.mxu0
  %v1754 = vadd.f32 %v1678, %v1750
  %v1755 = vadd.f32 %v1679, %v1752
  %v1756 = vxor.u32 %v1754, 2147483648
  %v1757 = vxor.u32 %v1755, 2147483648
  %v1758 = vmul.f32 %v1756, 1.442695
  %v1759 = vpow.pop %v1758
  %v1760 = vmul.f32 %v1757, 1.442695
  %v1761 = vpow.pop %v1760
  %v1762 = vadd.f32 %v1759, 1.0
  %v1763 = vadd.f32 %v1761, 1.0
  %v1764 = vrcp.pop %v1762
  %v1765 = vmul.f32 1.0, %v1764
  %v1766 = vrcp.pop %v1763
  %v1767 = vmul.f32 1.0, %v1766
  %v1768 = vtanh.pop %v1755
  %v1769 = vmul.f32 %v1765, %v1132
  %1771 = vrot.lane.b32.xlu0 %v1768, 64
  %v1772 = vpop.permute.xlu0 %1771
  %v1774 = vmul.f32 %v1765, %v1772
  %1776 = vrot.lane.b32.xlu0 %v1774, 64
  %v1777 = vpop.permute.xlu0 %1776
  %v1779 = vadd.f32 %v1769, %v1777
  %v1780 = vtanh.pop %v1779
  %1782 = vrot.lane.b32.xlu0 %v1780, 64
  %v1783 = vpop.permute.xlu0 %1782
  %v1785 = vmul.f32 %v1767, %v1783
  %1787 = vrot.lane.b32.xlu0 %v1132, 64
  %v1788 = vpop.permute.xlu0 %1787
  %v1790 = vsel %vm314, %v1788, %v1779
  %1791 = vmatprep.subr.mxu0 0.0
  %1792 = vmatpush1.msra.mxu0 %v426
  %1793 = vmatprep.subr.mxu0 0.0
  %1794 = vmatpush1.msra.mxu0 %v427
  %1795 = vmatprep.subr.mxu0 0.0
  %1796 = vmatpush1.msra.mxu0 %v428
  %1797 = vmatprep.subr.mxu0 0.0
  %1798 = vmatpush1.msra.mxu0 %v429
  %1799 = vmatprep.subr.mxu0 0.0
  %1800 = vmatpush1.msra.mxu0 %v430
  %1801 = vmatprep.subr.mxu0 0.0
  %1802 = vmatpush1.msra.mxu0 %v431
  %1803 = vmatprep.subr.mxu0 0.0
  %1804 = vmatpush1.msra.mxu0 %v432
  %1805 = vmatprep.subr.mxu0 0.0
  %1806 = vmatpush1.msra.mxu0 %v433
  %1807 = vmatprep.subr.mxu0 0.0
  %1808 = vmatpush1.msra.mxu0 %v434
  %1809 = vmatprep.subr.mxu0 0.0
  %1810 = vmatpush1.msra.mxu0 %v435
  %1811 = vmatprep.subr.mxu0 0.0
  %1812 = vmatpush1.msra.mxu0 %v436
  %1813 = vmatprep.subr.mxu0 0.0
  %1814 = vmatpush1.msra.mxu0 %v437
  %1815 = vmatprep.subr.mxu0 0.0
  %1816 = vmatpush1.msra.mxu0 %v438
  %1817 = vmatprep.subr.mxu0 0.0
  %1818 = vmatpush1.msra.mxu0 %v439
  %1819 = vmatprep.subr.mxu0 0.0
  %1820 = vmatpush1.msra.mxu0 %v440
  %1821 = vmatprep.subr.mxu0 0.0
  %1822 = vmatpush1.msra.mxu0 %v441
  %1823 = vmatprep.subr.mxu0 0.0
  %1824 = vmatpush1.msra.mxu0 0.0
  %1825 = vmatprep.subr.mxu0 0.0
  %1826 = vmatpush1.msra.mxu0 0.0
  %1827 = vmatprep.subr.mxu0 0.0
  %1828 = vmatpush1.msra.mxu0 0.0
  %1829 = vmatprep.subr.mxu0 0.0
  %1830 = vmatpush1.msra.mxu0 0.0
  %1831 = vmatprep.subr.mxu0 0.0
  %1832 = vmatpush1.msra.mxu0 0.0
  %1833 = vmatprep.subr.mxu0 0.0
  %1834 = vmatpush1.msra.mxu0 0.0
  %1835 = vmatprep.subr.mxu0 0.0
  %1836 = vmatpush1.msra.mxu0 0.0
  %1837 = vmatprep.subr.mxu0 0.0
  %1838 = vmatpush1.msra.mxu0 0.0
  %1839 = vmatprep.subr.mxu0 0.0
  %1840 = vmatpush1.msra.mxu0 0.0
  %1841 = vmatprep.subr.mxu0 0.0
  %1842 = vmatpush1.msra.mxu0 0.0
  %1843 = vmatprep.subr.mxu0 0.0
  %1844 = vmatpush1.msra.mxu0 0.0
  %1845 = vmatprep.subr.mxu0 0.0
  %1846 = vmatpush1.msra.mxu0 0.0
  %1847 = vmatprep.subr.mxu0 0.0
  %1848 = vmatpush1.msra.mxu0 0.0
  %1849 = vmatprep.subr.mxu0 0.0
  %1850 = vmatpush1.msra.mxu0 0.0
  %1851 = vmatprep.subr.mxu0 0.0
  %1852 = vmatpush1.msra.mxu0 0.0
  %1853 = vmatprep.subr.mxu0 0.0
  %1854 = vmatpush1.msra.mxu0 0.0
  %1855 = vmatprep.mubr.f32.mxu0 0.0
  %1856 = vmatmul.mubr.f32.gmra.mrb[0].mxu0 %v1790
  %v1857 = vpop.f32.mrb[0].mxu0
  %v1858 = vadd.f32 %v76, %v1857
  %v1859 = vpop.f32.mrb[0].mxu0
  %1860 = vdwg.mxu0
  %v1861 = vmax.f32 %v1858, 0.0
  %v1863 = vsel %vm141, %v1861, 0
  %1865 = vmatprep.subr.mxu0 0.0
  %1866 = vmatpush1.msra.mxu0 %v513
  %1867 = vmatprep.subr.mxu0 0.0
  %1868 = vmatpush1.msra.mxu0 %v514
  %1869 = vmatprep.subr.mxu0 0.0
  %1870 = vmatpush1.msra.mxu0 %v515
  %1871 = vmatprep.subr.mxu0 0.0
  %1872 = vmatpush1.msra.mxu0 %v516
  %1873 = vmatprep.subr.mxu0 0.0
  %1874 = vmatpush1.msra.mxu0 0.0
  %1875 = vmatprep.subr.mxu0 0.0
  %1876 = vmatpush1.msra.mxu0 0.0
  %1877 = vmatprep.subr.mxu0 0.0
  %1878 = vmatpush1.msra.mxu0 0.0
  %1879 = vmatprep.subr.mxu0 0.0
  %1880 = vmatpush1.msra.mxu0 0.0
  %1881 = vmatprep.subr.mxu0 0.0
  %1882 = vmatpush1.msra.mxu0 0.0
  %1883 = vmatprep.subr.mxu0 0.0
  %1884 = vmatpush1.msra.mxu0 0.0
  %1885 = vmatprep.subr.mxu0 0.0
  %1886 = vmatpush1.msra.mxu0 0.0
  %1887 = vmatprep.subr.mxu0 0.0
  %1888 = vmatpush1.msra.mxu0 0.0
  %1889 = vmatprep.subr.mxu0 0.0
  %1890 = vmatpush1.msra.mxu0 0.0
  %1891 = vmatprep.subr.mxu0 0.0
  %1892 = vmatpush1.msra.mxu0 0.0
  %1893 = vmatprep.subr.mxu0 0.0
  %1894 = vmatpush1.msra.mxu0 0.0
  %1895 = vmatprep.subr.mxu0 0.0
  %1896 = vmatpush1.msra.mxu0 0.0
  %1897 = vmatprep.subr.mxu0 0.0
  %1898 = vmatpush1.msra.mxu0 0.0
  %1899 = vmatprep.subr.mxu0 0.0
  %1900 = vmatpush1.msra.mxu0 0.0
  %1901 = vmatprep.subr.mxu0 0.0
  %1902 = vmatpush1.msra.mxu0 0.0
  %1903 = vmatprep.subr.mxu0 0.0
  %1904 = vmatpush1.msra.mxu0 0.0
  %1905 = vmatprep.subr.mxu0 0.0
  %1906 = vmatpush1.msra.mxu0 0.0
  %1907 = vmatprep.subr.mxu0 0.0
  %1908 = vmatpush1.msra.mxu0 0.0
  %1909 = vmatprep.subr.mxu0 0.0
  %1910 = vmatpush1.msra.mxu0 0.0
  %1911 = vmatprep.subr.mxu0 0.0
  %1912 = vmatpush1.msra.mxu0 0.0
  %1913 = vmatprep.subr.mxu0 0.0
  %1914 = vmatpush1.msra.mxu0 0.0
  %1915 = vmatprep.subr.mxu0 0.0
  %1916 = vmatpush1.msra.mxu0 0.0
  %1917 = vmatprep.subr.mxu0 0.0
  %1918 = vmatpush1.msra.mxu0 0.0
  %1919 = vmatprep.subr.mxu0 0.0
  %1920 = vmatpush1.msra.mxu0 0.0
  %1921 = vmatprep.subr.mxu0 0.0
  %1922 = vmatpush1.msra.mxu0 0.0
  %1923 = vmatprep.subr.mxu0 0.0
  %1924 = vmatpush1.msra.mxu0 0.0
  %1925 = vmatprep.subr.mxu0 0.0
  %1926 = vmatpush1.msra.mxu0 0.0
  %1927 = vmatprep.subr.mxu0 0.0
  %1928 = vmatpush1.msra.mxu0 0.0
  %1929 = vmatprep.mubr.f32.mxu0 0.0
  %1930 = vmatmul.mubr.f32.gmra.mrb[0].mxu0 %v1863
  %v1931 = vpop.f32.mrb[0].mxu0
  %v1932 = vadd.f32 %v83, %v1931
  %v1933 = vpop.f32.mrb[0].mxu0
  %1934 = vdwg.mxu0
  %1935 = vmax.xlane.f32.xlu0 %v1932
  %v1936 = vpop.xlane.xlu0 %1935
  %v1937 = vsub.f32 %v1932, %v1936
  %v1938 = vmul.f32 %v1937, 1.442695
  %v1939 = vpow.pop %v1938
  %1940 = vadd.xlane.f32.xlu0 %v1939
  %v1941 = vpop.xlane.xlu0 %1940
  %v1942 = vrcp.pop %v1941
  %v1943 = vmul.f32 %v1939, %v1942
  %v1944 = vmul.f32 %v1943, %v1790
  %1945 = vmatprep.subr.mxu0 0.0
  %1946 = vmatpush1.msra.mxu0 %v600
  %1947 = vmatprep.subr.mxu0 0.0
  %1948 = vmatpush1.msra.mxu0 %v601
  %1949 = vmatprep.subr.mxu0 0.0
  %1950 = vmatpush1.msra.mxu0 %v602
  %1951 = vmatprep.subr.mxu0 0.0
  %1952 = vmatpush1.msra.mxu0 %v603
  %1953 = vmatprep.subr.mxu0 0.0
  %1954 = vmatpush1.msra.mxu0 %v604
  %1955 = vmatprep.subr.mxu0 0.0
  %1956 = vmatpush1.msra.mxu0 %v605
  %1957 = vmatprep.subr.mxu0 0.0
  %1958 = vmatpush1.msra.mxu0 %v606
  %1959 = vmatprep.subr.mxu0 0.0
  %1960 = vmatpush1.msra.mxu0 %v607
  %1961 = vmatprep.subr.mxu0 0.0
  %1962 = vmatpush1.msra.mxu0 %v608
  %1963 = vmatprep.subr.mxu0 0.0
  %1964 = vmatpush1.msra.mxu0 %v609
  %1965 = vmatprep.subr.mxu0 0.0
  %1966 = vmatpush1.msra.mxu0 %v610
  %1967 = vmatprep.subr.mxu0 0.0
  %1968 = vmatpush1.msra.mxu0 %v611
  %1969 = vmatprep.subr.mxu0 0.0
  %1970 = vmatpush1.msra.mxu0 %v612
  %1971 = vmatprep.subr.mxu0 0.0
  %1972 = vmatpush1.msra.mxu0 %v613
  %1973 = vmatprep.subr.mxu0 0.0
  %1974 = vmatpush1.msra.mxu0 %v614
  %1975 = vmatprep.subr.mxu0 0.0
  %1976 = vmatpush1.msra.mxu0 %v615
  %1977 = vmatprep.subr.mxu0 0.0
  %1978 = vmatpush1.msra.mxu0 0.0
  %1979 = vmatprep.subr.mxu0 0.0
  %1980 = vmatpush1.msra.mxu0 0.0
  %1981 = vmatprep.subr.mxu0 0.0
  %1982 = vmatpush1.msra.mxu0 0.0
  %1983 = vmatprep.subr.mxu0 0.0
  %1984 = vmatpush1.msra.mxu0 0.0
  %1985 = vmatprep.subr.mxu0 0.0
  %1986 = vmatpush1.msra.mxu0 0.0
  %1987 = vmatprep.subr.mxu0 0.0
  %1988 = vmatpush1.msra.mxu0 0.0
  %1989 = vmatprep.subr.mxu0 0.0
  %1990 = vmatpush1.msra.mxu0 0.0
  %1991 = vmatprep.subr.mxu0 0.0
  %1992 = vmatpush1.msra.mxu0 0.0
  %1993 = vmatprep.subr.mxu0 0.0
  %1994 = vmatpush1.msra.mxu0 0.0
  %1995 = vmatprep.subr.mxu0 0.0
  %1996 = vmatpush1.msra.mxu0 0.0
  %1997 = vmatprep.subr.mxu0 0.0
  %1998 = vmatpush1.msra.mxu0 0.0
  %1999 = vmatprep.subr.mxu0 0.0
  %2000 = vmatpush1.msra.mxu0 0.0
  %2001 = vmatprep.subr.mxu0 0.0
  %2002 = vmatpush1.msra.mxu0 0.0
  %2003 = vmatprep.subr.mxu0 0.0
  %2004 = vmatpush1.msra.mxu0 0.0
  %2005 = vmatprep.subr.mxu0 0.0
  %2006 = vmatpush1.msra.mxu0 0.0
  %2007 = vmatprep.subr.mxu0 0.0
  %2008 = vmatpush1.msra.mxu0 0.0
  %2009 = vmatprep.mubr.f32.mxu0 0.0
  %2010 = vmatmul.mubr.f32.gmra.mrb[0].mxu0 %v1944
  %v2011 = vpop.f32.mrb[0].mxu0
  %v2012 = vadd.f32 %v90, %v2011
  %v2013 = vpop.f32.mrb[0].mxu0
  %2014 = vdwg.mxu0
  %v2015 = vmax.f32 %v2012, 0.0
  %v2017 = vsel %vm141, %v2015, 0
  %2019 = vmatprep.subr.mxu0 0.0
  %2020 = vmatpush1.msra.mxu0 %v687
  %2021 = vmatprep.subr.mxu0 0.0
  %2022 = vmatpush1.msra.mxu0 %v688
  %2023 = vmatprep.subr.mxu0 0.0
  %2024 = vmatpush1.msra.mxu0 %v689
  %2025 = vmatprep.subr.mxu0 0.0
  %2026 = vmatpush1.msra.mxu0 %v690
  %2027 = vmatprep.subr.mxu0 0.0
  %2028 = vmatpush1.msra.mxu0 0.0
  %2029 = vmatprep.subr.mxu0 0.0
  %2030 = vmatpush1.msra.mxu0 0.0
  %2031 = vmatprep.subr.mxu0 0.0
  %2032 = vmatpush1.msra.mxu0 0.0
  %2033 = vmatprep.subr.mxu0 0.0
  %2034 = vmatpush1.msra.mxu0 0.0
  %2035 = vmatprep.subr.mxu0 0.0
  %2036 = vmatpush1.msra.mxu0 0.0
  %2037 = vmatprep.subr.mxu0 0.0
  %2038 = vmatpush1.msra.mxu0 0.0
  %2039 = vmatprep.subr.mxu0 0.0
  %2040 = vmatpush1.msra.mxu0 0.0
  %2041 = vmatprep.subr.mxu0 0.0
  %2042 = vmatpush1.msra.mxu0 0.0
  %2043 = vmatprep.subr.mxu0 0.0
  %2044 = vmatpush1.msra.mxu0 0.0
  %2045 = vmatprep.subr.mxu0 0.0
  %2046 = vmatpush1.msra.mxu0 0.0
  %2047 = vmatprep.subr.mxu0 0.0
  %2048 = vmatpush1.msra.mxu0 0.0
  %2049 = vmatprep.subr.mxu0 0.0
  %2050 = vmatpush1.msra.mxu0 0.0
  %2051 = vmatprep.subr.mxu0 0.0
  %2052 = vmatpush1.msra.mxu0 0.0
  %2053 = vmatprep.subr.mxu0 0.0
  %2054 = vmatpush1.msra.mxu0 0.0
  %2055 = vmatprep.subr.mxu0 0.0
  %2056 = vmatpush1.msra.mxu0 0.0
  %2057 = vmatprep.subr.mxu0 0.0
  %2058 = vmatpush1.msra.mxu0 0.0
  %2059 = vmatprep.subr.mxu0 0.0
  %2060 = vmatpush1.msra.mxu0 0.0
  %2061 = vmatprep.subr.mxu0 0.0
  %2062 = vmatpush1.msra.mxu0 0.0
  %2063 = vmatprep.subr.mxu0 0.0
  %2064 = vmatpush1.msra.mxu0 0.0
  %2065 = vmatprep.subr.mxu0 0.0
  %2066 = vmatpush1.msra.mxu0 0.0
  %2067 = vmatprep.subr.mxu0 0.0
  %2068 = vmatpush1.msra.mxu0 0.0
  %2069 = vmatprep.subr.mxu0 0.0
  %2070 = vmatpush1.msra.mxu0 0.0
  %2071 = vmatprep.subr.mxu0 0.0
  %2072 = vmatpush1.msra.mxu0 0.0
  %2073 = vmatprep.subr.mxu0 0.0
  %2074 = vmatpush1.msra.mxu0 0.0
  %2075 = vmatprep.subr.mxu0 0.0
  %2076 = vmatpush1.msra.mxu0 0.0
  %2077 = vmatprep.subr.mxu0 0.0
  %2078 = vmatpush1.msra.mxu0 0.0
  %2079 = vmatprep.subr.mxu0 0.0
  %2080 = vmatpush1.msra.mxu0 0.0
  %2081 = vmatprep.subr.mxu0 0.0
  %2082 = vmatpush1.msra.mxu0 0.0
  %2083 = vmatprep.mubr.f32.mxu0 0.0
  %2084 = vmatmul.mubr.f32.gmra.mrb[0].mxu0 %v2017
  %v2085 = vpop.f32.mrb[0].mxu0
  %v2086 = vadd.f32 %v97, %v2085
  %v2087 = vpop.f32.mrb[0].mxu0
  %2088 = vdwg.mxu0
  %v2089 = vtanh.pop %v2086
  %v2091 = vsel %vm314, %v1677, 0
  %2093 = vmatprep.subr.mxu0 0.0
  %2094 = vmatpush1.msra.mxu0 %v781
  %2095 = vmatprep.subr.mxu0 0.0
  %2096 = vmatpush1.msra.mxu0 %v782
  %2097 = vmatprep.subr.mxu0 0.0
  %2098 = vmatpush1.msra.mxu0 %v783
  %2099 = vmatprep.subr.mxu0 0.0
  %2100 = vmatpush1.msra.mxu0 %v784
  %2101 = vmatprep.subr.mxu0 0.0
  %2102 = vmatpush1.msra.mxu0 %v785
  %2103 = vmatprep.subr.mxu0 0.0
  %2104 = vmatpush1.msra.mxu0 %v786
  %2105 = vmatprep.subr.mxu0 0.0
  %2106 = vmatpush1.msra.mxu0 %v787
  %2107 = vmatprep.subr.mxu0 0.0
  %2108 = vmatpush1.msra.mxu0 %v788
  %2109 = vmatprep.subr.mxu0 0.0
  %2110 = vmatpush1.msra.mxu0 0.0
  %2111 = vmatprep.subr.mxu0 0.0
  %2112 = vmatpush1.msra.mxu0 0.0
  %2113 = vmatprep.subr.mxu0 0.0
  %2114 = vmatpush1.msra.mxu0 0.0
  %2115 = vmatprep.subr.mxu0 0.0
  %2116 = vmatpush1.msra.mxu0 0.0
  %2117 = vmatprep.subr.mxu0 0.0
  %2118 = vmatpush1.msra.mxu0 0.0
  %2119 = vmatprep.subr.mxu0 0.0
  %2120 = vmatpush1.msra.mxu0 0.0
  %2121 = vmatprep.subr.mxu0 0.0
  %2122 = vmatpush1.msra.mxu0 0.0
  %2123 = vmatprep.subr.mxu0 0.0
  %2124 = vmatpush1.msra.mxu0 0.0
  %2125 = vmatprep.subr.mxu0 0.0
  %2126 = vmatpush1.msra.mxu0 0.0
  %2127 = vmatprep.subr.mxu0 0.0
  %2128 = vmatpush1.msra.mxu0 0.0
  %2129 = vmatprep.subr.mxu0 0.0
  %2130 = vmatpush1.msra.mxu0 0.0
  %2131 = vmatprep.subr.mxu0 0.0
  %2132 = vmatpush1.msra.mxu0 0.0
  %2133 = vmatprep.subr.mxu0 0.0
  %2134 = vmatpush1.msra.mxu0 0.0
  %2135 = vmatprep.subr.mxu0 0.0
  %2136 = vmatpush1.msra.mxu0 0.0
  %2137 = vmatprep.subr.mxu0 0.0
  %2138 = vmatpush1.msra.mxu0 0.0
  %2139 = vmatprep.subr.mxu0 0.0
  %2140 = vmatpush1.msra.mxu0 0.0
  %2141 = vmatprep.subr.mxu0 0.0
  %2142 = vmatpush1.msra.mxu0 0.0
  %2143 = vmatprep.subr.mxu0 0.0
  %2144 = vmatpush1.msra.mxu0 0.0
  %2145 = vmatprep.subr.mxu0 0.0
  %2146 = vmatpush1.msra.mxu0 0.0
  %2147 = vmatprep.subr.mxu0 0.0
  %2148 = vmatpush1.msra.mxu0 0.0
  %2149 = vmatprep.subr.mxu0 0.0
  %2150 = vmatpush1.msra.mxu0 0.0
  %2151 = vmatprep.subr.mxu0 0.0
  %2152 = vmatpush1.msra.mxu0 0.0
  %2153 = vmatprep.subr.mxu0 0.0
  %2154 = vmatpush1.msra.mxu0 0.0
  %2155 = vmatprep.subr.mxu0 0.0
  %2156 = vmatpush1.msra.mxu0 0.0
  %2157 = vmatprep.mubr.f32.mxu0 0.0
  %2158 = vmatmul.mubr.f32.gmra.mrb[0].mxu0 %v2091
  %v2159 = vpop.f32.mrb[0].mxu0
  %v2160 = vadd.f32 0.0, %v2159
  %v2161 = vpop.f32.mrb[0].mxu0
  %2162 = vdwg.mxu0
  %2163 = vmatprep.subr.mxu0 0.0
  %2164 = vmatpush1.msra.mxu0 %v765
  %2165 = vmatprep.subr.mxu0 0.0
  %2166 = vmatpush1.msra.mxu0 %v766
  %2167 = vmatprep.subr.mxu0 0.0
  %2168 = vmatpush1.msra.mxu0 %v767
  %2169 = vmatprep.subr.mxu0 0.0
  %2170 = vmatpush1.msra.mxu0 %v768
  %2171 = vmatprep.subr.mxu0 0.0
  %2172 = vmatpush1.msra.mxu0 %v769
  %2173 = vmatprep.subr.mxu0 0.0
  %2174 = vmatpush1.msra.mxu0 %v770
  %2175 = vmatprep.subr.mxu0 0.0
  %2176 = vmatpush1.msra.mxu0 %v771
  %2177 = vmatprep.subr.mxu0 0.0
  %2178 = vmatpush1.msra.mxu0 %v772
  %2179 = vmatprep.subr.mxu0 0.0
  %2180 = vmatpush1.msra.mxu0 %v773
  %2181 = vmatprep.subr.mxu0 0.0
  %2182 = vmatpush1.msra.mxu0 %v774
  %2183 = vmatprep.subr.mxu0 0.0
  %2184 = vmatpush1.msra.mxu0 %v775
  %2185 = vmatprep.subr.mxu0 0.0
  %2186 = vmatpush1.msra.mxu0 %v776
  %2187 = vmatprep.subr.mxu0 0.0
  %2188 = vmatpush1.msra.mxu0 %v777
  %2189 = vmatprep.subr.mxu0 0.0
  %2190 = vmatpush1.msra.mxu0 %v778
  %2191 = vmatprep.subr.mxu0 0.0
  %2192 = vmatpush1.msra.mxu0 %v779
  %2193 = vmatprep.subr.mxu0 0.0
  %2194 = vmatpush1.msra.mxu0 %v780
  %2195 = vmatprep.subr.mxu0 0.0
  %2196 = vmatpush1.msra.mxu0 0.0
  %2197 = vmatprep.subr.mxu0 0.0
  %2198 = vmatpush1.msra.mxu0 0.0
  %2199 = vmatprep.subr.mxu0 0.0
  %2200 = vmatpush1.msra.mxu0 0.0
  %2201 = vmatprep.subr.mxu0 0.0
  %2202 = vmatpush1.msra.mxu0 0.0
  %2203 = vmatprep.subr.mxu0 0.0
  %2204 = vmatpush1.msra.mxu0 0.0
  %2205 = vmatprep.subr.mxu0 0.0
  %2206 = vmatpush1.msra.mxu0 0.0
  %2207 = vmatprep.subr.mxu0 0.0
  %2208 = vmatpush1.msra.mxu0 0.0
  %2209 = vmatprep.subr.mxu0 0.0
  %2210 = vmatpush1.msra.mxu0 0.0
  %2211 = vmatprep.subr.mxu0 0.0
  %2212 = vmatpush1.msra.mxu0 0.0
  %2213 = vmatprep.subr.mxu0 0.0
  %2214 = vmatpush1.msra.mxu0 0.0
  %2215 = vmatprep.subr.mxu0 0.0
  %2216 = vmatpush1.msra.mxu0 0.0
  %2217 = vmatprep.subr.mxu0 0.0
  %2218 = vmatpush1.msra.mxu0 0.0
  %2219 = vmatprep.subr.mxu0 0.0
  %2220 = vmatpush1.msra.mxu0 0.0
  %2221 = vmatprep.subr.mxu0 0.0
  %2222 = vmatpush1.msra.mxu0 0.0
  %2223 = vmatprep.subr.mxu0 0.0
  %2224 = vmatpush1.msra.mxu0 0.0
  %2225 = vmatprep.subr.mxu0 0.0
  %2226 = vmatpush1.msra.mxu0 0.0
  %2227 = vmatprep.mubr.f32.mxu0 0.0
  %2228 = vmatmul.mubr.f32.gmra.mrb[0].mxu0 %v1944
  %v2229 = vpop.f32.mrb[0].mxu0
  %v2230 = vadd.f32 %v2160, %v2229
  %v2231 = vpop.f32.mrb[0].mxu0
  %2232 = vdwg.mxu0
  %v2233 = vadd.f32 %v2230, %v104
  %v2234 = vmax.f32 %v2233, 0.0
  %v2236 = vsel %vm314, %v2234, 0
  %2238 = vmatprep.subr.mxu0 0.0
  %2239 = vmatpush1.msra.mxu0 %v933
  %2240 = vmatprep.subr.mxu0 0.0
  %2241 = vmatpush1.msra.mxu0 %v934
  %2242 = vmatprep.subr.mxu0 0.0
  %2243 = vmatpush1.msra.mxu0 %v935
  %2244 = vmatprep.subr.mxu0 0.0
  %2245 = vmatpush1.msra.mxu0 %v936
  %2246 = vmatprep.subr.mxu0 0.0
  %2247 = vmatpush1.msra.mxu0 %v937
  %2248 = vmatprep.subr.mxu0 0.0
  %2249 = vmatpush1.msra.mxu0 %v938
  %2250 = vmatprep.subr.mxu0 0.0
  %2251 = vmatpush1.msra.mxu0 %v939
  %2252 = vmatprep.subr.mxu0 0.0
  %2253 = vmatpush1.msra.mxu0 %v940
  %2254 = vmatprep.subr.mxu0 0.0
  %2255 = vmatpush1.msra.mxu0 0.0
  %2256 = vmatprep.subr.mxu0 0.0
  %2257 = vmatpush1.msra.mxu0 0.0
  %2258 = vmatprep.subr.mxu0 0.0
  %2259 = vmatpush1.msra.mxu0 0.0
  %2260 = vmatprep.subr.mxu0 0.0
  %2261 = vmatpush1.msra.mxu0 0.0
  %2262 = vmatprep.subr.mxu0 0.0
  %2263 = vmatpush1.msra.mxu0 0.0
  %2264 = vmatprep.subr.mxu0 0.0
  %2265 = vmatpush1.msra.mxu0 0.0
  %2266 = vmatprep.subr.mxu0 0.0
  %2267 = vmatpush1.msra.mxu0 0.0
  %2268 = vmatprep.subr.mxu0 0.0
  %2269 = vmatpush1.msra.mxu0 0.0
  %2270 = vmatprep.subr.mxu0 0.0
  %2271 = vmatpush1.msra.mxu0 0.0
  %2272 = vmatprep.subr.mxu0 0.0
  %2273 = vmatpush1.msra.mxu0 0.0
  %2274 = vmatprep.subr.mxu0 0.0
  %2275 = vmatpush1.msra.mxu0 0.0
  %2276 = vmatprep.subr.mxu0 0.0
  %2277 = vmatpush1.msra.mxu0 0.0
  %2278 = vmatprep.subr.mxu0 0.0
  %2279 = vmatpush1.msra.mxu0 0.0
  %2280 = vmatprep.subr.mxu0 0.0
  %2281 = vmatpush1.msra.mxu0 0.0
  %2282 = vmatprep.subr.mxu0 0.0
  %2283 = vmatpush1.msra.mxu0 0.0
  %2284 = vmatprep.subr.mxu0 0.0
  %2285 = vmatpush1.msra.mxu0 0.0
  %2286 = vmatprep.subr.mxu0 0.0
  %2287 = vmatpush1.msra.mxu0 0.0
  %2288 = vmatprep.subr.mxu0 0.0
  %2289 = vmatpush1.msra.mxu0 0.0
  %2290 = vmatprep.subr.mxu0 0.0
  %2291 = vmatpush1.msra.mxu0 0.0
  %2292 = vmatprep.subr.mxu0 0.0
  %2293 = vmatpush1.msra.mxu0 0.0
  %2294 = vmatprep.subr.mxu0 0.0
  %2295 = vmatpush1.msra.mxu0 0.0
  %2296 = vmatprep.subr.mxu0 0.0
  %2297 = vmatpush1.msra.mxu0 0.0
  %2298 = vmatprep.subr.mxu0 0.0
  %2299 = vmatpush1.msra.mxu0 0.0
  %2300 = vmatprep.subr.mxu0 0.0
  %2301 = vmatpush1.msra.mxu0 0.0
  %2302 = vmatprep.mubr.f32.mxu0 0.0
  %2303 = vmatmul.mubr.f32.gmra.mrb[0].mxu0 %v2236
  %v2304 = vpop.f32.mrb[0].mxu0
  %v2305 = vadd.f32 %v111, %v2304
  %v2306 = vpop.f32.mrb[0].mxu0
  %2307 = vdwg.mxu0
  %v2308 = vxor.u32 %v2305, 2147483648
  %v2309 = vmul.f32 %v2308, 1.442695
  %v2310 = vpow.pop %v2309
  %v2311 = vadd.f32 %v2310, 1.0
  %v2312 = vrcp.pop %v2311
  %v2313 = vmul.f32 1.0, %v2312
  %v2314 = vmul.f32 %v2313, %v1677
  %2316 = vrot.lane.b32.xlu0 %v2089, 64
  %v2317 = vpop.permute.xlu0 %2316
  %v2319 = vmul.f32 %v2313, %v2317
  %2321 = vrot.lane.b32.xlu0 %v2319, 64
  %v2322 = vpop.permute.xlu0 %2321
  %v2324 = vadd.f32 %v2314, %v2322
  %v2325 = vld [vmem:[#allocation2 + $0x30] sm:$0xff]
  %v2326 = vld [vmem:[#allocation2 + $0x38] sm:$0xff]
  %v2328 = vsel %vm314, %v1785, 0
  %2330 = vmatprep.subr.mxu0 %v299
  %2331 = vmatpush1.msra.mxu0 %v298
  %2332 = vmatprep.subr.mxu0 %v301
  %2333 = vmatpush1.msra.mxu0 %v300
  %2334 = vmatprep.subr.mxu0 %v303
  %2335 = vmatpush1.msra.mxu0 %v302
  %2336 = vmatprep.subr.mxu0 %v305
  %2337 = vmatpush1.msra.mxu0 %v304
  %2338 = vmatprep.subr.mxu0 %v307
  %2339 = vmatpush1.msra.mxu0 %v306
  %2340 = vmatprep.subr.mxu0 %v309
  %2341 = vmatpush1.msra.mxu0 %v308
  %2342 = vmatprep.subr.mxu0 %v311
  %2343 = vmatpush1.msra.mxu0 %v310
  %2344 = vmatprep.subr.mxu0 %v313
  %2345 = vmatpush1.msra.mxu0 %v312
  %2346 = vmatprep.subr.mxu0 0.0
  %2347 = vmatpush1.msra.mxu0 0.0
  %2348 = vmatprep.subr.mxu0 0.0
  %2349 = vmatpush1.msra.mxu0 0.0
  %2350 = vmatprep.subr.mxu0 0.0
  %2351 = vmatpush1.msra.mxu0 0.0
  %2352 = vmatprep.subr.mxu0 0.0
  %2353 = vmatpush1.msra.mxu0 0.0
  %2354 = vmatprep.subr.mxu0 0.0
  %2355 = vmatpush1.msra.mxu0 0.0
  %2356 = vmatprep.subr.mxu0 0.0
  %2357 = vmatpush1.msra.mxu0 0.0
  %2358 = vmatprep.subr.mxu0 0.0
  %2359 = vmatpush1.msra.mxu0 0.0
  %2360 = vmatprep.subr.mxu0 0.0
  %2361 = vmatpush1.msra.mxu0 0.0
  %2362 = vmatprep.subr.mxu0 0.0
  %2363 = vmatpush1.msra.mxu0 0.0
  %2364 = vmatprep.subr.mxu0 0.0
  %2365 = vmatpush1.msra.mxu0 0.0
  %2366 = vmatprep.subr.mxu0 0.0
  %2367 = vmatpush1.msra.mxu0 0.0
  %2368 = vmatprep.subr.mxu0 0.0
  %2369 = vmatpush1.msra.mxu0 0.0
  %2370 = vmatprep.subr.mxu0 0.0
  %2371 = vmatpush1.msra.mxu0 0.0
  %2372 = vmatprep.subr.mxu0 0.0
  %2373 = vmatpush1.msra.mxu0 0.0
  %2374 = vmatprep.subr.mxu0 0.0
  %2375 = vmatpush1.msra.mxu0 0.0
  %2376 = vmatprep.subr.mxu0 0.0
  %2377 = vmatpush1.msra.mxu0 0.0
  %2378 = vmatprep.subr.mxu0 0.0
  %2379 = vmatpush1.msra.mxu0 0.0
  %2380 = vmatprep.subr.mxu0 0.0
  %2381 = vmatpush1.msra.mxu0 0.0
  %2382 = vmatprep.subr.mxu0 0.0
  %2383 = vmatpush1.msra.mxu0 0.0
  %2384 = vmatprep.subr.mxu0 0.0
  %2385 = vmatpush1.msra.mxu0 0.0
  %2386 = vmatprep.subr.mxu0 0.0
  %2387 = vmatpush1.msra.mxu0 0.0
  %2388 = vmatprep.subr.mxu0 0.0
  %2389 = vmatpush1.msra.mxu0 0.0
  %2390 = vmatprep.subr.mxu0 0.0
  %2391 = vmatpush1.msra.mxu0 0.0
  %2392 = vmatprep.subr.mxu0 0.0
  %2393 = vmatpush1.msra.mxu0 0.0
  %2394 = vmatprep.mubr.f32.mxu0 0.0
  %2395 = vmatmul.mubr.f32.gmra.mrb[0].mxu0 %v2328
  %v2396 = vpop.f32.mrb[0].mxu0
  %v2397 = vadd.f32 0.0, %v2396
  %v2398 = vpop.f32.mrb[0].mxu0
  %v2399 = vadd.f32 0.0, %v2398
  %2400 = vdwg.mxu0
  %v2401 = vadd.f32 %v2325, %v2397
  %v2402 = vadd.f32 %v2326, %v2399
  %v2403 = vxor.u32 %v2401, 2147483648
  %v2404 = vxor.u32 %v2402, 2147483648
  %v2405 = vmul.f32 %v2403, 1.442695
  %v2406 = vpow.pop %v2405
  %v2407 = vmul.f32 %v2404, 1.442695
  %v2408 = vpow.pop %v2407
  %v2409 = vadd.f32 %v2406, 1.0
  %v2410 = vadd.f32 %v2408, 1.0
  %v2411 = vrcp.pop %v2409
  %v2412 = vmul.f32 1.0, %v2411
  %v2413 = vrcp.pop %v2410
  %v2414 = vmul.f32 1.0, %v2413
  %v2415 = vtanh.pop %v2402
  %v2416 = vmul.f32 %v2412, %v1779
  %2418 = vrot.lane.b32.xlu0 %v2415, 64
  %v2419 = vpop.permute.xlu0 %2418
  %v2421 = vmul.f32 %v2412, %v2419
  %2423 = vrot.lane.b32.xlu0 %v2421, 64
  %v2424 = vpop.permute.xlu0 %2423
  %v2426 = vadd.f32 %v2416, %v2424
  %v2427 = vtanh.pop %v2426
  %2429 = vrot.lane.b32.xlu0 %v2427, 64
  %v2430 = vpop.permute.xlu0 %2429
  %v2432 = vmul.f32 %v2414, %v2430
  %2434 = vrot.lane.b32.xlu0 %v1779, 64
  %v2435 = vpop.permute.xlu0 %2434
  %v2437 = vsel %vm314, %v2435, %v2426
  %2438 = vmatprep.subr.mxu0 0.0
  %2439 = vmatpush1.msra.mxu0 %v426
  %2440 = vmatprep.subr.mxu0 0.0
  %2441 = vmatpush1.msra.mxu0 %v427
  %2442 = vmatprep.subr.mxu0 0.0
  %2443 = vmatpush1.msra.mxu0 %v428
  %2444 = vmatprep.subr.mxu0 0.0
  %2445 = vmatpush1.msra.mxu0 %v429
  %2446 = vmatprep.subr.mxu0 0.0
  %2447 = vmatpush1.msra.mxu0 %v430
  %2448 = vmatprep.subr.mxu0 0.0
  %2449 = vmatpush1.msra.mxu0 %v431
  %2450 = vmatprep.subr.mxu0 0.0
  %2451 = vmatpush1.msra.mxu0 %v432
  %2452 = vmatprep.subr.mxu0 0.0
  %2453 = vmatpush1.msra.mxu0 %v433
  %2454 = vmatprep.subr.mxu0 0.0
  %2455 = vmatpush1.msra.mxu0 %v434
  %2456 = vmatprep.subr.mxu0 0.0
  %2457 = vmatpush1.msra.mxu0 %v435
  %2458 = vmatprep.subr.mxu0 0.0
  %2459 = vmatpush1.msra.mxu0 %v436
  %2460 = vmatprep.subr.mxu0 0.0
  %2461 = vmatpush1.msra.mxu0 %v437
  %2462 = vmatprep.subr.mxu0 0.0
  %2463 = vmatpush1.msra.mxu0 %v438
  %2464 = vmatprep.subr.mxu0 0.0
  %2465 = vmatpush1.msra.mxu0 %v439
  %2466 = vmatprep.subr.mxu0 0.0
  %2467 = vmatpush1.msra.mxu0 %v440
  %2468 = vmatprep.subr.mxu0 0.0
  %2469 = vmatpush1.msra.mxu0 %v441
  %2470 = vmatprep.subr.mxu0 0.0
  %2471 = vmatpush1.msra.mxu0 0.0
  %2472 = vmatprep.subr.mxu0 0.0
  %2473 = vmatpush1.msra.mxu0 0.0
  %2474 = vmatprep.subr.mxu0 0.0
  %2475 = vmatpush1.msra.mxu0 0.0
  %2476 = vmatprep.subr.mxu0 0.0
  %2477 = vmatpush1.msra.mxu0 0.0
  %2478 = vmatprep.subr.mxu0 0.0
  %2479 = vmatpush1.msra.mxu0 0.0
  %2480 = vmatprep.subr.mxu0 0.0
  %2481 = vmatpush1.msra.mxu0 0.0
  %2482 = vmatprep.subr.mxu0 0.0
  %2483 = vmatpush1.msra.mxu0 0.0
  %2484 = vmatprep.subr.mxu0 0.0
  %2485 = vmatpush1.msra.mxu0 0.0
  %2486 = vmatprep.subr.mxu0 0.0
  %2487 = vmatpush1.msra.mxu0 0.0
  %2488 = vmatprep.subr.mxu0 0.0
  %2489 = vmatpush1.msra.mxu0 0.0
  %2490 = vmatprep.subr.mxu0 0.0
  %2491 = vmatpush1.msra.mxu0 0.0
  %2492 = vmatprep.subr.mxu0 0.0
  %2493 = vmatpush1.msra.mxu0 0.0
  %2494 = vmatprep.subr.mxu0 0.0
  %2495 = vmatpush1.msra.mxu0 0.0
  %2496 = vmatprep.subr.mxu0 0.0
  %2497 = vmatpush1.msra.mxu0 0.0
  %2498 = vmatprep.subr.mxu0 0.0
  %2499 = vmatpush1.msra.mxu0 0.0
  %2500 = vmatprep.subr.mxu0 0.0
  %2501 = vmatpush1.msra.mxu0 0.0
  %2502 = vmatprep.mubr.f32.mxu0 0.0
  %2503 = vmatmul.mubr.f32.gmra.mrb[0].mxu0 %v2437
  %v2504 = vpop.f32.mrb[0].mxu0
  %v2505 = vadd.f32 %v76, %v2504
  %v2506 = vpop.f32.mrb[0].mxu0
  %2507 = vdwg.mxu0
  %v2508 = vmax.f32 %v2505, 0.0
  %v2510 = vsel %vm141, %v2508, 0
  %2512 = vmatprep.subr.mxu0 0.0
  %2513 = vmatpush1.msra.mxu0 %v513
  %2514 = vmatprep.subr.mxu0 0.0
  %2515 = vmatpush1.msra.mxu0 %v514
  %2516 = vmatprep.subr.mxu0 0.0
  %2517 = vmatpush1.msra.mxu0 %v515
  %2518 = vmatprep.subr.mxu0 0.0
  %2519 = vmatpush1.msra.mxu0 %v516
  %2520 = vmatprep.subr.mxu0 0.0
  %2521 = vmatpush1.msra.mxu0 0.0
  %2522 = vmatprep.subr.mxu0 0.0
  %2523 = vmatpush1.msra.mxu0 0.0
  %2524 = vmatprep.subr.mxu0 0.0
  %2525 = vmatpush1.msra.mxu0 0.0
  %2526 = vmatprep.subr.mxu0 0.0
  %2527 = vmatpush1.msra.mxu0 0.0
  %2528 = vmatprep.subr.mxu0 0.0
  %2529 = vmatpush1.msra.mxu0 0.0
  %2530 = vmatprep.subr.mxu0 0.0
  %2531 = vmatpush1.msra.mxu0 0.0
  %2532 = vmatprep.subr.mxu0 0.0
  %2533 = vmatpush1.msra.mxu0 0.0
  %2534 = vmatprep.subr.mxu0 0.0
  %2535 = vmatpush1.msra.mxu0 0.0
  %2536 = vmatprep.subr.mxu0 0.0
  %2537 = vmatpush1.msra.mxu0 0.0
  %2538 = vmatprep.subr.mxu0 0.0
  %2539 = vmatpush1.msra.mxu0 0.0
  %2540 = vmatprep.subr.mxu0 0.0
  %2541 = vmatpush1.msra.mxu0 0.0
  %2542 = vmatprep.subr.mxu0 0.0
  %2543 = vmatpush1.msra.mxu0 0.0
  %2544 = vmatprep.subr.mxu0 0.0
  %2545 = vmatpush1.msra.mxu0 0.0
  %2546 = vmatprep.subr.mxu0 0.0
  %2547 = vmatpush1.msra.mxu0 0.0
  %2548 = vmatprep.subr.mxu0 0.0
  %2549 = vmatpush1.msra.mxu0 0.0
  %2550 = vmatprep.subr.mxu0 0.0
  %2551 = vmatpush1.msra.mxu0 0.0
  %2552 = vmatprep.subr.mxu0 0.0
  %2553 = vmatpush1.msra.mxu0 0.0
  %2554 = vmatprep.subr.mxu0 0.0
  %2555 = vmatpush1.msra.mxu0 0.0
  %2556 = vmatprep.subr.mxu0 0.0
  %2557 = vmatpush1.msra.mxu0 0.0
  %2558 = vmatprep.subr.mxu0 0.0
  %2559 = vmatpush1.msra.mxu0 0.0
  %2560 = vmatprep.subr.mxu0 0.0
  %2561 = vmatpush1.msra.mxu0 0.0
  %2562 = vmatprep.subr.mxu0 0.0
  %2563 = vmatpush1.msra.mxu0 0.0
  %2564 = vmatprep.subr.mxu0 0.0
  %2565 = vmatpush1.msra.mxu0 0.0
  %2566 = vmatprep.subr.mxu0 0.0
  %2567 = vmatpush1.msra.mxu0 0.0
  %2568 = vmatprep.subr.mxu0 0.0
  %2569 = vmatpush1.msra.mxu0 0.0
  %2570 = vmatprep.subr.mxu0 0.0
  %2571 = vmatpush1.msra.mxu0 0.0
  %2572 = vmatprep.subr.mxu0 0.0
  %2573 = vmatpush1.msra.mxu0 0.0
  %2574 = vmatprep.subr.mxu0 0.0
  %2575 = vmatpush1.msra.mxu0 0.0
  %2576 = vmatprep.mubr.f32.mxu0 0.0
  %2577 = vmatmul.mubr.f32.gmra.mrb[0].mxu0 %v2510
  %v2578 = vpop.f32.mrb[0].mxu0
  %v2579 = vadd.f32 %v83, %v2578
  %v2580 = vpop.f32.mrb[0].mxu0
  %2581 = vdwg.mxu0
  %2582 = vmax.xlane.f32.xlu0 %v2579
  %v2583 = vpop.xlane.xlu0 %2582
  %v2584 = vsub.f32 %v2579, %v2583
  %v2585 = vmul.f32 %v2584, 1.442695
  %v2586 = vpow.pop %v2585
  %2587 = vadd.xlane.f32.xlu0 %v2586
  %v2588 = vpop.xlane.xlu0 %2587
  %v2589 = vrcp.pop %v2588
  %v2590 = vmul.f32 %v2586, %v2589
  %v2591 = vmul.f32 %v2590, %v2437
  %2592 = vmatprep.subr.mxu0 0.0
  %2593 = vmatpush1.msra.mxu0 %v600
  %2594 = vmatprep.subr.mxu0 0.0
  %2595 = vmatpush1.msra.mxu0 %v601
  %2596 = vmatprep.subr.mxu0 0.0
  %2597 = vmatpush1.msra.mxu0 %v602
  %2598 = vmatprep.subr.mxu0 0.0
  %2599 = vmatpush1.msra.mxu0 %v603
  %2600 = vmatprep.subr.mxu0 0.0
  %2601 = vmatpush1.msra.mxu0 %v604
  %2602 = vmatprep.subr.mxu0 0.0
  %2603 = vmatpush1.msra.mxu0 %v605
  %2604 = vmatprep.subr.mxu0 0.0
  %2605 = vmatpush1.msra.mxu0 %v606
  %2606 = vmatprep.subr.mxu0 0.0
  %2607 = vmatpush1.msra.mxu0 %v607
  %2608 = vmatprep.subr.mxu0 0.0
  %2609 = vmatpush1.msra.mxu0 %v608
  %2610 = vmatprep.subr.mxu0 0.0
  %2611 = vmatpush1.msra.mxu0 %v609
  %2612 = vmatprep.subr.mxu0 0.0
  %2613 = vmatpush1.msra.mxu0 %v610
  %2614 = vmatprep.subr.mxu0 0.0
  %2615 = vmatpush1.msra.mxu0 %v611
  %2616 = vmatprep.subr.mxu0 0.0
  %2617 = vmatpush1.msra.mxu0 %v612
  %2618 = vmatprep.subr.mxu0 0.0
  %2619 = vmatpush1.msra.mxu0 %v613
  %2620 = vmatprep.subr.mxu0 0.0
  %2621 = vmatpush1.msra.mxu0 %v614
  %2622 = vmatprep.subr.mxu0 0.0
  %2623 = vmatpush1.msra.mxu0 %v615
  %2624 = vmatprep.subr.mxu0 0.0
  %2625 = vmatpush1.msra.mxu0 0.0
  %2626 = vmatprep.subr.mxu0 0.0
  %2627 = vmatpush1.msra.mxu0 0.0
  %2628 = vmatprep.subr.mxu0 0.0
  %2629 = vmatpush1.msra.mxu0 0.0
  %2630 = vmatprep.subr.mxu0 0.0
  %2631 = vmatpush1.msra.mxu0 0.0
  %2632 = vmatprep.subr.mxu0 0.0
  %2633 = vmatpush1.msra.mxu0 0.0
  %2634 = vmatprep.subr.mxu0 0.0
  %2635 = vmatpush1.msra.mxu0 0.0
  %2636 = vmatprep.subr.mxu0 0.0
  %2637 = vmatpush1.msra.mxu0 0.0
  %2638 = vmatprep.subr.mxu0 0.0
  %2639 = vmatpush1.msra.mxu0 0.0
  %2640 = vmatprep.subr.mxu0 0.0
  %2641 = vmatpush1.msra.mxu0 0.0
  %2642 = vmatprep.subr.mxu0 0.0
  %2643 = vmatpush1.msra.mxu0 0.0
  %2644 = vmatprep.subr.mxu0 0.0
  %2645 = vmatpush1.msra.mxu0 0.0
  %2646 = vmatprep.subr.mxu0 0.0
  %2647 = vmatpush1.msra.mxu0 0.0
  %2648 = vmatprep.subr.mxu0 0.0
  %2649 = vmatpush1.msra.mxu0 0.0
  %2650 = vmatprep.subr.mxu0 0.0
  %2651 = vmatpush1.msra.mxu0 0.0
  %2652 = vmatprep.subr.mxu0 0.0
  %2653 = vmatpush1.msra.mxu0 0.0
  %2654 = vmatprep.subr.mxu0 0.0
  %2655 = vmatpush1.msra.mxu0 0.0
  %2656 = vmatprep.mubr.f32.mxu0 0.0
  %2657 = vmatmul.mubr.f32.gmra.mrb[0].mxu0 %v2591
  %v2658 = vpop.f32.mrb[0].mxu0
  %v2659 = vadd.f32 %v90, %v2658
  %v2660 = vpop.f32.mrb[0].mxu0
  %2661 = vdwg.mxu0
  %v2662 = vmax.f32 %v2659, 0.0
  %v2664 = vsel %vm141, %v2662, 0
  %2666 = vmatprep.subr.mxu0 0.0
  %2667 = vmatpush1.msra.mxu0 %v687
  %2668 = vmatprep.subr.mxu0 0.0
  %2669 = vmatpush1.msra.mxu0 %v688
  %2670 = vmatprep.subr.mxu0 0.0
  %2671 = vmatpush1.msra.mxu0 %v689
  %2672 = vmatprep.subr.mxu0 0.0
  %2673 = vmatpush1.msra.mxu0 %v690
  %2674 = vmatprep.subr.mxu0 0.0
  %2675 = vmatpush1.msra.mxu0 0.0
  %2676 = vmatprep.subr.mxu0 0.0
  %2677 = vmatpush1.msra.mxu0 0.0
  %2678 = vmatprep.subr.mxu0 0.0
  %2679 = vmatpush1.msra.mxu0 0.0
  %2680 = vmatprep.subr.mxu0 0.0
  %2681 = vmatpush1.msra.mxu0 0.0
  %2682 = vmatprep.subr.mxu0 0.0
  %2683 = vmatpush1.msra.mxu0 0.0
  %2684 = vmatprep.subr.mxu0 0.0
  %2685 = vmatpush1.msra.mxu0 0.0
  %2686 = vmatprep.subr.mxu0 0.0
  %2687 = vmatpush1.msra.mxu0 0.0
  %2688 = vmatprep.subr.mxu0 0.0
  %2689 = vmatpush1.msra.mxu0 0.0
  %2690 = vmatprep.subr.mxu0 0.0
  %2691 = vmatpush1.msra.mxu0 0.0
  %2692 = vmatprep.subr.mxu0 0.0
  %2693 = vmatpush1.msra.mxu0 0.0
  %2694 = vmatprep.subr.mxu0 0.0
  %2695 = vmatpush1.msra.mxu0 0.0
  %2696 = vmatprep.subr.mxu0 0.0
  %2697 = vmatpush1.msra.mxu0 0.0
  %2698 = vmatprep.subr.mxu0 0.0
  %2699 = vmatpush1.msra.mxu0 0.0
  %2700 = vmatprep.subr.mxu0 0.0
  %2701 = vmatpush1.msra.mxu0 0.0
  %2702 = vmatprep.subr.mxu0 0.0
  %2703 = vmatpush1.msra.mxu0 0.0
  %2704 = vmatprep.subr.mxu0 0.0
  %2705 = vmatpush1.msra.mxu0 0.0
  %2706 = vmatprep.subr.mxu0 0.0
  %2707 = vmatpush1.msra.mxu0 0.0
  %2708 = vmatprep.subr.mxu0 0.0
  %2709 = vmatpush1.msra.mxu0 0.0
  %2710 = vmatprep.subr.mxu0 0.0
  %2711 = vmatpush1.msra.mxu0 0.0
  %2712 = vmatprep.subr.mxu0 0.0
  %2713 = vmatpush1.msra.mxu0 0.0
  %2714 = vmatprep.subr.mxu0 0.0
  %2715 = vmatpush1.msra.mxu0 0.0
  %2716 = vmatprep.subr.mxu0 0.0
  %2717 = vmatpush1.msra.mxu0 0.0
  %2718 = vmatprep.subr.mxu0 0.0
  %2719 = vmatpush1.msra.mxu0 0.0
  %2720 = vmatprep.subr.mxu0 0.0
  %2721 = vmatpush1.msra.mxu0 0.0
  %2722 = vmatprep.subr.mxu0 0.0
  %2723 = vmatpush1.msra.mxu0 0.0
  %2724 = vmatprep.subr.mxu0 0.0
  %2725 = vmatpush1.msra.mxu0 0.0
  %2726 = vmatprep.subr.mxu0 0.0
  %2727 = vmatpush1.msra.mxu0 0.0
  %2728 = vmatprep.subr.mxu0 0.0
  %2729 = vmatpush1.msra.mxu0 0.0
  %2730 = vmatprep.mubr.f32.mxu0 0.0
  %2731 = vmatmul.mubr.f32.gmra.mrb[0].mxu0 %v2664
  %v2732 = vpop.f32.mrb[0].mxu0
  %v2733 = vadd.f32 %v97, %v2732
  %v2734 = vpop.f32.mrb[0].mxu0
  %2735 = vdwg.mxu0
  %v2736 = vtanh.pop %v2733
  %v2738 = vsel %vm314, %v2324, 0
  %2740 = vmatprep.subr.mxu0 0.0
  %2741 = vmatpush1.msra.mxu0 %v781
  %2742 = vmatprep.subr.mxu0 0.0
  %2743 = vmatpush1.msra.mxu0 %v782
  %2744 = vmatprep.subr.mxu0 0.0
  %2745 = vmatpush1.msra.mxu0 %v783
  %2746 = vmatprep.subr.mxu0 0.0
  %2747 = vmatpush1.msra.mxu0 %v784
  %2748 = vmatprep.subr.mxu0 0.0
  %2749 = vmatpush1.msra.mxu0 %v785
  %2750 = vmatprep.subr.mxu0 0.0
  %2751 = vmatpush1.msra.mxu0 %v786
  %2752 = vmatprep.subr.mxu0 0.0
  %2753 = vmatpush1.msra.mxu0 %v787
  %2754 = vmatprep.subr.mxu0 0.0
  %2755 = vmatpush1.msra.mxu0 %v788
  %2756 = vmatprep.subr.mxu0 0.0
  %2757 = vmatpush1.msra.mxu0 0.0
  %2758 = vmatprep.subr.mxu0 0.0
  %2759 = vmatpush1.msra.mxu0 0.0
  %2760 = vmatprep.subr.mxu0 0.0
  %2761 = vmatpush1.msra.mxu0 0.0
  %2762 = vmatprep.subr.mxu0 0.0
  %2763 = vmatpush1.msra.mxu0 0.0
  %2764 = vmatprep.subr.mxu0 0.0
  %2765 = vmatpush1.msra.mxu0 0.0
  %2766 = vmatprep.subr.mxu0 0.0
  %2767 = vmatpush1.msra.mxu0 0.0
  %2768 = vmatprep.subr.mxu0 0.0
  %2769 = vmatpush1.msra.mxu0 0.0
  %2770 = vmatprep.subr.mxu0 0.0
  %2771 = vmatpush1.msra.mxu0 0.0
  %2772 = vmatprep.subr.mxu0 0.0
  %2773 = vmatpush1.msra.mxu0 0.0
  %2774 = vmatprep.subr.mxu0 0.0
  %2775 = vmatpush1.msra.mxu0 0.0
  %2776 = vmatprep.subr.mxu0 0.0
  %2777 = vmatpush1.msra.mxu0 0.0
  %2778 = vmatprep.subr.mxu0 0.0
  %2779 = vmatpush1.msra.mxu0 0.0
  %2780 = vmatprep.subr.mxu0 0.0
  %2781 = vmatpush1.msra.mxu0 0.0
  %2782 = vmatprep.subr.mxu0 0.0
  %2783 = vmatpush1.msra.mxu0 0.0
  %2784 = vmatprep.subr.mxu0 0.0
  %2785 = vmatpush1.msra.mxu0 0.0
  %2786 = vmatprep.subr.mxu0 0.0
  %2787 = vmatpush1.msra.mxu0 0.0
  %2788 = vmatprep.subr.mxu0 0.0
  %2789 = vmatpush1.msra.mxu0 0.0
  %2790 = vmatprep.subr.mxu0 0.0
  %2791 = vmatpush1.msra.mxu0 0.0
  %2792 = vmatprep.subr.mxu0 0.0
  %2793 = vmatpush1.msra.mxu0 0.0
  %2794 = vmatprep.subr.mxu0 0.0
  %2795 = vmatpush1.msra.mxu0 0.0
  %2796 = vmatprep.subr.mxu0 0.0
  %2797 = vmatpush1.msra.mxu0 0.0
  %2798 = vmatprep.subr.mxu0 0.0
  %2799 = vmatpush1.msra.mxu0 0.0
  %2800 = vmatprep.subr.mxu0 0.0
  %2801 = vmatpush1.msra.mxu0 0.0
  %2802 = vmatprep.subr.mxu0 0.0
  %2803 = vmatpush1.msra.mxu0 0.0
  %2804 = vmatprep.mubr.f32.mxu0 0.0
  %2805 = vmatmul.mubr.f32.gmra.mrb[0].mxu0 %v2738
  %v2806 = vpop.f32.mrb[0].mxu0
  %v2807 = vadd.f32 0.0, %v2806
  %v2808 = vpop.f32.mrb[0].mxu0
  %2809 = vdwg.mxu0
  %2810 = vmatprep.subr.mxu0 0.0
  %2811 = vmatpush1.msra.mxu0 %v765
  %2812 = vmatprep.subr.mxu0 0.0
  %2813 = vmatpush1.msra.mxu0 %v766
  %2814 = vmatprep.subr.mxu0 0.0
  %2815 = vmatpush1.msra.mxu0 %v767
  %2816 = vmatprep.subr.mxu0 0.0
  %2817 = vmatpush1.msra.mxu0 %v768
  %2818 = vmatprep.subr.mxu0 0.0
  %2819 = vmatpush1.msra.mxu0 %v769
  %2820 = vmatprep.subr.mxu0 0.0
  %2821 = vmatpush1.msra.mxu0 %v770
  %2822 = vmatprep.subr.mxu0 0.0
  %2823 = vmatpush1.msra.mxu0 %v771
  %2824 = vmatprep.subr.mxu0 0.0
  %2825 = vmatpush1.msra.mxu0 %v772
  %2826 = vmatprep.subr.mxu0 0.0
  %2827 = vmatpush1.msra.mxu0 %v773
  %2828 = vmatprep.subr.mxu0 0.0
  %2829 = vmatpush1.msra.mxu0 %v774
  %2830 = vmatprep.subr.mxu0 0.0
  %2831 = vmatpush1.msra.mxu0 %v775
  %2832 = vmatprep.subr.mxu0 0.0
  %2833 = vmatpush1.msra.mxu0 %v776
  %2834 = vmatprep.subr.mxu0 0.0
  %2835 = vmatpush1.msra.mxu0 %v777
  %2836 = vmatprep.subr.mxu0 0.0
  %2837 = vmatpush1.msra.mxu0 %v778
  %2838 = vmatprep.subr.mxu0 0.0
  %2839 = vmatpush1.msra.mxu0 %v779
  %2840 = vmatprep.subr.mxu0 0.0
  %2841 = vmatpush1.msra.mxu0 %v780
  %2842 = vmatprep.subr.mxu0 0.0
  %2843 = vmatpush1.msra.mxu0 0.0
  %2844 = vmatprep.subr.mxu0 0.0
  %2845 = vmatpush1.msra.mxu0 0.0
  %2846 = vmatprep.subr.mxu0 0.0
  %2847 = vmatpush1.msra.mxu0 0.0
  %2848 = vmatprep.subr.mxu0 0.0
  %2849 = vmatpush1.msra.mxu0 0.0
  %2850 = vmatprep.subr.mxu0 0.0
  %2851 = vmatpush1.msra.mxu0 0.0
  %2852 = vmatprep.subr.mxu0 0.0
  %2853 = vmatpush1.msra.mxu0 0.0
  %2854 = vmatprep.subr.mxu0 0.0
  %2855 = vmatpush1.msra.mxu0 0.0
  %2856 = vmatprep.subr.mxu0 0.0
  %2857 = vmatpush1.msra.mxu0 0.0
  %2858 = vmatprep.subr.mxu0 0.0
  %2859 = vmatpush1.msra.mxu0 0.0
  %2860 = vmatprep.subr.mxu0 0.0
  %2861 = vmatpush1.msra.mxu0 0.0
  %2862 = vmatprep.subr.mxu0 0.0
  %2863 = vmatpush1.msra.mxu0 0.0
  %2864 = vmatprep.subr.mxu0 0.0
  %2865 = vmatpush1.msra.mxu0 0.0
  %2866 = vmatprep.subr.mxu0 0.0
  %2867 = vmatpush1.msra.mxu0 0.0
  %2868 = vmatprep.subr.mxu0 0.0
  %2869 = vmatpush1.msra.mxu0 0.0
  %2870 = vmatprep.subr.mxu0 0.0
  %2871 = vmatpush1.msra.mxu0 0.0
  %2872 = vmatprep.subr.mxu0 0.0
  %2873 = vmatpush1.msra.mxu0 0.0
  %2874 = vmatprep.mubr.f32.mxu0 0.0
  %2875 = vmatmul.mubr.f32.gmra.mrb[0].mxu0 %v2591
  %v2876 = vpop.f32.mrb[0].mxu0
  %v2877 = vadd.f32 %v2807, %v2876
  %v2878 = vpop.f32.mrb[0].mxu0
  %2879 = vdwg.mxu0
  %v2880 = vadd.f32 %v2877, %v104
  %v2881 = vmax.f32 %v2880, 0.0
  %v2883 = vsel %vm314, %v2881, 0
  %2885 = vmatprep.subr.mxu0 0.0
  %2886 = vmatpush1.msra.mxu0 %v933
  %2887 = vmatprep.subr.mxu0 0.0
  %2888 = vmatpush1.msra.mxu0 %v934
  %2889 = vmatprep.subr.mxu0 0.0
  %2890 = vmatpush1.msra.mxu0 %v935
  %2891 = vmatprep.subr.mxu0 0.0
  %2892 = vmatpush1.msra.mxu0 %v936
  %2893 = vmatprep.subr.mxu0 0.0
  %2894 = vmatpush1.msra.mxu0 %v937
  %2895 = vmatprep.subr.mxu0 0.0
  %2896 = vmatpush1.msra.mxu0 %v938
  %2897 = vmatprep.subr.mxu0 0.0
  %2898 = vmatpush1.msra.mxu0 %v939
  %2899 = vmatprep.subr.mxu0 0.0
  %2900 = vmatpush1.msra.mxu0 %v940
  %2901 = vmatprep.subr.mxu0 0.0
  %2902 = vmatpush1.msra.mxu0 0.0
  %2903 = vmatprep.subr.mxu0 0.0
  %2904 = vmatpush1.msra.mxu0 0.0
  %2905 = vmatprep.subr.mxu0 0.0
  %2906 = vmatpush1.msra.mxu0 0.0
  %2907 = vmatprep.subr.mxu0 0.0
  %2908 = vmatpush1.msra.mxu0 0.0
  %2909 = vmatprep.subr.mxu0 0.0
  %2910 = vmatpush1.msra.mxu0 0.0
  %2911 = vmatprep.subr.mxu0 0.0
  %2912 = vmatpush1.msra.mxu0 0.0
  %2913 = vmatprep.subr.mxu0 0.0
  %2914 = vmatpush1.msra.mxu0 0.0
  %2915 = vmatprep.subr.mxu0 0.0
  %2916 = vmatpush1.msra.mxu0 0.0
  %2917 = vmatprep.subr.mxu0 0.0
  %2918 = vmatpush1.msra.mxu0 0.0
  %2919 = vmatprep.subr.mxu0 0.0
  %2920 = vmatpush1.msra.mxu0 0.0
  %2921 = vmatprep.subr.mxu0 0.0
  %2922 = vmatpush1.msra.mxu0 0.0
  %2923 = vmatprep.subr.mxu0 0.0
  %2924 = vmatpush1.msra.mxu0 0.0
  %2925 = vmatprep.subr.mxu0 0.0
  %2926 = vmatpush1.msra.mxu0 0.0
  %2927 = vmatprep.subr.mxu0 0.0
  %2928 = vmatpush1.msra.mxu0 0.0
  %2929 = vmatprep.subr.mxu0 0.0
  %2930 = vmatpush1.msra.mxu0 0.0
  %2931 = vmatprep.subr.mxu0 0.0
  %2932 = vmatpush1.msra.mxu0 0.0
  %2933 = vmatprep.subr.mxu0 0.0
  %2934 = vmatpush1.msra.mxu0 0.0
  %2935 = vmatprep.subr.mxu0 0.0
  %2936 = vmatpush1.msra.mxu0 0.0
  %2937 = vmatprep.subr.mxu0 0.0
  %2938 = vmatpush1.msra.mxu0 0.0
  %2939 = vmatprep.subr.mxu0 0.0
  %2940 = vmatpush1.msra.mxu0 0.0
  %2941 = vmatprep.subr.mxu0 0.0
  %2942 = vmatpush1.msra.mxu0 0.0
  %2943 = vmatprep.subr.mxu0 0.0
  %2944 = vmatpush1.msra.mxu0 0.0
  %2945 = vmatprep.subr.mxu0 0.0
  %2946 = vmatpush1.msra.mxu0 0.0
  %2947 = vmatprep.subr.mxu0 0.0
  %2948 = vmatpush1.msra.mxu0 0.0
  %2949 = vmatprep.mubr.f32.mxu0 0.0
  %2950 = vmatmul.mubr.f32.gmra.mrb[0].mxu0 %v2883
  %v2951 = vpop.f32.mrb[0].mxu0
  %v2952 = vadd.f32 %v111, %v2951
  %v2953 = vpop.f32.mrb[0].mxu0
  %2954 = vdwg.mxu0
  %v2955 = vxor.u32 %v2952, 2147483648
  %v2956 = vmul.f32 %v2955, 1.442695
  %v2957 = vpow.pop %v2956
  %v2958 = vadd.f32 %v2957, 1.0
  %v2959 = vrcp.pop %v2958
  %v2960 = vmul.f32 1.0, %v2959
  %v2961 = vmul.f32 %v2960, %v2324
  %2963 = vrot.lane.b32.xlu0 %v2736, 64
  %v2964 = vpop.permute.xlu0 %2963
  %v2966 = vmul.f32 %v2960, %v2964
  %2968 = vrot.lane.b32.xlu0 %v2966, 64
  %v2969 = vpop.permute.xlu0 %2968
  %v2971 = vadd.f32 %v2961, %v2969
  %v2972 = vld [vmem:[#allocation2 + $0x40] sm:$0xff]
  %v2973 = vld [vmem:[#allocation2 + $0x48] sm:$0xff]
  %v2975 = vsel %vm314, %v2432, 0
  %2977 = vmatprep.subr.mxu0 %v299
  %2978 = vmatpush1.msra.mxu0 %v298
  %2979 = vmatprep.subr.mxu0 %v301
  %2980 = vmatpush1.msra.mxu0 %v300
  %2981 = vmatprep.subr.mxu0 %v303
  %2982 = vmatpush1.msra.mxu0 %v302
  %2983 = vmatprep.subr.mxu0 %v305
  %2984 = vmatpush1.msra.mxu0 %v304
  %2985 = vmatprep.subr.mxu0 %v307
  %2986 = vmatpush1.msra.mxu0 %v306
  %2987 = vmatprep.subr.mxu0 %v309
  %2988 = vmatpush1.msra.mxu0 %v308
  %2989 = vmatprep.subr.mxu0 %v311
  %2990 = vmatpush1.msra.mxu0 %v310
  %2991 = vmatprep.subr.mxu0 %v313
  %2992 = vmatpush1.msra.mxu0 %v312
  %2993 = vmatprep.subr.mxu0 0.0
  %2994 = vmatpush1.msra.mxu0 0.0
  %2995 = vmatprep.subr.mxu0 0.0
  %2996 = vmatpush1.msra.mxu0 0.0
  %2997 = vmatprep.subr.mxu0 0.0
  %2998 = vmatpush1.msra.mxu0 0.0
  %2999 = vmatprep.subr.mxu0 0.0
  %3000 = vmatpush1.msra.mxu0 0.0
  %3001 = vmatprep.subr.mxu0 0.0
  %3002 = vmatpush1.msra.mxu0 0.0
  %3003 = vmatprep.subr.mxu0 0.0
  %3004 = vmatpush1.msra.mxu0 0.0
  %3005 = vmatprep.subr.mxu0 0.0
  %3006 = vmatpush1.msra.mxu0 0.0
  %3007 = vmatprep.subr.mxu0 0.0
  %3008 = vmatpush1.msra.mxu0 0.0
  %3009 = vmatprep.subr.mxu0 0.0
  %3010 = vmatpush1.msra.mxu0 0.0
  %3011 = vmatprep.subr.mxu0 0.0
  %3012 = vmatpush1.msra.mxu0 0.0
  %3013 = vmatprep.subr.mxu0 0.0
  %3014 = vmatpush1.msra.mxu0 0.0
  %3015 = vmatprep.subr.mxu0 0.0
  %3016 = vmatpush1.msra.mxu0 0.0
  %3017 = vmatprep.subr.mxu0 0.0
  %3018 = vmatpush1.msra.mxu0 0.0
  %3019 = vmatprep.subr.mxu0 0.0
  %3020 = vmatpush1.msra.mxu0 0.0
  %3021 = vmatprep.subr.mxu0 0.0
  %3022 = vmatpush1.msra.mxu0 0.0
  %3023 = vmatprep.subr.mxu0 0.0
  %3024 = vmatpush1.msra.mxu0 0.0
  %3025 = vmatprep.subr.mxu0 0.0
  %3026 = vmatpush1.msra.mxu0 0.0
  %3027 = vmatprep.subr.mxu0 0.0
  %3028 = vmatpush1.msra.mxu0 0.0
  %3029 = vmatprep.subr.mxu0 0.0
  %3030 = vmatpush1.msra.mxu0 0.0
  %3031 = vmatprep.subr.mxu0 0.0
  %3032 = vmatpush1.msra.mxu0 0.0
  %3033 = vmatprep.subr.mxu0 0.0
  %3034 = vmatpush1.msra.mxu0 0.0
  %3035 = vmatprep.subr.mxu0 0.0
  %3036 = vmatpush1.msra.mxu0 0.0
  %3037 = vmatprep.subr.mxu0 0.0
  %3038 = vmatpush1.msra.mxu0 0.0
  %3039 = vmatprep.subr.mxu0 0.0
  %3040 = vmatpush1.msra.mxu0 0.0
  %3041 = vmatprep.mubr.f32.mxu0 0.0
  %3042 = vmatmul.mubr.f32.gmra.mrb[0].mxu0 %v2975
  %v3043 = vpop.f32.mrb[0].mxu0
  %v3044 = vadd.f32 0.0, %v3043
  %v3045 = vpop.f32.mrb[0].mxu0
  %v3046 = vadd.f32 0.0, %v3045
  %3047 = vdwg.mxu0
  %v3048 = vadd.f32 %v2972, %v3044
  %v3049 = vadd.f32 %v2973, %v3046
  %v3050 = vxor.u32 %v3048, 2147483648
  %v3051 = vxor.u32 %v3049, 2147483648
  %v3052 = vmul.f32 %v3050, 1.442695
  %v3053 = vpow.pop %v3052
  %v3054 = vmul.f32 %v3051, 1.442695
  %v3055 = vpow.pop %v3054
  %v3056 = vadd.f32 %v3053, 1.0
  %v3057 = vadd.f32 %v3055, 1.0
  %v3058 = vrcp.pop %v3056
  %v3059 = vmul.f32 1.0, %v3058
  %v3060 = vrcp.pop %v3057
  %v3061 = vmul.f32 1.0, %v3060
  %v3062 = vtanh.pop %v3049
  %v3063 = vmul.f32 %v3059, %v2426
  %3065 = vrot.lane.b32.xlu0 %v3062, 64
  %v3066 = vpop.permute.xlu0 %3065
  %v3068 = vmul.f32 %v3059, %v3066
  %3070 = vrot.lane.b32.xlu0 %v3068, 64
  %v3071 = vpop.permute.xlu0 %3070
  %v3073 = vadd.f32 %v3063, %v3071
  %v3074 = vtanh.pop %v3073
  %3076 = vrot.lane.b32.xlu0 %v3074, 64
  %v3077 = vpop.permute.xlu0 %3076
  %v3079 = vmul.f32 %v3061, %v3077
  %3081 = vrot.lane.b32.xlu0 %v2426, 64
  %v3082 = vpop.permute.xlu0 %3081
  %v3084 = vsel %vm314, %v3082, %v3073
  %3085 = vmatprep.subr.mxu0 0.0
  %3086 = vmatpush1.msra.mxu0 %v426
  %3087 = vmatprep.subr.mxu0 0.0
  %3088 = vmatpush1.msra.mxu0 %v427
  %3089 = vmatprep.subr.mxu0 0.0
  %3090 = vmatpush1.msra.mxu0 %v428
  %3091 = vmatprep.subr.mxu0 0.0
  %3092 = vmatpush1.msra.mxu0 %v429
  %3093 = vmatprep.subr.mxu0 0.0
  %3094 = vmatpush1.msra.mxu0 %v430
  %3095 = vmatprep.subr.mxu0 0.0
  %3096 = vmatpush1.msra.mxu0 %v431
  %3097 = vmatprep.subr.mxu0 0.0
  %3098 = vmatpush1.msra.mxu0 %v432
  %3099 = vmatprep.subr.mxu0 0.0
  %3100 = vmatpush1.msra.mxu0 %v433
  %3101 = vmatprep.subr.mxu0 0.0
  %3102 = vmatpush1.msra.mxu0 %v434
  %3103 = vmatprep.subr.mxu0 0.0
  %3104 = vmatpush1.msra.mxu0 %v435
  %3105 = vmatprep.subr.mxu0 0.0
  %3106 = vmatpush1.msra.mxu0 %v436
  %3107 = vmatprep.subr.mxu0 0.0
  %3108 = vmatpush1.msra.mxu0 %v437
  %3109 = vmatprep.subr.mxu0 0.0
  %3110 = vmatpush1.msra.mxu0 %v438
  %3111 = vmatprep.subr.mxu0 0.0
  %3112 = vmatpush1.msra.mxu0 %v439
  %3113 = vmatprep.subr.mxu0 0.0
  %3114 = vmatpush1.msra.mxu0 %v440
  %3115 = vmatprep.subr.mxu0 0.0
  %3116 = vmatpush1.msra.mxu0 %v441
  %3117 = vmatprep.subr.mxu0 0.0
  %3118 = vmatpush1.msra.mxu0 0.0
  %3119 = vmatprep.subr.mxu0 0.0
  %3120 = vmatpush1.msra.mxu0 0.0
  %3121 = vmatprep.subr.mxu0 0.0
  %3122 = vmatpush1.msra.mxu0 0.0
  %3123 = vmatprep.subr.mxu0 0.0
  %3124 = vmatpush1.msra.mxu0 0.0
  %3125 = vmatprep.subr.mxu0 0.0
  %3126 = vmatpush1.msra.mxu0 0.0
  %3127 = vmatprep.subr.mxu0 0.0
  %3128 = vmatpush1.msra.mxu0 0.0
  %3129 = vmatprep.subr.mxu0 0.0
  %3130 = vmatpush1.msra.mxu0 0.0
  %3131 = vmatprep.subr.mxu0 0.0
  %3132 = vmatpush1.msra.mxu0 0.0
  %3133 = vmatprep.subr.mxu0 0.0
  %3134 = vmatpush1.msra.mxu0 0.0
  %3135 = vmatprep.subr.mxu0 0.0
  %3136 = vmatpush1.msra.mxu0 0.0
  %3137 = vmatprep.subr.mxu0 0.0
  %3138 = vmatpush1.msra.mxu0 0.0
  %3139 = vmatprep.subr.mxu0 0.0
  %3140 = vmatpush1.msra.mxu0 0.0
  %3141 = vmatprep.subr.mxu0 0.0
  %3142 = vmatpush1.msra.mxu0 0.0
  %3143 = vmatprep.subr.mxu0 0.0
  %3144 = vmatpush1.msra.mxu0 0.0
  %3145 = vmatprep.subr.mxu0 0.0
  %3146 = vmatpush1.msra.mxu0 0.0
  %3147 = vmatprep.subr.mxu0 0.0
  %3148 = vmatpush1.msra.mxu0 0.0
  %3149 = vmatprep.mubr.f32.mxu0 0.0
  %3150 = vmatmul.mubr.f32.gmra.mrb[0].mxu0 %v3084
  %v3151 = vpop.f32.mrb[0].mxu0
  %v3152 = vadd.f32 %v76, %v3151
  %v3153 = vpop.f32.mrb[0].mxu0
  %3154 = vdwg.mxu0
  %v3155 = vmax.f32 %v3152, 0.0
  %v3157 = vsel %vm141, %v3155, 0
  %3159 = vmatprep.subr.mxu0 0.0
  %3160 = vmatpush1.msra.mxu0 %v513
  %3161 = vmatprep.subr.mxu0 0.0
  %3162 = vmatpush1.msra.mxu0 %v514
  %3163 = vmatprep.subr.mxu0 0.0
  %3164 = vmatpush1.msra.mxu0 %v515
  %3165 = vmatprep.subr.mxu0 0.0
  %3166 = vmatpush1.msra.mxu0 %v516
  %3167 = vmatprep.subr.mxu0 0.0
  %3168 = vmatpush1.msra.mxu0 0.0
  %3169 = vmatprep.subr.mxu0 0.0
  %3170 = vmatpush1.msra.mxu0 0.0
  %3171 = vmatprep.subr.mxu0 0.0
  %3172 = vmatpush1.msra.mxu0 0.0
  %3173 = vmatprep.subr.mxu0 0.0
  %3174 = vmatpush1.msra.mxu0 0.0
  %3175 = vmatprep.subr.mxu0 0.0
  %3176 = vmatpush1.msra.mxu0 0.0
  %3177 = vmatprep.subr.mxu0 0.0
  %3178 = vmatpush1.msra.mxu0 0.0
  %3179 = vmatprep.subr.mxu0 0.0
  %3180 = vmatpush1.msra.mxu0 0.0
  %3181 = vmatprep.subr.mxu0 0.0
  %3182 = vmatpush1.msra.mxu0 0.0
  %3183 = vmatprep.subr.mxu0 0.0
  %3184 = vmatpush1.msra.mxu0 0.0
  %3185 = vmatprep.subr.mxu0 0.0
  %3186 = vmatpush1.msra.mxu0 0.0
  %3187 = vmatprep.subr.mxu0 0.0
  %3188 = vmatpush1.msra.mxu0 0.0
  %3189 = vmatprep.subr.mxu0 0.0
  %3190 = vmatpush1.msra.mxu0 0.0
  %3191 = vmatprep.subr.mxu0 0.0
  %3192 = vmatpush1.msra.mxu0 0.0
  %3193 = vmatprep.subr.mxu0 0.0
  %3194 = vmatpush1.msra.mxu0 0.0
  %3195 = vmatprep.subr.mxu0 0.0
  %3196 = vmatpush1.msra.mxu0 0.0
  %3197 = vmatprep.subr.mxu0 0.0
  %3198 = vmatpush1.msra.mxu0 0.0
  %3199 = vmatprep.subr.mxu0 0.0
  %3200 = vmatpush1.msra.mxu0 0.0
  %3201 = vmatprep.subr.mxu0 0.0
  %3202 = vmatpush1.msra.mxu0 0.0
  %3203 = vmatprep.subr.mxu0 0.0
  %3204 = vmatpush1.msra.mxu0 0.0
  %3205 = vmatprep.subr.mxu0 0.0
  %3206 = vmatpush1.msra.mxu0 0.0
  %3207 = vmatprep.subr.mxu0 0.0
  %3208 = vmatpush1.msra.mxu0 0.0
  %3209 = vmatprep.subr.mxu0 0.0
  %3210 = vmatpush1.msra.mxu0 0.0
  %3211 = vmatprep.subr.mxu0 0.0
  %3212 = vmatpush1.msra.mxu0 0.0
  %3213 = vmatprep.subr.mxu0 0.0
  %3214 = vmatpush1.msra.mxu0 0.0
  %3215 = vmatprep.subr.mxu0 0.0
  %3216 = vmatpush1.msra.mxu0 0.0
  %3217 = vmatprep.subr.mxu0 0.0
  %3218 = vmatpush1.msra.mxu0 0.0
  %3219 = vmatprep.subr.mxu0 0.0
  %3220 = vmatpush1.msra.mxu0 0.0
  %3221 = vmatprep.subr.mxu0 0.0
  %3222 = vmatpush1.msra.mxu0 0.0
  %3223 = vmatprep.mubr.f32.mxu0 0.0
  %3224 = vmatmul.mubr.f32.gmra.mrb[0].mxu0 %v3157
  %v3225 = vpop.f32.mrb[0].mxu0
  %v3226 = vadd.f32 %v83, %v3225
  %v3227 = vpop.f32.mrb[0].mxu0
  %3228 = vdwg.mxu0
  %3229 = vmax.xlane.f32.xlu0 %v3226
  %v3230 = vpop.xlane.xlu0 %3229
  %v3231 = vsub.f32 %v3226, %v3230
  %v3232 = vmul.f32 %v3231, 1.442695
  %v3233 = vpow.pop %v3232
  %3234 = vadd.xlane.f32.xlu0 %v3233
  %v3235 = vpop.xlane.xlu0 %3234
  %v3236 = vrcp.pop %v3235
  %v3237 = vmul.f32 %v3233, %v3236
  %v3238 = vmul.f32 %v3237, %v3084
  %3239 = vmatprep.subr.mxu0 0.0
  %3240 = vmatpush1.msra.mxu0 %v600
  %3241 = vmatprep.subr.mxu0 0.0
  %3242 = vmatpush1.msra.mxu0 %v601
  %3243 = vmatprep.subr.mxu0 0.0
  %3244 = vmatpush1.msra.mxu0 %v602
  %3245 = vmatprep.subr.mxu0 0.0
  %3246 = vmatpush1.msra.mxu0 %v603
  %3247 = vmatprep.subr.mxu0 0.0
  %3248 = vmatpush1.msra.mxu0 %v604
  %3249 = vmatprep.subr.mxu0 0.0
  %3250 = vmatpush1.msra.mxu0 %v605
  %3251 = vmatprep.subr.mxu0 0.0
  %3252 = vmatpush1.msra.mxu0 %v606
  %3253 = vmatprep.subr.mxu0 0.0
  %3254 = vmatpush1.msra.mxu0 %v607
  %3255 = vmatprep.subr.mxu0 0.0
  %3256 = vmatpush1.msra.mxu0 %v608
  %3257 = vmatprep.subr.mxu0 0.0
  %3258 = vmatpush1.msra.mxu0 %v609
  %3259 = vmatprep.subr.mxu0 0.0
  %3260 = vmatpush1.msra.mxu0 %v610
  %3261 = vmatprep.subr.mxu0 0.0
  %3262 = vmatpush1.msra.mxu0 %v611
  %3263 = vmatprep.subr.mxu0 0.0
  %3264 = vmatpush1.msra.mxu0 %v612
  %3265 = vmatprep.subr.mxu0 0.0
  %3266 = vmatpush1.msra.mxu0 %v613
  %3267 = vmatprep.subr.mxu0 0.0
  %3268 = vmatpush1.msra.mxu0 %v614
  %3269 = vmatprep.subr.mxu0 0.0
  %3270 = vmatpush1.msra.mxu0 %v615
  %3271 = vmatprep.subr.mxu0 0.0
  %3272 = vmatpush1.msra.mxu0 0.0
  %3273 = vmatprep.subr.mxu0 0.0
  %3274 = vmatpush1.msra.mxu0 0.0
  %3275 = vmatprep.subr.mxu0 0.0
  %3276 = vmatpush1.msra.mxu0 0.0
  %3277 = vmatprep.subr.mxu0 0.0
  %3278 = vmatpush1.msra.mxu0 0.0
  %3279 = vmatprep.subr.mxu0 0.0
  %3280 = vmatpush1.msra.mxu0 0.0
  %3281 = vmatprep.subr.mxu0 0.0
  %3282 = vmatpush1.msra.mxu0 0.0
  %3283 = vmatprep.subr.mxu0 0.0
  %3284 = vmatpush1.msra.mxu0 0.0
  %3285 = vmatprep.subr.mxu0 0.0
  %3286 = vmatpush1.msra.mxu0 0.0
  %3287 = vmatprep.subr.mxu0 0.0
  %3288 = vmatpush1.msra.mxu0 0.0
  %3289 = vmatprep.subr.mxu0 0.0
  %3290 = vmatpush1.msra.mxu0 0.0
  %3291 = vmatprep.subr.mxu0 0.0
  %3292 = vmatpush1.msra.mxu0 0.0
  %3293 = vmatprep.subr.mxu0 0.0
  %3294 = vmatpush1.msra.mxu0 0.0
  %3295 = vmatprep.subr.mxu0 0.0
  %3296 = vmatpush1.msra.mxu0 0.0
  %3297 = vmatprep.subr.mxu0 0.0
  %3298 = vmatpush1.msra.mxu0 0.0
  %3299 = vmatprep.subr.mxu0 0.0
  %3300 = vmatpush1.msra.mxu0 0.0
  %3301 = vmatprep.subr.mxu0 0.0
  %3302 = vmatpush1.msra.mxu0 0.0
  %3303 = vmatprep.mubr.f32.mxu0 0.0
  %3304 = vmatmul.mubr.f32.gmra.mrb[0].mxu0 %v3238
  %v3305 = vpop.f32.mrb[0].mxu0
  %v3306 = vadd.f32 %v90, %v3305
  %v3307 = vpop.f32.mrb[0].mxu0
  %3308 = vdwg.mxu0
  %v3309 = vmax.f32 %v3306, 0.0
  %v3311 = vsel %vm141, %v3309, 0
  %3313 = vmatprep.subr.mxu0 0.0
  %3314 = vmatpush1.msra.mxu0 %v687
  %3315 = vmatprep.subr.mxu0 0.0
  %3316 = vmatpush1.msra.mxu0 %v688
  %3317 = vmatprep.subr.mxu0 0.0
  %3318 = vmatpush1.msra.mxu0 %v689
  %3319 = vmatprep.subr.mxu0 0.0
  %3320 = vmatpush1.msra.mxu0 %v690
  %3321 = vmatprep.subr.mxu0 0.0
  %3322 = vmatpush1.msra.mxu0 0.0
  %3323 = vmatprep.subr.mxu0 0.0
  %3324 = vmatpush1.msra.mxu0 0.0
  %3325 = vmatprep.subr.mxu0 0.0
  %3326 = vmatpush1.msra.mxu0 0.0
  %3327 = vmatprep.subr.mxu0 0.0
  %3328 = vmatpush1.msra.mxu0 0.0
  %3329 = vmatprep.subr.mxu0 0.0
  %3330 = vmatpush1.msra.mxu0 0.0
  %3331 = vmatprep.subr.mxu0 0.0
  %3332 = vmatpush1.msra.mxu0 0.0
  %3333 = vmatprep.subr.mxu0 0.0
  %3334 = vmatpush1.msra.mxu0 0.0
  %3335 = vmatprep.subr.mxu0 0.0
  %3336 = vmatpush1.msra.mxu0 0.0
  %3337 = vmatprep.subr.mxu0 0.0
  %3338 = vmatpush1.msra.mxu0 0.0
  %3339 = vmatprep.subr.mxu0 0.0
  %3340 = vmatpush1.msra.mxu0 0.0
  %3341 = vmatprep.subr.mxu0 0.0
  %3342 = vmatpush1.msra.mxu0 0.0
  %3343 = vmatprep.subr.mxu0 0.0
  %3344 = vmatpush1.msra.mxu0 0.0
  %3345 = vmatprep.subr.mxu0 0.0
  %3346 = vmatpush1.msra.mxu0 0.0
  %3347 = vmatprep.subr.mxu0 0.0
  %3348 = vmatpush1.msra.mxu0 0.0
  %3349 = vmatprep.subr.mxu0 0.0
  %3350 = vmatpush1.msra.mxu0 0.0
  %3351 = vmatprep.subr.mxu0 0.0
  %3352 = vmatpush1.msra.mxu0 0.0
  %3353 = vmatprep.subr.mxu0 0.0
  %3354 = vmatpush1.msra.mxu0 0.0
  %3355 = vmatprep.subr.mxu0 0.0
  %3356 = vmatpush1.msra.mxu0 0.0
  %3357 = vmatprep.subr.mxu0 0.0
  %3358 = vmatpush1.msra.mxu0 0.0
  %3359 = vmatprep.subr.mxu0 0.0
  %3360 = vmatpush1.msra.mxu0 0.0
  %3361 = vmatprep.subr.mxu0 0.0
  %3362 = vmatpush1.msra.mxu0 0.0
  %3363 = vmatprep.subr.mxu0 0.0
  %3364 = vmatpush1.msra.mxu0 0.0
  %3365 = vmatprep.subr.mxu0 0.0
  %3366 = vmatpush1.msra.mxu0 0.0
  %3367 = vmatprep.subr.mxu0 0.0
  %3368 = vmatpush1.msra.mxu0 0.0
  %3369 = vmatprep.subr.mxu0 0.0
  %3370 = vmatpush1.msra.mxu0 0.0
  %3371 = vmatprep.subr.mxu0 0.0
  %3372 = vmatpush1.msra.mxu0 0.0
  %3373 = vmatprep.subr.mxu0 0.0
  %3374 = vmatpush1.msra.mxu0 0.0
  %3375 = vmatprep.subr.mxu0 0.0
  %3376 = vmatpush1.msra.mxu0 0.0
  %3377 = vmatprep.mubr.f32.mxu0 0.0
  %3378 = vmatmul.mubr.f32.gmra.mrb[0].mxu0 %v3311
  %v3379 = vpop.f32.mrb[0].mxu0
  %v3380 = vadd.f32 %v97, %v3379
  %v3381 = vpop.f32.mrb[0].mxu0
  %3382 = vdwg.mxu0
  %v3383 = vtanh.pop %v3380
  %v3385 = vsel %vm314, %v2971, 0
  %3387 = vmatprep.subr.mxu0 0.0
  %3388 = vmatpush1.msra.mxu0 %v781
  %3389 = vmatprep.subr.mxu0 0.0
  %3390 = vmatpush1.msra.mxu0 %v782
  %3391 = vmatprep.subr.mxu0 0.0
  %3392 = vmatpush1.msra.mxu0 %v783
  %3393 = vmatprep.subr.mxu0 0.0
  %3394 = vmatpush1.msra.mxu0 %v784
  %3395 = vmatprep.subr.mxu0 0.0
  %3396 = vmatpush1.msra.mxu0 %v785
  %3397 = vmatprep.subr.mxu0 0.0
  %3398 = vmatpush1.msra.mxu0 %v786
  %3399 = vmatprep.subr.mxu0 0.0
  %3400 = vmatpush1.msra.mxu0 %v787
  %3401 = vmatprep.subr.mxu0 0.0
  %3402 = vmatpush1.msra.mxu0 %v788
  %3403 = vmatprep.subr.mxu0 0.0
  %3404 = vmatpush1.msra.mxu0 0.0
  %3405 = vmatprep.subr.mxu0 0.0
  %3406 = vmatpush1.msra.mxu0 0.0
  %3407 = vmatprep.subr.mxu0 0.0
  %3408 = vmatpush1.msra.mxu0 0.0
  %3409 = vmatprep.subr.mxu0 0.0
  %3410 = vmatpush1.msra.mxu0 0.0
  %3411 = vmatprep.subr.mxu0 0.0
  %3412 = vmatpush1.msra.mxu0 0.0
  %3413 = vmatprep.subr.mxu0 0.0
  %3414 = vmatpush1.msra.mxu0 0.0
  %3415 = vmatprep.subr.mxu0 0.0
  %3416 = vmatpush1.msra.mxu0 0.0
  %3417 = vmatprep.subr.mxu0 0.0
  %3418 = vmatpush1.msra.mxu0 0.0
  %3419 = vmatprep.subr.mxu0 0.0
  %3420 = vmatpush1.msra.mxu0 0.0
  %3421 = vmatprep.subr.mxu0 0.0
  %3422 = vmatpush1.msra.mxu0 0.0
  %3423 = vmatprep.subr.mxu0 0.0
  %3424 = vmatpush1.msra.mxu0 0.0
  %3425 = vmatprep.subr.mxu0 0.0
  %3426 = vmatpush1.msra.mxu0 0.0
  %3427 = vmatprep.subr.mxu0 0.0
  %3428 = vmatpush1.msra.mxu0 0.0
  %3429 = vmatprep.subr.mxu0 0.0
  %3430 = vmatpush1.msra.mxu0 0.0
  %3431 = vmatprep.subr.mxu0 0.0
  %3432 = vmatpush1.msra.mxu0 0.0
  %3433 = vmatprep.subr.mxu0 0.0
  %3434 = vmatpush1.msra.mxu0 0.0
  %3435 = vmatprep.subr.mxu0 0.0
  %3436 = vmatpush1.msra.mxu0 0.0
  %3437 = vmatprep.subr.mxu0 0.0
  %3438 = vmatpush1.msra.mxu0 0.0
  %3439 = vmatprep.subr.mxu0 0.0
  %3440 = vmatpush1.msra.mxu0 0.0
  %3441 = vmatprep.subr.mxu0 0.0
  %3442 = vmatpush1.msra.mxu0 0.0
  %3443 = vmatprep.subr.mxu0 0.0
  %3444 = vmatpush1.msra.mxu0 0.0
  %3445 = vmatprep.subr.mxu0 0.0
  %3446 = vmatpush1.msra.mxu0 0.0
  %3447 = vmatprep.subr.mxu0 0.0
  %3448 = vmatpush1.msra.mxu0 0.0
  %3449 = vmatprep.subr.mxu0 0.0
  %3450 = vmatpush1.msra.mxu0 0.0
  %3451 = vmatprep.mubr.f32.mxu0 0.0
  %3452 = vmatmul.mubr.f32.gmra.mrb[0].mxu0 %v3385
  %v3453 = vpop.f32.mrb[0].mxu0
  %v3454 = vadd.f32 0.0, %v3453
  %v3455 = vpop.f32.mrb[0].mxu0
  %3456 = vdwg.mxu0
  %3457 = vmatprep.subr.mxu0 0.0
  %3458 = vmatpush1.msra.mxu0 %v765
  %3459 = vmatprep.subr.mxu0 0.0
  %3460 = vmatpush1.msra.mxu0 %v766
  %3461 = vmatprep.subr.mxu0 0.0
  %3462 = vmatpush1.msra.mxu0 %v767
  %3463 = vmatprep.subr.mxu0 0.0
  %3464 = vmatpush1.msra.mxu0 %v768
  %3465 = vmatprep.subr.mxu0 0.0
  %3466 = vmatpush1.msra.mxu0 %v769
  %3467 = vmatprep.subr.mxu0 0.0
  %3468 = vmatpush1.msra.mxu0 %v770
  %3469 = vmatprep.subr.mxu0 0.0
  %3470 = vmatpush1.msra.mxu0 %v771
  %3471 = vmatprep.subr.mxu0 0.0
  %3472 = vmatpush1.msra.mxu0 %v772
  %3473 = vmatprep.subr.mxu0 0.0
  %3474 = vmatpush1.msra.mxu0 %v773
  %3475 = vmatprep.subr.mxu0 0.0
  %3476 = vmatpush1.msra.mxu0 %v774
  %3477 = vmatprep.subr.mxu0 0.0
  %3478 = vmatpush1.msra.mxu0 %v775
  %3479 = vmatprep.subr.mxu0 0.0
  %3480 = vmatpush1.msra.mxu0 %v776
  %3481 = vmatprep.subr.mxu0 0.0
  %3482 = vmatpush1.msra.mxu0 %v777
  %3483 = vmatprep.subr.mxu0 0.0
  %3484 = vmatpush1.msra.mxu0 %v778
  %3485 = vmatprep.subr.mxu0 0.0
  %3486 = vmatpush1.msra.mxu0 %v779
  %3487 = vmatprep.subr.mxu0 0.0
  %3488 = vmatpush1.msra.mxu0 %v780
  %3489 = vmatprep.subr.mxu0 0.0
  %3490 = vmatpush1.msra.mxu0 0.0
  %3491 = vmatprep.subr.mxu0 0.0
  %3492 = vmatpush1.msra.mxu0 0.0
  %3493 = vmatprep.subr.mxu0 0.0
  %3494 = vmatpush1.msra.mxu0 0.0
  %3495 = vmatprep.subr.mxu0 0.0
  %3496 = vmatpush1.msra.mxu0 0.0
  %3497 = vmatprep.subr.mxu0 0.0
  %3498 = vmatpush1.msra.mxu0 0.0
  %3499 = vmatprep.subr.mxu0 0.0
  %3500 = vmatpush1.msra.mxu0 0.0
  %3501 = vmatprep.subr.mxu0 0.0
  %3502 = vmatpush1.msra.mxu0 0.0
  %3503 = vmatprep.subr.mxu0 0.0
  %3504 = vmatpush1.msra.mxu0 0.0
  %3505 = vmatprep.subr.mxu0 0.0
  %3506 = vmatpush1.msra.mxu0 0.0
  %3507 = vmatprep.subr.mxu0 0.0
  %3508 = vmatpush1.msra.mxu0 0.0
  %3509 = vmatprep.subr.mxu0 0.0
  %3510 = vmatpush1.msra.mxu0 0.0
  %3511 = vmatprep.subr.mxu0 0.0
  %3512 = vmatpush1.msra.mxu0 0.0
  %3513 = vmatprep.subr.mxu0 0.0
  %3514 = vmatpush1.msra.mxu0 0.0
  %3515 = vmatprep.subr.mxu0 0.0
  %3516 = vmatpush1.msra.mxu0 0.0
  %3517 = vmatprep.subr.mxu0 0.0
  %3518 = vmatpush1.msra.mxu0 0.0
  %3519 = vmatprep.subr.mxu0 0.0
  %3520 = vmatpush1.msra.mxu0 0.0
  %3521 = vmatprep.mubr.f32.mxu0 0.0
  %3522 = vmatmul.mubr.f32.gmra.mrb[0].mxu0 %v3238
  %v3523 = vpop.f32.mrb[0].mxu0
  %v3524 = vadd.f32 %v3454, %v3523
  %v3525 = vpop.f32.mrb[0].mxu0
  %3526 = vdwg.mxu0
  %v3527 = vadd.f32 %v3524, %v104
  %v3528 = vmax.f32 %v3527, 0.0
  %v3530 = vsel %vm314, %v3528, 0
  %3532 = vmatprep.subr.mxu0 0.0
  %3533 = vmatpush1.msra.mxu0 %v933
  %3534 = vmatprep.subr.mxu0 0.0
  %3535 = vmatpush1.msra.mxu0 %v934
  %3536 = vmatprep.subr.mxu0 0.0
  %3537 = vmatpush1.msra.mxu0 %v935
  %3538 = vmatprep.subr.mxu0 0.0
  %3539 = vmatpush1.msra.mxu0 %v936
  %3540 = vmatprep.subr.mxu0 0.0
  %3541 = vmatpush1.msra.mxu0 %v937
  %3542 = vmatprep.subr.mxu0 0.0
  %3543 = vmatpush1.msra.mxu0 %v938
  %3544 = vmatprep.subr.mxu0 0.0
  %3545 = vmatpush1.msra.mxu0 %v939
  %3546 = vmatprep.subr.mxu0 0.0
  %3547 = vmatpush1.msra.mxu0 %v940
  %3548 = vmatprep.subr.mxu0 0.0
  %3549 = vmatpush1.msra.mxu0 0.0
  %3550 = vmatprep.subr.mxu0 0.0
  %3551 = vmatpush1.msra.mxu0 0.0
  %3552 = vmatprep.subr.mxu0 0.0
  %3553 = vmatpush1.msra.mxu0 0.0
  %3554 = vmatprep.subr.mxu0 0.0
  %3555 = vmatpush1.msra.mxu0 0.0
  %3556 = vmatprep.subr.mxu0 0.0
  %3557 = vmatpush1.msra.mxu0 0.0
  %3558 = vmatprep.subr.mxu0 0.0
  %3559 = vmatpush1.msra.mxu0 0.0
  %3560 = vmatprep.subr.mxu0 0.0
  %3561 = vmatpush1.msra.mxu0 0.0
  %3562 = vmatprep.subr.mxu0 0.0
  %3563 = vmatpush1.msra.mxu0 0.0
  %3564 = vmatprep.subr.mxu0 0.0
  %3565 = vmatpush1.msra.mxu0 0.0
  %3566 = vmatprep.subr.mxu0 0.0
  %3567 = vmatpush1.msra.mxu0 0.0
  %3568 = vmatprep.subr.mxu0 0.0
  %3569 = vmatpush1.msra.mxu0 0.0
  %3570 = vmatprep.subr.mxu0 0.0
  %3571 = vmatpush1.msra.mxu0 0.0
  %3572 = vmatprep.subr.mxu0 0.0
  %3573 = vmatpush1.msra.mxu0 0.0
  %3574 = vmatprep.subr.mxu0 0.0
  %3575 = vmatpush1.msra.mxu0 0.0
  %3576 = vmatprep.subr.mxu0 0.0
  %3577 = vmatpush1.msra.mxu0 0.0
  %3578 = vmatprep.subr.mxu0 0.0
  %3579 = vmatpush1.msra.mxu0 0.0
  %3580 = vmatprep.subr.mxu0 0.0
  %3581 = vmatpush1.msra.mxu0 0.0
  %3582 = vmatprep.subr.mxu0 0.0
  %3583 = vmatpush1.msra.mxu0 0.0
  %3584 = vmatprep.subr.mxu0 0.0
  %3585 = vmatpush1.msra.mxu0 0.0
  %3586 = vmatprep.subr.mxu0 0.0
  %3587 = vmatpush1.msra.mxu0 0.0
  %3588 = vmatprep.subr.mxu0 0.0
  %3589 = vmatpush1.msra.mxu0 0.0
  %3590 = vmatprep.subr.mxu0 0.0
  %3591 = vmatpush1.msra.mxu0 0.0
  %3592 = vmatprep.subr.mxu0 0.0
  %3593 = vmatpush1.msra.mxu0 0.0
  %3594 = vmatprep.subr.mxu0 0.0
  %3595 = vmatpush1.msra.mxu0 0.0
  %3596 = vmatprep.mubr.f32.mxu0 0.0
  %3597 = vmatmul.mubr.f32.gmra.mrb[0].mxu0 %v3530
  %v3598 = vpop.f32.mrb[0].mxu0
  %v3599 = vadd.f32 %v111, %v3598
  %v3600 = vpop.f32.mrb[0].mxu0
  %3601 = vdwg.mxu0
  %v3602 = vxor.u32 %v3599, 2147483648
  %v3603 = vmul.f32 %v3602, 1.442695
  %v3604 = vpow.pop %v3603
  %v3605 = vadd.f32 %v3604, 1.0
  %v3606 = vrcp.pop %v3605
  %v3607 = vmul.f32 1.0, %v3606
  %v3608 = vmul.f32 %v3607, %v2971
  %3610 = vrot.lane.b32.xlu0 %v3383, 64
  %v3611 = vpop.permute.xlu0 %3610
  %v3613 = vmul.f32 %v3607, %v3611
  %3615 = vrot.lane.b32.xlu0 %v3613, 64
  %v3616 = vpop.permute.xlu0 %3615
  %v3618 = vadd.f32 %v3608, %v3616
  %v3619 = vld [vmem:[#allocation2 + $0x50] sm:$0xff]
  %v3620 = vld [vmem:[#allocation2 + $0x58] sm:$0xff]
  %v3622 = vsel %vm314, %v3079, 0
  %3624 = vmatprep.subr.mxu0 %v299
  %3625 = vmatpush1.msra.mxu0 %v298
  %3626 = vmatprep.subr.mxu0 %v301
  %3627 = vmatpush1.msra.mxu0 %v300
  %3628 = vmatprep.subr.mxu0 %v303
  %3629 = vmatpush1.msra.mxu0 %v302
  %3630 = vmatprep.subr.mxu0 %v305
  %3631 = vmatpush1.msra.mxu0 %v304
  %3632 = vmatprep.subr.mxu0 %v307
  %3633 = vmatpush1.msra.mxu0 %v306
  %3634 = vmatprep.subr.mxu0 %v309
  %3635 = vmatpush1.msra.mxu0 %v308
  %3636 = vmatprep.subr.mxu0 %v311
  %3637 = vmatpush1.msra.mxu0 %v310
  %3638 = vmatprep.subr.mxu0 %v313
  %3639 = vmatpush1.msra.mxu0 %v312
  %3640 = vmatprep.subr.mxu0 0.0
  %3641 = vmatpush1.msra.mxu0 0.0
  %3642 = vmatprep.subr.mxu0 0.0
  %3643 = vmatpush1.msra.mxu0 0.0
  %3644 = vmatprep.subr.mxu0 0.0
  %3645 = vmatpush1.msra.mxu0 0.0
  %3646 = vmatprep.subr.mxu0 0.0
  %3647 = vmatpush1.msra.mxu0 0.0
  %3648 = vmatprep.subr.mxu0 0.0
  %3649 = vmatpush1.msra.mxu0 0.0
  %3650 = vmatprep.subr.mxu0 0.0
  %3651 = vmatpush1.msra.mxu0 0.0
  %3652 = vmatprep.subr.mxu0 0.0
  %3653 = vmatpush1.msra.mxu0 0.0
  %3654 = vmatprep.subr.mxu0 0.0
  %3655 = vmatpush1.msra.mxu0 0.0
  %3656 = vmatprep.subr.mxu0 0.0
  %3657 = vmatpush1.msra.mxu0 0.0
  %3658 = vmatprep.subr.mxu0 0.0
  %3659 = vmatpush1.msra.mxu0 0.0
  %3660 = vmatprep.subr.mxu0 0.0
  %3661 = vmatpush1.msra.mxu0 0.0
  %3662 = vmatprep.subr.mxu0 0.0
  %3663 = vmatpush1.msra.mxu0 0.0
  %3664 = vmatprep.subr.mxu0 0.0
  %3665 = vmatpush1.msra.mxu0 0.0
  %3666 = vmatprep.subr.mxu0 0.0
  %3667 = vmatpush1.msra.mxu0 0.0
  %3668 = vmatprep.subr.mxu0 0.0
  %3669 = vmatpush1.msra.mxu0 0.0
  %3670 = vmatprep.subr.mxu0 0.0
  %3671 = vmatpush1.msra.mxu0 0.0
  %3672 = vmatprep.subr.mxu0 0.0
  %3673 = vmatpush1.msra.mxu0 0.0
  %3674 = vmatprep.subr.mxu0 0.0
  %3675 = vmatpush1.msra.mxu0 0.0
  %3676 = vmatprep.subr.mxu0 0.0
  %3677 = vmatpush1.msra.mxu0 0.0
  %3678 = vmatprep.subr.mxu0 0.0
  %3679 = vmatpush1.msra.mxu0 0.0
  %3680 = vmatprep.subr.mxu0 0.0
  %3681 = vmatpush1.msra.mxu0 0.0
  %3682 = vmatprep.subr.mxu0 0.0
  %3683 = vmatpush1.msra.mxu0 0.0
  %3684 = vmatprep.subr.mxu0 0.0
  %3685 = vmatpush1.msra.mxu0 0.0
  %3686 = vmatprep.subr.mxu0 0.0
  %3687 = vmatpush1.msra.mxu0 0.0
  %3688 = vmatprep.mubr.f32.mxu0 0.0
  %3689 = vmatmul.mubr.f32.gmra.mrb[0].mxu0 %v3622
  %v3690 = vpop.f32.mrb[0].mxu0
  %v3691 = vadd.f32 0.0, %v3690
  %v3692 = vpop.f32.mrb[0].mxu0
  %v3693 = vadd.f32 0.0, %v3692
  %3694 = vdwg.mxu0
  %v3695 = vadd.f32 %v3619, %v3691
  %v3696 = vadd.f32 %v3620, %v3693
  %v3697 = vxor.u32 %v3695, 2147483648
  %v3698 = vxor.u32 %v3696, 2147483648
  %v3699 = vmul.f32 %v3697, 1.442695
  %v3700 = vpow.pop %v3699
  %v3701 = vmul.f32 %v3698, 1.442695
  %v3702 = vpow.pop %v3701
  %v3703 = vadd.f32 %v3700, 1.0
  %v3704 = vadd.f32 %v3702, 1.0
  %v3705 = vrcp.pop %v3703
  %v3706 = vmul.f32 1.0, %v3705
  %v3707 = vrcp.pop %v3704
  %v3708 = vmul.f32 1.0, %v3707
  %v3709 = vtanh.pop %v3696
  %v3710 = vmul.f32 %v3706, %v3073
  %3712 = vrot.lane.b32.xlu0 %v3709, 64
  %v3713 = vpop.permute.xlu0 %3712
  %v3715 = vmul.f32 %v3706, %v3713
  %3717 = vrot.lane.b32.xlu0 %v3715, 64
  %v3718 = vpop.permute.xlu0 %3717
  %v3720 = vadd.f32 %v3710, %v3718
  %v3721 = vtanh.pop %v3720
  %3723 = vrot.lane.b32.xlu0 %v3721, 64
  %v3724 = vpop.permute.xlu0 %3723
  %v3726 = vmul.f32 %v3708, %v3724
  %3728 = vrot.lane.b32.xlu0 %v3073, 64
  %v3729 = vpop.permute.xlu0 %3728
  %v3731 = vsel %vm314, %v3729, %v3720
  %3732 = vmatprep.subr.mxu0 0.0
  %3733 = vmatpush1.msra.mxu0 %v426
  %3734 = vmatprep.subr.mxu0 0.0
  %3735 = vmatpush1.msra.mxu0 %v427
  %3736 = vmatprep.subr.mxu0 0.0
  %3737 = vmatpush1.msra.mxu0 %v428
  %3738 = vmatprep.subr.mxu0 0.0
  %3739 = vmatpush1.msra.mxu0 %v429
  %3740 = vmatprep.subr.mxu0 0.0
  %3741 = vmatpush1.msra.mxu0 %v430
  %3742 = vmatprep.subr.mxu0 0.0
  %3743 = vmatpush1.msra.mxu0 %v431
  %3744 = vmatprep.subr.mxu0 0.0
  %3745 = vmatpush1.msra.mxu0 %v432
  %3746 = vmatprep.subr.mxu0 0.0
  %3747 = vmatpush1.msra.mxu0 %v433
  %3748 = vmatprep.subr.mxu0 0.0
  %3749 = vmatpush1.msra.mxu0 %v434
  %3750 = vmatprep.subr.mxu0 0.0
  %3751 = vmatpush1.msra.mxu0 %v435
  %3752 = vmatprep.subr.mxu0 0.0
  %3753 = vmatpush1.msra.mxu0 %v436
  %3754 = vmatprep.subr.mxu0 0.0
  %3755 = vmatpush1.msra.mxu0 %v437
  %3756 = vmatprep.subr.mxu0 0.0
  %3757 = vmatpush1.msra.mxu0 %v438
  %3758 = vmatprep.subr.mxu0 0.0
  %3759 = vmatpush1.msra.mxu0 %v439
  %3760 = vmatprep.subr.mxu0 0.0
  %3761 = vmatpush1.msra.mxu0 %v440
  %3762 = vmatprep.subr.mxu0 0.0
  %3763 = vmatpush1.msra.mxu0 %v441
  %3764 = vmatprep.subr.mxu0 0.0
  %3765 = vmatpush1.msra.mxu0 0.0
  %3766 = vmatprep.subr.mxu0 0.0
  %3767 = vmatpush1.msra.mxu0 0.0
  %3768 = vmatprep.subr.mxu0 0.0
  %3769 = vmatpush1.msra.mxu0 0.0
  %3770 = vmatprep.subr.mxu0 0.0
  %3771 = vmatpush1.msra.mxu0 0.0
  %3772 = vmatprep.subr.mxu0 0.0
  %3773 = vmatpush1.msra.mxu0 0.0
  %3774 = vmatprep.subr.mxu0 0.0
  %3775 = vmatpush1.msra.mxu0 0.0
  %3776 = vmatprep.subr.mxu0 0.0
  %3777 = vmatpush1.msra.mxu0 0.0
  %3778 = vmatprep.subr.mxu0 0.0
  %3779 = vmatpush1.msra.mxu0 0.0
  %3780 = vmatprep.subr.mxu0 0.0
  %3781 = vmatpush1.msra.mxu0 0.0
  %3782 = vmatprep.subr.mxu0 0.0
  %3783 = vmatpush1.msra.mxu0 0.0
  %3784 = vmatprep.subr.mxu0 0.0
  %3785 = vmatpush1.msra.mxu0 0.0
  %3786 = vmatprep.subr.mxu0 0.0
  %3787 = vmatpush1.msra.mxu0 0.0
  %3788 = vmatprep.subr.mxu0 0.0
  %3789 = vmatpush1.msra.mxu0 0.0
  %3790 = vmatprep.subr.mxu0 0.0
  %3791 = vmatpush1.msra.mxu0 0.0
  %3792 = vmatprep.subr.mxu0 0.0
  %3793 = vmatpush1.msra.mxu0 0.0
  %3794 = vmatprep.subr.mxu0 0.0
  %3795 = vmatpush1.msra.mxu0 0.0
  %3796 = vmatprep.mubr.f32.mxu0 0.0
  %3797 = vmatmul.mubr.f32.gmra.mrb[0].mxu0 %v3731
  %v3798 = vpop.f32.mrb[0].mxu0
  %v3799 = vadd.f32 %v76, %v3798
  %v3800 = vpop.f32.mrb[0].mxu0
  %3801 = vdwg.mxu0
  %v3802 = vmax.f32 %v3799, 0.0
  %v3804 = vsel %vm141, %v3802, 0
  %3806 = vmatprep.subr.mxu0 0.0
  %3807 = vmatpush1.msra.mxu0 %v513
  %3808 = vmatprep.subr.mxu0 0.0
  %3809 = vmatpush1.msra.mxu0 %v514
  %3810 = vmatprep.subr.mxu0 0.0
  %3811 = vmatpush1.msra.mxu0 %v515
  %3812 = vmatprep.subr.mxu0 0.0
  %3813 = vmatpush1.msra.mxu0 %v516
  %3814 = vmatprep.subr.mxu0 0.0
  %3815 = vmatpush1.msra.mxu0 0.0
  %3816 = vmatprep.subr.mxu0 0.0
  %3817 = vmatpush1.msra.mxu0 0.0
  %3818 = vmatprep.subr.mxu0 0.0
  %3819 = vmatpush1.msra.mxu0 0.0
  %3820 = vmatprep.subr.mxu0 0.0
  %3821 = vmatpush1.msra.mxu0 0.0
  %3822 = vmatprep.subr.mxu0 0.0
  %3823 = vmatpush1.msra.mxu0 0.0
  %3824 = vmatprep.subr.mxu0 0.0
  %3825 = vmatpush1.msra.mxu0 0.0
  %3826 = vmatprep.subr.mxu0 0.0
  %3827 = vmatpush1.msra.mxu0 0.0
  %3828 = vmatprep.subr.mxu0 0.0
  %3829 = vmatpush1.msra.mxu0 0.0
  %3830 = vmatprep.subr.mxu0 0.0
  %3831 = vmatpush1.msra.mxu0 0.0
  %3832 = vmatprep.subr.mxu0 0.0
  %3833 = vmatpush1.msra.mxu0 0.0
  %3834 = vmatprep.subr.mxu0 0.0
  %3835 = vmatpush1.msra.mxu0 0.0
  %3836 = vmatprep.subr.mxu0 0.0
  %3837 = vmatpush1.msra.mxu0 0.0
  %3838 = vmatprep.subr.mxu0 0.0
  %3839 = vmatpush1.msra.mxu0 0.0
  %3840 = vmatprep.subr.mxu0 0.0
  %3841 = vmatpush1.msra.mxu0 0.0
  %3842 = vmatprep.subr.mxu0 0.0
  %3843 = vmatpush1.msra.mxu0 0.0
  %3844 = vmatprep.subr.mxu0 0.0
  %3845 = vmatpush1.msra.mxu0 0.0
  %3846 = vmatprep.subr.mxu0 0.0
  %3847 = vmatpush1.msra.mxu0 0.0
  %3848 = vmatprep.subr.mxu0 0.0
  %3849 = vmatpush1.msra.mxu0 0.0
  %3850 = vmatprep.subr.mxu0 0.0
  %3851 = vmatpush1.msra.mxu0 0.0
  %3852 = vmatprep.subr.mxu0 0.0
  %3853 = vmatpush1.msra.mxu0 0.0
  %3854 = vmatprep.subr.mxu0 0.0
  %3855 = vmatpush1.msra.mxu0 0.0
  %3856 = vmatprep.subr.mxu0 0.0
  %3857 = vmatpush1.msra.mxu0 0.0
  %3858 = vmatprep.subr.mxu0 0.0
  %3859 = vmatpush1.msra.mxu0 0.0
  %3860 = vmatprep.subr.mxu0 0.0
  %3861 = vmatpush1.msra.mxu0 0.0
  %3862 = vmatprep.subr.mxu0 0.0
  %3863 = vmatpush1.msra.mxu0 0.0
  %3864 = vmatprep.subr.mxu0 0.0
  %3865 = vmatpush1.msra.mxu0 0.0
  %3866 = vmatprep.subr.mxu0 0.0
  %3867 = vmatpush1.msra.mxu0 0.0
  %3868 = vmatprep.subr.mxu0 0.0
  %3869 = vmatpush1.msra.mxu0 0.0
  %3870 = vmatprep.mubr.f32.mxu0 0.0
  %3871 = vmatmul.mubr.f32.gmra.mrb[0].mxu0 %v3804
  %v3872 = vpop.f32.mrb[0].mxu0
  %v3873 = vadd.f32 %v83, %v3872
  %v3874 = vpop.f32.mrb[0].mxu0
  %3875 = vdwg.mxu0
  %3876 = vmax.xlane.f32.xlu0 %v3873
  %v3877 = vpop.xlane.xlu0 %3876
  %v3878 = vsub.f32 %v3873, %v3877
  %v3879 = vmul.f32 %v3878, 1.442695
  %v3880 = vpow.pop %v3879
  %3881 = vadd.xlane.f32.xlu0 %v3880
  %v3882 = vpop.xlane.xlu0 %3881
  %v3883 = vrcp.pop %v3882
  %v3884 = vmul.f32 %v3880, %v3883
  %v3885 = vmul.f32 %v3884, %v3731
  %3886 = vmatprep.subr.mxu0 0.0
  %3887 = vmatpush1.msra.mxu0 %v600
  %3888 = vmatprep.subr.mxu0 0.0
  %3889 = vmatpush1.msra.mxu0 %v601
  %3890 = vmatprep.subr.mxu0 0.0
  %3891 = vmatpush1.msra.mxu0 %v602
  %3892 = vmatprep.subr.mxu0 0.0
  %3893 = vmatpush1.msra.mxu0 %v603
  %3894 = vmatprep.subr.mxu0 0.0
  %3895 = vmatpush1.msra.mxu0 %v604
  %3896 = vmatprep.subr.mxu0 0.0
  %3897 = vmatpush1.msra.mxu0 %v605
  %3898 = vmatprep.subr.mxu0 0.0
  %3899 = vmatpush1.msra.mxu0 %v606
  %3900 = vmatprep.subr.mxu0 0.0
  %3901 = vmatpush1.msra.mxu0 %v607
  %3902 = vmatprep.subr.mxu0 0.0
  %3903 = vmatpush1.msra.mxu0 %v608
  %3904 = vmatprep.subr.mxu0 0.0
  %3905 = vmatpush1.msra.mxu0 %v609
  %3906 = vmatprep.subr.mxu0 0.0
  %3907 = vmatpush1.msra.mxu0 %v610
  %3908 = vmatprep.subr.mxu0 0.0
  %3909 = vmatpush1.msra.mxu0 %v611
  %3910 = vmatprep.subr.mxu0 0.0
  %3911 = vmatpush1.msra.mxu0 %v612
  %3912 = vmatprep.subr.mxu0 0.0
  %3913 = vmatpush1.msra.mxu0 %v613
  %3914 = vmatprep.subr.mxu0 0.0
  %3915 = vmatpush1.msra.mxu0 %v614
  %3916 = vmatprep.subr.mxu0 0.0
  %3917 = vmatpush1.msra.mxu0 %v615
  %3918 = vmatprep.subr.mxu0 0.0
  %3919 = vmatpush1.msra.mxu0 0.0
  %3920 = vmatprep.subr.mxu0 0.0
  %3921 = vmatpush1.msra.mxu0 0.0
  %3922 = vmatprep.subr.mxu0 0.0
  %3923 = vmatpush1.msra.mxu0 0.0
  %3924 = vmatprep.subr.mxu0 0.0
  %3925 = vmatpush1.msra.mxu0 0.0
  %3926 = vmatprep.subr.mxu0 0.0
  %3927 = vmatpush1.msra.mxu0 0.0
  %3928 = vmatprep.subr.mxu0 0.0
  %3929 = vmatpush1.msra.mxu0 0.0
  %3930 = vmatprep.subr.mxu0 0.0
  %3931 = vmatpush1.msra.mxu0 0.0
  %3932 = vmatprep.subr.mxu0 0.0
  %3933 = vmatpush1.msra.mxu0 0.0
  %3934 = vmatprep.subr.mxu0 0.0
  %3935 = vmatpush1.msra.mxu0 0.0
  %3936 = vmatprep.subr.mxu0 0.0
  %3937 = vmatpush1.msra.mxu0 0.0
  %3938 = vmatprep.subr.mxu0 0.0
  %3939 = vmatpush1.msra.mxu0 0.0
  %3940 = vmatprep.subr.mxu0 0.0
  %3941 = vmatpush1.msra.mxu0 0.0
  %3942 = vmatprep.subr.mxu0 0.0
  %3943 = vmatpush1.msra.mxu0 0.0
  %3944 = vmatprep.subr.mxu0 0.0
  %3945 = vmatpush1.msra.mxu0 0.0
  %3946 = vmatprep.subr.mxu0 0.0
  %3947 = vmatpush1.msra.mxu0 0.0
  %3948 = vmatprep.subr.mxu0 0.0
  %3949 = vmatpush1.msra.mxu0 0.0
  %3950 = vmatprep.mubr.f32.mxu0 0.0
  %3951 = vmatmul.mubr.f32.gmra.mrb[0].mxu0 %v3885
  %v3952 = vpop.f32.mrb[0].mxu0
  %v3953 = vadd.f32 %v90, %v3952
  %v3954 = vpop.f32.mrb[0].mxu0
  %3955 = vdwg.mxu0
  %v3956 = vmax.f32 %v3953, 0.0
  %v3958 = vsel %vm141, %v3956, 0
  %3960 = vmatprep.subr.mxu0 0.0
  %3961 = vmatpush1.msra.mxu0 %v687
  %3962 = vmatprep.subr.mxu0 0.0
  %3963 = vmatpush1.msra.mxu0 %v688
  %3964 = vmatprep.subr.mxu0 0.0
  %3965 = vmatpush1.msra.mxu0 %v689
  %3966 = vmatprep.subr.mxu0 0.0
  %3967 = vmatpush1.msra.mxu0 %v690
  %3968 = vmatprep.subr.mxu0 0.0
  %3969 = vmatpush1.msra.mxu0 0.0
  %3970 = vmatprep.subr.mxu0 0.0
  %3971 = vmatpush1.msra.mxu0 0.0
  %3972 = vmatprep.subr.mxu0 0.0
  %3973 = vmatpush1.msra.mxu0 0.0
  %3974 = vmatprep.subr.mxu0 0.0
  %3975 = vmatpush1.msra.mxu0 0.0
  %3976 = vmatprep.subr.mxu0 0.0
  %3977 = vmatpush1.msra.mxu0 0.0
  %3978 = vmatprep.subr.mxu0 0.0
  %3979 = vmatpush1.msra.mxu0 0.0
  %3980 = vmatprep.subr.mxu0 0.0
  %3981 = vmatpush1.msra.mxu0 0.0
  %3982 = vmatprep.subr.mxu0 0.0
  %3983 = vmatpush1.msra.mxu0 0.0
  %3984 = vmatprep.subr.mxu0 0.0
  %3985 = vmatpush1.msra.mxu0 0.0
  %3986 = vmatprep.subr.mxu0 0.0
  %3987 = vmatpush1.msra.mxu0 0.0
  %3988 = vmatprep.subr.mxu0 0.0
  %3989 = vmatpush1.msra.mxu0 0.0
  %3990 = vmatprep.subr.mxu0 0.0
  %3991 = vmatpush1.msra.mxu0 0.0
  %3992 = vmatprep.subr.mxu0 0.0
  %3993 = vmatpush1.msra.mxu0 0.0
  %3994 = vmatprep.subr.mxu0 0.0
  %3995 = vmatpush1.msra.mxu0 0.0
  %3996 = vmatprep.subr.mxu0 0.0
  %3997 = vmatpush1.msra.mxu0 0.0
  %3998 = vmatprep.subr.mxu0 0.0
  %3999 = vmatpush1.msra.mxu0 0.0
  %4000 = vmatprep.subr.mxu0 0.0
  %4001 = vmatpush1.msra.mxu0 0.0
  %4002 = vmatprep.subr.mxu0 0.0
  %4003 = vmatpush1.msra.mxu0 0.0
  %4004 = vmatprep.subr.mxu0 0.0
  %4005 = vmatpush1.msra.mxu0 0.0
  %4006 = vmatprep.subr.mxu0 0.0
  %4007 = vmatpush1.msra.mxu0 0.0
  %4008 = vmatprep.subr.mxu0 0.0
  %4009 = vmatpush1.msra.mxu0 0.0
  %4010 = vmatprep.subr.mxu0 0.0
  %4011 = vmatpush1.msra.mxu0 0.0
  %4012 = vmatprep.subr.mxu0 0.0
  %4013 = vmatpush1.msra.mxu0 0.0
  %4014 = vmatprep.subr.mxu0 0.0
  %4015 = vmatpush1.msra.mxu0 0.0
  %4016 = vmatprep.subr.mxu0 0.0
  %4017 = vmatpush1.msra.mxu0 0.0
  %4018 = vmatprep.subr.mxu0 0.0
  %4019 = vmatpush1.msra.mxu0 0.0
  %4020 = vmatprep.subr.mxu0 0.0
  %4021 = vmatpush1.msra.mxu0 0.0
  %4022 = vmatprep.subr.mxu0 0.0
  %4023 = vmatpush1.msra.mxu0 0.0
  %4024 = vmatprep.mubr.f32.mxu0 0.0
  %4025 = vmatmul.mubr.f32.gmra.mrb[0].mxu0 %v3958
  %v4026 = vpop.f32.mrb[0].mxu0
  %v4027 = vadd.f32 %v97, %v4026
  %v4028 = vpop.f32.mrb[0].mxu0
  %4029 = vdwg.mxu0
  %v4030 = vtanh.pop %v4027
  %v4032 = vsel %vm314, %v3618, 0
  %4034 = vmatprep.subr.mxu0 0.0
  %4035 = vmatpush1.msra.mxu0 %v781
  %4036 = vmatprep.subr.mxu0 0.0
  %4037 = vmatpush1.msra.mxu0 %v782
  %4038 = vmatprep.subr.mxu0 0.0
  %4039 = vmatpush1.msra.mxu0 %v783
  %4040 = vmatprep.subr.mxu0 0.0
  %4041 = vmatpush1.msra.mxu0 %v784
  %4042 = vmatprep.subr.mxu0 0.0
  %4043 = vmatpush1.msra.mxu0 %v785
  %4044 = vmatprep.subr.mxu0 0.0
  %4045 = vmatpush1.msra.mxu0 %v786
  %4046 = vmatprep.subr.mxu0 0.0
  %4047 = vmatpush1.msra.mxu0 %v787
  %4048 = vmatprep.subr.mxu0 0.0
  %4049 = vmatpush1.msra.mxu0 %v788
  %4050 = vmatprep.subr.mxu0 0.0
  %4051 = vmatpush1.msra.mxu0 0.0
  %4052 = vmatprep.subr.mxu0 0.0
  %4053 = vmatpush1.msra.mxu0 0.0
  %4054 = vmatprep.subr.mxu0 0.0
  %4055 = vmatpush1.msra.mxu0 0.0
  %4056 = vmatprep.subr.mxu0 0.0
  %4057 = vmatpush1.msra.mxu0 0.0
  %4058 = vmatprep.subr.mxu0 0.0
  %4059 = vmatpush1.msra.mxu0 0.0
  %4060 = vmatprep.subr.mxu0 0.0
  %4061 = vmatpush1.msra.mxu0 0.0
  %4062 = vmatprep.subr.mxu0 0.0
  %4063 = vmatpush1.msra.mxu0 0.0
  %4064 = vmatprep.subr.mxu0 0.0
  %4065 = vmatpush1.msra.mxu0 0.0
  %4066 = vmatprep.subr.mxu0 0.0
  %4067 = vmatpush1.msra.mxu0 0.0
  %4068 = vmatprep.subr.mxu0 0.0
  %4069 = vmatpush1.msra.mxu0 0.0
  %4070 = vmatprep.subr.mxu0 0.0
  %4071 = vmatpush1.msra.mxu0 0.0
  %4072 = vmatprep.subr.mxu0 0.0
  %4073 = vmatpush1.msra.mxu0 0.0
  %4074 = vmatprep.subr.mxu0 0.0
  %4075 = vmatpush1.msra.mxu0 0.0
  %4076 = vmatprep.subr.mxu0 0.0
  %4077 = vmatpush1.msra.mxu0 0.0
  %4078 = vmatprep.subr.mxu0 0.0
  %4079 = vmatpush1.msra.mxu0 0.0
  %4080 = vmatprep.subr.mxu0 0.0
  %4081 = vmatpush1.msra.mxu0 0.0
  %4082 = vmatprep.subr.mxu0 0.0
  %4083 = vmatpush1.msra.mxu0 0.0
  %4084 = vmatprep.subr.mxu0 0.0
  %4085 = vmatpush1.msra.mxu0 0.0
  %4086 = vmatprep.subr.mxu0 0.0
  %4087 = vmatpush1.msra.mxu0 0.0
  %4088 = vmatprep.subr.mxu0 0.0
  %4089 = vmatpush1.msra.mxu0 0.0
  %4090 = vmatprep.subr.mxu0 0.0
  %4091 = vmatpush1.msra.mxu0 0.0
  %4092 = vmatprep.subr.mxu0 0.0
  %4093 = vmatpush1.msra.mxu0 0.0
  %4094 = vmatprep.subr.mxu0 0.0
  %4095 = vmatpush1.msra.mxu0 0.0
  %4096 = vmatprep.subr.mxu0 0.0
  %4097 = vmatpush1.msra.mxu0 0.0
  %4098 = vmatprep.mubr.f32.mxu0 0.0
  %4099 = vmatmul.mubr.f32.gmra.mrb[0].mxu0 %v4032
  %v4100 = vpop.f32.mrb[0].mxu0
  %v4101 = vadd.f32 0.0, %v4100
  %v4102 = vpop.f32.mrb[0].mxu0
  %4103 = vdwg.mxu0
  %4104 = vmatprep.subr.mxu0 0.0
  %4105 = vmatpush1.msra.mxu0 %v765
  %4106 = vmatprep.subr.mxu0 0.0
  %4107 = vmatpush1.msra.mxu0 %v766
  %4108 = vmatprep.subr.mxu0 0.0
  %4109 = vmatpush1.msra.mxu0 %v767
  %4110 = vmatprep.subr.mxu0 0.0
  %4111 = vmatpush1.msra.mxu0 %v768
  %4112 = vmatprep.subr.mxu0 0.0
  %4113 = vmatpush1.msra.mxu0 %v769
  %4114 = vmatprep.subr.mxu0 0.0
  %4115 = vmatpush1.msra.mxu0 %v770
  %4116 = vmatprep.subr.mxu0 0.0
  %4117 = vmatpush1.msra.mxu0 %v771
  %4118 = vmatprep.subr.mxu0 0.0
  %4119 = vmatpush1.msra.mxu0 %v772
  %4120 = vmatprep.subr.mxu0 0.0
  %4121 = vmatpush1.msra.mxu0 %v773
  %4122 = vmatprep.subr.mxu0 0.0
  %4123 = vmatpush1.msra.mxu0 %v774
  %4124 = vmatprep.subr.mxu0 0.0
  %4125 = vmatpush1.msra.mxu0 %v775
  %4126 = vmatprep.subr.mxu0 0.0
  %4127 = vmatpush1.msra.mxu0 %v776
  %4128 = vmatprep.subr.mxu0 0.0
  %4129 = vmatpush1.msra.mxu0 %v777
  %4130 = vmatprep.subr.mxu0 0.0
  %4131 = vmatpush1.msra.mxu0 %v778
  %4132 = vmatprep.subr.mxu0 0.0
  %4133 = vmatpush1.msra.mxu0 %v779
  %4134 = vmatprep.subr.mxu0 0.0
  %4135 = vmatpush1.msra.mxu0 %v780
  %4136 = vmatprep.subr.mxu0 0.0
  %4137 = vmatpush1.msra.mxu0 0.0
  %4138 = vmatprep.subr.mxu0 0.0
  %4139 = vmatpush1.msra.mxu0 0.0
  %4140 = vmatprep.subr.mxu0 0.0
  %4141 = vmatpush1.msra.mxu0 0.0
  %4142 = vmatprep.subr.mxu0 0.0
  %4143 = vmatpush1.msra.mxu0 0.0
  %4144 = vmatprep.subr.mxu0 0.0
  %4145 = vmatpush1.msra.mxu0 0.0
  %4146 = vmatprep.subr.mxu0 0.0
  %4147 = vmatpush1.msra.mxu0 0.0
  %4148 = vmatprep.subr.mxu0 0.0
  %4149 = vmatpush1.msra.mxu0 0.0
  %4150 = vmatprep.subr.mxu0 0.0
  %4151 = vmatpush1.msra.mxu0 0.0
  %4152 = vmatprep.subr.mxu0 0.0
  %4153 = vmatpush1.msra.mxu0 0.0
  %4154 = vmatprep.subr.mxu0 0.0
  %4155 = vmatpush1.msra.mxu0 0.0
  %4156 = vmatprep.subr.mxu0 0.0
  %4157 = vmatpush1.msra.mxu0 0.0
  %4158 = vmatprep.subr.mxu0 0.0
  %4159 = vmatpush1.msra.mxu0 0.0
  %4160 = vmatprep.subr.mxu0 0.0
  %4161 = vmatpush1.msra.mxu0 0.0
  %4162 = vmatprep.subr.mxu0 0.0
  %4163 = vmatpush1.msra.mxu0 0.0
  %4164 = vmatprep.subr.mxu0 0.0
  %4165 = vmatpush1.msra.mxu0 0.0
  %4166 = vmatprep.subr.mxu0 0.0
  %4167 = vmatpush1.msra.mxu0 0.0
  %4168 = vmatprep.mubr.f32.mxu0 0.0
  %4169 = vmatmul.mubr.f32.gmra.mrb[0].mxu0 %v3885
  %v4170 = vpop.f32.mrb[0].mxu0
  %v4171 = vadd.f32 %v4101, %v4170
  %v4172 = vpop.f32.mrb[0].mxu0
  %4173 = vdwg.mxu0
  %v4174 = vadd.f32 %v4171, %v104
  %v4175 = vmax.f32 %v4174, 0.0
  %v4177 = vsel %vm314, %v4175, 0
  %4179 = vmatprep.subr.mxu0 0.0
  %4180 = vmatpush1.msra.mxu0 %v933
  %4181 = vmatprep.subr.mxu0 0.0
  %4182 = vmatpush1.msra.mxu0 %v934
  %4183 = vmatprep.subr.mxu0 0.0
  %4184 = vmatpush1.msra.mxu0 %v935
  %4185 = vmatprep.subr.mxu0 0.0
  %4186 = vmatpush1.msra.mxu0 %v936
  %4187 = vmatprep.subr.mxu0 0.0
  %4188 = vmatpush1.msra.mxu0 %v937
  %4189 = vmatprep.subr.mxu0 0.0
  %4190 = vmatpush1.msra.mxu0 %v938
  %4191 = vmatprep.subr.mxu0 0.0
  %4192 = vmatpush1.msra.mxu0 %v939
  %4193 = vmatprep.subr.mxu0 0.0
  %4194 = vmatpush1.msra.mxu0 %v940
  %4195 = vmatprep.subr.mxu0 0.0
  %4196 = vmatpush1.msra.mxu0 0.0
  %4197 = vmatprep.subr.mxu0 0.0
  %4198 = vmatpush1.msra.mxu0 0.0
  %4199 = vmatprep.subr.mxu0 0.0
  %4200 = vmatpush1.msra.mxu0 0.0
  %4201 = vmatprep.subr.mxu0 0.0
  %4202 = vmatpush1.msra.mxu0 0.0
  %4203 = vmatprep.subr.mxu0 0.0
  %4204 = vmatpush1.msra.mxu0 0.0
  %4205 = vmatprep.subr.mxu0 0.0
  %4206 = vmatpush1.msra.mxu0 0.0
  %4207 = vmatprep.subr.mxu0 0.0
  %4208 = vmatpush1.msra.mxu0 0.0
  %4209 = vmatprep.subr.mxu0 0.0
  %4210 = vmatpush1.msra.mxu0 0.0
  %4211 = vmatprep.subr.mxu0 0.0
  %4212 = vmatpush1.msra.mxu0 0.0
  %4213 = vmatprep.subr.mxu0 0.0
  %4214 = vmatpush1.msra.mxu0 0.0
  %4215 = vmatprep.subr.mxu0 0.0
  %4216 = vmatpush1.msra.mxu0 0.0
  %4217 = vmatprep.subr.mxu0 0.0
  %4218 = vmatpush1.msra.mxu0 0.0
  %4219 = vmatprep.subr.mxu0 0.0
  %4220 = vmatpush1.msra.mxu0 0.0
  %4221 = vmatprep.subr.mxu0 0.0
  %4222 = vmatpush1.msra.mxu0 0.0
  %4223 = vmatprep.subr.mxu0 0.0
  %4224 = vmatpush1.msra.mxu0 0.0
  %4225 = vmatprep.subr.mxu0 0.0
  %4226 = vmatpush1.msra.mxu0 0.0
  %4227 = vmatprep.subr.mxu0 0.0
  %4228 = vmatpush1.msra.mxu0 0.0
  %4229 = vmatprep.subr.mxu0 0.0
  %4230 = vmatpush1.msra.mxu0 0.0
  %4231 = vmatprep.subr.mxu0 0.0
  %4232 = vmatpush1.msra.mxu0 0.0
  %4233 = vmatprep.subr.mxu0 0.0
  %4234 = vmatpush1.msra.mxu0 0.0
  %4235 = vmatprep.subr.mxu0 0.0
  %4236 = vmatpush1.msra.mxu0 0.0
  %4237 = vmatprep.subr.mxu0 0.0
  %4238 = vmatpush1.msra.mxu0 0.0
  %4239 = vmatprep.subr.mxu0 0.0
  %4240 = vmatpush1.msra.mxu0 0.0
  %4241 = vmatprep.subr.mxu0 0.0
  %4242 = vmatpush1.msra.mxu0 0.0
  %4243 = vmatprep.mubr.f32.mxu0 0.0
  %4244 = vmatmul.mubr.f32.gmra.mrb[0].mxu0 %v4177
  %v4245 = vpop.f32.mrb[0].mxu0
  %v4246 = vadd.f32 %v111, %v4245
  %v4247 = vpop.f32.mrb[0].mxu0
  %4248 = vdwg.mxu0
  %v4249 = vxor.u32 %v4246, 2147483648
  %v4250 = vmul.f32 %v4249, 1.442695
  %v4251 = vpow.pop %v4250
  %v4252 = vadd.f32 %v4251, 1.0
  %v4253 = vrcp.pop %v4252
  %v4254 = vmul.f32 1.0, %v4253
  %v4255 = vmul.f32 %v4254, %v3618
  %4257 = vrot.lane.b32.xlu0 %v4030, 64
  %v4258 = vpop.permute.xlu0 %4257
  %v4260 = vmul.f32 %v4254, %v4258
  %4262 = vrot.lane.b32.xlu0 %v4260, 64
  %v4263 = vpop.permute.xlu0 %4262
  %v4265 = vadd.f32 %v4255, %v4263
  %v4266 = vld [vmem:[#allocation2 + $0x60] sm:$0xff]
  %v4267 = vld [vmem:[#allocation2 + $0x68] sm:$0xff]
  %v4269 = vsel %vm314, %v3726, 0
  %4271 = vmatprep.subr.mxu0 %v299
  %4272 = vmatpush1.msra.mxu0 %v298
  %4273 = vmatprep.subr.mxu0 %v301
  %4274 = vmatpush1.msra.mxu0 %v300
  %4275 = vmatprep.subr.mxu0 %v303
  %4276 = vmatpush1.msra.mxu0 %v302
  %4277 = vmatprep.subr.mxu0 %v305
  %4278 = vmatpush1.msra.mxu0 %v304
  %4279 = vmatprep.subr.mxu0 %v307
  %4280 = vmatpush1.msra.mxu0 %v306
  %4281 = vmatprep.subr.mxu0 %v309
  %4282 = vmatpush1.msra.mxu0 %v308
  %4283 = vmatprep.subr.mxu0 %v311
  %4284 = vmatpush1.msra.mxu0 %v310
  %4285 = vmatprep.subr.mxu0 %v313
  %4286 = vmatpush1.msra.mxu0 %v312
  %4287 = vmatprep.subr.mxu0 0.0
  %4288 = vmatpush1.msra.mxu0 0.0
  %4289 = vmatprep.subr.mxu0 0.0
  %4290 = vmatpush1.msra.mxu0 0.0
  %4291 = vmatprep.subr.mxu0 0.0
  %4292 = vmatpush1.msra.mxu0 0.0
  %4293 = vmatprep.subr.mxu0 0.0
  %4294 = vmatpush1.msra.mxu0 0.0
  %4295 = vmatprep.subr.mxu0 0.0
  %4296 = vmatpush1.msra.mxu0 0.0
  %4297 = vmatprep.subr.mxu0 0.0
  %4298 = vmatpush1.msra.mxu0 0.0
  %4299 = vmatprep.subr.mxu0 0.0
  %4300 = vmatpush1.msra.mxu0 0.0
  %4301 = vmatprep.subr.mxu0 0.0
  %4302 = vmatpush1.msra.mxu0 0.0
  %4303 = vmatprep.subr.mxu0 0.0
  %4304 = vmatpush1.msra.mxu0 0.0
  %4305 = vmatprep.subr.mxu0 0.0
  %4306 = vmatpush1.msra.mxu0 0.0
  %4307 = vmatprep.subr.mxu0 0.0
  %4308 = vmatpush1.msra.mxu0 0.0
  %4309 = vmatprep.subr.mxu0 0.0
  %4310 = vmatpush1.msra.mxu0 0.0
  %4311 = vmatprep.subr.mxu0 0.0
  %4312 = vmatpush1.msra.mxu0 0.0
  %4313 = vmatprep.subr.mxu0 0.0
  %4314 = vmatpush1.msra.mxu0 0.0
  %4315 = vmatprep.subr.mxu0 0.0
  %4316 = vmatpush1.msra.mxu0 0.0
  %4317 = vmatprep.subr.mxu0 0.0
  %4318 = vmatpush1.msra.mxu0 0.0
  %4319 = vmatprep.subr.mxu0 0.0
  %4320 = vmatpush1.msra.mxu0 0.0
  %4321 = vmatprep.subr.mxu0 0.0
  %4322 = vmatpush1.msra.mxu0 0.0
  %4323 = vmatprep.subr.mxu0 0.0
  %4324 = vmatpush1.msra.mxu0 0.0
  %4325 = vmatprep.subr.mxu0 0.0
  %4326 = vmatpush1.msra.mxu0 0.0
  %4327 = vmatprep.subr.mxu0 0.0
  %4328 = vmatpush1.msra.mxu0 0.0
  %4329 = vmatprep.subr.mxu0 0.0
  %4330 = vmatpush1.msra.mxu0 0.0
  %4331 = vmatprep.subr.mxu0 0.0
  %4332 = vmatpush1.msra.mxu0 0.0
  %4333 = vmatprep.subr.mxu0 0.0
  %4334 = vmatpush1.msra.mxu0 0.0
  %4335 = vmatprep.mubr.f32.mxu0 0.0
  %4336 = vmatmul.mubr.f32.gmra.mrb[0].mxu0 %v4269
  %v4337 = vpop.f32.mrb[0].mxu0
  %v4338 = vadd.f32 0.0, %v4337
  %v4339 = vpop.f32.mrb[0].mxu0
  %v4340 = vadd.f32 0.0, %v4339
  %4341 = vdwg.mxu0
  %v4342 = vadd.f32 %v4266, %v4338
  %v4343 = vadd.f32 %v4267, %v4340
  %v4344 = vxor.u32 %v4342, 2147483648
  %v4345 = vxor.u32 %v4343, 2147483648
  %v4346 = vmul.f32 %v4344, 1.442695
  %v4347 = vpow.pop %v4346
  %v4348 = vmul.f32 %v4345, 1.442695
  %v4349 = vpow.pop %v4348
  %v4350 = vadd.f32 %v4347, 1.0
  %v4351 = vadd.f32 %v4349, 1.0
  %v4352 = vrcp.pop %v4350
  %v4353 = vmul.f32 1.0, %v4352
  %v4354 = vrcp.pop %v4351
  %v4355 = vmul.f32 1.0, %v4354
  %v4356 = vtanh.pop %v4343
  %v4357 = vmul.f32 %v4353, %v3720
  %4359 = vrot.lane.b32.xlu0 %v4356, 64
  %v4360 = vpop.permute.xlu0 %4359
  %v4362 = vmul.f32 %v4353, %v4360
  %4364 = vrot.lane.b32.xlu0 %v4362, 64
  %v4365 = vpop.permute.xlu0 %4364
  %v4367 = vadd.f32 %v4357, %v4365
  %v4368 = vtanh.pop %v4367
  %4370 = vrot.lane.b32.xlu0 %v4368, 64
  %v4371 = vpop.permute.xlu0 %4370
  %v4373 = vmul.f32 %v4355, %v4371
  %4375 = vrot.lane.b32.xlu0 %v3720, 64
  %v4376 = vpop.permute.xlu0 %4375
  %v4378 = vsel %vm314, %v4376, %v4367
  %4379 = vmatprep.subr.mxu0 0.0
  %4380 = vmatpush1.msra.mxu0 %v426
  %4381 = vmatprep.subr.mxu0 0.0
  %4382 = vmatpush1.msra.mxu0 %v427
  %4383 = vmatprep.subr.mxu0 0.0
  %4384 = vmatpush1.msra.mxu0 %v428
  %4385 = vmatprep.subr.mxu0 0.0
  %4386 = vmatpush1.msra.mxu0 %v429
  %4387 = vmatprep.subr.mxu0 0.0
  %4388 = vmatpush1.msra.mxu0 %v430
  %4389 = vmatprep.subr.mxu0 0.0
  %4390 = vmatpush1.msra.mxu0 %v431
  %4391 = vmatprep.subr.mxu0 0.0
  %4392 = vmatpush1.msra.mxu0 %v432
  %4393 = vmatprep.subr.mxu0 0.0
  %4394 = vmatpush1.msra.mxu0 %v433
  %4395 = vmatprep.subr.mxu0 0.0
  %4396 = vmatpush1.msra.mxu0 %v434
  %4397 = vmatprep.subr.mxu0 0.0
  %4398 = vmatpush1.msra.mxu0 %v435
  %4399 = vmatprep.subr.mxu0 0.0
  %4400 = vmatpush1.msra.mxu0 %v436
  %4401 = vmatprep.subr.mxu0 0.0
  %4402 = vmatpush1.msra.mxu0 %v437
  %4403 = vmatprep.subr.mxu0 0.0
  %4404 = vmatpush1.msra.mxu0 %v438
  %4405 = vmatprep.subr.mxu0 0.0
  %4406 = vmatpush1.msra.mxu0 %v439
  %4407 = vmatprep.subr.mxu0 0.0
  %4408 = vmatpush1.msra.mxu0 %v440
  %4409 = vmatprep.subr.mxu0 0.0
  %4410 = vmatpush1.msra.mxu0 %v441
  %4411 = vmatprep.subr.mxu0 0.0
  %4412 = vmatpush1.msra.mxu0 0.0
  %4413 = vmatprep.subr.mxu0 0.0
  %4414 = vmatpush1.msra.mxu0 0.0
  %4415 = vmatprep.subr.mxu0 0.0
  %4416 = vmatpush1.msra.mxu0 0.0
  %4417 = vmatprep.subr.mxu0 0.0
  %4418 = vmatpush1.msra.mxu0 0.0
  %4419 = vmatprep.subr.mxu0 0.0
  %4420 = vmatpush1.msra.mxu0 0.0
  %4421 = vmatprep.subr.mxu0 0.0
  %4422 = vmatpush1.msra.mxu0 0.0
  %4423 = vmatprep.subr.mxu0 0.0
  %4424 = vmatpush1.msra.mxu0 0.0
  %4425 = vmatprep.subr.mxu0 0.0
  %4426 = vmatpush1.msra.mxu0 0.0
  %4427 = vmatprep.subr.mxu0 0.0
  %4428 = vmatpush1.msra.mxu0 0.0
  %4429 = vmatprep.subr.mxu0 0.0
  %4430 = vmatpush1.msra.mxu0 0.0
  %4431 = vmatprep.subr.mxu0 0.0
  %4432 = vmatpush1.msra.mxu0 0.0
  %4433 = vmatprep.subr.mxu0 0.0
  %4434 = vmatpush1.msra.mxu0 0.0
  %4435 = vmatprep.subr.mxu0 0.0
  %4436 = vmatpush1.msra.mxu0 0.0
  %4437 = vmatprep.subr.mxu0 0.0
  %4438 = vmatpush1.msra.mxu0 0.0
  %4439 = vmatprep.subr.mxu0 0.0
  %4440 = vmatpush1.msra.mxu0 0.0
  %4441 = vmatprep.subr.mxu0 0.0
  %4442 = vmatpush1.msra.mxu0 0.0
  %4443 = vmatprep.mubr.f32.mxu0 0.0
  %4444 = vmatmul.mubr.f32.gmra.mrb[0].mxu0 %v4378
  %v4445 = vpop.f32.mrb[0].mxu0
  %v4446 = vadd.f32 %v76, %v4445
  %v4447 = vpop.f32.mrb[0].mxu0
  %4448 = vdwg.mxu0
  %v4449 = vmax.f32 %v4446, 0.0
  %v4451 = vsel %vm141, %v4449, 0
  %4453 = vmatprep.subr.mxu0 0.0
  %4454 = vmatpush1.msra.mxu0 %v513
  %4455 = vmatprep.subr.mxu0 0.0
  %4456 = vmatpush1.msra.mxu0 %v514
  %4457 = vmatprep.subr.mxu0 0.0
  %4458 = vmatpush1.msra.mxu0 %v515
  %4459 = vmatprep.subr.mxu0 0.0
  %4460 = vmatpush1.msra.mxu0 %v516
  %4461 = vmatprep.subr.mxu0 0.0
  %4462 = vmatpush1.msra.mxu0 0.0
  %4463 = vmatprep.subr.mxu0 0.0
  %4464 = vmatpush1.msra.mxu0 0.0
  %4465 = vmatprep.subr.mxu0 0.0
  %4466 = vmatpush1.msra.mxu0 0.0
  %4467 = vmatprep.subr.mxu0 0.0
  %4468 = vmatpush1.msra.mxu0 0.0
  %4469 = vmatprep.subr.mxu0 0.0
  %4470 = vmatpush1.msra.mxu0 0.0
  %4471 = vmatprep.subr.mxu0 0.0
  %4472 = vmatpush1.msra.mxu0 0.0
  %4473 = vmatprep.subr.mxu0 0.0
  %4474 = vmatpush1.msra.mxu0 0.0
  %4475 = vmatprep.subr.mxu0 0.0
  %4476 = vmatpush1.msra.mxu0 0.0
  %4477 = vmatprep.subr.mxu0 0.0
  %4478 = vmatpush1.msra.mxu0 0.0
  %4479 = vmatprep.subr.mxu0 0.0
  %4480 = vmatpush1.msra.mxu0 0.0
  %4481 = vmatprep.subr.mxu0 0.0
  %4482 = vmatpush1.msra.mxu0 0.0
  %4483 = vmatprep.subr.mxu0 0.0
  %4484 = vmatpush1.msra.mxu0 0.0
  %4485 = vmatprep.subr.mxu0 0.0
  %4486 = vmatpush1.msra.mxu0 0.0
  %4487 = vmatprep.subr.mxu0 0.0
  %4488 = vmatpush1.msra.mxu0 0.0
  %4489 = vmatprep.subr.mxu0 0.0
  %4490 = vmatpush1.msra.mxu0 0.0
  %4491 = vmatprep.subr.mxu0 0.0
  %4492 = vmatpush1.msra.mxu0 0.0
  %4493 = vmatprep.subr.mxu0 0.0
  %4494 = vmatpush1.msra.mxu0 0.0
  %4495 = vmatprep.subr.mxu0 0.0
  %4496 = vmatpush1.msra.mxu0 0.0
  %4497 = vmatprep.subr.mxu0 0.0
  %4498 = vmatpush1.msra.mxu0 0.0
  %4499 = vmatprep.subr.mxu0 0.0
  %4500 = vmatpush1.msra.mxu0 0.0
  %4501 = vmatprep.subr.mxu0 0.0
  %4502 = vmatpush1.msra.mxu0 0.0
  %4503 = vmatprep.subr.mxu0 0.0
  %4504 = vmatpush1.msra.mxu0 0.0
  %4505 = vmatprep.subr.mxu0 0.0
  %4506 = vmatpush1.msra.mxu0 0.0
  %4507 = vmatprep.subr.mxu0 0.0
  %4508 = vmatpush1.msra.mxu0 0.0
  %4509 = vmatprep.subr.mxu0 0.0
  %4510 = vmatpush1.msra.mxu0 0.0
  %4511 = vmatprep.subr.mxu0 0.0
  %4512 = vmatpush1.msra.mxu0 0.0
  %4513 = vmatprep.subr.mxu0 0.0
  %4514 = vmatpush1.msra.mxu0 0.0
  %4515 = vmatprep.subr.mxu0 0.0
  %4516 = vmatpush1.msra.mxu0 0.0
  %4517 = vmatprep.mubr.f32.mxu0 0.0
  %4518 = vmatmul.mubr.f32.gmra.mrb[0].mxu0 %v4451
  %v4519 = vpop.f32.mrb[0].mxu0
  %v4520 = vadd.f32 %v83, %v4519
  %v4521 = vpop.f32.mrb[0].mxu0
  %4522 = vdwg.mxu0
  %4523 = vmax.xlane.f32.xlu0 %v4520
  %v4524 = vpop.xlane.xlu0 %4523
  %v4525 = vsub.f32 %v4520, %v4524
  %v4526 = vmul.f32 %v4525, 1.442695
  %v4527 = vpow.pop %v4526
  %4528 = vadd.xlane.f32.xlu0 %v4527
  %v4529 = vpop.xlane.xlu0 %4528
  %v4530 = vrcp.pop %v4529
  %v4531 = vmul.f32 %v4527, %v4530
  %v4532 = vmul.f32 %v4531, %v4378
  %4533 = vmatprep.subr.mxu0 0.0
  %4534 = vmatpush1.msra.mxu0 %v600
  %4535 = vmatprep.subr.mxu0 0.0
  %4536 = vmatpush1.msra.mxu0 %v601
  %4537 = vmatprep.subr.mxu0 0.0
  %4538 = vmatpush1.msra.mxu0 %v602
  %4539 = vmatprep.subr.mxu0 0.0
  %4540 = vmatpush1.msra.mxu0 %v603
  %4541 = vmatprep.subr.mxu0 0.0
  %4542 = vmatpush1.msra.mxu0 %v604
  %4543 = vmatprep.subr.mxu0 0.0
  %4544 = vmatpush1.msra.mxu0 %v605
  %4545 = vmatprep.subr.mxu0 0.0
  %4546 = vmatpush1.msra.mxu0 %v606
  %4547 = vmatprep.subr.mxu0 0.0
  %4548 = vmatpush1.msra.mxu0 %v607
  %4549 = vmatprep.subr.mxu0 0.0
  %4550 = vmatpush1.msra.mxu0 %v608
  %4551 = vmatprep.subr.mxu0 0.0
  %4552 = vmatpush1.msra.mxu0 %v609
  %4553 = vmatprep.subr.mxu0 0.0
  %4554 = vmatpush1.msra.mxu0 %v610
  %4555 = vmatprep.subr.mxu0 0.0
  %4556 = vmatpush1.msra.mxu0 %v611
  %4557 = vmatprep.subr.mxu0 0.0
  %4558 = vmatpush1.msra.mxu0 %v612
  %4559 = vmatprep.subr.mxu0 0.0
  %4560 = vmatpush1.msra.mxu0 %v613
  %4561 = vmatprep.subr.mxu0 0.0
  %4562 = vmatpush1.msra.mxu0 %v614
  %4563 = vmatprep.subr.mxu0 0.0
  %4564 = vmatpush1.msra.mxu0 %v615
  %4565 = vmatprep.subr.mxu0 0.0
  %4566 = vmatpush1.msra.mxu0 0.0
  %4567 = vmatprep.subr.mxu0 0.0
  %4568 = vmatpush1.msra.mxu0 0.0
  %4569 = vmatprep.subr.mxu0 0.0
  %4570 = vmatpush1.msra.mxu0 0.0
  %4571 = vmatprep.subr.mxu0 0.0
  %4572 = vmatpush1.msra.mxu0 0.0
  %4573 = vmatprep.subr.mxu0 0.0
  %4574 = vmatpush1.msra.mxu0 0.0
  %4575 = vmatprep.subr.mxu0 0.0
  %4576 = vmatpush1.msra.mxu0 0.0
  %4577 = vmatprep.subr.mxu0 0.0
  %4578 = vmatpush1.msra.mxu0 0.0
  %4579 = vmatprep.subr.mxu0 0.0
  %4580 = vmatpush1.msra.mxu0 0.0
  %4581 = vmatprep.subr.mxu0 0.0
  %4582 = vmatpush1.msra.mxu0 0.0
  %4583 = vmatprep.subr.mxu0 0.0
  %4584 = vmatpush1.msra.mxu0 0.0
  %4585 = vmatprep.subr.mxu0 0.0
  %4586 = vmatpush1.msra.mxu0 0.0
  %4587 = vmatprep.subr.mxu0 0.0
  %4588 = vmatpush1.msra.mxu0 0.0
  %4589 = vmatprep.subr.mxu0 0.0
  %4590 = vmatpush1.msra.mxu0 0.0
  %4591 = vmatprep.subr.mxu0 0.0
  %4592 = vmatpush1.msra.mxu0 0.0
  %4593 = vmatprep.subr.mxu0 0.0
  %4594 = vmatpush1.msra.mxu0 0.0
  %4595 = vmatprep.subr.mxu0 0.0
  %4596 = vmatpush1.msra.mxu0 0.0
  %4597 = vmatprep.mubr.f32.mxu0 0.0
  %4598 = vmatmul.mubr.f32.gmra.mrb[0].mxu0 %v4532
  %v4599 = vpop.f32.mrb[0].mxu0
  %v4600 = vadd.f32 %v90, %v4599
  %v4601 = vpop.f32.mrb[0].mxu0
  %4602 = vdwg.mxu0
  %v4603 = vmax.f32 %v4600, 0.0
  %v4605 = vsel %vm141, %v4603, 0
  %4607 = vmatprep.subr.mxu0 0.0
  %4608 = vmatpush1.msra.mxu0 %v687
  %4609 = vmatprep.subr.mxu0 0.0
  %4610 = vmatpush1.msra.mxu0 %v688
  %4611 = vmatprep.subr.mxu0 0.0
  %4612 = vmatpush1.msra.mxu0 %v689
  %4613 = vmatprep.subr.mxu0 0.0
  %4614 = vmatpush1.msra.mxu0 %v690
  %4615 = vmatprep.subr.mxu0 0.0
  %4616 = vmatpush1.msra.mxu0 0.0
  %4617 = vmatprep.subr.mxu0 0.0
  %4618 = vmatpush1.msra.mxu0 0.0
  %4619 = vmatprep.subr.mxu0 0.0
  %4620 = vmatpush1.msra.mxu0 0.0
  %4621 = vmatprep.subr.mxu0 0.0
  %4622 = vmatpush1.msra.mxu0 0.0
  %4623 = vmatprep.subr.mxu0 0.0
  %4624 = vmatpush1.msra.mxu0 0.0
  %4625 = vmatprep.subr.mxu0 0.0
  %4626 = vmatpush1.msra.mxu0 0.0
  %4627 = vmatprep.subr.mxu0 0.0
  %4628 = vmatpush1.msra.mxu0 0.0
  %4629 = vmatprep.subr.mxu0 0.0
  %4630 = vmatpush1.msra.mxu0 0.0
  %4631 = vmatprep.subr.mxu0 0.0
  %4632 = vmatpush1.msra.mxu0 0.0
  %4633 = vmatprep.subr.mxu0 0.0
  %4634 = vmatpush1.msra.mxu0 0.0
  %4635 = vmatprep.subr.mxu0 0.0
  %4636 = vmatpush1.msra.mxu0 0.0
  %4637 = vmatprep.subr.mxu0 0.0
  %4638 = vmatpush1.msra.mxu0 0.0
  %4639 = vmatprep.subr.mxu0 0.0
  %4640 = vmatpush1.msra.mxu0 0.0
  %4641 = vmatprep.subr.mxu0 0.0
  %4642 = vmatpush1.msra.mxu0 0.0
  %4643 = vmatprep.subr.mxu0 0.0
  %4644 = vmatpush1.msra.mxu0 0.0
  %4645 = vmatprep.subr.mxu0 0.0
  %4646 = vmatpush1.msra.mxu0 0.0
  %4647 = vmatprep.subr.mxu0 0.0
  %4648 = vmatpush1.msra.mxu0 0.0
  %4649 = vmatprep.subr.mxu0 0.0
  %4650 = vmatpush1.msra.mxu0 0.0
  %4651 = vmatprep.subr.mxu0 0.0
  %4652 = vmatpush1.msra.mxu0 0.0
  %4653 = vmatprep.subr.mxu0 0.0
  %4654 = vmatpush1.msra.mxu0 0.0
  %4655 = vmatprep.subr.mxu0 0.0
  %4656 = vmatpush1.msra.mxu0 0.0
  %4657 = vmatprep.subr.mxu0 0.0
  %4658 = vmatpush1.msra.mxu0 0.0
  %4659 = vmatprep.subr.mxu0 0.0
  %4660 = vmatpush1.msra.mxu0 0.0
  %4661 = vmatprep.subr.mxu0 0.0
  %4662 = vmatpush1.msra.mxu0 0.0
  %4663 = vmatprep.subr.mxu0 0.0
  %4664 = vmatpush1.msra.mxu0 0.0
  %4665 = vmatprep.subr.mxu0 0.0
  %4666 = vmatpush1.msra.mxu0 0.0
  %4667 = vmatprep.subr.mxu0 0.0
  %4668 = vmatpush1.msra.mxu0 0.0
  %4669 = vmatprep.subr.mxu0 0.0
  %4670 = vmatpush1.msra.mxu0 0.0
  %4671 = vmatprep.mubr.f32.mxu0 0.0
  %4672 = vmatmul.mubr.f32.gmra.mrb[0].mxu0 %v4605
  %v4673 = vpop.f32.mrb[0].mxu0
  %v4674 = vadd.f32 %v97, %v4673
  %v4675 = vpop.f32.mrb[0].mxu0
  %4676 = vdwg.mxu0
  %v4677 = vtanh.pop %v4674
  %v4679 = vsel %vm314, %v4265, 0
  %4681 = vmatprep.subr.mxu0 0.0
  %4682 = vmatpush1.msra.mxu0 %v781
  %4683 = vmatprep.subr.mxu0 0.0
  %4684 = vmatpush1.msra.mxu0 %v782
  %4685 = vmatprep.subr.mxu0 0.0
  %4686 = vmatpush1.msra.mxu0 %v783
  %4687 = vmatprep.subr.mxu0 0.0
  %4688 = vmatpush1.msra.mxu0 %v784
  %4689 = vmatprep.subr.mxu0 0.0
  %4690 = vmatpush1.msra.mxu0 %v785
  %4691 = vmatprep.subr.mxu0 0.0
  %4692 = vmatpush1.msra.mxu0 %v786
  %4693 = vmatprep.subr.mxu0 0.0
  %4694 = vmatpush1.msra.mxu0 %v787
  %4695 = vmatprep.subr.mxu0 0.0
  %4696 = vmatpush1.msra.mxu0 %v788
  %4697 = vmatprep.subr.mxu0 0.0
  %4698 = vmatpush1.msra.mxu0 0.0
  %4699 = vmatprep.subr.mxu0 0.0
  %4700 = vmatpush1.msra.mxu0 0.0
  %4701 = vmatprep.subr.mxu0 0.0
  %4702 = vmatpush1.msra.mxu0 0.0
  %4703 = vmatprep.subr.mxu0 0.0
  %4704 = vmatpush1.msra.mxu0 0.0
  %4705 = vmatprep.subr.mxu0 0.0
  %4706 = vmatpush1.msra.mxu0 0.0
  %4707 = vmatprep.subr.mxu0 0.0
  %4708 = vmatpush1.msra.mxu0 0.0
  %4709 = vmatprep.subr.mxu0 0.0
  %4710 = vmatpush1.msra.mxu0 0.0
  %4711 = vmatprep.subr.mxu0 0.0
  %4712 = vmatpush1.msra.mxu0 0.0
  %4713 = vmatprep.subr.mxu0 0.0
  %4714 = vmatpush1.msra.mxu0 0.0
  %4715 = vmatprep.subr.mxu0 0.0
  %4716 = vmatpush1.msra.mxu0 0.0
  %4717 = vmatprep.subr.mxu0 0.0
  %4718 = vmatpush1.msra.mxu0 0.0
  %4719 = vmatprep.subr.mxu0 0.0
  %4720 = vmatpush1.msra.mxu0 0.0
  %4721 = vmatprep.subr.mxu0 0.0
  %4722 = vmatpush1.msra.mxu0 0.0
  %4723 = vmatprep.subr.mxu0 0.0
  %4724 = vmatpush1.msra.mxu0 0.0
  %4725 = vmatprep.subr.mxu0 0.0
  %4726 = vmatpush1.msra.mxu0 0.0
  %4727 = vmatprep.subr.mxu0 0.0
  %4728 = vmatpush1.msra.mxu0 0.0
  %4729 = vmatprep.subr.mxu0 0.0
  %4730 = vmatpush1.msra.mxu0 0.0
  %4731 = vmatprep.subr.mxu0 0.0
  %4732 = vmatpush1.msra.mxu0 0.0
  %4733 = vmatprep.subr.mxu0 0.0
  %4734 = vmatpush1.msra.mxu0 0.0
  %4735 = vmatprep.subr.mxu0 0.0
  %4736 = vmatpush1.msra.mxu0 0.0
  %4737 = vmatprep.subr.mxu0 0.0
  %4738 = vmatpush1.msra.mxu0 0.0
  %4739 = vmatprep.subr.mxu0 0.0
  %4740 = vmatpush1.msra.mxu0 0.0
  %4741 = vmatprep.subr.mxu0 0.0
  %4742 = vmatpush1.msra.mxu0 0.0
  %4743 = vmatprep.subr.mxu0 0.0
  %4744 = vmatpush1.msra.mxu0 0.0
  %4745 = vmatprep.mubr.f32.mxu0 0.0
  %4746 = vmatmul.mubr.f32.gmra.mrb[0].mxu0 %v4679
  %v4747 = vpop.f32.mrb[0].mxu0
  %v4748 = vadd.f32 0.0, %v4747
  %v4749 = vpop.f32.mrb[0].mxu0
  %4750 = vdwg.mxu0
  %4751 = vmatprep.subr.mxu0 0.0
  %4752 = vmatpush1.msra.mxu0 %v765
  %4753 = vmatprep.subr.mxu0 0.0
  %4754 = vmatpush1.msra.mxu0 %v766
  %4755 = vmatprep.subr.mxu0 0.0
  %4756 = vmatpush1.msra.mxu0 %v767
  %4757 = vmatprep.subr.mxu0 0.0
  %4758 = vmatpush1.msra.mxu0 %v768
  %4759 = vmatprep.subr.mxu0 0.0
  %4760 = vmatpush1.msra.mxu0 %v769
  %4761 = vmatprep.subr.mxu0 0.0
  %4762 = vmatpush1.msra.mxu0 %v770
  %4763 = vmatprep.subr.mxu0 0.0
  %4764 = vmatpush1.msra.mxu0 %v771
  %4765 = vmatprep.subr.mxu0 0.0
  %4766 = vmatpush1.msra.mxu0 %v772
  %4767 = vmatprep.subr.mxu0 0.0
  %4768 = vmatpush1.msra.mxu0 %v773
  %4769 = vmatprep.subr.mxu0 0.0
  %4770 = vmatpush1.msra.mxu0 %v774
  %4771 = vmatprep.subr.mxu0 0.0
  %4772 = vmatpush1.msra.mxu0 %v775
  %4773 = vmatprep.subr.mxu0 0.0
  %4774 = vmatpush1.msra.mxu0 %v776
  %4775 = vmatprep.subr.mxu0 0.0
  %4776 = vmatpush1.msra.mxu0 %v777
  %4777 = vmatprep.subr.mxu0 0.0
  %4778 = vmatpush1.msra.mxu0 %v778
  %4779 = vmatprep.subr.mxu0 0.0
  %4780 = vmatpush1.msra.mxu0 %v779
  %4781 = vmatprep.subr.mxu0 0.0
  %4782 = vmatpush1.msra.mxu0 %v780
  %4783 = vmatprep.subr.mxu0 0.0
  %4784 = vmatpush1.msra.mxu0 0.0
  %4785 = vmatprep.subr.mxu0 0.0
  %4786 = vmatpush1.msra.mxu0 0.0
  %4787 = vmatprep.subr.mxu0 0.0
  %4788 = vmatpush1.msra.mxu0 0.0
  %4789 = vmatprep.subr.mxu0 0.0
  %4790 = vmatpush1.msra.mxu0 0.0
  %4791 = vmatprep.subr.mxu0 0.0
  %4792 = vmatpush1.msra.mxu0 0.0
  %4793 = vmatprep.subr.mxu0 0.0
  %4794 = vmatpush1.msra.mxu0 0.0
  %4795 = vmatprep.subr.mxu0 0.0
  %4796 = vmatpush1.msra.mxu0 0.0
  %4797 = vmatprep.subr.mxu0 0.0
  %4798 = vmatpush1.msra.mxu0 0.0
  %4799 = vmatprep.subr.mxu0 0.0
  %4800 = vmatpush1.msra.mxu0 0.0
  %4801 = vmatprep.subr.mxu0 0.0
  %4802 = vmatpush1.msra.mxu0 0.0
  %4803 = vmatprep.subr.mxu0 0.0
  %4804 = vmatpush1.msra.mxu0 0.0
  %4805 = vmatprep.subr.mxu0 0.0
  %4806 = vmatpush1.msra.mxu0 0.0
  %4807 = vmatprep.subr.mxu0 0.0
  %4808 = vmatpush1.msra.mxu0 0.0
  %4809 = vmatprep.subr.mxu0 0.0
  %4810 = vmatpush1.msra.mxu0 0.0
  %4811 = vmatprep.subr.mxu0 0.0
  %4812 = vmatpush1.msra.mxu0 0.0
  %4813 = vmatprep.subr.mxu0 0.0
  %4814 = vmatpush1.msra.mxu0 0.0
  %4815 = vmatprep.mubr.f32.mxu0 0.0
  %4816 = vmatmul.mubr.f32.gmra.mrb[0].mxu0 %v4532
  %v4817 = vpop.f32.mrb[0].mxu0
  %v4818 = vadd.f32 %v4748, %v4817
  %v4819 = vpop.f32.mrb[0].mxu0
  %4820 = vdwg.mxu0
  %v4821 = vadd.f32 %v4818, %v104
  %v4822 = vmax.f32 %v4821, 0.0
  %v4824 = vsel %vm314, %v4822, 0
  %4826 = vmatprep.subr.mxu0 0.0
  %4827 = vmatpush1.msra.mxu0 %v933
  %4828 = vmatprep.subr.mxu0 0.0
  %4829 = vmatpush1.msra.mxu0 %v934
  %4830 = vmatprep.subr.mxu0 0.0
  %4831 = vmatpush1.msra.mxu0 %v935
  %4832 = vmatprep.subr.mxu0 0.0
  %4833 = vmatpush1.msra.mxu0 %v936
  %4834 = vmatprep.subr.mxu0 0.0
  %4835 = vmatpush1.msra.mxu0 %v937
  %4836 = vmatprep.subr.mxu0 0.0
  %4837 = vmatpush1.msra.mxu0 %v938
  %4838 = vmatprep.subr.mxu0 0.0
  %4839 = vmatpush1.msra.mxu0 %v939
  %4840 = vmatprep.subr.mxu0 0.0
  %4841 = vmatpush1.msra.mxu0 %v940
  %4842 = vmatprep.subr.mxu0 0.0
  %4843 = vmatpush1.msra.mxu0 0.0
  %4844 = vmatprep.subr.mxu0 0.0
  %4845 = vmatpush1.msra.mxu0 0.0
  %4846 = vmatprep.subr.mxu0 0.0
  %4847 = vmatpush1.msra.mxu0 0.0
  %4848 = vmatprep.subr.mxu0 0.0
  %4849 = vmatpush1.msra.mxu0 0.0
  %4850 = vmatprep.subr.mxu0 0.0
  %4851 = vmatpush1.msra.mxu0 0.0
  %4852 = vmatprep.subr.mxu0 0.0
  %4853 = vmatpush1.msra.mxu0 0.0
  %4854 = vmatprep.subr.mxu0 0.0
  %4855 = vmatpush1.msra.mxu0 0.0
  %4856 = vmatprep.subr.mxu0 0.0
  %4857 = vmatpush1.msra.mxu0 0.0
  %4858 = vmatprep.subr.mxu0 0.0
  %4859 = vmatpush1.msra.mxu0 0.0
  %4860 = vmatprep.subr.mxu0 0.0
  %4861 = vmatpush1.msra.mxu0 0.0
  %4862 = vmatprep.subr.mxu0 0.0
  %4863 = vmatpush1.msra.mxu0 0.0
  %4864 = vmatprep.subr.mxu0 0.0
  %4865 = vmatpush1.msra.mxu0 0.0
  %4866 = vmatprep.subr.mxu0 0.0
  %4867 = vmatpush1.msra.mxu0 0.0
  %4868 = vmatprep.subr.mxu0 0.0
  %4869 = vmatpush1.msra.mxu0 0.0
  %4870 = vmatprep.subr.mxu0 0.0
  %4871 = vmatpush1.msra.mxu0 0.0
  %4872 = vmatprep.subr.mxu0 0.0
  %4873 = vmatpush1.msra.mxu0 0.0
  %4874 = vmatprep.subr.mxu0 0.0
  %4875 = vmatpush1.msra.mxu0 0.0
  %4876 = vmatprep.subr.mxu0 0.0
  %4877 = vmatpush1.msra.mxu0 0.0
  %4878 = vmatprep.subr.mxu0 0.0
  %4879 = vmatpush1.msra.mxu0 0.0
  %4880 = vmatprep.subr.mxu0 0.0
  %4881 = vmatpush1.msra.mxu0 0.0
  %4882 = vmatprep.subr.mxu0 0.0
  %4883 = vmatpush1.msra.mxu0 0.0
  %4884 = vmatprep.subr.mxu0 0.0
  %4885 = vmatpush1.msra.mxu0 0.0
  %4886 = vmatprep.subr.mxu0 0.0
  %4887 = vmatpush1.msra.mxu0 0.0
  %4888 = vmatprep.subr.mxu0 0.0
  %4889 = vmatpush1.msra.mxu0 0.0
  %4890 = vmatprep.mubr.f32.mxu0 0.0
  %4891 = vmatmul.mubr.f32.gmra.mrb[0].mxu0 %v4824
  %v4892 = vpop.f32.mrb[0].mxu0
  %v4893 = vadd.f32 %v111, %v4892
  %v4894 = vpop.f32.mrb[0].mxu0
  %4895 = vdwg.mxu0
  %v4896 = vxor.u32 %v4893, 2147483648
  %v4897 = vmul.f32 %v4896, 1.442695
  %v4898 = vpow.pop %v4897
  %v4899 = vadd.f32 %v4898, 1.0
  %v4900 = vrcp.pop %v4899
  %v4901 = vmul.f32 1.0, %v4900
  %v4902 = vmul.f32 %v4901, %v4265
  %4904 = vrot.lane.b32.xlu0 %v4677, 64
  %v4905 = vpop.permute.xlu0 %4904
  %v4907 = vmul.f32 %v4901, %v4905
  %4909 = vrot.lane.b32.xlu0 %v4907, 64
  %v4910 = vpop.permute.xlu0 %4909
  %v4912 = vadd.f32 %v4902, %v4910
  %v4913 = vld [vmem:[#allocation2 + $0x70] sm:$0xff]
  %v4914 = vld [vmem:[#allocation2 + $0x78] sm:$0xff]
  %v4916 = vsel %vm314, %v4373, 0
  %4918 = vmatprep.subr.mxu0 %v299
  %4919 = vmatpush1.msra.mxu0 %v298
  %4920 = vmatprep.subr.mxu0 %v301
  %4921 = vmatpush1.msra.mxu0 %v300
  %4922 = vmatprep.subr.mxu0 %v303
  %4923 = vmatpush1.msra.mxu0 %v302
  %4924 = vmatprep.subr.mxu0 %v305
  %4925 = vmatpush1.msra.mxu0 %v304
  %4926 = vmatprep.subr.mxu0 %v307
  %4927 = vmatpush1.msra.mxu0 %v306
  %4928 = vmatprep.subr.mxu0 %v309
  %4929 = vmatpush1.msra.mxu0 %v308
  %4930 = vmatprep.subr.mxu0 %v311
  %4931 = vmatpush1.msra.mxu0 %v310
  %4932 = vmatprep.subr.mxu0 %v313
  %4933 = vmatpush1.msra.mxu0 %v312
  %4934 = vmatprep.subr.mxu0 0.0
  %4935 = vmatpush1.msra.mxu0 0.0
  %4936 = vmatprep.subr.mxu0 0.0
  %4937 = vmatpush1.msra.mxu0 0.0
  %4938 = vmatprep.subr.mxu0 0.0
  %4939 = vmatpush1.msra.mxu0 0.0
  %4940 = vmatprep.subr.mxu0 0.0
  %4941 = vmatpush1.msra.mxu0 0.0
  %4942 = vmatprep.subr.mxu0 0.0
  %4943 = vmatpush1.msra.mxu0 0.0
  %4944 = vmatprep.subr.mxu0 0.0
  %4945 = vmatpush1.msra.mxu0 0.0
  %4946 = vmatprep.subr.mxu0 0.0
  %4947 = vmatpush1.msra.mxu0 0.0
  %4948 = vmatprep.subr.mxu0 0.0
  %4949 = vmatpush1.msra.mxu0 0.0
  %4950 = vmatprep.subr.mxu0 0.0
  %4951 = vmatpush1.msra.mxu0 0.0
  %4952 = vmatprep.subr.mxu0 0.0
  %4953 = vmatpush1.msra.mxu0 0.0
  %4954 = vmatprep.subr.mxu0 0.0
  %4955 = vmatpush1.msra.mxu0 0.0
  %4956 = vmatprep.subr.mxu0 0.0
  %4957 = vmatpush1.msra.mxu0 0.0
  %4958 = vmatprep.subr.mxu0 0.0
  %4959 = vmatpush1.msra.mxu0 0.0
  %4960 = vmatprep.subr.mxu0 0.0
  %4961 = vmatpush1.msra.mxu0 0.0
  %4962 = vmatprep.subr.mxu0 0.0
  %4963 = vmatpush1.msra.mxu0 0.0
  %4964 = vmatprep.subr.mxu0 0.0
  %4965 = vmatpush1.msra.mxu0 0.0
  %4966 = vmatprep.subr.mxu0 0.0
  %4967 = vmatpush1.msra.mxu0 0.0
  %4968 = vmatprep.subr.mxu0 0.0
  %4969 = vmatpush1.msra.mxu0 0.0
  %4970 = vmatprep.subr.mxu0 0.0
  %4971 = vmatpush1.msra.mxu0 0.0
  %4972 = vmatprep.subr.mxu0 0.0
  %4973 = vmatpush1.msra.mxu0 0.0
  %4974 = vmatprep.subr.mxu0 0.0
  %4975 = vmatpush1.msra.mxu0 0.0
  %4976 = vmatprep.subr.mxu0 0.0
  %4977 = vmatpush1.msra.mxu0 0.0
  %4978 = vmatprep.subr.mxu0 0.0
  %4979 = vmatpush1.msra.mxu0 0.0
  %4980 = vmatprep.subr.mxu0 0.0
  %4981 = vmatpush1.msra.mxu0 0.0
  %4982 = vmatprep.mubr.f32.mxu0 0.0
  %4983 = vmatmul.mubr.f32.gmra.mrb[0].mxu0 %v4916
  %v4984 = vpop.f32.mrb[0].mxu0
  %v4985 = vadd.f32 0.0, %v4984
  %v4986 = vpop.f32.mrb[0].mxu0
  %v4987 = vadd.f32 0.0, %v4986
  %4988 = vdwg.mxu0
  %v4989 = vadd.f32 %v4913, %v4985
  %v4990 = vadd.f32 %v4914, %v4987
  %v4991 = vxor.u32 %v4989, 2147483648
  %v4992 = vxor.u32 %v4990, 2147483648
  %v4993 = vmul.f32 %v4991, 1.442695
  %v4994 = vpow.pop %v4993
  %v4995 = vmul.f32 %v4992, 1.442695
  %v4996 = vpow.pop %v4995
  %v4997 = vadd.f32 %v4994, 1.0
  %v4998 = vadd.f32 %v4996, 1.0
  %v4999 = vrcp.pop %v4997
  %v5000 = vmul.f32 1.0, %v4999
  %v5001 = vrcp.pop %v4998
  %v5002 = vmul.f32 1.0, %v5001
  %v5003 = vtanh.pop %v4990
  %v5004 = vmul.f32 %v5000, %v4367
  %5006 = vrot.lane.b32.xlu0 %v5003, 64
  %v5007 = vpop.permute.xlu0 %5006
  %v5009 = vmul.f32 %v5000, %v5007
  %5011 = vrot.lane.b32.xlu0 %v5009, 64
  %v5012 = vpop.permute.xlu0 %5011
  %v5014 = vadd.f32 %v5004, %v5012
  %v5015 = vtanh.pop %v5014
  %5017 = vrot.lane.b32.xlu0 %v5015, 64
  %v5018 = vpop.permute.xlu0 %5017
  %v5020 = vmul.f32 %v5002, %v5018
  %5022 = vrot.lane.b32.xlu0 %v4367, 64
  %v5023 = vpop.permute.xlu0 %5022
  %v5025 = vsel %vm314, %v5023, %v5014
  %5026 = vmatprep.subr.mxu0 0.0
  %5027 = vmatpush1.msra.mxu0 %v426
  %5028 = vmatprep.subr.mxu0 0.0
  %5029 = vmatpush1.msra.mxu0 %v427
  %5030 = vmatprep.subr.mxu0 0.0
  %5031 = vmatpush1.msra.mxu0 %v428
  %5032 = vmatprep.subr.mxu0 0.0
  %5033 = vmatpush1.msra.mxu0 %v429
  %5034 = vmatprep.subr.mxu0 0.0
  %5035 = vmatpush1.msra.mxu0 %v430
  %5036 = vmatprep.subr.mxu0 0.0
  %5037 = vmatpush1.msra.mxu0 %v431
  %5038 = vmatprep.subr.mxu0 0.0
  %5039 = vmatpush1.msra.mxu0 %v432
  %5040 = vmatprep.subr.mxu0 0.0
  %5041 = vmatpush1.msra.mxu0 %v433
  %5042 = vmatprep.subr.mxu0 0.0
  %5043 = vmatpush1.msra.mxu0 %v434
  %5044 = vmatprep.subr.mxu0 0.0
  %5045 = vmatpush1.msra.mxu0 %v435
  %5046 = vmatprep.subr.mxu0 0.0
  %5047 = vmatpush1.msra.mxu0 %v436
  %5048 = vmatprep.subr.mxu0 0.0
  %5049 = vmatpush1.msra.mxu0 %v437
  %5050 = vmatprep.subr.mxu0 0.0
  %5051 = vmatpush1.msra.mxu0 %v438
  %5052 = vmatprep.subr.mxu0 0.0
  %5053 = vmatpush1.msra.mxu0 %v439
  %5054 = vmatprep.subr.mxu0 0.0
  %5055 = vmatpush1.msra.mxu0 %v440
  %5056 = vmatprep.subr.mxu0 0.0
  %5057 = vmatpush1.msra.mxu0 %v441
  %5058 = vmatprep.subr.mxu0 0.0
  %5059 = vmatpush1.msra.mxu0 0.0
  %5060 = vmatprep.subr.mxu0 0.0
  %5061 = vmatpush1.msra.mxu0 0.0
  %5062 = vmatprep.subr.mxu0 0.0
  %5063 = vmatpush1.msra.mxu0 0.0
  %5064 = vmatprep.subr.mxu0 0.0
  %5065 = vmatpush1.msra.mxu0 0.0
  %5066 = vmatprep.subr.mxu0 0.0
  %5067 = vmatpush1.msra.mxu0 0.0
  %5068 = vmatprep.subr.mxu0 0.0
  %5069 = vmatpush1.msra.mxu0 0.0
  %5070 = vmatprep.subr.mxu0 0.0
  %5071 = vmatpush1.msra.mxu0 0.0
  %5072 = vmatprep.subr.mxu0 0.0
  %5073 = vmatpush1.msra.mxu0 0.0
  %5074 = vmatprep.subr.mxu0 0.0
  %5075 = vmatpush1.msra.mxu0 0.0
  %5076 = vmatprep.subr.mxu0 0.0
  %5077 = vmatpush1.msra.mxu0 0.0
  %5078 = vmatprep.subr.mxu0 0.0
  %5079 = vmatpush1.msra.mxu0 0.0
  %5080 = vmatprep.subr.mxu0 0.0
  %5081 = vmatpush1.msra.mxu0 0.0
  %5082 = vmatprep.subr.mxu0 0.0
  %5083 = vmatpush1.msra.mxu0 0.0
  %5084 = vmatprep.subr.mxu0 0.0
  %5085 = vmatpush1.msra.mxu0 0.0
  %5086 = vmatprep.subr.mxu0 0.0
  %5087 = vmatpush1.msra.mxu0 0.0
  %5088 = vmatprep.subr.mxu0 0.0
  %5089 = vmatpush1.msra.mxu0 0.0
  %5090 = vmatprep.mubr.f32.mxu0 0.0
  %5091 = vmatmul.mubr.f32.gmra.mrb[0].mxu0 %v5025
  %v5092 = vpop.f32.mrb[0].mxu0
  %v5093 = vadd.f32 %v76, %v5092
  %v5094 = vpop.f32.mrb[0].mxu0
  %5095 = vdwg.mxu0
  %v5096 = vmax.f32 %v5093, 0.0
  %v5098 = vsel %vm141, %v5096, 0
  %5100 = vmatprep.subr.mxu0 0.0
  %5101 = vmatpush1.msra.mxu0 %v513
  %5102 = vmatprep.subr.mxu0 0.0
  %5103 = vmatpush1.msra.mxu0 %v514
  %5104 = vmatprep.subr.mxu0 0.0
  %5105 = vmatpush1.msra.mxu0 %v515
  %5106 = vmatprep.subr.mxu0 0.0
  %5107 = vmatpush1.msra.mxu0 %v516
  %5108 = vmatprep.subr.mxu0 0.0
  %5109 = vmatpush1.msra.mxu0 0.0
  %5110 = vmatprep.subr.mxu0 0.0
  %5111 = vmatpush1.msra.mxu0 0.0
  %5112 = vmatprep.subr.mxu0 0.0
  %5113 = vmatpush1.msra.mxu0 0.0
  %5114 = vmatprep.subr.mxu0 0.0
  %5115 = vmatpush1.msra.mxu0 0.0
  %5116 = vmatprep.subr.mxu0 0.0
  %5117 = vmatpush1.msra.mxu0 0.0
  %5118 = vmatprep.subr.mxu0 0.0
  %5119 = vmatpush1.msra.mxu0 0.0
  %5120 = vmatprep.subr.mxu0 0.0
  %5121 = vmatpush1.msra.mxu0 0.0
  %5122 = vmatprep.subr.mxu0 0.0
  %5123 = vmatpush1.msra.mxu0 0.0
  %5124 = vmatprep.subr.mxu0 0.0
  %5125 = vmatpush1.msra.mxu0 0.0
  %5126 = vmatprep.subr.mxu0 0.0
  %5127 = vmatpush1.msra.mxu0 0.0
  %5128 = vmatprep.subr.mxu0 0.0
  %5129 = vmatpush1.msra.mxu0 0.0
  %5130 = vmatprep.subr.mxu0 0.0
  %5131 = vmatpush1.msra.mxu0 0.0
  %5132 = vmatprep.subr.mxu0 0.0
  %5133 = vmatpush1.msra.mxu0 0.0
  %5134 = vmatprep.subr.mxu0 0.0
  %5135 = vmatpush1.msra.mxu0 0.0
  %5136 = vmatprep.subr.mxu0 0.0
  %5137 = vmatpush1.msra.mxu0 0.0
  %5138 = vmatprep.subr.mxu0 0.0
  %5139 = vmatpush1.msra.mxu0 0.0
  %5140 = vmatprep.subr.mxu0 0.0
  %5141 = vmatpush1.msra.mxu0 0.0
  %5142 = vmatprep.subr.mxu0 0.0
  %5143 = vmatpush1.msra.mxu0 0.0
  %5144 = vmatprep.subr.mxu0 0.0
  %5145 = vmatpush1.msra.mxu0 0.0
  %5146 = vmatprep.subr.mxu0 0.0
  %5147 = vmatpush1.msra.mxu0 0.0
  %5148 = vmatprep.subr.mxu0 0.0
  %5149 = vmatpush1.msra.mxu0 0.0
  %5150 = vmatprep.subr.mxu0 0.0
  %5151 = vmatpush1.msra.mxu0 0.0
  %5152 = vmatprep.subr.mxu0 0.0
  %5153 = vmatpush1.msra.mxu0 0.0
  %5154 = vmatprep.subr.mxu0 0.0
  %5155 = vmatpush1.msra.mxu0 0.0
  %5156 = vmatprep.subr.mxu0 0.0
  %5157 = vmatpush1.msra.mxu0 0.0
  %5158 = vmatprep.subr.mxu0 0.0
  %5159 = vmatpush1.msra.mxu0 0.0
  %5160 = vmatprep.subr.mxu0 0.0
  %5161 = vmatpush1.msra.mxu0 0.0
  %5162 = vmatprep.subr.mxu0 0.0
  %5163 = vmatpush1.msra.mxu0 0.0
  %5164 = vmatprep.mubr.f32.mxu0 0.0
  %5165 = vmatmul.mubr.f32.gmra.mrb[0].mxu0 %v5098
  %v5166 = vpop.f32.mrb[0].mxu0
  %v5167 = vadd.f32 %v83, %v5166
  %v5168 = vpop.f32.mrb[0].mxu0
  %5169 = vdwg.mxu0
  %5170 = vmax.xlane.f32.xlu0 %v5167
  %v5171 = vpop.xlane.xlu0 %5170
  %v5172 = vsub.f32 %v5167, %v5171
  %v5173 = vmul.f32 %v5172, 1.442695
  %v5174 = vpow.pop %v5173
  %5175 = vadd.xlane.f32.xlu0 %v5174
  %v5176 = vpop.xlane.xlu0 %5175
  %v5177 = vrcp.pop %v5176
  %v5178 = vmul.f32 %v5174, %v5177
  %v5179 = vmul.f32 %v5178, %v5025
  %5180 = vmatprep.subr.mxu0 0.0
  %5181 = vmatpush1.msra.mxu0 %v600
  %5182 = vmatprep.subr.mxu0 0.0
  %5183 = vmatpush1.msra.mxu0 %v601
  %5184 = vmatprep.subr.mxu0 0.0
  %5185 = vmatpush1.msra.mxu0 %v602
  %5186 = vmatprep.subr.mxu0 0.0
  %5187 = vmatpush1.msra.mxu0 %v603
  %5188 = vmatprep.subr.mxu0 0.0
  %5189 = vmatpush1.msra.mxu0 %v604
  %5190 = vmatprep.subr.mxu0 0.0
  %5191 = vmatpush1.msra.mxu0 %v605
  %5192 = vmatprep.subr.mxu0 0.0
  %5193 = vmatpush1.msra.mxu0 %v606
  %5194 = vmatprep.subr.mxu0 0.0
  %5195 = vmatpush1.msra.mxu0 %v607
  %5196 = vmatprep.subr.mxu0 0.0
  %5197 = vmatpush1.msra.mxu0 %v608
  %5198 = vmatprep.subr.mxu0 0.0
  %5199 = vmatpush1.msra.mxu0 %v609
  %5200 = vmatprep.subr.mxu0 0.0
  %5201 = vmatpush1.msra.mxu0 %v610
  %5202 = vmatprep.subr.mxu0 0.0
  %5203 = vmatpush1.msra.mxu0 %v611
  %5204 = vmatprep.subr.mxu0 0.0
  %5205 = vmatpush1.msra.mxu0 %v612
  %5206 = vmatprep.subr.mxu0 0.0
  %5207 = vmatpush1.msra.mxu0 %v613
  %5208 = vmatprep.subr.mxu0 0.0
  %5209 = vmatpush1.msra.mxu0 %v614
  %5210 = vmatprep.subr.mxu0 0.0
  %5211 = vmatpush1.msra.mxu0 %v615
  %5212 = vmatprep.subr.mxu0 0.0
  %5213 = vmatpush1.msra.mxu0 0.0
  %5214 = vmatprep.subr.mxu0 0.0
  %5215 = vmatpush1.msra.mxu0 0.0
  %5216 = vmatprep.subr.mxu0 0.0
  %5217 = vmatpush1.msra.mxu0 0.0
  %5218 = vmatprep.subr.mxu0 0.0
  %5219 = vmatpush1.msra.mxu0 0.0
  %5220 = vmatprep.subr.mxu0 0.0
  %5221 = vmatpush1.msra.mxu0 0.0
  %5222 = vmatprep.subr.mxu0 0.0
  %5223 = vmatpush1.msra.mxu0 0.0
  %5224 = vmatprep.subr.mxu0 0.0
  %5225 = vmatpush1.msra.mxu0 0.0
  %5226 = vmatprep.subr.mxu0 0.0
  %5227 = vmatpush1.msra.mxu0 0.0
  %5228 = vmatprep.subr.mxu0 0.0
  %5229 = vmatpush1.msra.mxu0 0.0
  %5230 = vmatprep.subr.mxu0 0.0
  %5231 = vmatpush1.msra.mxu0 0.0
  %5232 = vmatprep.subr.mxu0 0.0
  %5233 = vmatpush1.msra.mxu0 0.0
  %5234 = vmatprep.subr.mxu0 0.0
  %5235 = vmatpush1.msra.mxu0 0.0
  %5236 = vmatprep.subr.mxu0 0.0
  %5237 = vmatpush1.msra.mxu0 0.0
  %5238 = vmatprep.subr.mxu0 0.0
  %5239 = vmatpush1.msra.mxu0 0.0
  %5240 = vmatprep.subr.mxu0 0.0
  %5241 = vmatpush1.msra.mxu0 0.0
  %5242 = vmatprep.subr.mxu0 0.0
  %5243 = vmatpush1.msra.mxu0 0.0
  %5244 = vmatprep.mubr.f32.mxu0 0.0
  %5245 = vmatmul.mubr.f32.gmra.mrb[0].mxu0 %v5179
  %v5246 = vpop.f32.mrb[0].mxu0
  %v5247 = vadd.f32 %v90, %v5246
  %v5248 = vpop.f32.mrb[0].mxu0
  %5249 = vdwg.mxu0
  %v5250 = vmax.f32 %v5247, 0.0
  %v5252 = vsel %vm141, %v5250, 0
  %5254 = vmatprep.subr.mxu0 0.0
  %5255 = vmatpush1.msra.mxu0 %v687
  %5256 = vmatprep.subr.mxu0 0.0
  %5257 = vmatpush1.msra.mxu0 %v688
  %5258 = vmatprep.subr.mxu0 0.0
  %5259 = vmatpush1.msra.mxu0 %v689
  %5260 = vmatprep.subr.mxu0 0.0
  %5261 = vmatpush1.msra.mxu0 %v690
  %5262 = vmatprep.subr.mxu0 0.0
  %5263 = vmatpush1.msra.mxu0 0.0
  %5264 = vmatprep.subr.mxu0 0.0
  %5265 = vmatpush1.msra.mxu0 0.0
  %5266 = vmatprep.subr.mxu0 0.0
  %5267 = vmatpush1.msra.mxu0 0.0
  %5268 = vmatprep.subr.mxu0 0.0
  %5269 = vmatpush1.msra.mxu0 0.0
  %5270 = vmatprep.subr.mxu0 0.0
  %5271 = vmatpush1.msra.mxu0 0.0
  %5272 = vmatprep.subr.mxu0 0.0
  %5273 = vmatpush1.msra.mxu0 0.0
  %5274 = vmatprep.subr.mxu0 0.0
  %5275 = vmatpush1.msra.mxu0 0.0
  %5276 = vmatprep.subr.mxu0 0.0
  %5277 = vmatpush1.msra.mxu0 0.0
  %5278 = vmatprep.subr.mxu0 0.0
  %5279 = vmatpush1.msra.mxu0 0.0
  %5280 = vmatprep.subr.mxu0 0.0
  %5281 = vmatpush1.msra.mxu0 0.0
  %5282 = vmatprep.subr.mxu0 0.0
  %5283 = vmatpush1.msra.mxu0 0.0
  %5284 = vmatprep.subr.mxu0 0.0
  %5285 = vmatpush1.msra.mxu0 0.0
  %5286 = vmatprep.subr.mxu0 0.0
  %5287 = vmatpush1.msra.mxu0 0.0
  %5288 = vmatprep.subr.mxu0 0.0
  %5289 = vmatpush1.msra.mxu0 0.0
  %5290 = vmatprep.subr.mxu0 0.0
  %5291 = vmatpush1.msra.mxu0 0.0
  %5292 = vmatprep.subr.mxu0 0.0
  %5293 = vmatpush1.msra.mxu0 0.0
  %5294 = vmatprep.subr.mxu0 0.0
  %5295 = vmatpush1.msra.mxu0 0.0
  %5296 = vmatprep.subr.mxu0 0.0
  %5297 = vmatpush1.msra.mxu0 0.0
  %5298 = vmatprep.subr.mxu0 0.0
  %5299 = vmatpush1.msra.mxu0 0.0
  %5300 = vmatprep.subr.mxu0 0.0
  %5301 = vmatpush1.msra.mxu0 0.0
  %5302 = vmatprep.subr.mxu0 0.0
  %5303 = vmatpush1.msra.mxu0 0.0
  %5304 = vmatprep.subr.mxu0 0.0
  %5305 = vmatpush1.msra.mxu0 0.0
  %5306 = vmatprep.subr.mxu0 0.0
  %5307 = vmatpush1.msra.mxu0 0.0
  %5308 = vmatprep.subr.mxu0 0.0
  %5309 = vmatpush1.msra.mxu0 0.0
  %5310 = vmatprep.subr.mxu0 0.0
  %5311 = vmatpush1.msra.mxu0 0.0
  %5312 = vmatprep.subr.mxu0 0.0
  %5313 = vmatpush1.msra.mxu0 0.0
  %5314 = vmatprep.subr.mxu0 0.0
  %5315 = vmatpush1.msra.mxu0 0.0
  %5316 = vmatprep.subr.mxu0 0.0
  %5317 = vmatpush1.msra.mxu0 0.0
  %5318 = vmatprep.mubr.f32.mxu0 0.0
  %5319 = vmatmul.mubr.f32.gmra.mrb[0].mxu0 %v5252
  %v5320 = vpop.f32.mrb[0].mxu0
  %v5321 = vadd.f32 %v97, %v5320
  %v5322 = vpop.f32.mrb[0].mxu0
  %5323 = vdwg.mxu0
  %v5324 = vtanh.pop %v5321
  %v5326 = vsel %vm314, %v4912, 0
  %5328 = vmatprep.subr.mxu0 0.0
  %5329 = vmatpush1.msra.mxu0 %v781
  %5330 = vmatprep.subr.mxu0 0.0
  %5331 = vmatpush1.msra.mxu0 %v782
  %5332 = vmatprep.subr.mxu0 0.0
  %5333 = vmatpush1.msra.mxu0 %v783
  %5334 = vmatprep.subr.mxu0 0.0
  %5335 = vmatpush1.msra.mxu0 %v784
  %5336 = vmatprep.subr.mxu0 0.0
  %5337 = vmatpush1.msra.mxu0 %v785
  %5338 = vmatprep.subr.mxu0 0.0
  %5339 = vmatpush1.msra.mxu0 %v786
  %5340 = vmatprep.subr.mxu0 0.0
  %5341 = vmatpush1.msra.mxu0 %v787
  %5342 = vmatprep.subr.mxu0 0.0
  %5343 = vmatpush1.msra.mxu0 %v788
  %5344 = vmatprep.subr.mxu0 0.0
  %5345 = vmatpush1.msra.mxu0 0.0
  %5346 = vmatprep.subr.mxu0 0.0
  %5347 = vmatpush1.msra.mxu0 0.0
  %5348 = vmatprep.subr.mxu0 0.0
  %5349 = vmatpush1.msra.mxu0 0.0
  %5350 = vmatprep.subr.mxu0 0.0
  %5351 = vmatpush1.msra.mxu0 0.0
  %5352 = vmatprep.subr.mxu0 0.0
  %5353 = vmatpush1.msra.mxu0 0.0
  %5354 = vmatprep.subr.mxu0 0.0
  %5355 = vmatpush1.msra.mxu0 0.0
  %5356 = vmatprep.subr.mxu0 0.0
  %5357 = vmatpush1.msra.mxu0 0.0
  %5358 = vmatprep.subr.mxu0 0.0
  %5359 = vmatpush1.msra.mxu0 0.0
  %5360 = vmatprep.subr.mxu0 0.0
  %5361 = vmatpush1.msra.mxu0 0.0
  %5362 = vmatprep.subr.mxu0 0.0
  %5363 = vmatpush1.msra.mxu0 0.0
  %5364 = vmatprep.subr.mxu0 0.0
  %5365 = vmatpush1.msra.mxu0 0.0
  %5366 = vmatprep.subr.mxu0 0.0
  %5367 = vmatpush1.msra.mxu0 0.0
  %5368 = vmatprep.subr.mxu0 0.0
  %5369 = vmatpush1.msra.mxu0 0.0
  %5370 = vmatprep.subr.mxu0 0.0
  %5371 = vmatpush1.msra.mxu0 0.0
  %5372 = vmatprep.subr.mxu0 0.0
  %5373 = vmatpush1.msra.mxu0 0.0
  %5374 = vmatprep.subr.mxu0 0.0
  %5375 = vmatpush1.msra.mxu0 0.0
  %5376 = vmatprep.subr.mxu0 0.0
  %5377 = vmatpush1.msra.mxu0 0.0
  %5378 = vmatprep.subr.mxu0 0.0
  %5379 = vmatpush1.msra.mxu0 0.0
  %5380 = vmatprep.subr.mxu0 0.0
  %5381 = vmatpush1.msra.mxu0 0.0
  %5382 = vmatprep.subr.mxu0 0.0
  %5383 = vmatpush1.msra.mxu0 0.0
  %5384 = vmatprep.subr.mxu0 0.0
  %5385 = vmatpush1.msra.mxu0 0.0
  %5386 = vmatprep.subr.mxu0 0.0
  %5387 = vmatpush1.msra.mxu0 0.0
  %5388 = vmatprep.subr.mxu0 0.0
  %5389 = vmatpush1.msra.mxu0 0.0
  %5390 = vmatprep.subr.mxu0 0.0
  %5391 = vmatpush1.msra.mxu0 0.0
  %5392 = vmatprep.mubr.f32.mxu0 0.0
  %5393 = vmatmul.mubr.f32.gmra.mrb[0].mxu0 %v5326
  %v5394 = vpop.f32.mrb[0].mxu0
  %v5395 = vadd.f32 0.0, %v5394
  %v5396 = vpop.f32.mrb[0].mxu0
  %5397 = vdwg.mxu0
  %5398 = vmatprep.subr.mxu0 0.0
  %5399 = vmatpush1.msra.mxu0 %v765
  %5400 = vmatprep.subr.mxu0 0.0
  %5401 = vmatpush1.msra.mxu0 %v766
  %5402 = vmatprep.subr.mxu0 0.0
  %5403 = vmatpush1.msra.mxu0 %v767
  %5404 = vmatprep.subr.mxu0 0.0
  %5405 = vmatpush1.msra.mxu0 %v768
  %5406 = vmatprep.subr.mxu0 0.0
  %5407 = vmatpush1.msra.mxu0 %v769
  %5408 = vmatprep.subr.mxu0 0.0
  %5409 = vmatpush1.msra.mxu0 %v770
  %5410 = vmatprep.subr.mxu0 0.0
  %5411 = vmatpush1.msra.mxu0 %v771
  %5412 = vmatprep.subr.mxu0 0.0
  %5413 = vmatpush1.msra.mxu0 %v772
  %5414 = vmatprep.subr.mxu0 0.0
  %5415 = vmatpush1.msra.mxu0 %v773
  %5416 = vmatprep.subr.mxu0 0.0
  %5417 = vmatpush1.msra.mxu0 %v774
  %5418 = vmatprep.subr.mxu0 0.0
  %5419 = vmatpush1.msra.mxu0 %v775
  %5420 = vmatprep.subr.mxu0 0.0
  %5421 = vmatpush1.msra.mxu0 %v776
  %5422 = vmatprep.subr.mxu0 0.0
  %5423 = vmatpush1.msra.mxu0 %v777
  %5424 = vmatprep.subr.mxu0 0.0
  %5425 = vmatpush1.msra.mxu0 %v778
  %5426 = vmatprep.subr.mxu0 0.0
  %5427 = vmatpush1.msra.mxu0 %v779
  %5428 = vmatprep.subr.mxu0 0.0
  %5429 = vmatpush1.msra.mxu0 %v780
  %5430 = vmatprep.subr.mxu0 0.0
  %5431 = vmatpush1.msra.mxu0 0.0
  %5432 = vmatprep.subr.mxu0 0.0
  %5433 = vmatpush1.msra.mxu0 0.0
  %5434 = vmatprep.subr.mxu0 0.0
  %5435 = vmatpush1.msra.mxu0 0.0
  %5436 = vmatprep.subr.mxu0 0.0
  %5437 = vmatpush1.msra.mxu0 0.0
  %5438 = vmatprep.subr.mxu0 0.0
  %5439 = vmatpush1.msra.mxu0 0.0
  %5440 = vmatprep.subr.mxu0 0.0
  %5441 = vmatpush1.msra.mxu0 0.0
  %5442 = vmatprep.subr.mxu0 0.0
  %5443 = vmatpush1.msra.mxu0 0.0
  %5444 = vmatprep.subr.mxu0 0.0
  %5445 = vmatpush1.msra.mxu0 0.0
  %5446 = vmatprep.subr.mxu0 0.0
  %5447 = vmatpush1.msra.mxu0 0.0
  %5448 = vmatprep.subr.mxu0 0.0
  %5449 = vmatpush1.msra.mxu0 0.0
  %5450 = vmatprep.subr.mxu0 0.0
  %5451 = vmatpush1.msra.mxu0 0.0
  %5452 = vmatprep.subr.mxu0 0.0
  %5453 = vmatpush1.msra.mxu0 0.0
  %5454 = vmatprep.subr.mxu0 0.0
  %5455 = vmatpush1.msra.mxu0 0.0
  %5456 = vmatprep.subr.mxu0 0.0
  %5457 = vmatpush1.msra.mxu0 0.0
  %5458 = vmatprep.subr.mxu0 0.0
  %5459 = vmatpush1.msra.mxu0 0.0
  %5460 = vmatprep.subr.mxu0 0.0
  %5461 = vmatpush1.msra.mxu0 0.0
  %5462 = vmatprep.mubr.f32.mxu0 0.0
  %5463 = vmatmul.mubr.f32.gmra.mrb[0].mxu0 %v5179
  %v5464 = vpop.f32.mrb[0].mxu0
  %v5465 = vadd.f32 %v5395, %v5464
  %v5466 = vpop.f32.mrb[0].mxu0
  %5467 = vdwg.mxu0
  %v5468 = vadd.f32 %v5465, %v104
  %v5469 = vmax.f32 %v5468, 0.0
  %v5471 = vsel %vm314, %v5469, 0
  %5473 = vmatprep.subr.mxu0 0.0
  %5474 = vmatpush1.msra.mxu0 %v933
  %5475 = vmatprep.subr.mxu0 0.0
  %5476 = vmatpush1.msra.mxu0 %v934
  %5477 = vmatprep.subr.mxu0 0.0
  %5478 = vmatpush1.msra.mxu0 %v935
  %5479 = vmatprep.subr.mxu0 0.0
  %5480 = vmatpush1.msra.mxu0 %v936
  %5481 = vmatprep.subr.mxu0 0.0
  %5482 = vmatpush1.msra.mxu0 %v937
  %5483 = vmatprep.subr.mxu0 0.0
  %5484 = vmatpush1.msra.mxu0 %v938
  %5485 = vmatprep.subr.mxu0 0.0
  %5486 = vmatpush1.msra.mxu0 %v939
  %5487 = vmatprep.subr.mxu0 0.0
  %5488 = vmatpush1.msra.mxu0 %v940
  %5489 = vmatprep.subr.mxu0 0.0
  %5490 = vmatpush1.msra.mxu0 0.0
  %5491 = vmatprep.subr.mxu0 0.0
  %5492 = vmatpush1.msra.mxu0 0.0
  %5493 = vmatprep.subr.mxu0 0.0
  %5494 = vmatpush1.msra.mxu0 0.0
  %5495 = vmatprep.subr.mxu0 0.0
  %5496 = vmatpush1.msra.mxu0 0.0
  %5497 = vmatprep.subr.mxu0 0.0
  %5498 = vmatpush1.msra.mxu0 0.0
  %5499 = vmatprep.subr.mxu0 0.0
  %5500 = vmatpush1.msra.mxu0 0.0
  %5501 = vmatprep.subr.mxu0 0.0
  %5502 = vmatpush1.msra.mxu0 0.0
  %5503 = vmatprep.subr.mxu0 0.0
  %5504 = vmatpush1.msra.mxu0 0.0
  %5505 = vmatprep.subr.mxu0 0.0
  %5506 = vmatpush1.msra.mxu0 0.0
  %5507 = vmatprep.subr.mxu0 0.0
  %5508 = vmatpush1.msra.mxu0 0.0
  %5509 = vmatprep.subr.mxu0 0.0
  %5510 = vmatpush1.msra.mxu0 0.0
  %5511 = vmatprep.subr.mxu0 0.0
  %5512 = vmatpush1.msra.mxu0 0.0
  %5513 = vmatprep.subr.mxu0 0.0
  %5514 = vmatpush1.msra.mxu0 0.0
  %5515 = vmatprep.subr.mxu0 0.0
  %5516 = vmatpush1.msra.mxu0 0.0
  %5517 = vmatprep.subr.mxu0 0.0
  %5518 = vmatpush1.msra.mxu0 0.0
  %5519 = vmatprep.subr.mxu0 0.0
  %5520 = vmatpush1.msra.mxu0 0.0
  %5521 = vmatprep.subr.mxu0 0.0
  %5522 = vmatpush1.msra.mxu0 0.0
  %5523 = vmatprep.subr.mxu0 0.0
  %5524 = vmatpush1.msra.mxu0 0.0
  %5525 = vmatprep.subr.mxu0 0.0
  %5526 = vmatpush1.msra.mxu0 0.0
  %5527 = vmatprep.subr.mxu0 0.0
  %5528 = vmatpush1.msra.mxu0 0.0
  %5529 = vmatprep.subr.mxu0 0.0
  %5530 = vmatpush1.msra.mxu0 0.0
  %5531 = vmatprep.subr.mxu0 0.0
  %5532 = vmatpush1.msra.mxu0 0.0
  %5533 = vmatprep.subr.mxu0 0.0
  %5534 = vmatpush1.msra.mxu0 0.0
  %5535 = vmatprep.subr.mxu0 0.0
  %5536 = vmatpush1.msra.mxu0 0.0
  %5537 = vmatprep.mubr.f32.mxu0 0.0
  %5538 = vmatmul.mubr.f32.gmra.mrb[0].mxu0 %v5471
  %v5539 = vpop.f32.mrb[0].mxu0
  %v5540 = vadd.f32 %v111, %v5539
  %v5541 = vpop.f32.mrb[0].mxu0
  %5542 = vdwg.mxu0
  %v5543 = vxor.u32 %v5540, 2147483648
  %v5544 = vmul.f32 %v5543, 1.442695
  %v5545 = vpow.pop %v5544
  %v5546 = vadd.f32 %v5545, 1.0
  %v5547 = vrcp.pop %v5546
  %v5548 = vmul.f32 1.0, %v5547
  %v5549 = vmul.f32 %v5548, %v4912
  %5551 = vrot.lane.b32.xlu0 %v5324, 64
  %v5552 = vpop.permute.xlu0 %5551
  %v5554 = vmul.f32 %v5548, %v5552
  %5556 = vrot.lane.b32.xlu0 %v5554, 64
  %v5557 = vpop.permute.xlu0 %5556
  %v5559 = vadd.f32 %v5549, %v5557
  %5561 = vrot.lane.b32.xlu0 %v5559, 64
  %v5562 = vpop.permute.xlu0 %5561
  %v5564 = vsel %vm314, %v5020, %v5562
  %v5565 = vld [vmem:[%s18] sm:$0xff]
  %v5566 = vld [vmem:[%s18 + $0x8] sm:$0xff]
  %v5567 = vld [vmem:[%s18 + $0x10] sm:$0xff]
  %v5568 = vld [vmem:[%s18 + $0x18] sm:$0xff]
  %v5569 = vld [vmem:[%s18 + $0x20] sm:$0xff]
  %v5570 = vld [vmem:[%s18 + $0x28] sm:$0xff]
  %v5571 = vld [vmem:[%s18 + $0x30] sm:$0xff]
  %v5572 = vld [vmem:[%s18 + $0x38] sm:$0xff]
  %v5573 = vld [vmem:[%s18 + $0x40] sm:$0xff]
  %v5574 = vld [vmem:[%s18 + $0x48] sm:$0xff]
  %v5575 = vld [vmem:[%s18 + $0x50] sm:$0xff]
  %v5576 = vld [vmem:[%s18 + $0x58] sm:$0xff]
  %v5577 = vld [vmem:[%s18 + $0x60] sm:$0xff]
  %v5578 = vld [vmem:[%s18 + $0x68] sm:$0xff]
  %v5579 = vld [vmem:[%s18 + $0x70] sm:$0xff]
  %v5580 = vld [vmem:[%s18 + $0x78] sm:$0xff]
  %v5581 = vld [vmem:[%s19] sm:$0x1]
  %v5583 = vlaneseq
  %v5584 = vshrl.u32 %v5583, 7
  %v5585 = vsub.s32 0, %v5584
  %v5586 = vrot.slane %v5581, %v5585
  %5588 = vmatprep.subr.mxu0 0.0
  %5589 = vmatpush1.msra.mxu0 %v5565
  %5590 = vmatprep.subr.mxu0 0.0
  %5591 = vmatpush1.msra.mxu0 %v5566
  %5592 = vmatprep.subr.mxu0 0.0
  %5593 = vmatpush1.msra.mxu0 %v5567
  %5594 = vmatprep.subr.mxu0 0.0
  %5595 = vmatpush1.msra.mxu0 %v5568
  %5596 = vmatprep.subr.mxu0 0.0
  %5597 = vmatpush1.msra.mxu0 %v5569
  %5598 = vmatprep.subr.mxu0 0.0
  %5599 = vmatpush1.msra.mxu0 %v5570
  %5600 = vmatprep.subr.mxu0 0.0
  %5601 = vmatpush1.msra.mxu0 %v5571
  %5602 = vmatprep.subr.mxu0 0.0
  %5603 = vmatpush1.msra.mxu0 %v5572
  %5604 = vmatprep.subr.mxu0 0.0
  %5605 = vmatpush1.msra.mxu0 %v5573
  %5606 = vmatprep.subr.mxu0 0.0
  %5607 = vmatpush1.msra.mxu0 %v5574
  %5608 = vmatprep.subr.mxu0 0.0
  %5609 = vmatpush1.msra.mxu0 %v5575
  %5610 = vmatprep.subr.mxu0 0.0
  %5611 = vmatpush1.msra.mxu0 %v5576
  %5612 = vmatprep.subr.mxu0 0.0
  %5613 = vmatpush1.msra.mxu0 %v5577
  %5614 = vmatprep.subr.mxu0 0.0
  %5615 = vmatpush1.msra.mxu0 %v5578
  %5616 = vmatprep.subr.mxu0 0.0
  %5617 = vmatpush1.msra.mxu0 %v5579
  %5618 = vmatprep.subr.mxu0 0.0
  %5619 = vmatpush1.msra.mxu0 %v5580
  %5620 = vmatprep.subr.mxu0 0.0
  %5621 = vmatpush1.msra.mxu0 0.0
  %5622 = vmatprep.subr.mxu0 0.0
  %5623 = vmatpush1.msra.mxu0 0.0
  %5624 = vmatprep.subr.mxu0 0.0
  %5625 = vmatpush1.msra.mxu0 0.0
  %5626 = vmatprep.subr.mxu0 0.0
  %5627 = vmatpush1.msra.mxu0 0.0
  %5628 = vmatprep.subr.mxu0 0.0
  %5629 = vmatpush1.msra.mxu0 0.0
  %5630 = vmatprep.subr.mxu0 0.0
  %5631 = vmatpush1.msra.mxu0 0.0
  %5632 = vmatprep.subr.mxu0 0.0
  %5633 = vmatpush1.msra.mxu0 0.0
  %5634 = vmatprep.subr.mxu0 0.0
  %5635 = vmatpush1.msra.mxu0 0.0
  %5636 = vmatprep.subr.mxu0 0.0
  %5637 = vmatpush1.msra.mxu0 0.0
  %5638 = vmatprep.subr.mxu0 0.0
  %5639 = vmatpush1.msra.mxu0 0.0
  %5640 = vmatprep.subr.mxu0 0.0
  %5641 = vmatpush1.msra.mxu0 0.0
  %5642 = vmatprep.subr.mxu0 0.0
  %5643 = vmatpush1.msra.mxu0 0.0
  %5644 = vmatprep.subr.mxu0 0.0
  %5645 = vmatpush1.msra.mxu0 0.0
  %5646 = vmatprep.subr.mxu0 0.0
  %5647 = vmatpush1.msra.mxu0 0.0
  %5648 = vmatprep.subr.mxu0 0.0
  %5649 = vmatpush1.msra.mxu0 0.0
  %5650 = vmatprep.subr.mxu0 0.0
  %5651 = vmatpush1.msra.mxu0 0.0
  %5652 = vmatprep.mubr.f32.mxu0 0.0
  %5653 = vmatmul.mubr.f32.gmra.mrb[0].mxu0 %v5564
  %v5654 = vpop.f32.mrb[0].mxu0
  %v5655 = vadd.f32 %v5586, %v5654
  %v5656 = vpop.f32.mrb[0].mxu0
  %5657 = vdwg.mxu0
  %v5658 = vmax.f32 %v5655, 0.0
  %v5659 = vld [vmem:[%s20] sm:$0xff]
  %v5660 = vld [vmem:[%s20 + $0x8] sm:$0xff]
  %v5661 = vld [vmem:[%s20 + $0x10] sm:$0xff]
  %v5662 = vld [vmem:[%s20 + $0x18] sm:$0xff]
  %v5663 = vld [vmem:[%s21] sm:$0x1]
  %v5665 = vlaneseq
  %v5666 = vshrl.u32 %v5665, 7
  %v5667 = vsub.s32 0, %v5666
  %v5668 = vrot.slane %v5663, %v5667
  %v5671 = vsel %vm141, %v5658, 0
  %5673 = vmatprep.subr.mxu0 0.0
  %5674 = vmatpush1.msra.mxu0 %v5659
  %5675 = vmatprep.subr.mxu0 0.0
  %5676 = vmatpush1.msra.mxu0 %v5660
  %5677 = vmatprep.subr.mxu0 0.0
  %5678 = vmatpush1.msra.mxu0 %v5661
  %5679 = vmatprep.subr.mxu0 0.0
  %5680 = vmatpush1.msra.mxu0 %v5662
  %5681 = vmatprep.subr.mxu0 0.0
  %5682 = vmatpush1.msra.mxu0 0.0
  %5683 = vmatprep.subr.mxu0 0.0
  %5684 = vmatpush1.msra.mxu0 0.0
  %5685 = vmatprep.subr.mxu0 0.0
  %5686 = vmatpush1.msra.mxu0 0.0
  %5687 = vmatprep.subr.mxu0 0.0
  %5688 = vmatpush1.msra.mxu0 0.0
  %5689 = vmatprep.subr.mxu0 0.0
  %5690 = vmatpush1.msra.mxu0 0.0
  %5691 = vmatprep.subr.mxu0 0.0
  %5692 = vmatpush1.msra.mxu0 0.0
  %5693 = vmatprep.subr.mxu0 0.0
  %5694 = vmatpush1.msra.mxu0 0.0
  %5695 = vmatprep.subr.mxu0 0.0
  %5696 = vmatpush1.msra.mxu0 0.0
  %5697 = vmatprep.subr.mxu0 0.0
  %5698 = vmatpush1.msra.mxu0 0.0
  %5699 = vmatprep.subr.mxu0 0.0
  %5700 = vmatpush1.msra.mxu0 0.0
  %5701 = vmatprep.subr.mxu0 0.0
  %5702 = vmatpush1.msra.mxu0 0.0
  %5703 = vmatprep.subr.mxu0 0.0
  %5704 = vmatpush1.msra.mxu0 0.0
  %5705 = vmatprep.subr.mxu0 0.0
  %5706 = vmatpush1.msra.mxu0 0.0
  %5707 = vmatprep.subr.mxu0 0.0
  %5708 = vmatpush1.msra.mxu0 0.0
  %5709 = vmatprep.subr.mxu0 0.0
  %5710 = vmatpush1.msra.mxu0 0.0
  %5711 = vmatprep.subr.mxu0 0.0
  %5712 = vmatpush1.msra.mxu0 0.0
  %5713 = vmatprep.subr.mxu0 0.0
  %5714 = vmatpush1.msra.mxu0 0.0
  %5715 = vmatprep.subr.mxu0 0.0
  %5716 = vmatpush1.msra.mxu0 0.0
  %5717 = vmatprep.subr.mxu0 0.0
  %5718 = vmatpush1.msra.mxu0 0.0
  %5719 = vmatprep.subr.mxu0 0.0
  %5720 = vmatpush1.msra.mxu0 0.0
  %5721 = vmatprep.subr.mxu0 0.0
  %5722 = vmatpush1.msra.mxu0 0.0
  %5723 = vmatprep.subr.mxu0 0.0
  %5724 = vmatpush1.msra.mxu0 0.0
  %5725 = vmatprep.subr.mxu0 0.0
  %5726 = vmatpush1.msra.mxu0 0.0
  %5727 = vmatprep.subr.mxu0 0.0
  %5728 = vmatpush1.msra.mxu0 0.0
  %5729 = vmatprep.subr.mxu0 0.0
  %5730 = vmatpush1.msra.mxu0 0.0
  %5731 = vmatprep.subr.mxu0 0.0
  %5732 = vmatpush1.msra.mxu0 0.0
  %5733 = vmatprep.subr.mxu0 0.0
  %5734 = vmatpush1.msra.mxu0 0.0
  %5735 = vmatprep.subr.mxu0 0.0
  %5736 = vmatpush1.msra.mxu0 0.0
  %5737 = vmatprep.mubr.f32.mxu0 0.0
  %5738 = vmatmul.mubr.f32.gmra.mrb[0].mxu0 %v5671
  %v5739 = vpop.f32.mrb[0].mxu0
  %v5740 = vadd.f32 %v5668, %v5739
  %v5741 = vpop.f32.mrb[0].mxu0
  %5742 = vdwg.mxu0
  %5743 = vst [vmem:[%s22] sm:$0xff] %v5740
  // Predicated region
  $region90: #{mfn_forward.1} parent=0 // pred_check
    _
  $region91: #{mfn_forward.1} parent=0 // pred_check_branch
    %5745 = sbr.rel (0) target = $region93
  $region92: #{mfn_forward.1} parent=0 // pred_region
    _
  $region93: #{mfn_forward.1} parent=0 // pred_fallthru
    _
  // Predicated region
  $region94: #{mfn_forward.1} parent=0 // pred_check
    _
  $region95: #{mfn_forward.1} parent=0 // pred_check_branch
    %5747 = sbr.rel (0) target = $region97
  $region96: #{mfn_forward.1} parent=0 // pred_region
    _
  $region97: #{mfn_forward.1} parent=0 // pred_fallthru
    _

</llo_original>
